<compile_context>
chip_gen: v6e
topology: v6e:2x2x1
jax: 0.10.0
libtpu: 0.0.40
codegen_flags: <defaults>
</compile_context>

<pallas_src>
import jax
import jax.numpy as jnp
import numpy as np
from jax.experimental import pallas as pl
from jax.experimental.pallas import tpu as pltpu

EPS = 1e-5


def _pick_cin_tile(cin: int, p: int, cout: int,
                   budget_bytes: int = 10 * 1024 * 1024) -> int:
    """Largest divisor of `cin` that is a multiple of 8 whose double-buffered
    per-step footprint (x tile + weight tile + BN1 params, lane-padded f32)
    fits `budget_bytes`.  For Cin=1504, P=196, Cout=128 -> 1504 (one step)."""
    p_lanes = ((p + 127) // 128) * 128
    cout_lanes = max(((cout + 127) // 128) * 128, 128)
    best = None
    for t in range(8, cin + 1, 8):
        if cin % t:
            continue
        x_b = 2 * t * p_lanes * 4        # double-buffered x tile
        w_b = 2 * t * cout_lanes * 4     # double-buffered weight tile
        p_b = 2 * t * 128 * 4            # BN1 param tile (lane-padded (t,2)->(t,128))
        if x_b + w_b + p_b <= budget_bytes:
            best = t
    if best is None:
        best = 8 if cin % 8 == 0 else cin
    return best


def _fused_kernel(x_ref, p1_ref, wt_ref, p2_ref, out_ref):
    # x_ref  : (TC, P)     tile of the input slab (channels x pixels)
    # p1_ref : (TC, 2)     BN1 params, col0 = gamma, col1 = beta
    # wt_ref : (TC, Cout)  transposed 1x1-conv weight tile
    # p2_ref : (Cout, 2)   BN2 params (resident, same block every step)
    # out_ref: (Cout, P)   resident output; doubles as the f32 accumulator
    k = pl.program_id(0)
    last = pl.num_programs(0) - 1

    x = x_ref[...]                                     # (TC, P)
    inv_p = 1.0 / x.shape[1]

    # ---- BN1 stats in ONE pass over the tile (per-channel, so tiling over
    #      Cin keeps each channel's statistics complete). ----
    mean1 = jnp.sum(x, axis=1, keepdims=True) * inv_p           # E[x]
    ex2 = jnp.sum(x * x, axis=1, keepdims=True) * inv_p         # E[x^2]
    var1 = ex2 - mean1 * mean1

    # ---- Fold BN1 affine into a single scale/bias, fuse with ReLU. ----
    g1 = p1_ref[:, 0:1]
    b1 = p1_ref[:, 1:2]
    s1 = g1 * jax.lax.rsqrt(var1 + EPS)                # (TC, 1)
    t1 = b1 - mean1 * s1                               # (TC, 1)
    xr = jnp.maximum(x * s1 + t1, 0.0)                 # single VPU pass

    # ---- 1x1 conv == matmul on the MXU.  wt is (TC, Cout); contract dim 0 of
    #      both operands -> (Cout, P) partial in f32. ----
    partial = jax.lax.dot_general(
        wt_ref[...], xr,
        dimension_numbers=(((0,), (0,)), ((), ())),
        preferred_element_type=jnp.float32)

    # ---- Accumulate directly into the resident output block (no scratch). ----
    @pl.when(k == 0)
    def _store_first():
        out_ref[...] = partial

    @pl.when(k > 0)
    def _accumulate():
        out_ref[...] += partial

    # ---- BN2 in place, only once all Cin tiles have been accumulated. ----
    @pl.when(k == last)
    def _finalize():
        y = out_ref[...]                               # (Cout, P)
        inv_q = 1.0 / y.shape[1]
        mean2 = jnp.sum(y, axis=1, keepdims=True) * inv_q
        ey2 = jnp.sum(y * y, axis=1, keepdims=True) * inv_q
        var2 = ey2 - mean2 * mean2
        g2 = p2_ref[:, 0:1]
        b2 = p2_ref[:, 1:2]
        s2 = g2 * jax.lax.rsqrt(var2 + EPS)
        t2 = b2 - mean2 * s2
        out_ref[...] = y * s2 + t2


def fused_bn_relu_conv_bn(x_nchw, gamma1, beta1, w, gamma2, beta2):
    """x_nchw: (N, Cin, H, W) f32. w: (Cout, Cin, 1, 1). Returns (N, Cout, H, W)."""
    N, Cin, H, W = x_nchw.shape
    Cout = w.shape[0]
    P = N * H * W

    # NCHW -> (Cin, P). For N == 1 the transpose is a pure reshape (free).
    x2d = jnp.transpose(x_nchw, (1, 0, 2, 3)).reshape(Cin, P)
    # Weight in (Cin, Cout) layout so per-step blocks are (TC, Cout): lane-dense
    # and legal under the (8,128) block rule (Cin has no 128-multiple divisor).
    wt = jnp.transpose(w.reshape(Cout, Cin), (1, 0))
    # Pack BN affine params: (C, 2) = [gamma | beta]  (2 DMAs instead of 4).
    p1 = jnp.stack([gamma1, beta1], axis=1)            # (Cin, 2)
    p2 = jnp.stack([gamma2, beta2], axis=1)            # (Cout, 2)

    tc = _pick_cin_tile(Cin, P, Cout)                  # 1504 for this shape -> 1 step
    n_steps = Cin // tc

    cost = pl.CostEstimate(
        flops=int(2 * Cout * Cin * P + 8 * Cin * P + 8 * Cout * P),
        transcendentals=int(Cin + Cout),
        bytes_accessed=int(4 * (Cin * P + Cin * Cout + Cout * P
                                + 2 * (Cin + Cout))),
    )

    out2d = pl.pallas_call(
        _fused_kernel,
        out_shape=jax.ShapeDtypeStruct((Cout, P), jnp.float32),
        grid_spec=pltpu.PrefetchScalarGridSpec(
            num_scalar_prefetch=0,
            grid=(n_steps,),
            in_specs=[
                pl.BlockSpec((tc, P), lambda k: (k, 0)),       # x tile
                pl.BlockSpec((tc, 2), lambda k: (k, 0)),       # BN1 params tile
                pl.BlockSpec((tc, Cout), lambda k: (k, 0)),    # weight tile
                pl.BlockSpec((Cout, 2), lambda k: (0, 0)),     # BN2 params (resident)
            ],
            out_specs=pl.BlockSpec((Cout, P), lambda k: (0, 0)),  # resident accumulator
        ),
        compiler_params=pltpu.CompilerParams(
            dimension_semantics=("arbitrary",)),       # Cin axis is a reduction
        cost_estimate=cost,
    )(x2d, p1, wt, p2)

    # (Cout, N*H*W) -> (N, Cout, H, W).  Pure reshape for N == 1.
    return jnp.transpose(out2d.reshape(Cout, N, H, W), (1, 0, 2, 3))


def _reference(x_nchw, gamma1, beta1, w, gamma2, beta2):
    """Pure-JAX reference (PyTorch training-mode BN semantics)."""
    def bn(x, g, b):
        mean = jnp.mean(x, axis=(0, 2, 3), keepdims=True)
        var = jnp.mean((x - mean) ** 2, axis=(0, 2, 3), keepdims=True)
        return (x - mean) * jax.lax.rsqrt(var + EPS) * g[None, :, None, None] \
            + b[None, :, None, None]

    h = jnp.maximum(bn(x_nchw, gamma1, beta1), 0.0)
    y = jnp.einsum("oc,nchw->nohw", w.reshape(w.shape[0], w.shape[1]), h,
                   preferred_element_type=jnp.float32)
    return bn(y, gamma2, beta2)


if __name__ == "__main__":
    # Shapes implied by the module: x414 = (1, 1504, 14, 14), conv 1504 -> 128.
    N, Cin, H, W = 1, 1504, 14, 14
    Cout = 128

    key = jax.random.PRNGKey(0)
    kx, kw, kg1, kb1, kg2, kb2 = jax.random.split(key, 6)

    x = jax.random.normal(kx, (N, Cin, H, W), dtype=jnp.float32)
    conv_w = jax.random.normal(kw, (Cout, Cin, 1, 1), dtype=jnp.float32) * (1.0 / np.sqrt(Cin))
    gamma1 = 1.0 + 0.1 * jax.random.normal(kg1, (Cin,), dtype=jnp.float32)
    beta1 = 0.1 * jax.random.normal(kb1, (Cin,), dtype=jnp.float32)
    gamma2 = 1.0 + 0.1 * jax.random.normal(kg2, (Cout,), dtype=jnp.float32)
    beta2 = 0.1 * jax.random.normal(kb2, (Cout,), dtype=jnp.float32)

    out = fused_bn_relu_conv_bn(x, gamma1, beta1, conv_w, gamma2, beta2)
    out = jax.block_until_ready(out)

    ref = jax.block_until_ready(_reference(x, gamma1, beta1, conv_w, gamma2, beta2))
    assert out.shape == (N, Cout, H, W), out.shape
    np.testing.assert_allclose(np.asarray(out), np.asarray(ref), rtol=1e-3, atol=1e-3)

    print("KERNEL_OK")
</pallas_src>

<mosaic_0001>
module attributes {stable_mosaic.version = 11 : i64} {
  func.func @_fused_kernel(%arg0: i32, %arg1: memref<1504x196xf32, #tpu.memory_space<vmem>>, %arg2: memref<1504x2xf32, #tpu.memory_space<vmem>>, %arg3: memref<1504x128xf32, #tpu.memory_space<vmem>>, %arg4: memref<128x2xf32, #tpu.memory_space<vmem>>, %arg5: memref<128x196xf32, #tpu.memory_space<vmem>>) attributes {dimension_semantics = [#tpu.dimension_semantics<arbitrary>], iteration_bounds = array<i64: 1>, scalar_prefetch = 0 : i64, scratch_operands = 0 : i64, tpu.core_type = #tpu.core_type<tc>, window_params = [{transform_indices = @transform_0, window_bounds = array<i64: 1504, 196>}, {transform_indices = @transform_1, window_bounds = array<i64: 1504, 2>}, {transform_indices = @transform_2, window_bounds = array<i64: 1504, 128>}, {pipeline_mode = #tpu.pipeline_mode<synchronous>, transform_indices = @transform_3, window_bounds = array<i64: 128, 2>}, {pipeline_mode = #tpu.pipeline_mode<synchronous>, transform_indices = @transform_4, window_bounds = array<i64: 128, 196>}]} {
    %c0 = arith.constant 0 : index
    %c0_0 = arith.constant 0 : index
    %0 = vector.load %arg1[%c0, %c0_0] : memref<1504x196xf32, #tpu.memory_space<vmem>>, vector<1504x196xf32>
    %cst = arith.constant dense<0.000000e+00> : vector<1504xf32>
    %1 = vector.multi_reduction <add>, %0, %cst [1] : vector<1504x196xf32> to vector<1504xf32>
    %2 = vector.shape_cast %1 : vector<1504xf32> to vector<1504x1xf32>
    %cst_1 = arith.constant 0.00510204071 : f32
    %3 = vector.broadcast %cst_1 : f32 to vector<1504x1xf32>
    %4 = arith.mulf %2, %3 : vector<1504x1xf32>
    %5 = arith.mulf %0, %0 : vector<1504x196xf32>
    %cst_2 = arith.constant dense<0.000000e+00> : vector<1504xf32>
    %6 = vector.multi_reduction <add>, %5, %cst_2 [1] : vector<1504x196xf32> to vector<1504xf32>
    %7 = vector.shape_cast %6 : vector<1504xf32> to vector<1504x1xf32>
    %cst_3 = arith.constant 0.00510204071 : f32
    %8 = vector.broadcast %cst_3 : f32 to vector<1504x1xf32>
    %9 = arith.mulf %7, %8 : vector<1504x1xf32>
    %10 = arith.mulf %4, %4 : vector<1504x1xf32>
    %11 = arith.subf %9, %10 : vector<1504x1xf32>
    %c0_4 = arith.constant 0 : index
    %c0_5 = arith.constant 0 : index
    %12 = vector.load %arg2[%c0_4, %c0_5] : memref<1504x2xf32, #tpu.memory_space<vmem>>, vector<1504x1xf32>
    %c0_6 = arith.constant 0 : index
    %c1 = arith.constant 1 : index
    %13 = vector.load %arg2[%c0_6, %c1] : memref<1504x2xf32, #tpu.memory_space<vmem>>, vector<1504x1xf32>
    %cst_7 = arith.constant 9.99999974E-6 : f32
    %14 = vector.broadcast %cst_7 : f32 to vector<1504x1xf32>
    %15 = arith.addf %11, %14 : vector<1504x1xf32>
    %16 = math.rsqrt %15 : vector<1504x1xf32>
    %17 = arith.mulf %12, %16 : vector<1504x1xf32>
    %18 = arith.mulf %4, %17 : vector<1504x1xf32>
    %19 = arith.subf %13, %18 : vector<1504x1xf32>
    %20 = vector.broadcast %17 : vector<1504x1xf32> to vector<1504x196xf32>
    %21 = arith.mulf %0, %20 : vector<1504x196xf32>
    %22 = vector.broadcast %19 : vector<1504x1xf32> to vector<1504x196xf32>
    %23 = arith.addf %21, %22 : vector<1504x196xf32>
    %cst_8 = arith.constant 0.000000e+00 : f32
    %24 = vector.broadcast %cst_8 : f32 to vector<1504x196xf32>
    %25 = arith.maximumf %23, %24 : vector<1504x196xf32>
    %c0_9 = arith.constant 0 : index
    %c0_10 = arith.constant 0 : index
    %26 = vector.load %arg3[%c0_9, %c0_10] : memref<1504x128xf32, #tpu.memory_space<vmem>>, vector<1504x128xf32>
    %cst_11 = arith.constant dense<0.000000e+00> : vector<128x196xf32>
    %27 = tpu.matmul %26, %25, %cst_11 {dimension_numbers = #tpu.dot_dimension_numbers<[0], [0], [1], [1], [0, 1, 1, 1], [], []>} : vector<1504x128xf32>, vector<1504x196xf32>, vector<128x196xf32> -> vector<128x196xf32>
    %c0_i32 = arith.constant 0 : i32
    %28 = arith.cmpi eq, %arg0, %c0_i32 : i32
    %29 = arith.extui %28 : i1 to i32
    %c0_i32_12 = arith.constant 0 : i32
    %30 = arith.cmpi ne, %29, %c0_i32_12 : i32
    scf.if %30 {
      %c0_17 = arith.constant 0 : index
      %c0_18 = arith.constant 0 : index
      %37 = vector.load %arg5[%c0_17, %c0_18] : memref<128x196xf32, #tpu.memory_space<vmem>>, vector<128x196xf32>
      tpu.vector_store %arg5[%c0_17, %c0_18], %27 {strides = array<i32>} : memref<128x196xf32, #tpu.memory_space<vmem>>, vector<128x196xf32>,
    } else {
    }
    %c0_i32_13 = arith.constant 0 : i32
    %31 = arith.cmpi sgt, %arg0, %c0_i32_13 : i32
    %32 = arith.extui %31 : i1 to i32
    %c0_i32_14 = arith.constant 0 : i32
    %33 = arith.cmpi ne, %32, %c0_i32_14 : i32
    scf.if %33 {
      %c0_17 = arith.constant 0 : index
      %c0_18 = arith.constant 0 : index
      %37 = vector.load %arg5[%c0_17, %c0_18] : memref<128x196xf32, #tpu.memory_space<vmem>>, vector<128x196xf32>
      %38 = arith.addf %37, %27 : vector<128x196xf32>
      %c0_19 = arith.constant 0 : index
      %c0_20 = arith.constant 0 : index
      %39 = vector.load %arg5[%c0_19, %c0_20] : memref<128x196xf32, #tpu.memory_space<vmem>>, vector<128x196xf32>
      tpu.vector_store %arg5[%c0_19, %c0_20], %38 {strides = array<i32>} : memref<128x196xf32, #tpu.memory_space<vmem>>, vector<128x196xf32>,
    } else {
    }
    %c0_i32_15 = arith.constant 0 : i32
    %34 = arith.cmpi eq, %arg0, %c0_i32_15 : i32
    %35 = arith.extui %34 : i1 to i32
    %c0_i32_16 = arith.constant 0 : i32
    %36 = arith.cmpi ne, %35, %c0_i32_16 : i32
    scf.if %36 {
      %c0_17 = arith.constant 0 : index
      %c0_18 = arith.constant 0 : index
      %37 = vector.load %arg5[%c0_17, %c0_18] : memref<128x196xf32, #tpu.memory_space<vmem>>, vector<128x196xf32>
      %cst_19 = arith.constant dense<0.000000e+00> : vector<128xf32>
      %38 = vector.multi_reduction <add>, %37, %cst_19 [1] : vector<128x196xf32> to vector<128xf32>
      %39 = vector.shape_cast %38 : vector<128xf32> to vector<128x1xf32>
      %cst_20 = arith.constant 0.00510204071 : f32
      %40 = vector.broadcast %cst_20 : f32 to vector<128x1xf32>
      %41 = arith.mulf %39, %40 : vector<128x1xf32>
      %42 = arith.mulf %37, %37 : vector<128x196xf32>
      %cst_21 = arith.constant dense<0.000000e+00> : vector<128xf32>
      %43 = vector.multi_reduction <add>, %42, %cst_21 [1] : vector<128x196xf32> to vector<128xf32>
      %44 = vector.shape_cast %43 : vector<128xf32> to vector<128x1xf32>
      %cst_22 = arith.constant 0.00510204071 : f32
      %45 = vector.broadcast %cst_22 : f32 to vector<128x1xf32>
      %46 = arith.mulf %44, %45 : vector<128x1xf32>
      %47 = arith.mulf %41, %41 : vector<128x1xf32>
      %48 = arith.subf %46, %47 : vector<128x1xf32>
      %c0_23 = arith.constant 0 : index
      %c0_24 = arith.constant 0 : index
      %49 = vector.load %arg4[%c0_23, %c0_24] : memref<128x2xf32, #tpu.memory_space<vmem>>, vector<128x1xf32>
      %c0_25 = arith.constant 0 : index
      %c1_26 = arith.constant 1 : index
      %50 = vector.load %arg4[%c0_25, %c1_26] : memref<128x2xf32, #tpu.memory_space<vmem>>, vector<128x1xf32>
      %cst_27 = arith.constant 9.99999974E-6 : f32
      %51 = vector.broadcast %cst_27 : f32 to vector<128x1xf32>
      %52 = arith.addf %48, %51 : vector<128x1xf32>
      %53 = math.rsqrt %52 : vector<128x1xf32>
      %54 = arith.mulf %49, %53 : vector<128x1xf32>
      %55 = arith.mulf %41, %54 : vector<128x1xf32>
      %56 = arith.subf %50, %55 : vector<128x1xf32>
      %57 = vector.broadcast %54 : vector<128x1xf32> to vector<128x196xf32>
      %58 = arith.mulf %37, %57 : vector<128x196xf32>
      %59 = vector.broadcast %56 : vector<128x1xf32> to vector<128x196xf32>
      %60 = arith.addf %58, %59 : vector<128x196xf32>
      %c0_28 = arith.constant 0 : index
      %c0_29 = arith.constant 0 : index
      %61 = vector.load %arg5[%c0_28, %c0_29] : memref<128x196xf32, #tpu.memory_space<vmem>>, vector<128x196xf32>
      tpu.vector_store %arg5[%c0_28, %c0_29], %60 {strides = array<i32>} : memref<128x196xf32, #tpu.memory_space<vmem>>, vector<128x196xf32>,
    } else {
    }
    return
  }
  func.func @transform_0(%arg0: i32) -> (i32, i32) {
    %c0_i32 = arith.constant 0 : i32
    %c0_i32_0 = arith.constant 0 : i32
    return %arg0, %c0_i32 : i32, i32
  }
  func.func @transform_1(%arg0: i32) -> (i32, i32) {
    %c0_i32 = arith.constant 0 : i32
    %c0_i32_0 = arith.constant 0 : i32
    return %arg0, %c0_i32 : i32, i32
  }
  func.func @transform_2(%arg0: i32) -> (i32, i32) {
    %c0_i32 = arith.constant 0 : i32
    %c0_i32_0 = arith.constant 0 : i32
    return %arg0, %c0_i32 : i32, i32
  }
  func.func @transform_3(%arg0: i32) -> (i32, i32) {
    %c0_i32 = arith.constant 0 : i32
    %c0_i32_0 = arith.constant 0 : i32
    %c0_i32_1 = arith.constant 0 : i32
    return %c0_i32, %c0_i32_0 : i32, i32
  }
  func.func @transform_4(%arg0: i32) -> (i32, i32) {
    %c0_i32 = arith.constant 0 : i32
    %c0_i32_0 = arith.constant 0 : i32
    %c0_i32_1 = arith.constant 0 : i32
    return %c0_i32, %c0_i32_0 : i32, i32
  }
}

</mosaic_0001>

<llo_original>
// kernel: tpu_custom_call.1
$region0: #{tpu_custom_call.1}
  #allocation0 [shape = 'u32[]', space=smem, size = 0x4, offset = 0x4, fixed_abs, tag = 'smem constant byte address 0x4 - core index']
  #allocation1 [shape = 'u32[144,128]{1,0:T(1,128)}', space=vmem, size = 0x12000, scoped, tag = 'internal scratch']
  %s0 = inlined_call_operand.vmem [shape: f32[1504,196], index: 0, kind: input, shape index: {}]
  %s1 = inlined_call_operand.vmem [shape: f32[1504,2], index: 1, kind: input, shape index: {}]
  %s2 = inlined_call_operand.vmem [shape: f32[1504,128], index: 2, kind: input, shape index: {}]
  %s3 = inlined_call_operand.vmem [shape: f32[128,2], index: 3, kind: input, shape index: {}]
  %s4 = inlined_call_operand.vmem [shape: f32[128,196], index: 4, kind: output, shape index: {}]
  %s5 = sld [smem:[#allocation0]]
  $region38: #{tpu_custom_call.1} parent=0
    _
  %s7 = ssub.s32 1, %s5
  %s8 = scalar_select 0, %s7, %s5
  // Predicated region
  $region2: #{tpu_custom_call.1} parent=0 // pred_check
    _
  $region3: #{tpu_custom_call.1} parent=0 // pred_check_branch
    %10 = sbr.rel (0) target = $region5
  $region4: #{tpu_custom_call.1} parent=0 // pred_region
    _
  $region5: #{tpu_custom_call.1} parent=0 // pred_fallthru
    _
  // Predicated region
  $region6: #{tpu_custom_call.1} parent=0 // pred_check
    _
  $region7: #{tpu_custom_call.1} parent=0 // pred_check_branch
    %12 = sbr.rel (0) target = $region9
  $region8: #{tpu_custom_call.1} parent=0 // pred_region
    _
  $region9: #{tpu_custom_call.1} parent=0 // pred_fallthru
    _
  // Predicated region
  $region10: #{tpu_custom_call.1} parent=0 // pred_check
    _
  $region11: #{tpu_custom_call.1} parent=0 // pred_check_branch
    %14 = sbr.rel (0) target = $region13
  $region12: #{tpu_custom_call.1} parent=0 // pred_region
    _
  $region13: #{tpu_custom_call.1} parent=0 // pred_fallthru
    _
  // Predicated region
  $region14: #{tpu_custom_call.1} parent=0 // pred_check
    _
  $region15: #{tpu_custom_call.1} parent=0 // pred_check_branch
    %16 = sbr.rel (0) target = $region17
  $region16: #{tpu_custom_call.1} parent=0 // pred_region
    _
  $region17: #{tpu_custom_call.1} parent=0 // pred_fallthru
    _
  %v17 = vld [vmem:[%s0] sm:$0xff]
  %v18 = vld [vmem:[%s0 + $0x8] sm:$0xff]
  %v19 = vld [vmem:[%s0 + $0x10] sm:$0xff]
  %v20 = vld [vmem:[%s0 + $0x18] sm:$0xff]
  %v21 = vld [vmem:[%s0 + $0x20] sm:$0xff]
  %v22 = vld [vmem:[%s0 + $0x28] sm:$0xff]
  %v23 = vld [vmem:[%s0 + $0x30] sm:$0xff]
  %v24 = vld [vmem:[%s0 + $0x38] sm:$0xff]
  %v25 = vld [vmem:[%s0 + $0x40] sm:$0xff]
  %v26 = vld [vmem:[%s0 + $0x48] sm:$0xff]
  %v27 = vld [vmem:[%s0 + $0x50] sm:$0xff]
  %v28 = vld [vmem:[%s0 + $0x58] sm:$0xff]
  %v29 = vld [vmem:[%s0 + $0x60] sm:$0xff]
  %v30 = vld [vmem:[%s0 + $0x68] sm:$0xff]
  %v31 = vld [vmem:[%s0 + $0x70] sm:$0xff]
  %v32 = vld [vmem:[%s0 + $0x78] sm:$0xff]
  %v33 = vld [vmem:[%s0 + $0x80] sm:$0xff]
  %v34 = vld [vmem:[%s0 + $0x88] sm:$0xff]
  %v35 = vld [vmem:[%s0 + $0x90] sm:$0xff]
  %v36 = vld [vmem:[%s0 + $0x98] sm:$0xff]
  %v37 = vld [vmem:[%s0 + $0xa0] sm:$0xff]
  %v38 = vld [vmem:[%s0 + $0xa8] sm:$0xff]
  %v39 = vld [vmem:[%s0 + $0xb0] sm:$0xff]
  %v40 = vld [vmem:[%s0 + $0xb8] sm:$0xff]
  %v41 = vld [vmem:[%s0 + $0xc0] sm:$0xff]
  %v42 = vld [vmem:[%s0 + $0xc8] sm:$0xff]
  %v43 = vld [vmem:[%s0 + $0xd0] sm:$0xff]
  %v44 = vld [vmem:[%s0 + $0xd8] sm:$0xff]
  %v45 = vld [vmem:[%s0 + $0xe0] sm:$0xff]
  %v46 = vld [vmem:[%s0 + $0xe8] sm:$0xff]
  %v47 = vld [vmem:[%s0 + $0xf0] sm:$0xff]
  %v48 = vld [vmem:[%s0 + $0xf8] sm:$0xff]
  %v49 = vld [vmem:[%s0 + $0x100] sm:$0xff]
  %v50 = vld [vmem:[%s0 + $0x108] sm:$0xff]
  %v51 = vld [vmem:[%s0 + $0x110] sm:$0xff]
  %v52 = vld [vmem:[%s0 + $0x118] sm:$0xff]
  %v53 = vld [vmem:[%s0 + $0x120] sm:$0xff]
  %v54 = vld [vmem:[%s0 + $0x128] sm:$0xff]
  %v55 = vld [vmem:[%s0 + $0x130] sm:$0xff]
  %v56 = vld [vmem:[%s0 + $0x138] sm:$0xff]
  %v57 = vld [vmem:[%s0 + $0x140] sm:$0xff]
  %v58 = vld [vmem:[%s0 + $0x148] sm:$0xff]
  %v59 = vld [vmem:[%s0 + $0x150] sm:$0xff]
  %v60 = vld [vmem:[%s0 + $0x158] sm:$0xff]
  %v61 = vld [vmem:[%s0 + $0x160] sm:$0xff]
  %v62 = vld [vmem:[%s0 + $0x168] sm:$0xff]
  %v63 = vld [vmem:[%s0 + $0x170] sm:$0xff]
  %v64 = vld [vmem:[%s0 + $0x178] sm:$0xff]
  %v65 = vld [vmem:[%s0 + $0x180] sm:$0xff]
  %v66 = vld [vmem:[%s0 + $0x188] sm:$0xff]
  %v67 = vld [vmem:[%s0 + $0x190] sm:$0xff]
  %v68 = vld [vmem:[%s0 + $0x198] sm:$0xff]
  %v69 = vld [vmem:[%s0 + $0x1a0] sm:$0xff]
  %v70 = vld [vmem:[%s0 + $0x1a8] sm:$0xff]
  %v71 = vld [vmem:[%s0 + $0x1b0] sm:$0xff]
  %v72 = vld [vmem:[%s0 + $0x1b8] sm:$0xff]
  %v73 = vld [vmem:[%s0 + $0x1c0] sm:$0xff]
  %v74 = vld [vmem:[%s0 + $0x1c8] sm:$0xff]
  %v75 = vld [vmem:[%s0 + $0x1d0] sm:$0xff]
  %v76 = vld [vmem:[%s0 + $0x1d8] sm:$0xff]
  %v77 = vld [vmem:[%s0 + $0x1e0] sm:$0xff]
  %v78 = vld [vmem:[%s0 + $0x1e8] sm:$0xff]
  %v79 = vld [vmem:[%s0 + $0x1f0] sm:$0xff]
  %v80 = vld [vmem:[%s0 + $0x1f8] sm:$0xff]
  %v81 = vld [vmem:[%s0 + $0x200] sm:$0xff]
  %v82 = vld [vmem:[%s0 + $0x208] sm:$0xff]
  %v83 = vld [vmem:[%s0 + $0x210] sm:$0xff]
  %v84 = vld [vmem:[%s0 + $0x218] sm:$0xff]
  %v85 = vld [vmem:[%s0 + $0x220] sm:$0xff]
  %v86 = vld [vmem:[%s0 + $0x228] sm:$0xff]
  %v87 = vld [vmem:[%s0 + $0x230] sm:$0xff]
  %v88 = vld [vmem:[%s0 + $0x238] sm:$0xff]
  %v89 = vld [vmem:[%s0 + $0x240] sm:$0xff]
  %v90 = vld [vmem:[%s0 + $0x248] sm:$0xff]
  %v91 = vld [vmem:[%s0 + $0x250] sm:$0xff]
  %v92 = vld [vmem:[%s0 + $0x258] sm:$0xff]
  %v93 = vld [vmem:[%s0 + $0x260] sm:$0xff]
  %v94 = vld [vmem:[%s0 + $0x268] sm:$0xff]
  %v95 = vld [vmem:[%s0 + $0x270] sm:$0xff]
  %v96 = vld [vmem:[%s0 + $0x278] sm:$0xff]
  %v97 = vld [vmem:[%s0 + $0x280] sm:$0xff]
  %v98 = vld [vmem:[%s0 + $0x288] sm:$0xff]
  %v99 = vld [vmem:[%s0 + $0x290] sm:$0xff]
  %v100 = vld [vmem:[%s0 + $0x298] sm:$0xff]
  %v101 = vld [vmem:[%s0 + $0x2a0] sm:$0xff]
  %v102 = vld [vmem:[%s0 + $0x2a8] sm:$0xff]
  %v103 = vld [vmem:[%s0 + $0x2b0] sm:$0xff]
  %v104 = vld [vmem:[%s0 + $0x2b8] sm:$0xff]
  %v105 = vld [vmem:[%s0 + $0x2c0] sm:$0xff]
  %v106 = vld [vmem:[%s0 + $0x2c8] sm:$0xff]
  %v107 = vld [vmem:[%s0 + $0x2d0] sm:$0xff]
  %v108 = vld [vmem:[%s0 + $0x2d8] sm:$0xff]
  %v109 = vld [vmem:[%s0 + $0x2e0] sm:$0xff]
  %v110 = vld [vmem:[%s0 + $0x2e8] sm:$0xff]
  %v111 = vld [vmem:[%s0 + $0x2f0] sm:$0xff]
  %v112 = vld [vmem:[%s0 + $0x2f8] sm:$0xff]
  %v113 = vld [vmem:[%s0 + $0x300] sm:$0xff]
  %v114 = vld [vmem:[%s0 + $0x308] sm:$0xff]
  %v115 = vld [vmem:[%s0 + $0x310] sm:$0xff]
  %v116 = vld [vmem:[%s0 + $0x318] sm:$0xff]
  %v117 = vld [vmem:[%s0 + $0x320] sm:$0xff]
  %v118 = vld [vmem:[%s0 + $0x328] sm:$0xff]
  %v119 = vld [vmem:[%s0 + $0x330] sm:$0xff]
  %v120 = vld [vmem:[%s0 + $0x338] sm:$0xff]
  %v121 = vld [vmem:[%s0 + $0x340] sm:$0xff]
  %v122 = vld [vmem:[%s0 + $0x348] sm:$0xff]
  %v123 = vld [vmem:[%s0 + $0x350] sm:$0xff]
  %v124 = vld [vmem:[%s0 + $0x358] sm:$0xff]
  %v125 = vld [vmem:[%s0 + $0x360] sm:$0xff]
  %v126 = vld [vmem:[%s0 + $0x368] sm:$0xff]
  %v127 = vld [vmem:[%s0 + $0x370] sm:$0xff]
  %v128 = vld [vmem:[%s0 + $0x378] sm:$0xff]
  %v129 = vld [vmem:[%s0 + $0x380] sm:$0xff]
  %v130 = vld [vmem:[%s0 + $0x388] sm:$0xff]
  %v131 = vld [vmem:[%s0 + $0x390] sm:$0xff]
  %v132 = vld [vmem:[%s0 + $0x398] sm:$0xff]
  %v133 = vld [vmem:[%s0 + $0x3a0] sm:$0xff]
  %v134 = vld [vmem:[%s0 + $0x3a8] sm:$0xff]
  %v135 = vld [vmem:[%s0 + $0x3b0] sm:$0xff]
  %v136 = vld [vmem:[%s0 + $0x3b8] sm:$0xff]
  %v137 = vld [vmem:[%s0 + $0x3c0] sm:$0xff]
  %v138 = vld [vmem:[%s0 + $0x3c8] sm:$0xff]
  %v139 = vld [vmem:[%s0 + $0x3d0] sm:$0xff]
  %v140 = vld [vmem:[%s0 + $0x3d8] sm:$0xff]
  %v141 = vld [vmem:[%s0 + $0x3e0] sm:$0xff]
  %v142 = vld [vmem:[%s0 + $0x3e8] sm:$0xff]
  %v143 = vld [vmem:[%s0 + $0x3f0] sm:$0xff]
  %v144 = vld [vmem:[%s0 + $0x3f8] sm:$0xff]
  %v145 = vld [vmem:[%s0 + $0x400] sm:$0xff]
  %v146 = vld [vmem:[%s0 + $0x408] sm:$0xff]
  %v147 = vld [vmem:[%s0 + $0x410] sm:$0xff]
  %v148 = vld [vmem:[%s0 + $0x418] sm:$0xff]
  %v149 = vld [vmem:[%s0 + $0x420] sm:$0xff]
  %v150 = vld [vmem:[%s0 + $0x428] sm:$0xff]
  %v151 = vld [vmem:[%s0 + $0x430] sm:$0xff]
  %v152 = vld [vmem:[%s0 + $0x438] sm:$0xff]
  %v153 = vld [vmem:[%s0 + $0x440] sm:$0xff]
  %v154 = vld [vmem:[%s0 + $0x448] sm:$0xff]
  %v155 = vld [vmem:[%s0 + $0x450] sm:$0xff]
  %v156 = vld [vmem:[%s0 + $0x458] sm:$0xff]
  %v157 = vld [vmem:[%s0 + $0x460] sm:$0xff]
  %v158 = vld [vmem:[%s0 + $0x468] sm:$0xff]
  %v159 = vld [vmem:[%s0 + $0x470] sm:$0xff]
  %v160 = vld [vmem:[%s0 + $0x478] sm:$0xff]
  %v161 = vld [vmem:[%s0 + $0x480] sm:$0xff]
  %v162 = vld [vmem:[%s0 + $0x488] sm:$0xff]
  %v163 = vld [vmem:[%s0 + $0x490] sm:$0xff]
  %v164 = vld [vmem:[%s0 + $0x498] sm:$0xff]
  %v165 = vld [vmem:[%s0 + $0x4a0] sm:$0xff]
  %v166 = vld [vmem:[%s0 + $0x4a8] sm:$0xff]
  %v167 = vld [vmem:[%s0 + $0x4b0] sm:$0xff]
  %v168 = vld [vmem:[%s0 + $0x4b8] sm:$0xff]
  %v169 = vld [vmem:[%s0 + $0x4c0] sm:$0xff]
  %v170 = vld [vmem:[%s0 + $0x4c8] sm:$0xff]
  %v171 = vld [vmem:[%s0 + $0x4d0] sm:$0xff]
  %v172 = vld [vmem:[%s0 + $0x4d8] sm:$0xff]
  %v173 = vld [vmem:[%s0 + $0x4e0] sm:$0xff]
  %v174 = vld [vmem:[%s0 + $0x4e8] sm:$0xff]
  %v175 = vld [vmem:[%s0 + $0x4f0] sm:$0xff]
  %v176 = vld [vmem:[%s0 + $0x4f8] sm:$0xff]
  %v177 = vld [vmem:[%s0 + $0x500] sm:$0xff]
  %v178 = vld [vmem:[%s0 + $0x508] sm:$0xff]
  %v179 = vld [vmem:[%s0 + $0x510] sm:$0xff]
  %v180 = vld [vmem:[%s0 + $0x518] sm:$0xff]
  %v181 = vld [vmem:[%s0 + $0x520] sm:$0xff]
  %v182 = vld [vmem:[%s0 + $0x528] sm:$0xff]
  %v183 = vld [vmem:[%s0 + $0x530] sm:$0xff]
  %v184 = vld [vmem:[%s0 + $0x538] sm:$0xff]
  %v185 = vld [vmem:[%s0 + $0x540] sm:$0xff]
  %v186 = vld [vmem:[%s0 + $0x548] sm:$0xff]
  %v187 = vld [vmem:[%s0 + $0x550] sm:$0xff]
  %v188 = vld [vmem:[%s0 + $0x558] sm:$0xff]
  %v189 = vld [vmem:[%s0 + $0x560] sm:$0xff]
  %v190 = vld [vmem:[%s0 + $0x568] sm:$0xff]
  %v191 = vld [vmem:[%s0 + $0x570] sm:$0xff]
  %v192 = vld [vmem:[%s0 + $0x578] sm:$0xff]
  %v193 = vld [vmem:[%s0 + $0x580] sm:$0xff]
  %v194 = vld [vmem:[%s0 + $0x588] sm:$0xff]
  %v195 = vld [vmem:[%s0 + $0x590] sm:$0xff]
  %v196 = vld [vmem:[%s0 + $0x598] sm:$0xff]
  %v197 = vld [vmem:[%s0 + $0x5a0] sm:$0xff]
  %v198 = vld [vmem:[%s0 + $0x5a8] sm:$0xff]
  %v199 = vld [vmem:[%s0 + $0x5b0] sm:$0xff]
  %v200 = vld [vmem:[%s0 + $0x5b8] sm:$0xff]
  %v201 = vld [vmem:[%s0 + $0x5c0] sm:$0xff]
  %v202 = vld [vmem:[%s0 + $0x5c8] sm:$0xff]
  %v203 = vld [vmem:[%s0 + $0x5d0] sm:$0xff]
  %v204 = vld [vmem:[%s0 + $0x5d8] sm:$0xff]
  %v205 = vld [vmem:[%s0 + $0x5e0] sm:$0xff]
  %v206 = vld [vmem:[%s0 + $0x5e8] sm:$0xff]
  %v207 = vld [vmem:[%s0 + $0x5f0] sm:$0xff]
  %v208 = vld [vmem:[%s0 + $0x5f8] sm:$0xff]
  %v209 = vld [vmem:[%s0 + $0x600] sm:$0xff]
  %v210 = vld [vmem:[%s0 + $0x608] sm:$0xff]
  %v211 = vld [vmem:[%s0 + $0x610] sm:$0xff]
  %v212 = vld [vmem:[%s0 + $0x618] sm:$0xff]
  %v213 = vld [vmem:[%s0 + $0x620] sm:$0xff]
  %v214 = vld [vmem:[%s0 + $0x628] sm:$0xff]
  %v215 = vld [vmem:[%s0 + $0x630] sm:$0xff]
  %v216 = vld [vmem:[%s0 + $0x638] sm:$0xff]
  %v217 = vld [vmem:[%s0 + $0x640] sm:$0xff]
  %v218 = vld [vmem:[%s0 + $0x648] sm:$0xff]
  %v219 = vld [vmem:[%s0 + $0x650] sm:$0xff]
  %v220 = vld [vmem:[%s0 + $0x658] sm:$0xff]
  %v221 = vld [vmem:[%s0 + $0x660] sm:$0xff]
  %v222 = vld [vmem:[%s0 + $0x668] sm:$0xff]
  %v223 = vld [vmem:[%s0 + $0x670] sm:$0xff]
  %v224 = vld [vmem:[%s0 + $0x678] sm:$0xff]
  %v225 = vld [vmem:[%s0 + $0x680] sm:$0xff]
  %v226 = vld [vmem:[%s0 + $0x688] sm:$0xff]
  %v227 = vld [vmem:[%s0 + $0x690] sm:$0xff]
  %v228 = vld [vmem:[%s0 + $0x698] sm:$0xff]
  %v229 = vld [vmem:[%s0 + $0x6a0] sm:$0xff]
  %v230 = vld [vmem:[%s0 + $0x6a8] sm:$0xff]
  %v231 = vld [vmem:[%s0 + $0x6b0] sm:$0xff]
  %v232 = vld [vmem:[%s0 + $0x6b8] sm:$0xff]
  %v233 = vld [vmem:[%s0 + $0x6c0] sm:$0xff]
  %v234 = vld [vmem:[%s0 + $0x6c8] sm:$0xff]
  %v235 = vld [vmem:[%s0 + $0x6d0] sm:$0xff]
  %v236 = vld [vmem:[%s0 + $0x6d8] sm:$0xff]
  %v237 = vld [vmem:[%s0 + $0x6e0] sm:$0xff]
  %v238 = vld [vmem:[%s0 + $0x6e8] sm:$0xff]
  %v239 = vld [vmem:[%s0 + $0x6f0] sm:$0xff]
  %v240 = vld [vmem:[%s0 + $0x6f8] sm:$0xff]
  %v241 = vld [vmem:[%s0 + $0x700] sm:$0xff]
  %v242 = vld [vmem:[%s0 + $0x708] sm:$0xff]
  %v243 = vld [vmem:[%s0 + $0x710] sm:$0xff]
  %v244 = vld [vmem:[%s0 + $0x718] sm:$0xff]
  %v245 = vld [vmem:[%s0 + $0x720] sm:$0xff]
  %v246 = vld [vmem:[%s0 + $0x728] sm:$0xff]
  %v247 = vld [vmem:[%s0 + $0x730] sm:$0xff]
  %v248 = vld [vmem:[%s0 + $0x738] sm:$0xff]
  %v249 = vld [vmem:[%s0 + $0x740] sm:$0xff]
  %v250 = vld [vmem:[%s0 + $0x748] sm:$0xff]
  %v251 = vld [vmem:[%s0 + $0x750] sm:$0xff]
  %v252 = vld [vmem:[%s0 + $0x758] sm:$0xff]
  %v253 = vld [vmem:[%s0 + $0x760] sm:$0xff]
  %v254 = vld [vmem:[%s0 + $0x768] sm:$0xff]
  %v255 = vld [vmem:[%s0 + $0x770] sm:$0xff]
  %v256 = vld [vmem:[%s0 + $0x778] sm:$0xff]
  %v257 = vld [vmem:[%s0 + $0x780] sm:$0xff]
  %v258 = vld [vmem:[%s0 + $0x788] sm:$0xff]
  %v259 = vld [vmem:[%s0 + $0x790] sm:$0xff]
  %v260 = vld [vmem:[%s0 + $0x798] sm:$0xff]
  %v261 = vld [vmem:[%s0 + $0x7a0] sm:$0xff]
  %v262 = vld [vmem:[%s0 + $0x7a8] sm:$0xff]
  %v263 = vld [vmem:[%s0 + $0x7b0] sm:$0xff]
  %v264 = vld [vmem:[%s0 + $0x7b8] sm:$0xff]
  %v265 = vld [vmem:[%s0 + $0x7c0] sm:$0xff]
  %v266 = vld [vmem:[%s0 + $0x7c8] sm:$0xff]
  %v267 = vld [vmem:[%s0 + $0x7d0] sm:$0xff]
  %v268 = vld [vmem:[%s0 + $0x7d8] sm:$0xff]
  %v269 = vld [vmem:[%s0 + $0x7e0] sm:$0xff]
  %v270 = vld [vmem:[%s0 + $0x7e8] sm:$0xff]
  %v271 = vld [vmem:[%s0 + $0x7f0] sm:$0xff]
  %v272 = vld [vmem:[%s0 + $0x7f8] sm:$0xff]
  %v273 = vld [vmem:[%s0 + $0x800] sm:$0xff]
  %v274 = vld [vmem:[%s0 + $0x808] sm:$0xff]
  %v275 = vld [vmem:[%s0 + $0x810] sm:$0xff]
  %v276 = vld [vmem:[%s0 + $0x818] sm:$0xff]
  %v277 = vld [vmem:[%s0 + $0x820] sm:$0xff]
  %v278 = vld [vmem:[%s0 + $0x828] sm:$0xff]
  %v279 = vld [vmem:[%s0 + $0x830] sm:$0xff]
  %v280 = vld [vmem:[%s0 + $0x838] sm:$0xff]
  %v281 = vld [vmem:[%s0 + $0x840] sm:$0xff]
  %v282 = vld [vmem:[%s0 + $0x848] sm:$0xff]
  %v283 = vld [vmem:[%s0 + $0x850] sm:$0xff]
  %v284 = vld [vmem:[%s0 + $0x858] sm:$0xff]
  %v285 = vld [vmem:[%s0 + $0x860] sm:$0xff]
  %v286 = vld [vmem:[%s0 + $0x868] sm:$0xff]
  %v287 = vld [vmem:[%s0 + $0x870] sm:$0xff]
  %v288 = vld [vmem:[%s0 + $0x878] sm:$0xff]
  %v289 = vld [vmem:[%s0 + $0x880] sm:$0xff]
  %v290 = vld [vmem:[%s0 + $0x888] sm:$0xff]
  %v291 = vld [vmem:[%s0 + $0x890] sm:$0xff]
  %v292 = vld [vmem:[%s0 + $0x898] sm:$0xff]
  %v293 = vld [vmem:[%s0 + $0x8a0] sm:$0xff]
  %v294 = vld [vmem:[%s0 + $0x8a8] sm:$0xff]
  %v295 = vld [vmem:[%s0 + $0x8b0] sm:$0xff]
  %v296 = vld [vmem:[%s0 + $0x8b8] sm:$0xff]
  %v297 = vld [vmem:[%s0 + $0x8c0] sm:$0xff]
  %v298 = vld [vmem:[%s0 + $0x8c8] sm:$0xff]
  %v299 = vld [vmem:[%s0 + $0x8d0] sm:$0xff]
  %v300 = vld [vmem:[%s0 + $0x8d8] sm:$0xff]
  %v301 = vld [vmem:[%s0 + $0x8e0] sm:$0xff]
  %v302 = vld [vmem:[%s0 + $0x8e8] sm:$0xff]
  %v303 = vld [vmem:[%s0 + $0x8f0] sm:$0xff]
  %v304 = vld [vmem:[%s0 + $0x8f8] sm:$0xff]
  %v305 = vld [vmem:[%s0 + $0x900] sm:$0xff]
  %v306 = vld [vmem:[%s0 + $0x908] sm:$0xff]
  %v307 = vld [vmem:[%s0 + $0x910] sm:$0xff]
  %v308 = vld [vmem:[%s0 + $0x918] sm:$0xff]
  %v309 = vld [vmem:[%s0 + $0x920] sm:$0xff]
  %v310 = vld [vmem:[%s0 + $0x928] sm:$0xff]
  %v311 = vld [vmem:[%s0 + $0x930] sm:$0xff]
  %v312 = vld [vmem:[%s0 + $0x938] sm:$0xff]
  %v313 = vld [vmem:[%s0 + $0x940] sm:$0xff]
  %v314 = vld [vmem:[%s0 + $0x948] sm:$0xff]
  %v315 = vld [vmem:[%s0 + $0x950] sm:$0xff]
  %v316 = vld [vmem:[%s0 + $0x958] sm:$0xff]
  %v317 = vld [vmem:[%s0 + $0x960] sm:$0xff]
  %v318 = vld [vmem:[%s0 + $0x968] sm:$0xff]
  %v319 = vld [vmem:[%s0 + $0x970] sm:$0xff]
  %v320 = vld [vmem:[%s0 + $0x978] sm:$0xff]
  %v321 = vld [vmem:[%s0 + $0x980] sm:$0xff]
  %v322 = vld [vmem:[%s0 + $0x988] sm:$0xff]
  %v323 = vld [vmem:[%s0 + $0x990] sm:$0xff]
  %v324 = vld [vmem:[%s0 + $0x998] sm:$0xff]
  %v325 = vld [vmem:[%s0 + $0x9a0] sm:$0xff]
  %v326 = vld [vmem:[%s0 + $0x9a8] sm:$0xff]
  %v327 = vld [vmem:[%s0 + $0x9b0] sm:$0xff]
  %v328 = vld [vmem:[%s0 + $0x9b8] sm:$0xff]
  %v329 = vld [vmem:[%s0 + $0x9c0] sm:$0xff]
  %v330 = vld [vmem:[%s0 + $0x9c8] sm:$0xff]
  %v331 = vld [vmem:[%s0 + $0x9d0] sm:$0xff]
  %v332 = vld [vmem:[%s0 + $0x9d8] sm:$0xff]
  %v333 = vld [vmem:[%s0 + $0x9e0] sm:$0xff]
  %v334 = vld [vmem:[%s0 + $0x9e8] sm:$0xff]
  %v335 = vld [vmem:[%s0 + $0x9f0] sm:$0xff]
  %v336 = vld [vmem:[%s0 + $0x9f8] sm:$0xff]
  %v337 = vld [vmem:[%s0 + $0xa00] sm:$0xff]
  %v338 = vld [vmem:[%s0 + $0xa08] sm:$0xff]
  %v339 = vld [vmem:[%s0 + $0xa10] sm:$0xff]
  %v340 = vld [vmem:[%s0 + $0xa18] sm:$0xff]
  %v341 = vld [vmem:[%s0 + $0xa20] sm:$0xff]
  %v342 = vld [vmem:[%s0 + $0xa28] sm:$0xff]
  %v343 = vld [vmem:[%s0 + $0xa30] sm:$0xff]
  %v344 = vld [vmem:[%s0 + $0xa38] sm:$0xff]
  %v345 = vld [vmem:[%s0 + $0xa40] sm:$0xff]
  %v346 = vld [vmem:[%s0 + $0xa48] sm:$0xff]
  %v347 = vld [vmem:[%s0 + $0xa50] sm:$0xff]
  %v348 = vld [vmem:[%s0 + $0xa58] sm:$0xff]
  %v349 = vld [vmem:[%s0 + $0xa60] sm:$0xff]
  %v350 = vld [vmem:[%s0 + $0xa68] sm:$0xff]
  %v351 = vld [vmem:[%s0 + $0xa70] sm:$0xff]
  %v352 = vld [vmem:[%s0 + $0xa78] sm:$0xff]
  %v353 = vld [vmem:[%s0 + $0xa80] sm:$0xff]
  %v354 = vld [vmem:[%s0 + $0xa88] sm:$0xff]
  %v355 = vld [vmem:[%s0 + $0xa90] sm:$0xff]
  %v356 = vld [vmem:[%s0 + $0xa98] sm:$0xff]
  %v357 = vld [vmem:[%s0 + $0xaa0] sm:$0xff]
  %v358 = vld [vmem:[%s0 + $0xaa8] sm:$0xff]
  %v359 = vld [vmem:[%s0 + $0xab0] sm:$0xff]
  %v360 = vld [vmem:[%s0 + $0xab8] sm:$0xff]
  %v361 = vld [vmem:[%s0 + $0xac0] sm:$0xff]
  %v362 = vld [vmem:[%s0 + $0xac8] sm:$0xff]
  %v363 = vld [vmem:[%s0 + $0xad0] sm:$0xff]
  %v364 = vld [vmem:[%s0 + $0xad8] sm:$0xff]
  %v365 = vld [vmem:[%s0 + $0xae0] sm:$0xff]
  %v366 = vld [vmem:[%s0 + $0xae8] sm:$0xff]
  %v367 = vld [vmem:[%s0 + $0xaf0] sm:$0xff]
  %v368 = vld [vmem:[%s0 + $0xaf8] sm:$0xff]
  %v369 = vld [vmem:[%s0 + $0xb00] sm:$0xff]
  %v370 = vld [vmem:[%s0 + $0xb08] sm:$0xff]
  %v371 = vld [vmem:[%s0 + $0xb10] sm:$0xff]
  %v372 = vld [vmem:[%s0 + $0xb18] sm:$0xff]
  %v373 = vld [vmem:[%s0 + $0xb20] sm:$0xff]
  %v374 = vld [vmem:[%s0 + $0xb28] sm:$0xff]
  %v375 = vld [vmem:[%s0 + $0xb30] sm:$0xff]
  %v376 = vld [vmem:[%s0 + $0xb38] sm:$0xff]
  %v377 = vld [vmem:[%s0 + $0xb40] sm:$0xff]
  %v378 = vld [vmem:[%s0 + $0xb48] sm:$0xff]
  %v379 = vld [vmem:[%s0 + $0xb50] sm:$0xff]
  %v380 = vld [vmem:[%s0 + $0xb58] sm:$0xff]
  %v381 = vld [vmem:[%s0 + $0xb60] sm:$0xff]
  %v382 = vld [vmem:[%s0 + $0xb68] sm:$0xff]
  %v383 = vld [vmem:[%s0 + $0xb70] sm:$0xff]
  %v384 = vld [vmem:[%s0 + $0xb78] sm:$0xff]
  %v385 = vld [vmem:[%s0 + $0xb80] sm:$0xff]
  %v386 = vld [vmem:[%s0 + $0xb88] sm:$0xff]
  %v387 = vld [vmem:[%s0 + $0xb90] sm:$0xff]
  %v388 = vld [vmem:[%s0 + $0xb98] sm:$0xff]
  %v389 = vld [vmem:[%s0 + $0xba0] sm:$0xff]
  %v390 = vld [vmem:[%s0 + $0xba8] sm:$0xff]
  %v391 = vld [vmem:[%s0 + $0xbb0] sm:$0xff]
  %v392 = vld [vmem:[%s0 + $0xbb8] sm:$0xff]
  %vm393 = vcmask 556032
  %v394 = vsel %vm393, %v18, 0.0
  %v395 = vadd.f32 %v17, %v394
  %396 = vadd.xlane.f32.xlu0 %v395
  %v397 = vpop.xlane.xlu0 %396
  %v398 = vsel %vm393, %v20, 0.0
  %v399 = vadd.f32 %v19, %v398
  %400 = vadd.xlane.f32.xlu0 %v399
  %v401 = vpop.xlane.xlu0 %400
  %v402 = vsel %vm393, %v22, 0.0
  %v403 = vadd.f32 %v21, %v402
  %404 = vadd.xlane.f32.xlu0 %v403
  %v405 = vpop.xlane.xlu0 %404
  %v406 = vsel %vm393, %v24, 0.0
  %v407 = vadd.f32 %v23, %v406
  %408 = vadd.xlane.f32.xlu0 %v407
  %v409 = vpop.xlane.xlu0 %408
  %v410 = vsel %vm393, %v26, 0.0
  %v411 = vadd.f32 %v25, %v410
  %412 = vadd.xlane.f32.xlu0 %v411
  %v413 = vpop.xlane.xlu0 %412
  %v414 = vsel %vm393, %v28, 0.0
  %v415 = vadd.f32 %v27, %v414
  %416 = vadd.xlane.f32.xlu0 %v415
  %v417 = vpop.xlane.xlu0 %416
  %v418 = vsel %vm393, %v30, 0.0
  %v419 = vadd.f32 %v29, %v418
  %420 = vadd.xlane.f32.xlu0 %v419
  %v421 = vpop.xlane.xlu0 %420
  %v422 = vsel %vm393, %v32, 0.0
  %v423 = vadd.f32 %v31, %v422
  %424 = vadd.xlane.f32.xlu0 %v423
  %v425 = vpop.xlane.xlu0 %424
  %v426 = vsel %vm393, %v34, 0.0
  %v427 = vadd.f32 %v33, %v426
  %428 = vadd.xlane.f32.xlu0 %v427
  %v429 = vpop.xlane.xlu0 %428
  %v430 = vsel %vm393, %v36, 0.0
  %v431 = vadd.f32 %v35, %v430
  %432 = vadd.xlane.f32.xlu0 %v431
  %v433 = vpop.xlane.xlu0 %432
  %v434 = vsel %vm393, %v38, 0.0
  %v435 = vadd.f32 %v37, %v434
  %436 = vadd.xlane.f32.xlu0 %v435
  %v437 = vpop.xlane.xlu0 %436
  %v438 = vsel %vm393, %v40, 0.0
  %v439 = vadd.f32 %v39, %v438
  %440 = vadd.xlane.f32.xlu0 %v439
  %v441 = vpop.xlane.xlu0 %440
  %v442 = vsel %vm393, %v42, 0.0
  %v443 = vadd.f32 %v41, %v442
  %444 = vadd.xlane.f32.xlu0 %v443
  %v445 = vpop.xlane.xlu0 %444
  %v446 = vsel %vm393, %v44, 0.0
  %v447 = vadd.f32 %v43, %v446
  %448 = vadd.xlane.f32.xlu0 %v447
  %v449 = vpop.xlane.xlu0 %448
  %v450 = vsel %vm393, %v46, 0.0
  %v451 = vadd.f32 %v45, %v450
  %452 = vadd.xlane.f32.xlu0 %v451
  %v453 = vpop.xlane.xlu0 %452
  %v454 = vsel %vm393, %v48, 0.0
  %v455 = vadd.f32 %v47, %v454
  %456 = vadd.xlane.f32.xlu0 %v455
  %v457 = vpop.xlane.xlu0 %456
  %v458 = vsel %vm393, %v50, 0.0
  %v459 = vadd.f32 %v49, %v458
  %460 = vadd.xlane.f32.xlu0 %v459
  %v461 = vpop.xlane.xlu0 %460
  %v462 = vsel %vm393, %v52, 0.0
  %v463 = vadd.f32 %v51, %v462
  %464 = vadd.xlane.f32.xlu0 %v463
  %v465 = vpop.xlane.xlu0 %464
  %v466 = vsel %vm393, %v54, 0.0
  %v467 = vadd.f32 %v53, %v466
  %468 = vadd.xlane.f32.xlu0 %v467
  %v469 = vpop.xlane.xlu0 %468
  %v470 = vsel %vm393, %v56, 0.0
  %v471 = vadd.f32 %v55, %v470
  %472 = vadd.xlane.f32.xlu0 %v471
  %v473 = vpop.xlane.xlu0 %472
  %v474 = vsel %vm393, %v58, 0.0
  %v475 = vadd.f32 %v57, %v474
  %476 = vadd.xlane.f32.xlu0 %v475
  %v477 = vpop.xlane.xlu0 %476
  %v478 = vsel %vm393, %v60, 0.0
  %v479 = vadd.f32 %v59, %v478
  %480 = vadd.xlane.f32.xlu0 %v479
  %v481 = vpop.xlane.xlu0 %480
  %v482 = vsel %vm393, %v62, 0.0
  %v483 = vadd.f32 %v61, %v482
  %484 = vadd.xlane.f32.xlu0 %v483
  %v485 = vpop.xlane.xlu0 %484
  %v486 = vsel %vm393, %v64, 0.0
  %v487 = vadd.f32 %v63, %v486
  %488 = vadd.xlane.f32.xlu0 %v487
  %v489 = vpop.xlane.xlu0 %488
  %v490 = vsel %vm393, %v66, 0.0
  %v491 = vadd.f32 %v65, %v490
  %492 = vadd.xlane.f32.xlu0 %v491
  %v493 = vpop.xlane.xlu0 %492
  %v494 = vsel %vm393, %v68, 0.0
  %v495 = vadd.f32 %v67, %v494
  %496 = vadd.xlane.f32.xlu0 %v495
  %v497 = vpop.xlane.xlu0 %496
  %v498 = vsel %vm393, %v70, 0.0
  %v499 = vadd.f32 %v69, %v498
  %500 = vadd.xlane.f32.xlu0 %v499
  %v501 = vpop.xlane.xlu0 %500
  %v502 = vsel %vm393, %v72, 0.0
  %v503 = vadd.f32 %v71, %v502
  %504 = vadd.xlane.f32.xlu0 %v503
  %v505 = vpop.xlane.xlu0 %504
  %v506 = vsel %vm393, %v74, 0.0
  %v507 = vadd.f32 %v73, %v506
  %508 = vadd.xlane.f32.xlu0 %v507
  %v509 = vpop.xlane.xlu0 %508
  %v510 = vsel %vm393, %v76, 0.0
  %v511 = vadd.f32 %v75, %v510
  %512 = vadd.xlane.f32.xlu0 %v511
  %v513 = vpop.xlane.xlu0 %512
  %v514 = vsel %vm393, %v78, 0.0
  %v515 = vadd.f32 %v77, %v514
  %516 = vadd.xlane.f32.xlu0 %v515
  %v517 = vpop.xlane.xlu0 %516
  %v518 = vsel %vm393, %v80, 0.0
  %v519 = vadd.f32 %v79, %v518
  %520 = vadd.xlane.f32.xlu0 %v519
  %v521 = vpop.xlane.xlu0 %520
  %v522 = vsel %vm393, %v82, 0.0
  %v523 = vadd.f32 %v81, %v522
  %524 = vadd.xlane.f32.xlu0 %v523
  %v525 = vpop.xlane.xlu0 %524
  %v526 = vsel %vm393, %v84, 0.0
  %v527 = vadd.f32 %v83, %v526
  %528 = vadd.xlane.f32.xlu0 %v527
  %v529 = vpop.xlane.xlu0 %528
  %v530 = vsel %vm393, %v86, 0.0
  %v531 = vadd.f32 %v85, %v530
  %532 = vadd.xlane.f32.xlu0 %v531
  %v533 = vpop.xlane.xlu0 %532
  %v534 = vsel %vm393, %v88, 0.0
  %v535 = vadd.f32 %v87, %v534
  %536 = vadd.xlane.f32.xlu0 %v535
  %v537 = vpop.xlane.xlu0 %536
  %v538 = vsel %vm393, %v90, 0.0
  %v539 = vadd.f32 %v89, %v538
  %540 = vadd.xlane.f32.xlu0 %v539
  %v541 = vpop.xlane.xlu0 %540
  %v542 = vsel %vm393, %v92, 0.0
  %v543 = vadd.f32 %v91, %v542
  %544 = vadd.xlane.f32.xlu0 %v543
  %v545 = vpop.xlane.xlu0 %544
  %v546 = vsel %vm393, %v94, 0.0
  %v547 = vadd.f32 %v93, %v546
  %548 = vadd.xlane.f32.xlu0 %v547
  %v549 = vpop.xlane.xlu0 %548
  %v550 = vsel %vm393, %v96, 0.0
  %v551 = vadd.f32 %v95, %v550
  %552 = vadd.xlane.f32.xlu0 %v551
  %v553 = vpop.xlane.xlu0 %552
  %v554 = vsel %vm393, %v98, 0.0
  %v555 = vadd.f32 %v97, %v554
  %556 = vadd.xlane.f32.xlu0 %v555
  %v557 = vpop.xlane.xlu0 %556
  %v558 = vsel %vm393, %v100, 0.0
  %v559 = vadd.f32 %v99, %v558
  %560 = vadd.xlane.f32.xlu0 %v559
  %v561 = vpop.xlane.xlu0 %560
  %v562 = vsel %vm393, %v102, 0.0
  %v563 = vadd.f32 %v101, %v562
  %564 = vadd.xlane.f32.xlu0 %v563
  %v565 = vpop.xlane.xlu0 %564
  %v566 = vsel %vm393, %v104, 0.0
  %v567 = vadd.f32 %v103, %v566
  %568 = vadd.xlane.f32.xlu0 %v567
  %v569 = vpop.xlane.xlu0 %568
  %v570 = vsel %vm393, %v106, 0.0
  %v571 = vadd.f32 %v105, %v570
  %572 = vadd.xlane.f32.xlu0 %v571
  %v573 = vpop.xlane.xlu0 %572
  %v574 = vsel %vm393, %v108, 0.0
  %v575 = vadd.f32 %v107, %v574
  %576 = vadd.xlane.f32.xlu0 %v575
  %v577 = vpop.xlane.xlu0 %576
  %v578 = vsel %vm393, %v110, 0.0
  %v579 = vadd.f32 %v109, %v578
  %580 = vadd.xlane.f32.xlu0 %v579
  %v581 = vpop.xlane.xlu0 %580
  %v582 = vsel %vm393, %v112, 0.0
  %v583 = vadd.f32 %v111, %v582
  %584 = vadd.xlane.f32.xlu0 %v583
  %v585 = vpop.xlane.xlu0 %584
  %v586 = vsel %vm393, %v114, 0.0
  %v587 = vadd.f32 %v113, %v586
  %588 = vadd.xlane.f32.xlu0 %v587
  %v589 = vpop.xlane.xlu0 %588
  %v590 = vsel %vm393, %v116, 0.0
  %v591 = vadd.f32 %v115, %v590
  %592 = vadd.xlane.f32.xlu0 %v591
  %v593 = vpop.xlane.xlu0 %592
  %v594 = vsel %vm393, %v118, 0.0
  %v595 = vadd.f32 %v117, %v594
  %596 = vadd.xlane.f32.xlu0 %v595
  %v597 = vpop.xlane.xlu0 %596
  %v598 = vsel %vm393, %v120, 0.0
  %v599 = vadd.f32 %v119, %v598
  %600 = vadd.xlane.f32.xlu0 %v599
  %v601 = vpop.xlane.xlu0 %600
  %v602 = vsel %vm393, %v122, 0.0
  %v603 = vadd.f32 %v121, %v602
  %604 = vadd.xlane.f32.xlu0 %v603
  %v605 = vpop.xlane.xlu0 %604
  %v606 = vsel %vm393, %v124, 0.0
  %v607 = vadd.f32 %v123, %v606
  %608 = vadd.xlane.f32.xlu0 %v607
  %v609 = vpop.xlane.xlu0 %608
  %v610 = vsel %vm393, %v126, 0.0
  %v611 = vadd.f32 %v125, %v610
  %612 = vadd.xlane.f32.xlu0 %v611
  %v613 = vpop.xlane.xlu0 %612
  %v614 = vsel %vm393, %v128, 0.0
  %v615 = vadd.f32 %v127, %v614
  %616 = vadd.xlane.f32.xlu0 %v615
  %v617 = vpop.xlane.xlu0 %616
  %v618 = vsel %vm393, %v130, 0.0
  %v619 = vadd.f32 %v129, %v618
  %620 = vadd.xlane.f32.xlu0 %v619
  %v621 = vpop.xlane.xlu0 %620
  %v622 = vsel %vm393, %v132, 0.0
  %v623 = vadd.f32 %v131, %v622
  %624 = vadd.xlane.f32.xlu0 %v623
  %v625 = vpop.xlane.xlu0 %624
  %v626 = vsel %vm393, %v134, 0.0
  %v627 = vadd.f32 %v133, %v626
  %628 = vadd.xlane.f32.xlu0 %v627
  %v629 = vpop.xlane.xlu0 %628
  %v630 = vsel %vm393, %v136, 0.0
  %v631 = vadd.f32 %v135, %v630
  %632 = vadd.xlane.f32.xlu0 %v631
  %v633 = vpop.xlane.xlu0 %632
  %v634 = vsel %vm393, %v138, 0.0
  %v635 = vadd.f32 %v137, %v634
  %636 = vadd.xlane.f32.xlu0 %v635
  %v637 = vpop.xlane.xlu0 %636
  %v638 = vsel %vm393, %v140, 0.0
  %v639 = vadd.f32 %v139, %v638
  %640 = vadd.xlane.f32.xlu0 %v639
  %v641 = vpop.xlane.xlu0 %640
  %v642 = vsel %vm393, %v142, 0.0
  %v643 = vadd.f32 %v141, %v642
  %644 = vadd.xlane.f32.xlu0 %v643
  %v645 = vpop.xlane.xlu0 %644
  %v646 = vsel %vm393, %v144, 0.0
  %v647 = vadd.f32 %v143, %v646
  %648 = vadd.xlane.f32.xlu0 %v647
  %v649 = vpop.xlane.xlu0 %648
  %v650 = vsel %vm393, %v146, 0.0
  %v651 = vadd.f32 %v145, %v650
  %652 = vadd.xlane.f32.xlu0 %v651
  %v653 = vpop.xlane.xlu0 %652
  %v654 = vsel %vm393, %v148, 0.0
  %v655 = vadd.f32 %v147, %v654
  %656 = vadd.xlane.f32.xlu0 %v655
  %v657 = vpop.xlane.xlu0 %656
  %v658 = vsel %vm393, %v150, 0.0
  %v659 = vadd.f32 %v149, %v658
  %660 = vadd.xlane.f32.xlu0 %v659
  %v661 = vpop.xlane.xlu0 %660
  %v662 = vsel %vm393, %v152, 0.0
  %v663 = vadd.f32 %v151, %v662
  %664 = vadd.xlane.f32.xlu0 %v663
  %v665 = vpop.xlane.xlu0 %664
  %v666 = vsel %vm393, %v154, 0.0
  %v667 = vadd.f32 %v153, %v666
  %668 = vadd.xlane.f32.xlu0 %v667
  %v669 = vpop.xlane.xlu0 %668
  %v670 = vsel %vm393, %v156, 0.0
  %v671 = vadd.f32 %v155, %v670
  %672 = vadd.xlane.f32.xlu0 %v671
  %v673 = vpop.xlane.xlu0 %672
  %v674 = vsel %vm393, %v158, 0.0
  %v675 = vadd.f32 %v157, %v674
  %676 = vadd.xlane.f32.xlu0 %v675
  %v677 = vpop.xlane.xlu0 %676
  %v678 = vsel %vm393, %v160, 0.0
  %v679 = vadd.f32 %v159, %v678
  %680 = vadd.xlane.f32.xlu0 %v679
  %v681 = vpop.xlane.xlu0 %680
  %v682 = vsel %vm393, %v162, 0.0
  %v683 = vadd.f32 %v161, %v682
  %684 = vadd.xlane.f32.xlu0 %v683
  %v685 = vpop.xlane.xlu0 %684
  %v686 = vsel %vm393, %v164, 0.0
  %v687 = vadd.f32 %v163, %v686
  %688 = vadd.xlane.f32.xlu0 %v687
  %v689 = vpop.xlane.xlu0 %688
  %v690 = vsel %vm393, %v166, 0.0
  %v691 = vadd.f32 %v165, %v690
  %692 = vadd.xlane.f32.xlu0 %v691
  %v693 = vpop.xlane.xlu0 %692
  %v694 = vsel %vm393, %v168, 0.0
  %v695 = vadd.f32 %v167, %v694
  %696 = vadd.xlane.f32.xlu0 %v695
  %v697 = vpop.xlane.xlu0 %696
  %v698 = vsel %vm393, %v170, 0.0
  %v699 = vadd.f32 %v169, %v698
  %700 = vadd.xlane.f32.xlu0 %v699
  %v701 = vpop.xlane.xlu0 %700
  %v702 = vsel %vm393, %v172, 0.0
  %v703 = vadd.f32 %v171, %v702
  %704 = vadd.xlane.f32.xlu0 %v703
  %v705 = vpop.xlane.xlu0 %704
  %v706 = vsel %vm393, %v174, 0.0
  %v707 = vadd.f32 %v173, %v706
  %708 = vadd.xlane.f32.xlu0 %v707
  %v709 = vpop.xlane.xlu0 %708
  %v710 = vsel %vm393, %v176, 0.0
  %v711 = vadd.f32 %v175, %v710
  %712 = vadd.xlane.f32.xlu0 %v711
  %v713 = vpop.xlane.xlu0 %712
  %v714 = vsel %vm393, %v178, 0.0
  %v715 = vadd.f32 %v177, %v714
  %716 = vadd.xlane.f32.xlu0 %v715
  %v717 = vpop.xlane.xlu0 %716
  %v718 = vsel %vm393, %v180, 0.0
  %v719 = vadd.f32 %v179, %v718
  %720 = vadd.xlane.f32.xlu0 %v719
  %v721 = vpop.xlane.xlu0 %720
  %v722 = vsel %vm393, %v182, 0.0
  %v723 = vadd.f32 %v181, %v722
  %724 = vadd.xlane.f32.xlu0 %v723
  %v725 = vpop.xlane.xlu0 %724
  %v726 = vsel %vm393, %v184, 0.0
  %v727 = vadd.f32 %v183, %v726
  %728 = vadd.xlane.f32.xlu0 %v727
  %v729 = vpop.xlane.xlu0 %728
  %v730 = vsel %vm393, %v186, 0.0
  %v731 = vadd.f32 %v185, %v730
  %732 = vadd.xlane.f32.xlu0 %v731
  %v733 = vpop.xlane.xlu0 %732
  %v734 = vsel %vm393, %v188, 0.0
  %v735 = vadd.f32 %v187, %v734
  %736 = vadd.xlane.f32.xlu0 %v735
  %v737 = vpop.xlane.xlu0 %736
  %v738 = vsel %vm393, %v190, 0.0
  %v739 = vadd.f32 %v189, %v738
  %740 = vadd.xlane.f32.xlu0 %v739
  %v741 = vpop.xlane.xlu0 %740
  %v742 = vsel %vm393, %v192, 0.0
  %v743 = vadd.f32 %v191, %v742
  %744 = vadd.xlane.f32.xlu0 %v743
  %v745 = vpop.xlane.xlu0 %744
  %v746 = vsel %vm393, %v194, 0.0
  %v747 = vadd.f32 %v193, %v746
  %748 = vadd.xlane.f32.xlu0 %v747
  %v749 = vpop.xlane.xlu0 %748
  %v750 = vsel %vm393, %v196, 0.0
  %v751 = vadd.f32 %v195, %v750
  %752 = vadd.xlane.f32.xlu0 %v751
  %v753 = vpop.xlane.xlu0 %752
  %v754 = vsel %vm393, %v198, 0.0
  %v755 = vadd.f32 %v197, %v754
  %756 = vadd.xlane.f32.xlu0 %v755
  %v757 = vpop.xlane.xlu0 %756
  %v758 = vsel %vm393, %v200, 0.0
  %v759 = vadd.f32 %v199, %v758
  %760 = vadd.xlane.f32.xlu0 %v759
  %v761 = vpop.xlane.xlu0 %760
  %v762 = vsel %vm393, %v202, 0.0
  %v763 = vadd.f32 %v201, %v762
  %764 = vadd.xlane.f32.xlu0 %v763
  %v765 = vpop.xlane.xlu0 %764
  %v766 = vsel %vm393, %v204, 0.0
  %v767 = vadd.f32 %v203, %v766
  %768 = vadd.xlane.f32.xlu0 %v767
  %v769 = vpop.xlane.xlu0 %768
  %v770 = vsel %vm393, %v206, 0.0
  %v771 = vadd.f32 %v205, %v770
  %772 = vadd.xlane.f32.xlu0 %v771
  %v773 = vpop.xlane.xlu0 %772
  %v774 = vsel %vm393, %v208, 0.0
  %v775 = vadd.f32 %v207, %v774
  %776 = vadd.xlane.f32.xlu0 %v775
  %v777 = vpop.xlane.xlu0 %776
  %v778 = vsel %vm393, %v210, 0.0
  %v779 = vadd.f32 %v209, %v778
  %780 = vadd.xlane.f32.xlu0 %v779
  %v781 = vpop.xlane.xlu0 %780
  %v782 = vsel %vm393, %v212, 0.0
  %v783 = vadd.f32 %v211, %v782
  %784 = vadd.xlane.f32.xlu0 %v783
  %v785 = vpop.xlane.xlu0 %784
  %v786 = vsel %vm393, %v214, 0.0
  %v787 = vadd.f32 %v213, %v786
  %788 = vadd.xlane.f32.xlu0 %v787
  %v789 = vpop.xlane.xlu0 %788
  %v790 = vsel %vm393, %v216, 0.0
  %v791 = vadd.f32 %v215, %v790
  %792 = vadd.xlane.f32.xlu0 %v791
  %v793 = vpop.xlane.xlu0 %792
  %v794 = vsel %vm393, %v218, 0.0
  %v795 = vadd.f32 %v217, %v794
  %796 = vadd.xlane.f32.xlu0 %v795
  %v797 = vpop.xlane.xlu0 %796
  %v798 = vsel %vm393, %v220, 0.0
  %v799 = vadd.f32 %v219, %v798
  %800 = vadd.xlane.f32.xlu0 %v799
  %v801 = vpop.xlane.xlu0 %800
  %v802 = vsel %vm393, %v222, 0.0
  %v803 = vadd.f32 %v221, %v802
  %804 = vadd.xlane.f32.xlu0 %v803
  %v805 = vpop.xlane.xlu0 %804
  %v806 = vsel %vm393, %v224, 0.0
  %v807 = vadd.f32 %v223, %v806
  %808 = vadd.xlane.f32.xlu0 %v807
  %v809 = vpop.xlane.xlu0 %808
  %v810 = vsel %vm393, %v226, 0.0
  %v811 = vadd.f32 %v225, %v810
  %812 = vadd.xlane.f32.xlu0 %v811
  %v813 = vpop.xlane.xlu0 %812
  %v814 = vsel %vm393, %v228, 0.0
  %v815 = vadd.f32 %v227, %v814
  %816 = vadd.xlane.f32.xlu0 %v815
  %v817 = vpop.xlane.xlu0 %816
  %v818 = vsel %vm393, %v230, 0.0
  %v819 = vadd.f32 %v229, %v818
  %820 = vadd.xlane.f32.xlu0 %v819
  %v821 = vpop.xlane.xlu0 %820
  %v822 = vsel %vm393, %v232, 0.0
  %v823 = vadd.f32 %v231, %v822
  %824 = vadd.xlane.f32.xlu0 %v823
  %v825 = vpop.xlane.xlu0 %824
  %v826 = vsel %vm393, %v234, 0.0
  %v827 = vadd.f32 %v233, %v826
  %828 = vadd.xlane.f32.xlu0 %v827
  %v829 = vpop.xlane.xlu0 %828
  %v830 = vsel %vm393, %v236, 0.0
  %v831 = vadd.f32 %v235, %v830
  %832 = vadd.xlane.f32.xlu0 %v831
  %v833 = vpop.xlane.xlu0 %832
  %v834 = vsel %vm393, %v238, 0.0
  %v835 = vadd.f32 %v237, %v834
  %836 = vadd.xlane.f32.xlu0 %v835
  %v837 = vpop.xlane.xlu0 %836
  %v838 = vsel %vm393, %v240, 0.0
  %v839 = vadd.f32 %v239, %v838
  %840 = vadd.xlane.f32.xlu0 %v839
  %v841 = vpop.xlane.xlu0 %840
  %v842 = vsel %vm393, %v242, 0.0
  %v843 = vadd.f32 %v241, %v842
  %844 = vadd.xlane.f32.xlu0 %v843
  %v845 = vpop.xlane.xlu0 %844
  %v846 = vsel %vm393, %v244, 0.0
  %v847 = vadd.f32 %v243, %v846
  %848 = vadd.xlane.f32.xlu0 %v847
  %v849 = vpop.xlane.xlu0 %848
  %v850 = vsel %vm393, %v246, 0.0
  %v851 = vadd.f32 %v245, %v850
  %852 = vadd.xlane.f32.xlu0 %v851
  %v853 = vpop.xlane.xlu0 %852
  %v854 = vsel %vm393, %v248, 0.0
  %v855 = vadd.f32 %v247, %v854
  %856 = vadd.xlane.f32.xlu0 %v855
  %v857 = vpop.xlane.xlu0 %856
  %v858 = vsel %vm393, %v250, 0.0
  %v859 = vadd.f32 %v249, %v858
  %860 = vadd.xlane.f32.xlu0 %v859
  %v861 = vpop.xlane.xlu0 %860
  %v862 = vsel %vm393, %v252, 0.0
  %v863 = vadd.f32 %v251, %v862
  %864 = vadd.xlane.f32.xlu0 %v863
  %v865 = vpop.xlane.xlu0 %864
  %v866 = vsel %vm393, %v254, 0.0
  %v867 = vadd.f32 %v253, %v866
  %868 = vadd.xlane.f32.xlu0 %v867
  %v869 = vpop.xlane.xlu0 %868
  %v870 = vsel %vm393, %v256, 0.0
  %v871 = vadd.f32 %v255, %v870
  %872 = vadd.xlane.f32.xlu0 %v871
  %v873 = vpop.xlane.xlu0 %872
  %v874 = vsel %vm393, %v258, 0.0
  %v875 = vadd.f32 %v257, %v874
  %876 = vadd.xlane.f32.xlu0 %v875
  %v877 = vpop.xlane.xlu0 %876
  %v878 = vsel %vm393, %v260, 0.0
  %v879 = vadd.f32 %v259, %v878
  %880 = vadd.xlane.f32.xlu0 %v879
  %v881 = vpop.xlane.xlu0 %880
  %v882 = vsel %vm393, %v262, 0.0
  %v883 = vadd.f32 %v261, %v882
  %884 = vadd.xlane.f32.xlu0 %v883
  %v885 = vpop.xlane.xlu0 %884
  %v886 = vsel %vm393, %v264, 0.0
  %v887 = vadd.f32 %v263, %v886
  %888 = vadd.xlane.f32.xlu0 %v887
  %v889 = vpop.xlane.xlu0 %888
  %v890 = vsel %vm393, %v266, 0.0
  %v891 = vadd.f32 %v265, %v890
  %892 = vadd.xlane.f32.xlu0 %v891
  %v893 = vpop.xlane.xlu0 %892
  %v894 = vsel %vm393, %v268, 0.0
  %v895 = vadd.f32 %v267, %v894
  %896 = vadd.xlane.f32.xlu0 %v895
  %v897 = vpop.xlane.xlu0 %896
  %v898 = vsel %vm393, %v270, 0.0
  %v899 = vadd.f32 %v269, %v898
  %900 = vadd.xlane.f32.xlu0 %v899
  %v901 = vpop.xlane.xlu0 %900
  %v902 = vsel %vm393, %v272, 0.0
  %v903 = vadd.f32 %v271, %v902
  %904 = vadd.xlane.f32.xlu0 %v903
  %v905 = vpop.xlane.xlu0 %904
  %v906 = vsel %vm393, %v274, 0.0
  %v907 = vadd.f32 %v273, %v906
  %908 = vadd.xlane.f32.xlu0 %v907
  %v909 = vpop.xlane.xlu0 %908
  %v910 = vsel %vm393, %v276, 0.0
  %v911 = vadd.f32 %v275, %v910
  %912 = vadd.xlane.f32.xlu0 %v911
  %v913 = vpop.xlane.xlu0 %912
  %v914 = vsel %vm393, %v278, 0.0
  %v915 = vadd.f32 %v277, %v914
  %916 = vadd.xlane.f32.xlu0 %v915
  %v917 = vpop.xlane.xlu0 %916
  %v918 = vsel %vm393, %v280, 0.0
  %v919 = vadd.f32 %v279, %v918
  %920 = vadd.xlane.f32.xlu0 %v919
  %v921 = vpop.xlane.xlu0 %920
  %v922 = vsel %vm393, %v282, 0.0
  %v923 = vadd.f32 %v281, %v922
  %924 = vadd.xlane.f32.xlu0 %v923
  %v925 = vpop.xlane.xlu0 %924
  %v926 = vsel %vm393, %v284, 0.0
  %v927 = vadd.f32 %v283, %v926
  %928 = vadd.xlane.f32.xlu0 %v927
  %v929 = vpop.xlane.xlu0 %928
  %v930 = vsel %vm393, %v286, 0.0
  %v931 = vadd.f32 %v285, %v930
  %932 = vadd.xlane.f32.xlu0 %v931
  %v933 = vpop.xlane.xlu0 %932
  %v934 = vsel %vm393, %v288, 0.0
  %v935 = vadd.f32 %v287, %v934
  %936 = vadd.xlane.f32.xlu0 %v935
  %v937 = vpop.xlane.xlu0 %936
  %v938 = vsel %vm393, %v290, 0.0
  %v939 = vadd.f32 %v289, %v938
  %940 = vadd.xlane.f32.xlu0 %v939
  %v941 = vpop.xlane.xlu0 %940
  %v942 = vsel %vm393, %v292, 0.0
  %v943 = vadd.f32 %v291, %v942
  %944 = vadd.xlane.f32.xlu0 %v943
  %v945 = vpop.xlane.xlu0 %944
  %v946 = vsel %vm393, %v294, 0.0
  %v947 = vadd.f32 %v293, %v946
  %948 = vadd.xlane.f32.xlu0 %v947
  %v949 = vpop.xlane.xlu0 %948
  %v950 = vsel %vm393, %v296, 0.0
  %v951 = vadd.f32 %v295, %v950
  %952 = vadd.xlane.f32.xlu0 %v951
  %v953 = vpop.xlane.xlu0 %952
  %v954 = vsel %vm393, %v298, 0.0
  %v955 = vadd.f32 %v297, %v954
  %956 = vadd.xlane.f32.xlu0 %v955
  %v957 = vpop.xlane.xlu0 %956
  %v958 = vsel %vm393, %v300, 0.0
  %v959 = vadd.f32 %v299, %v958
  %960 = vadd.xlane.f32.xlu0 %v959
  %v961 = vpop.xlane.xlu0 %960
  %v962 = vsel %vm393, %v302, 0.0
  %v963 = vadd.f32 %v301, %v962
  %964 = vadd.xlane.f32.xlu0 %v963
  %v965 = vpop.xlane.xlu0 %964
  %v966 = vsel %vm393, %v304, 0.0
  %v967 = vadd.f32 %v303, %v966
  %968 = vadd.xlane.f32.xlu0 %v967
  %v969 = vpop.xlane.xlu0 %968
  %v970 = vsel %vm393, %v306, 0.0
  %v971 = vadd.f32 %v305, %v970
  %972 = vadd.xlane.f32.xlu0 %v971
  %v973 = vpop.xlane.xlu0 %972
  %v974 = vsel %vm393, %v308, 0.0
  %v975 = vadd.f32 %v307, %v974
  %976 = vadd.xlane.f32.xlu0 %v975
  %v977 = vpop.xlane.xlu0 %976
  %v978 = vsel %vm393, %v310, 0.0
  %v979 = vadd.f32 %v309, %v978
  %980 = vadd.xlane.f32.xlu0 %v979
  %v981 = vpop.xlane.xlu0 %980
  %v982 = vsel %vm393, %v312, 0.0
  %v983 = vadd.f32 %v311, %v982
  %984 = vadd.xlane.f32.xlu0 %v983
  %v985 = vpop.xlane.xlu0 %984
  %v986 = vsel %vm393, %v314, 0.0
  %v987 = vadd.f32 %v313, %v986
  %988 = vadd.xlane.f32.xlu0 %v987
  %v989 = vpop.xlane.xlu0 %988
  %v990 = vsel %vm393, %v316, 0.0
  %v991 = vadd.f32 %v315, %v990
  %992 = vadd.xlane.f32.xlu0 %v991
  %v993 = vpop.xlane.xlu0 %992
  %v994 = vsel %vm393, %v318, 0.0
  %v995 = vadd.f32 %v317, %v994
  %996 = vadd.xlane.f32.xlu0 %v995
  %v997 = vpop.xlane.xlu0 %996
  %v998 = vsel %vm393, %v320, 0.0
  %v999 = vadd.f32 %v319, %v998
  %1000 = vadd.xlane.f32.xlu0 %v999
  %v1001 = vpop.xlane.xlu0 %1000
  %v1002 = vsel %vm393, %v322, 0.0
  %v1003 = vadd.f32 %v321, %v1002
  %1004 = vadd.xlane.f32.xlu0 %v1003
  %v1005 = vpop.xlane.xlu0 %1004
  %v1006 = vsel %vm393, %v324, 0.0
  %v1007 = vadd.f32 %v323, %v1006
  %1008 = vadd.xlane.f32.xlu0 %v1007
  %v1009 = vpop.xlane.xlu0 %1008
  %v1010 = vsel %vm393, %v326, 0.0
  %v1011 = vadd.f32 %v325, %v1010
  %1012 = vadd.xlane.f32.xlu0 %v1011
  %v1013 = vpop.xlane.xlu0 %1012
  %v1014 = vsel %vm393, %v328, 0.0
  %v1015 = vadd.f32 %v327, %v1014
  %1016 = vadd.xlane.f32.xlu0 %v1015
  %v1017 = vpop.xlane.xlu0 %1016
  %v1018 = vsel %vm393, %v330, 0.0
  %v1019 = vadd.f32 %v329, %v1018
  %1020 = vadd.xlane.f32.xlu0 %v1019
  %v1021 = vpop.xlane.xlu0 %1020
  %v1022 = vsel %vm393, %v332, 0.0
  %v1023 = vadd.f32 %v331, %v1022
  %1024 = vadd.xlane.f32.xlu0 %v1023
  %v1025 = vpop.xlane.xlu0 %1024
  %v1026 = vsel %vm393, %v334, 0.0
  %v1027 = vadd.f32 %v333, %v1026
  %1028 = vadd.xlane.f32.xlu0 %v1027
  %v1029 = vpop.xlane.xlu0 %1028
  %v1030 = vsel %vm393, %v336, 0.0
  %v1031 = vadd.f32 %v335, %v1030
  %1032 = vadd.xlane.f32.xlu0 %v1031
  %v1033 = vpop.xlane.xlu0 %1032
  %v1034 = vsel %vm393, %v338, 0.0
  %v1035 = vadd.f32 %v337, %v1034
  %1036 = vadd.xlane.f32.xlu0 %v1035
  %v1037 = vpop.xlane.xlu0 %1036
  %v1038 = vsel %vm393, %v340, 0.0
  %v1039 = vadd.f32 %v339, %v1038
  %1040 = vadd.xlane.f32.xlu0 %v1039
  %v1041 = vpop.xlane.xlu0 %1040
  %v1042 = vsel %vm393, %v342, 0.0
  %v1043 = vadd.f32 %v341, %v1042
  %1044 = vadd.xlane.f32.xlu0 %v1043
  %v1045 = vpop.xlane.xlu0 %1044
  %v1046 = vsel %vm393, %v344, 0.0
  %v1047 = vadd.f32 %v343, %v1046
  %1048 = vadd.xlane.f32.xlu0 %v1047
  %v1049 = vpop.xlane.xlu0 %1048
  %v1050 = vsel %vm393, %v346, 0.0
  %v1051 = vadd.f32 %v345, %v1050
  %1052 = vadd.xlane.f32.xlu0 %v1051
  %v1053 = vpop.xlane.xlu0 %1052
  %v1054 = vsel %vm393, %v348, 0.0
  %v1055 = vadd.f32 %v347, %v1054
  %1056 = vadd.xlane.f32.xlu0 %v1055
  %v1057 = vpop.xlane.xlu0 %1056
  %v1058 = vsel %vm393, %v350, 0.0
  %v1059 = vadd.f32 %v349, %v1058
  %1060 = vadd.xlane.f32.xlu0 %v1059
  %v1061 = vpop.xlane.xlu0 %1060
  %v1062 = vsel %vm393, %v352, 0.0
  %v1063 = vadd.f32 %v351, %v1062
  %1064 = vadd.xlane.f32.xlu0 %v1063
  %v1065 = vpop.xlane.xlu0 %1064
  %v1066 = vsel %vm393, %v354, 0.0
  %v1067 = vadd.f32 %v353, %v1066
  %1068 = vadd.xlane.f32.xlu0 %v1067
  %v1069 = vpop.xlane.xlu0 %1068
  %v1070 = vsel %vm393, %v356, 0.0
  %v1071 = vadd.f32 %v355, %v1070
  %1072 = vadd.xlane.f32.xlu0 %v1071
  %v1073 = vpop.xlane.xlu0 %1072
  %v1074 = vsel %vm393, %v358, 0.0
  %v1075 = vadd.f32 %v357, %v1074
  %1076 = vadd.xlane.f32.xlu0 %v1075
  %v1077 = vpop.xlane.xlu0 %1076
  %v1078 = vsel %vm393, %v360, 0.0
  %v1079 = vadd.f32 %v359, %v1078
  %1080 = vadd.xlane.f32.xlu0 %v1079
  %v1081 = vpop.xlane.xlu0 %1080
  %v1082 = vsel %vm393, %v362, 0.0
  %v1083 = vadd.f32 %v361, %v1082
  %1084 = vadd.xlane.f32.xlu0 %v1083
  %v1085 = vpop.xlane.xlu0 %1084
  %v1086 = vsel %vm393, %v364, 0.0
  %v1087 = vadd.f32 %v363, %v1086
  %1088 = vadd.xlane.f32.xlu0 %v1087
  %v1089 = vpop.xlane.xlu0 %1088
  %v1090 = vsel %vm393, %v366, 0.0
  %v1091 = vadd.f32 %v365, %v1090
  %1092 = vadd.xlane.f32.xlu0 %v1091
  %v1093 = vpop.xlane.xlu0 %1092
  %v1094 = vsel %vm393, %v368, 0.0
  %v1095 = vadd.f32 %v367, %v1094
  %1096 = vadd.xlane.f32.xlu0 %v1095
  %v1097 = vpop.xlane.xlu0 %1096
  %v1098 = vsel %vm393, %v370, 0.0
  %v1099 = vadd.f32 %v369, %v1098
  %1100 = vadd.xlane.f32.xlu0 %v1099
  %v1101 = vpop.xlane.xlu0 %1100
  %v1102 = vsel %vm393, %v372, 0.0
  %v1103 = vadd.f32 %v371, %v1102
  %1104 = vadd.xlane.f32.xlu0 %v1103
  %v1105 = vpop.xlane.xlu0 %1104
  %v1106 = vsel %vm393, %v374, 0.0
  %v1107 = vadd.f32 %v373, %v1106
  %1108 = vadd.xlane.f32.xlu0 %v1107
  %v1109 = vpop.xlane.xlu0 %1108
  %v1110 = vsel %vm393, %v376, 0.0
  %v1111 = vadd.f32 %v375, %v1110
  %1112 = vadd.xlane.f32.xlu0 %v1111
  %v1113 = vpop.xlane.xlu0 %1112
  %v1114 = vsel %vm393, %v378, 0.0
  %v1115 = vadd.f32 %v377, %v1114
  %1116 = vadd.xlane.f32.xlu0 %v1115
  %v1117 = vpop.xlane.xlu0 %1116
  %v1118 = vsel %vm393, %v380, 0.0
  %v1119 = vadd.f32 %v379, %v1118
  %1120 = vadd.xlane.f32.xlu0 %v1119
  %v1121 = vpop.xlane.xlu0 %1120
  %v1122 = vsel %vm393, %v382, 0.0
  %v1123 = vadd.f32 %v381, %v1122
  %1124 = vadd.xlane.f32.xlu0 %v1123
  %v1125 = vpop.xlane.xlu0 %1124
  %v1126 = vsel %vm393, %v384, 0.0
  %v1127 = vadd.f32 %v383, %v1126
  %1128 = vadd.xlane.f32.xlu0 %v1127
  %v1129 = vpop.xlane.xlu0 %1128
  %v1130 = vsel %vm393, %v386, 0.0
  %v1131 = vadd.f32 %v385, %v1130
  %1132 = vadd.xlane.f32.xlu0 %v1131
  %v1133 = vpop.xlane.xlu0 %1132
  %v1134 = vsel %vm393, %v388, 0.0
  %v1135 = vadd.f32 %v387, %v1134
  %1136 = vadd.xlane.f32.xlu0 %v1135
  %v1137 = vpop.xlane.xlu0 %1136
  %v1138 = vsel %vm393, %v390, 0.0
  %v1139 = vadd.f32 %v389, %v1138
  %1140 = vadd.xlane.f32.xlu0 %v1139
  %v1141 = vpop.xlane.xlu0 %1140
  %v1142 = vsel %vm393, %v392, 0.0
  %v1143 = vadd.f32 %v391, %v1142
  %1144 = vadd.xlane.f32.xlu0 %v1143
  %v1145 = vpop.xlane.xlu0 %1144
  %v1146 = vmul.f32 %v397, 0.0051020407
  %v1147 = vmul.f32 %v401, 0.0051020407
  %v1148 = vmul.f32 %v405, 0.0051020407
  %v1149 = vmul.f32 %v409, 0.0051020407
  %v1150 = vmul.f32 %v413, 0.0051020407
  %v1151 = vmul.f32 %v417, 0.0051020407
  %v1152 = vmul.f32 %v421, 0.0051020407
  %v1153 = vmul.f32 %v425, 0.0051020407
  %v1154 = vmul.f32 %v429, 0.0051020407
  %v1155 = vmul.f32 %v433, 0.0051020407
  %v1156 = vmul.f32 %v437, 0.0051020407
  %v1157 = vmul.f32 %v441, 0.0051020407
  %v1158 = vmul.f32 %v445, 0.0051020407
  %v1159 = vmul.f32 %v449, 0.0051020407
  %v1160 = vmul.f32 %v453, 0.0051020407
  %v1161 = vmul.f32 %v457, 0.0051020407
  %v1162 = vmul.f32 %v461, 0.0051020407
  %v1163 = vmul.f32 %v465, 0.0051020407
  %v1164 = vmul.f32 %v469, 0.0051020407
  %v1165 = vmul.f32 %v473, 0.0051020407
  %v1166 = vmul.f32 %v477, 0.0051020407
  %v1167 = vmul.f32 %v481, 0.0051020407
  %v1168 = vmul.f32 %v485, 0.0051020407
  %v1169 = vmul.f32 %v489, 0.0051020407
  %v1170 = vmul.f32 %v493, 0.0051020407
  %v1171 = vmul.f32 %v497, 0.0051020407
  %v1172 = vmul.f32 %v501, 0.0051020407
  %v1173 = vmul.f32 %v505, 0.0051020407
  %v1174 = vmul.f32 %v509, 0.0051020407
  %v1175 = vmul.f32 %v513, 0.0051020407
  %v1176 = vmul.f32 %v517, 0.0051020407
  %v1177 = vmul.f32 %v521, 0.0051020407
  %v1178 = vmul.f32 %v525, 0.0051020407
  %v1179 = vmul.f32 %v529, 0.0051020407
  %v1180 = vmul.f32 %v533, 0.0051020407
  %v1181 = vmul.f32 %v537, 0.0051020407
  %v1182 = vmul.f32 %v541, 0.0051020407
  %v1183 = vmul.f32 %v545, 0.0051020407
  %v1184 = vmul.f32 %v549, 0.0051020407
  %v1185 = vmul.f32 %v553, 0.0051020407
  %v1186 = vmul.f32 %v557, 0.0051020407
  %v1187 = vmul.f32 %v561, 0.0051020407
  %v1188 = vmul.f32 %v565, 0.0051020407
  %v1189 = vmul.f32 %v569, 0.0051020407
  %v1190 = vmul.f32 %v573, 0.0051020407
  %v1191 = vmul.f32 %v577, 0.0051020407
  %v1192 = vmul.f32 %v581, 0.0051020407
  %v1193 = vmul.f32 %v585, 0.0051020407
  %v1194 = vmul.f32 %v589, 0.0051020407
  %v1195 = vmul.f32 %v593, 0.0051020407
  %v1196 = vmul.f32 %v597, 0.0051020407
  %v1197 = vmul.f32 %v601, 0.0051020407
  %v1198 = vmul.f32 %v605, 0.0051020407
  %v1199 = vmul.f32 %v609, 0.0051020407
  %v1200 = vmul.f32 %v613, 0.0051020407
  %v1201 = vmul.f32 %v617, 0.0051020407
  %v1202 = vmul.f32 %v621, 0.0051020407
  %v1203 = vmul.f32 %v625, 0.0051020407
  %v1204 = vmul.f32 %v629, 0.0051020407
  %v1205 = vmul.f32 %v633, 0.0051020407
  %v1206 = vmul.f32 %v637, 0.0051020407
  %v1207 = vmul.f32 %v641, 0.0051020407
  %v1208 = vmul.f32 %v645, 0.0051020407
  %v1209 = vmul.f32 %v649, 0.0051020407
  %v1210 = vmul.f32 %v653, 0.0051020407
  %v1211 = vmul.f32 %v657, 0.0051020407
  %v1212 = vmul.f32 %v661, 0.0051020407
  %v1213 = vmul.f32 %v665, 0.0051020407
  %v1214 = vmul.f32 %v669, 0.0051020407
  %v1215 = vmul.f32 %v673, 0.0051020407
  %v1216 = vmul.f32 %v677, 0.0051020407
  %v1217 = vmul.f32 %v681, 0.0051020407
  %v1218 = vmul.f32 %v685, 0.0051020407
  %v1219 = vmul.f32 %v689, 0.0051020407
  %v1220 = vmul.f32 %v693, 0.0051020407
  %v1221 = vmul.f32 %v697, 0.0051020407
  %v1222 = vmul.f32 %v701, 0.0051020407
  %v1223 = vmul.f32 %v705, 0.0051020407
  %v1224 = vmul.f32 %v709, 0.0051020407
  %v1225 = vmul.f32 %v713, 0.0051020407
  %v1226 = vmul.f32 %v717, 0.0051020407
  %v1227 = vmul.f32 %v721, 0.0051020407
  %v1228 = vmul.f32 %v725, 0.0051020407
  %v1229 = vmul.f32 %v729, 0.0051020407
  %v1230 = vmul.f32 %v733, 0.0051020407
  %v1231 = vmul.f32 %v737, 0.0051020407
  %v1232 = vmul.f32 %v741, 0.0051020407
  %v1233 = vmul.f32 %v745, 0.0051020407
  %v1234 = vmul.f32 %v749, 0.0051020407
  %v1235 = vmul.f32 %v753, 0.0051020407
  %v1236 = vmul.f32 %v757, 0.0051020407
  %v1237 = vmul.f32 %v761, 0.0051020407
  %v1238 = vmul.f32 %v765, 0.0051020407
  %v1239 = vmul.f32 %v769, 0.0051020407
  %v1240 = vmul.f32 %v773, 0.0051020407
  %v1241 = vmul.f32 %v777, 0.0051020407
  %v1242 = vmul.f32 %v781, 0.0051020407
  %v1243 = vmul.f32 %v785, 0.0051020407
  %v1244 = vmul.f32 %v789, 0.0051020407
  %v1245 = vmul.f32 %v793, 0.0051020407
  %v1246 = vmul.f32 %v797, 0.0051020407
  %v1247 = vmul.f32 %v801, 0.0051020407
  %v1248 = vmul.f32 %v805, 0.0051020407
  %v1249 = vmul.f32 %v809, 0.0051020407
  %v1250 = vmul.f32 %v813, 0.0051020407
  %v1251 = vmul.f32 %v817, 0.0051020407
  %v1252 = vmul.f32 %v821, 0.0051020407
  %v1253 = vmul.f32 %v825, 0.0051020407
  %v1254 = vmul.f32 %v829, 0.0051020407
  %v1255 = vmul.f32 %v833, 0.0051020407
  %v1256 = vmul.f32 %v837, 0.0051020407
  %v1257 = vmul.f32 %v841, 0.0051020407
  %v1258 = vmul.f32 %v845, 0.0051020407
  %v1259 = vmul.f32 %v849, 0.0051020407
  %v1260 = vmul.f32 %v853, 0.0051020407
  %v1261 = vmul.f32 %v857, 0.0051020407
  %v1262 = vmul.f32 %v861, 0.0051020407
  %v1263 = vmul.f32 %v865, 0.0051020407
  %v1264 = vmul.f32 %v869, 0.0051020407
  %v1265 = vmul.f32 %v873, 0.0051020407
  %v1266 = vmul.f32 %v877, 0.0051020407
  %v1267 = vmul.f32 %v881, 0.0051020407
  %v1268 = vmul.f32 %v885, 0.0051020407
  %v1269 = vmul.f32 %v889, 0.0051020407
  %v1270 = vmul.f32 %v893, 0.0051020407
  %v1271 = vmul.f32 %v897, 0.0051020407
  %v1272 = vmul.f32 %v901, 0.0051020407
  %v1273 = vmul.f32 %v905, 0.0051020407
  %v1274 = vmul.f32 %v909, 0.0051020407
  %v1275 = vmul.f32 %v913, 0.0051020407
  %v1276 = vmul.f32 %v917, 0.0051020407
  %v1277 = vmul.f32 %v921, 0.0051020407
  %v1278 = vmul.f32 %v925, 0.0051020407
  %v1279 = vmul.f32 %v929, 0.0051020407
  %v1280 = vmul.f32 %v933, 0.0051020407
  %v1281 = vmul.f32 %v937, 0.0051020407
  %v1282 = vmul.f32 %v941, 0.0051020407
  %v1283 = vmul.f32 %v945, 0.0051020407
  %v1284 = vmul.f32 %v949, 0.0051020407
  %v1285 = vmul.f32 %v953, 0.0051020407
  %v1286 = vmul.f32 %v957, 0.0051020407
  %v1287 = vmul.f32 %v961, 0.0051020407
  %v1288 = vmul.f32 %v965, 0.0051020407
  %v1289 = vmul.f32 %v969, 0.0051020407
  %v1290 = vmul.f32 %v973, 0.0051020407
  %v1291 = vmul.f32 %v977, 0.0051020407
  %v1292 = vmul.f32 %v981, 0.0051020407
  %v1293 = vmul.f32 %v985, 0.0051020407
  %v1294 = vmul.f32 %v989, 0.0051020407
  %v1295 = vmul.f32 %v993, 0.0051020407
  %v1296 = vmul.f32 %v997, 0.0051020407
  %v1297 = vmul.f32 %v1001, 0.0051020407
  %v1298 = vmul.f32 %v1005, 0.0051020407
  %v1299 = vmul.f32 %v1009, 0.0051020407
  %v1300 = vmul.f32 %v1013, 0.0051020407
  %v1301 = vmul.f32 %v1017, 0.0051020407
  %v1302 = vmul.f32 %v1021, 0.0051020407
  %v1303 = vmul.f32 %v1025, 0.0051020407
  %v1304 = vmul.f32 %v1029, 0.0051020407
  %v1305 = vmul.f32 %v1033, 0.0051020407
  %v1306 = vmul.f32 %v1037, 0.0051020407
  %v1307 = vmul.f32 %v1041, 0.0051020407
  %v1308 = vmul.f32 %v1045, 0.0051020407
  %v1309 = vmul.f32 %v1049, 0.0051020407
  %v1310 = vmul.f32 %v1053, 0.0051020407
  %v1311 = vmul.f32 %v1057, 0.0051020407
  %v1312 = vmul.f32 %v1061, 0.0051020407
  %v1313 = vmul.f32 %v1065, 0.0051020407
  %v1314 = vmul.f32 %v1069, 0.0051020407
  %v1315 = vmul.f32 %v1073, 0.0051020407
  %v1316 = vmul.f32 %v1077, 0.0051020407
  %v1317 = vmul.f32 %v1081, 0.0051020407
  %v1318 = vmul.f32 %v1085, 0.0051020407
  %v1319 = vmul.f32 %v1089, 0.0051020407
  %v1320 = vmul.f32 %v1093, 0.0051020407
  %v1321 = vmul.f32 %v1097, 0.0051020407
  %v1322 = vmul.f32 %v1101, 0.0051020407
  %v1323 = vmul.f32 %v1105, 0.0051020407
  %v1324 = vmul.f32 %v1109, 0.0051020407
  %v1325 = vmul.f32 %v1113, 0.0051020407
  %v1326 = vmul.f32 %v1117, 0.0051020407
  %v1327 = vmul.f32 %v1121, 0.0051020407
  %v1328 = vmul.f32 %v1125, 0.0051020407
  %v1329 = vmul.f32 %v1129, 0.0051020407
  %v1330 = vmul.f32 %v1133, 0.0051020407
  %v1331 = vmul.f32 %v1137, 0.0051020407
  %v1332 = vmul.f32 %v1141, 0.0051020407
  %v1333 = vmul.f32 %v1145, 0.0051020407
  %v1334 = vmul.f32 %v17, %v17
  %v1335 = vmul.f32 %v18, %v18
  %v1336 = vmul.f32 %v19, %v19
  %v1337 = vmul.f32 %v20, %v20
  %v1338 = vmul.f32 %v21, %v21
  %v1339 = vmul.f32 %v22, %v22
  %v1340 = vmul.f32 %v23, %v23
  %v1341 = vmul.f32 %v24, %v24
  %v1342 = vmul.f32 %v25, %v25
  %v1343 = vmul.f32 %v26, %v26
  %v1344 = vmul.f32 %v27, %v27
  %v1345 = vmul.f32 %v28, %v28
  %v1346 = vmul.f32 %v29, %v29
  %v1347 = vmul.f32 %v30, %v30
  %v1348 = vmul.f32 %v31, %v31
  %v1349 = vmul.f32 %v32, %v32
  %v1350 = vmul.f32 %v33, %v33
  %v1351 = vmul.f32 %v34, %v34
  %v1352 = vmul.f32 %v35, %v35
  %v1353 = vmul.f32 %v36, %v36
  %v1354 = vmul.f32 %v37, %v37
  %v1355 = vmul.f32 %v38, %v38
  %v1356 = vmul.f32 %v39, %v39
  %v1357 = vmul.f32 %v40, %v40
  %v1358 = vmul.f32 %v41, %v41
  %v1359 = vmul.f32 %v42, %v42
  %v1360 = vmul.f32 %v43, %v43
  %v1361 = vmul.f32 %v44, %v44
  %v1362 = vmul.f32 %v45, %v45
  %v1363 = vmul.f32 %v46, %v46
  %v1364 = vmul.f32 %v47, %v47
  %v1365 = vmul.f32 %v48, %v48
  %v1366 = vmul.f32 %v49, %v49
  %v1367 = vmul.f32 %v50, %v50
  %v1368 = vmul.f32 %v51, %v51
  %v1369 = vmul.f32 %v52, %v52
  %v1370 = vmul.f32 %v53, %v53
  %v1371 = vmul.f32 %v54, %v54
  %v1372 = vmul.f32 %v55, %v55
  %v1373 = vmul.f32 %v56, %v56
  %v1374 = vmul.f32 %v57, %v57
  %v1375 = vmul.f32 %v58, %v58
  %v1376 = vmul.f32 %v59, %v59
  %v1377 = vmul.f32 %v60, %v60
  %v1378 = vmul.f32 %v61, %v61
  %v1379 = vmul.f32 %v62, %v62
  %v1380 = vmul.f32 %v63, %v63
  %v1381 = vmul.f32 %v64, %v64
  %v1382 = vmul.f32 %v65, %v65
  %v1383 = vmul.f32 %v66, %v66
  %v1384 = vmul.f32 %v67, %v67
  %v1385 = vmul.f32 %v68, %v68
  %v1386 = vmul.f32 %v69, %v69
  %v1387 = vmul.f32 %v70, %v70
  %v1388 = vmul.f32 %v71, %v71
  %v1389 = vmul.f32 %v72, %v72
  %v1390 = vmul.f32 %v73, %v73
  %v1391 = vmul.f32 %v74, %v74
  %v1392 = vmul.f32 %v75, %v75
  %v1393 = vmul.f32 %v76, %v76
  %v1394 = vmul.f32 %v77, %v77
  %v1395 = vmul.f32 %v78, %v78
  %v1396 = vmul.f32 %v79, %v79
  %v1397 = vmul.f32 %v80, %v80
  %v1398 = vmul.f32 %v81, %v81
  %v1399 = vmul.f32 %v82, %v82
  %v1400 = vmul.f32 %v83, %v83
  %v1401 = vmul.f32 %v84, %v84
  %v1402 = vmul.f32 %v85, %v85
  %v1403 = vmul.f32 %v86, %v86
  %v1404 = vmul.f32 %v87, %v87
  %v1405 = vmul.f32 %v88, %v88
  %v1406 = vmul.f32 %v89, %v89
  %v1407 = vmul.f32 %v90, %v90
  %v1408 = vmul.f32 %v91, %v91
  %v1409 = vmul.f32 %v92, %v92
  %v1410 = vmul.f32 %v93, %v93
  %v1411 = vmul.f32 %v94, %v94
  %v1412 = vmul.f32 %v95, %v95
  %v1413 = vmul.f32 %v96, %v96
  %v1414 = vmul.f32 %v97, %v97
  %v1415 = vmul.f32 %v98, %v98
  %v1416 = vmul.f32 %v99, %v99
  %v1417 = vmul.f32 %v100, %v100
  %v1418 = vmul.f32 %v101, %v101
  %v1419 = vmul.f32 %v102, %v102
  %v1420 = vmul.f32 %v103, %v103
  %v1421 = vmul.f32 %v104, %v104
  %v1422 = vmul.f32 %v105, %v105
  %v1423 = vmul.f32 %v106, %v106
  %v1424 = vmul.f32 %v107, %v107
  %v1425 = vmul.f32 %v108, %v108
  %v1426 = vmul.f32 %v109, %v109
  %v1427 = vmul.f32 %v110, %v110
  %v1428 = vmul.f32 %v111, %v111
  %v1429 = vmul.f32 %v112, %v112
  %v1430 = vmul.f32 %v113, %v113
  %v1431 = vmul.f32 %v114, %v114
  %v1432 = vmul.f32 %v115, %v115
  %v1433 = vmul.f32 %v116, %v116
  %v1434 = vmul.f32 %v117, %v117
  %v1435 = vmul.f32 %v118, %v118
  %v1436 = vmul.f32 %v119, %v119
  %v1437 = vmul.f32 %v120, %v120
  %v1438 = vmul.f32 %v121, %v121
  %v1439 = vmul.f32 %v122, %v122
  %v1440 = vmul.f32 %v123, %v123
  %v1441 = vmul.f32 %v124, %v124
  %v1442 = vmul.f32 %v125, %v125
  %v1443 = vmul.f32 %v126, %v126
  %v1444 = vmul.f32 %v127, %v127
  %v1445 = vmul.f32 %v128, %v128
  %v1446 = vmul.f32 %v129, %v129
  %v1447 = vmul.f32 %v130, %v130
  %v1448 = vmul.f32 %v131, %v131
  %v1449 = vmul.f32 %v132, %v132
  %v1450 = vmul.f32 %v133, %v133
  %v1451 = vmul.f32 %v134, %v134
  %v1452 = vmul.f32 %v135, %v135
  %v1453 = vmul.f32 %v136, %v136
  %v1454 = vmul.f32 %v137, %v137
  %v1455 = vmul.f32 %v138, %v138
  %v1456 = vmul.f32 %v139, %v139
  %v1457 = vmul.f32 %v140, %v140
  %v1458 = vmul.f32 %v141, %v141
  %v1459 = vmul.f32 %v142, %v142
  %v1460 = vmul.f32 %v143, %v143
  %v1461 = vmul.f32 %v144, %v144
  %v1462 = vmul.f32 %v145, %v145
  %v1463 = vmul.f32 %v146, %v146
  %v1464 = vmul.f32 %v147, %v147
  %v1465 = vmul.f32 %v148, %v148
  %v1466 = vmul.f32 %v149, %v149
  %v1467 = vmul.f32 %v150, %v150
  %v1468 = vmul.f32 %v151, %v151
  %v1469 = vmul.f32 %v152, %v152
  %v1470 = vmul.f32 %v153, %v153
  %v1471 = vmul.f32 %v154, %v154
  %v1472 = vmul.f32 %v155, %v155
  %v1473 = vmul.f32 %v156, %v156
  %v1474 = vmul.f32 %v157, %v157
  %v1475 = vmul.f32 %v158, %v158
  %v1476 = vmul.f32 %v159, %v159
  %v1477 = vmul.f32 %v160, %v160
  %v1478 = vmul.f32 %v161, %v161
  %v1479 = vmul.f32 %v162, %v162
  %v1480 = vmul.f32 %v163, %v163
  %v1481 = vmul.f32 %v164, %v164
  %v1482 = vmul.f32 %v165, %v165
  %v1483 = vmul.f32 %v166, %v166
  %v1484 = vmul.f32 %v167, %v167
  %v1485 = vmul.f32 %v168, %v168
  %v1486 = vmul.f32 %v169, %v169
  %v1487 = vmul.f32 %v170, %v170
  %v1488 = vmul.f32 %v171, %v171
  %v1489 = vmul.f32 %v172, %v172
  %v1490 = vmul.f32 %v173, %v173
  %v1491 = vmul.f32 %v174, %v174
  %v1492 = vmul.f32 %v175, %v175
  %v1493 = vmul.f32 %v176, %v176
  %v1494 = vmul.f32 %v177, %v177
  %v1495 = vmul.f32 %v178, %v178
  %v1496 = vmul.f32 %v179, %v179
  %v1497 = vmul.f32 %v180, %v180
  %v1498 = vmul.f32 %v181, %v181
  %v1499 = vmul.f32 %v182, %v182
  %v1500 = vmul.f32 %v183, %v183
  %v1501 = vmul.f32 %v184, %v184
  %v1502 = vmul.f32 %v185, %v185
  %v1503 = vmul.f32 %v186, %v186
  %v1504 = vmul.f32 %v187, %v187
  %v1505 = vmul.f32 %v188, %v188
  %v1506 = vmul.f32 %v189, %v189
  %v1507 = vmul.f32 %v190, %v190
  %v1508 = vmul.f32 %v191, %v191
  %v1509 = vmul.f32 %v192, %v192
  %v1510 = vmul.f32 %v193, %v193
  %v1511 = vmul.f32 %v194, %v194
  %v1512 = vmul.f32 %v195, %v195
  %v1513 = vmul.f32 %v196, %v196
  %v1514 = vmul.f32 %v197, %v197
  %v1515 = vmul.f32 %v198, %v198
  %v1516 = vmul.f32 %v199, %v199
  %v1517 = vmul.f32 %v200, %v200
  %v1518 = vmul.f32 %v201, %v201
  %v1519 = vmul.f32 %v202, %v202
  %v1520 = vmul.f32 %v203, %v203
  %v1521 = vmul.f32 %v204, %v204
  %v1522 = vmul.f32 %v205, %v205
  %v1523 = vmul.f32 %v206, %v206
  %v1524 = vmul.f32 %v207, %v207
  %v1525 = vmul.f32 %v208, %v208
  %v1526 = vmul.f32 %v209, %v209
  %v1527 = vmul.f32 %v210, %v210
  %v1528 = vmul.f32 %v211, %v211
  %v1529 = vmul.f32 %v212, %v212
  %v1530 = vmul.f32 %v213, %v213
  %v1531 = vmul.f32 %v214, %v214
  %v1532 = vmul.f32 %v215, %v215
  %v1533 = vmul.f32 %v216, %v216
  %v1534 = vmul.f32 %v217, %v217
  %v1535 = vmul.f32 %v218, %v218
  %v1536 = vmul.f32 %v219, %v219
  %v1537 = vmul.f32 %v220, %v220
  %v1538 = vmul.f32 %v221, %v221
  %v1539 = vmul.f32 %v222, %v222
  %v1540 = vmul.f32 %v223, %v223
  %v1541 = vmul.f32 %v224, %v224
  %v1542 = vmul.f32 %v225, %v225
  %v1543 = vmul.f32 %v226, %v226
  %v1544 = vmul.f32 %v227, %v227
  %v1545 = vmul.f32 %v228, %v228
  %v1546 = vmul.f32 %v229, %v229
  %v1547 = vmul.f32 %v230, %v230
  %v1548 = vmul.f32 %v231, %v231
  %v1549 = vmul.f32 %v232, %v232
  %v1550 = vmul.f32 %v233, %v233
  %v1551 = vmul.f32 %v234, %v234
  %v1552 = vmul.f32 %v235, %v235
  %v1553 = vmul.f32 %v236, %v236
  %v1554 = vmul.f32 %v237, %v237
  %v1555 = vmul.f32 %v238, %v238
  %v1556 = vmul.f32 %v239, %v239
  %v1557 = vmul.f32 %v240, %v240
  %v1558 = vmul.f32 %v241, %v241
  %v1559 = vmul.f32 %v242, %v242
  %v1560 = vmul.f32 %v243, %v243
  %v1561 = vmul.f32 %v244, %v244
  %v1562 = vmul.f32 %v245, %v245
  %v1563 = vmul.f32 %v246, %v246
  %v1564 = vmul.f32 %v247, %v247
  %v1565 = vmul.f32 %v248, %v248
  %v1566 = vmul.f32 %v249, %v249
  %v1567 = vmul.f32 %v250, %v250
  %v1568 = vmul.f32 %v251, %v251
  %v1569 = vmul.f32 %v252, %v252
  %v1570 = vmul.f32 %v253, %v253
  %v1571 = vmul.f32 %v254, %v254
  %v1572 = vmul.f32 %v255, %v255
  %v1573 = vmul.f32 %v256, %v256
  %v1574 = vmul.f32 %v257, %v257
  %v1575 = vmul.f32 %v258, %v258
  %v1576 = vmul.f32 %v259, %v259
  %v1577 = vmul.f32 %v260, %v260
  %v1578 = vmul.f32 %v261, %v261
  %v1579 = vmul.f32 %v262, %v262
  %v1580 = vmul.f32 %v263, %v263
  %v1581 = vmul.f32 %v264, %v264
  %v1582 = vmul.f32 %v265, %v265
  %v1583 = vmul.f32 %v266, %v266
  %v1584 = vmul.f32 %v267, %v267
  %v1585 = vmul.f32 %v268, %v268
  %v1586 = vmul.f32 %v269, %v269
  %v1587 = vmul.f32 %v270, %v270
  %v1588 = vmul.f32 %v271, %v271
  %v1589 = vmul.f32 %v272, %v272
  %v1590 = vmul.f32 %v273, %v273
  %v1591 = vmul.f32 %v274, %v274
  %v1592 = vmul.f32 %v275, %v275
  %v1593 = vmul.f32 %v276, %v276
  %v1594 = vmul.f32 %v277, %v277
  %v1595 = vmul.f32 %v278, %v278
  %v1596 = vmul.f32 %v279, %v279
  %v1597 = vmul.f32 %v280, %v280
  %v1598 = vmul.f32 %v281, %v281
  %v1599 = vmul.f32 %v282, %v282
  %v1600 = vmul.f32 %v283, %v283
  %v1601 = vmul.f32 %v284, %v284
  %v1602 = vmul.f32 %v285, %v285
  %v1603 = vmul.f32 %v286, %v286
  %v1604 = vmul.f32 %v287, %v287
  %v1605 = vmul.f32 %v288, %v288
  %v1606 = vmul.f32 %v289, %v289
  %v1607 = vmul.f32 %v290, %v290
  %v1608 = vmul.f32 %v291, %v291
  %v1609 = vmul.f32 %v292, %v292
  %v1610 = vmul.f32 %v293, %v293
  %v1611 = vmul.f32 %v294, %v294
  %v1612 = vmul.f32 %v295, %v295
  %v1613 = vmul.f32 %v296, %v296
  %v1614 = vmul.f32 %v297, %v297
  %v1615 = vmul.f32 %v298, %v298
  %v1616 = vmul.f32 %v299, %v299
  %v1617 = vmul.f32 %v300, %v300
  %v1618 = vmul.f32 %v301, %v301
  %v1619 = vmul.f32 %v302, %v302
  %v1620 = vmul.f32 %v303, %v303
  %v1621 = vmul.f32 %v304, %v304
  %v1622 = vmul.f32 %v305, %v305
  %v1623 = vmul.f32 %v306, %v306
  %v1624 = vmul.f32 %v307, %v307
  %v1625 = vmul.f32 %v308, %v308
  %v1626 = vmul.f32 %v309, %v309
  %v1627 = vmul.f32 %v310, %v310
  %v1628 = vmul.f32 %v311, %v311
  %v1629 = vmul.f32 %v312, %v312
  %v1630 = vmul.f32 %v313, %v313
  %v1631 = vmul.f32 %v314, %v314
  %v1632 = vmul.f32 %v315, %v315
  %v1633 = vmul.f32 %v316, %v316
  %v1634 = vmul.f32 %v317, %v317
  %v1635 = vmul.f32 %v318, %v318
  %v1636 = vmul.f32 %v319, %v319
  %v1637 = vmul.f32 %v320, %v320
  %v1638 = vmul.f32 %v321, %v321
  %v1639 = vmul.f32 %v322, %v322
  %v1640 = vmul.f32 %v323, %v323
  %v1641 = vmul.f32 %v324, %v324
  %v1642 = vmul.f32 %v325, %v325
  %v1643 = vmul.f32 %v326, %v326
  %v1644 = vmul.f32 %v327, %v327
  %v1645 = vmul.f32 %v328, %v328
  %v1646 = vmul.f32 %v329, %v329
  %v1647 = vmul.f32 %v330, %v330
  %v1648 = vmul.f32 %v331, %v331
  %v1649 = vmul.f32 %v332, %v332
  %v1650 = vmul.f32 %v333, %v333
  %v1651 = vmul.f32 %v334, %v334
  %v1652 = vmul.f32 %v335, %v335
  %v1653 = vmul.f32 %v336, %v336
  %v1654 = vmul.f32 %v337, %v337
  %v1655 = vmul.f32 %v338, %v338
  %v1656 = vmul.f32 %v339, %v339
  %v1657 = vmul.f32 %v340, %v340
  %v1658 = vmul.f32 %v341, %v341
  %v1659 = vmul.f32 %v342, %v342
  %v1660 = vmul.f32 %v343, %v343
  %v1661 = vmul.f32 %v344, %v344
  %v1662 = vmul.f32 %v345, %v345
  %v1663 = vmul.f32 %v346, %v346
  %v1664 = vmul.f32 %v347, %v347
  %v1665 = vmul.f32 %v348, %v348
  %v1666 = vmul.f32 %v349, %v349
  %v1667 = vmul.f32 %v350, %v350
  %v1668 = vmul.f32 %v351, %v351
  %v1669 = vmul.f32 %v352, %v352
  %v1670 = vmul.f32 %v353, %v353
  %v1671 = vmul.f32 %v354, %v354
  %v1672 = vmul.f32 %v355, %v355
  %v1673 = vmul.f32 %v356, %v356
  %v1674 = vmul.f32 %v357, %v357
  %v1675 = vmul.f32 %v358, %v358
  %v1676 = vmul.f32 %v359, %v359
  %v1677 = vmul.f32 %v360, %v360
  %v1678 = vmul.f32 %v361, %v361
  %v1679 = vmul.f32 %v362, %v362
  %v1680 = vmul.f32 %v363, %v363
  %v1681 = vmul.f32 %v364, %v364
  %v1682 = vmul.f32 %v365, %v365
  %v1683 = vmul.f32 %v366, %v366
  %v1684 = vmul.f32 %v367, %v367
  %v1685 = vmul.f32 %v368, %v368
  %v1686 = vmul.f32 %v369, %v369
  %v1687 = vmul.f32 %v370, %v370
  %v1688 = vmul.f32 %v371, %v371
  %v1689 = vmul.f32 %v372, %v372
  %v1690 = vmul.f32 %v373, %v373
  %v1691 = vmul.f32 %v374, %v374
  %v1692 = vmul.f32 %v375, %v375
  %v1693 = vmul.f32 %v376, %v376
  %v1694 = vmul.f32 %v377, %v377
  %v1695 = vmul.f32 %v378, %v378
  %v1696 = vmul.f32 %v379, %v379
  %v1697 = vmul.f32 %v380, %v380
  %v1698 = vmul.f32 %v381, %v381
  %v1699 = vmul.f32 %v382, %v382
  %v1700 = vmul.f32 %v383, %v383
  %v1701 = vmul.f32 %v384, %v384
  %v1702 = vmul.f32 %v385, %v385
  %v1703 = vmul.f32 %v386, %v386
  %v1704 = vmul.f32 %v387, %v387
  %v1705 = vmul.f32 %v388, %v388
  %v1706 = vmul.f32 %v389, %v389
  %v1707 = vmul.f32 %v390, %v390
  %v1708 = vmul.f32 %v391, %v391
  %v1709 = vmul.f32 %v392, %v392
  %v1710 = vsel %vm393, %v1335, 0.0
  %v1711 = vadd.f32 %v1334, %v1710
  %1712 = vadd.xlane.f32.xlu0 %v1711
  %v1713 = vpop.xlane.xlu0 %1712
  %v1714 = vsel %vm393, %v1337, 0.0
  %v1715 = vadd.f32 %v1336, %v1714
  %1716 = vadd.xlane.f32.xlu0 %v1715
  %v1717 = vpop.xlane.xlu0 %1716
  %v1718 = vsel %vm393, %v1339, 0.0
  %v1719 = vadd.f32 %v1338, %v1718
  %1720 = vadd.xlane.f32.xlu0 %v1719
  %v1721 = vpop.xlane.xlu0 %1720
  %v1722 = vsel %vm393, %v1341, 0.0
  %v1723 = vadd.f32 %v1340, %v1722
  %1724 = vadd.xlane.f32.xlu0 %v1723
  %v1725 = vpop.xlane.xlu0 %1724
  %v1726 = vsel %vm393, %v1343, 0.0
  %v1727 = vadd.f32 %v1342, %v1726
  %1728 = vadd.xlane.f32.xlu0 %v1727
  %v1729 = vpop.xlane.xlu0 %1728
  %v1730 = vsel %vm393, %v1345, 0.0
  %v1731 = vadd.f32 %v1344, %v1730
  %1732 = vadd.xlane.f32.xlu0 %v1731
  %v1733 = vpop.xlane.xlu0 %1732
  %v1734 = vsel %vm393, %v1347, 0.0
  %v1735 = vadd.f32 %v1346, %v1734
  %1736 = vadd.xlane.f32.xlu0 %v1735
  %v1737 = vpop.xlane.xlu0 %1736
  %v1738 = vsel %vm393, %v1349, 0.0
  %v1739 = vadd.f32 %v1348, %v1738
  %1740 = vadd.xlane.f32.xlu0 %v1739
  %v1741 = vpop.xlane.xlu0 %1740
  %v1742 = vsel %vm393, %v1351, 0.0
  %v1743 = vadd.f32 %v1350, %v1742
  %1744 = vadd.xlane.f32.xlu0 %v1743
  %v1745 = vpop.xlane.xlu0 %1744
  %v1746 = vsel %vm393, %v1353, 0.0
  %v1747 = vadd.f32 %v1352, %v1746
  %1748 = vadd.xlane.f32.xlu0 %v1747
  %v1749 = vpop.xlane.xlu0 %1748
  %v1750 = vsel %vm393, %v1355, 0.0
  %v1751 = vadd.f32 %v1354, %v1750
  %1752 = vadd.xlane.f32.xlu0 %v1751
  %v1753 = vpop.xlane.xlu0 %1752
  %v1754 = vsel %vm393, %v1357, 0.0
  %v1755 = vadd.f32 %v1356, %v1754
  %1756 = vadd.xlane.f32.xlu0 %v1755
  %v1757 = vpop.xlane.xlu0 %1756
  %v1758 = vsel %vm393, %v1359, 0.0
  %v1759 = vadd.f32 %v1358, %v1758
  %1760 = vadd.xlane.f32.xlu0 %v1759
  %v1761 = vpop.xlane.xlu0 %1760
  %v1762 = vsel %vm393, %v1361, 0.0
  %v1763 = vadd.f32 %v1360, %v1762
  %1764 = vadd.xlane.f32.xlu0 %v1763
  %v1765 = vpop.xlane.xlu0 %1764
  %v1766 = vsel %vm393, %v1363, 0.0
  %v1767 = vadd.f32 %v1362, %v1766
  %1768 = vadd.xlane.f32.xlu0 %v1767
  %v1769 = vpop.xlane.xlu0 %1768
  %v1770 = vsel %vm393, %v1365, 0.0
  %v1771 = vadd.f32 %v1364, %v1770
  %1772 = vadd.xlane.f32.xlu0 %v1771
  %v1773 = vpop.xlane.xlu0 %1772
  %v1774 = vsel %vm393, %v1367, 0.0
  %v1775 = vadd.f32 %v1366, %v1774
  %1776 = vadd.xlane.f32.xlu0 %v1775
  %v1777 = vpop.xlane.xlu0 %1776
  %v1778 = vsel %vm393, %v1369, 0.0
  %v1779 = vadd.f32 %v1368, %v1778
  %1780 = vadd.xlane.f32.xlu0 %v1779
  %v1781 = vpop.xlane.xlu0 %1780
  %v1782 = vsel %vm393, %v1371, 0.0
  %v1783 = vadd.f32 %v1370, %v1782
  %1784 = vadd.xlane.f32.xlu0 %v1783
  %v1785 = vpop.xlane.xlu0 %1784
  %v1786 = vsel %vm393, %v1373, 0.0
  %v1787 = vadd.f32 %v1372, %v1786
  %1788 = vadd.xlane.f32.xlu0 %v1787
  %v1789 = vpop.xlane.xlu0 %1788
  %v1790 = vsel %vm393, %v1375, 0.0
  %v1791 = vadd.f32 %v1374, %v1790
  %1792 = vadd.xlane.f32.xlu0 %v1791
  %v1793 = vpop.xlane.xlu0 %1792
  %v1794 = vsel %vm393, %v1377, 0.0
  %v1795 = vadd.f32 %v1376, %v1794
  %1796 = vadd.xlane.f32.xlu0 %v1795
  %v1797 = vpop.xlane.xlu0 %1796
  %v1798 = vsel %vm393, %v1379, 0.0
  %v1799 = vadd.f32 %v1378, %v1798
  %1800 = vadd.xlane.f32.xlu0 %v1799
  %v1801 = vpop.xlane.xlu0 %1800
  %v1802 = vsel %vm393, %v1381, 0.0
  %v1803 = vadd.f32 %v1380, %v1802
  %1804 = vadd.xlane.f32.xlu0 %v1803
  %v1805 = vpop.xlane.xlu0 %1804
  %v1806 = vsel %vm393, %v1383, 0.0
  %v1807 = vadd.f32 %v1382, %v1806
  %1808 = vadd.xlane.f32.xlu0 %v1807
  %v1809 = vpop.xlane.xlu0 %1808
  %v1810 = vsel %vm393, %v1385, 0.0
  %v1811 = vadd.f32 %v1384, %v1810
  %1812 = vadd.xlane.f32.xlu0 %v1811
  %v1813 = vpop.xlane.xlu0 %1812
  %v1814 = vsel %vm393, %v1387, 0.0
  %v1815 = vadd.f32 %v1386, %v1814
  %1816 = vadd.xlane.f32.xlu0 %v1815
  %v1817 = vpop.xlane.xlu0 %1816
  %v1818 = vsel %vm393, %v1389, 0.0
  %v1819 = vadd.f32 %v1388, %v1818
  %1820 = vadd.xlane.f32.xlu0 %v1819
  %v1821 = vpop.xlane.xlu0 %1820
  %v1822 = vsel %vm393, %v1391, 0.0
  %v1823 = vadd.f32 %v1390, %v1822
  %1824 = vadd.xlane.f32.xlu0 %v1823
  %v1825 = vpop.xlane.xlu0 %1824
  %v1826 = vsel %vm393, %v1393, 0.0
  %v1827 = vadd.f32 %v1392, %v1826
  %1828 = vadd.xlane.f32.xlu0 %v1827
  %v1829 = vpop.xlane.xlu0 %1828
  %v1830 = vsel %vm393, %v1395, 0.0
  %v1831 = vadd.f32 %v1394, %v1830
  %1832 = vadd.xlane.f32.xlu0 %v1831
  %v1833 = vpop.xlane.xlu0 %1832
  %v1834 = vsel %vm393, %v1397, 0.0
  %v1835 = vadd.f32 %v1396, %v1834
  %1836 = vadd.xlane.f32.xlu0 %v1835
  %v1837 = vpop.xlane.xlu0 %1836
  %v1838 = vsel %vm393, %v1399, 0.0
  %v1839 = vadd.f32 %v1398, %v1838
  %1840 = vadd.xlane.f32.xlu0 %v1839
  %v1841 = vpop.xlane.xlu0 %1840
  %v1842 = vsel %vm393, %v1401, 0.0
  %v1843 = vadd.f32 %v1400, %v1842
  %1844 = vadd.xlane.f32.xlu0 %v1843
  %v1845 = vpop.xlane.xlu0 %1844
  %v1846 = vsel %vm393, %v1403, 0.0
  %v1847 = vadd.f32 %v1402, %v1846
  %1848 = vadd.xlane.f32.xlu0 %v1847
  %v1849 = vpop.xlane.xlu0 %1848
  %v1850 = vsel %vm393, %v1405, 0.0
  %v1851 = vadd.f32 %v1404, %v1850
  %1852 = vadd.xlane.f32.xlu0 %v1851
  %v1853 = vpop.xlane.xlu0 %1852
  %v1854 = vsel %vm393, %v1407, 0.0
  %v1855 = vadd.f32 %v1406, %v1854
  %1856 = vadd.xlane.f32.xlu0 %v1855
  %v1857 = vpop.xlane.xlu0 %1856
  %v1858 = vsel %vm393, %v1409, 0.0
  %v1859 = vadd.f32 %v1408, %v1858
  %1860 = vadd.xlane.f32.xlu0 %v1859
  %v1861 = vpop.xlane.xlu0 %1860
  %v1862 = vsel %vm393, %v1411, 0.0
  %v1863 = vadd.f32 %v1410, %v1862
  %1864 = vadd.xlane.f32.xlu0 %v1863
  %v1865 = vpop.xlane.xlu0 %1864
  %v1866 = vsel %vm393, %v1413, 0.0
  %v1867 = vadd.f32 %v1412, %v1866
  %1868 = vadd.xlane.f32.xlu0 %v1867
  %v1869 = vpop.xlane.xlu0 %1868
  %v1870 = vsel %vm393, %v1415, 0.0
  %v1871 = vadd.f32 %v1414, %v1870
  %1872 = vadd.xlane.f32.xlu0 %v1871
  %v1873 = vpop.xlane.xlu0 %1872
  %v1874 = vsel %vm393, %v1417, 0.0
  %v1875 = vadd.f32 %v1416, %v1874
  %1876 = vadd.xlane.f32.xlu0 %v1875
  %v1877 = vpop.xlane.xlu0 %1876
  %v1878 = vsel %vm393, %v1419, 0.0
  %v1879 = vadd.f32 %v1418, %v1878
  %1880 = vadd.xlane.f32.xlu0 %v1879
  %v1881 = vpop.xlane.xlu0 %1880
  %v1882 = vsel %vm393, %v1421, 0.0
  %v1883 = vadd.f32 %v1420, %v1882
  %1884 = vadd.xlane.f32.xlu0 %v1883
  %v1885 = vpop.xlane.xlu0 %1884
  %v1886 = vsel %vm393, %v1423, 0.0
  %v1887 = vadd.f32 %v1422, %v1886
  %1888 = vadd.xlane.f32.xlu0 %v1887
  %v1889 = vpop.xlane.xlu0 %1888
  %v1890 = vsel %vm393, %v1425, 0.0
  %v1891 = vadd.f32 %v1424, %v1890
  %1892 = vadd.xlane.f32.xlu0 %v1891
  %v1893 = vpop.xlane.xlu0 %1892
  %v1894 = vsel %vm393, %v1427, 0.0
  %v1895 = vadd.f32 %v1426, %v1894
  %1896 = vadd.xlane.f32.xlu0 %v1895
  %v1897 = vpop.xlane.xlu0 %1896
  %v1898 = vsel %vm393, %v1429, 0.0
  %v1899 = vadd.f32 %v1428, %v1898
  %1900 = vadd.xlane.f32.xlu0 %v1899
  %v1901 = vpop.xlane.xlu0 %1900
  %v1902 = vsel %vm393, %v1431, 0.0
  %v1903 = vadd.f32 %v1430, %v1902
  %1904 = vadd.xlane.f32.xlu0 %v1903
  %v1905 = vpop.xlane.xlu0 %1904
  %v1906 = vsel %vm393, %v1433, 0.0
  %v1907 = vadd.f32 %v1432, %v1906
  %1908 = vadd.xlane.f32.xlu0 %v1907
  %v1909 = vpop.xlane.xlu0 %1908
  %v1910 = vsel %vm393, %v1435, 0.0
  %v1911 = vadd.f32 %v1434, %v1910
  %1912 = vadd.xlane.f32.xlu0 %v1911
  %v1913 = vpop.xlane.xlu0 %1912
  %v1914 = vsel %vm393, %v1437, 0.0
  %v1915 = vadd.f32 %v1436, %v1914
  %1916 = vadd.xlane.f32.xlu0 %v1915
  %v1917 = vpop.xlane.xlu0 %1916
  %v1918 = vsel %vm393, %v1439, 0.0
  %v1919 = vadd.f32 %v1438, %v1918
  %1920 = vadd.xlane.f32.xlu0 %v1919
  %v1921 = vpop.xlane.xlu0 %1920
  %v1922 = vsel %vm393, %v1441, 0.0
  %v1923 = vadd.f32 %v1440, %v1922
  %1924 = vadd.xlane.f32.xlu0 %v1923
  %v1925 = vpop.xlane.xlu0 %1924
  %v1926 = vsel %vm393, %v1443, 0.0
  %v1927 = vadd.f32 %v1442, %v1926
  %1928 = vadd.xlane.f32.xlu0 %v1927
  %v1929 = vpop.xlane.xlu0 %1928
  %v1930 = vsel %vm393, %v1445, 0.0
  %v1931 = vadd.f32 %v1444, %v1930
  %1932 = vadd.xlane.f32.xlu0 %v1931
  %v1933 = vpop.xlane.xlu0 %1932
  %v1934 = vsel %vm393, %v1447, 0.0
  %v1935 = vadd.f32 %v1446, %v1934
  %1936 = vadd.xlane.f32.xlu0 %v1935
  %v1937 = vpop.xlane.xlu0 %1936
  %v1938 = vsel %vm393, %v1449, 0.0
  %v1939 = vadd.f32 %v1448, %v1938
  %1940 = vadd.xlane.f32.xlu0 %v1939
  %v1941 = vpop.xlane.xlu0 %1940
  %v1942 = vsel %vm393, %v1451, 0.0
  %v1943 = vadd.f32 %v1450, %v1942
  %1944 = vadd.xlane.f32.xlu0 %v1943
  %v1945 = vpop.xlane.xlu0 %1944
  %v1946 = vsel %vm393, %v1453, 0.0
  %v1947 = vadd.f32 %v1452, %v1946
  %1948 = vadd.xlane.f32.xlu0 %v1947
  %v1949 = vpop.xlane.xlu0 %1948
  %v1950 = vsel %vm393, %v1455, 0.0
  %v1951 = vadd.f32 %v1454, %v1950
  %1952 = vadd.xlane.f32.xlu0 %v1951
  %v1953 = vpop.xlane.xlu0 %1952
  %v1954 = vsel %vm393, %v1457, 0.0
  %v1955 = vadd.f32 %v1456, %v1954
  %1956 = vadd.xlane.f32.xlu0 %v1955
  %v1957 = vpop.xlane.xlu0 %1956
  %v1958 = vsel %vm393, %v1459, 0.0
  %v1959 = vadd.f32 %v1458, %v1958
  %1960 = vadd.xlane.f32.xlu0 %v1959
  %v1961 = vpop.xlane.xlu0 %1960
  %v1962 = vsel %vm393, %v1461, 0.0
  %v1963 = vadd.f32 %v1460, %v1962
  %1964 = vadd.xlane.f32.xlu0 %v1963
  %v1965 = vpop.xlane.xlu0 %1964
  %v1966 = vsel %vm393, %v1463, 0.0
  %v1967 = vadd.f32 %v1462, %v1966
  %1968 = vadd.xlane.f32.xlu0 %v1967
  %v1969 = vpop.xlane.xlu0 %1968
  %v1970 = vsel %vm393, %v1465, 0.0
  %v1971 = vadd.f32 %v1464, %v1970
  %1972 = vadd.xlane.f32.xlu0 %v1971
  %v1973 = vpop.xlane.xlu0 %1972
  %v1974 = vsel %vm393, %v1467, 0.0
  %v1975 = vadd.f32 %v1466, %v1974
  %1976 = vadd.xlane.f32.xlu0 %v1975
  %v1977 = vpop.xlane.xlu0 %1976
  %v1978 = vsel %vm393, %v1469, 0.0
  %v1979 = vadd.f32 %v1468, %v1978
  %1980 = vadd.xlane.f32.xlu0 %v1979
  %v1981 = vpop.xlane.xlu0 %1980
  %v1982 = vsel %vm393, %v1471, 0.0
  %v1983 = vadd.f32 %v1470, %v1982
  %1984 = vadd.xlane.f32.xlu0 %v1983
  %v1985 = vpop.xlane.xlu0 %1984
  %v1986 = vsel %vm393, %v1473, 0.0
  %v1987 = vadd.f32 %v1472, %v1986
  %1988 = vadd.xlane.f32.xlu0 %v1987
  %v1989 = vpop.xlane.xlu0 %1988
  %v1990 = vsel %vm393, %v1475, 0.0
  %v1991 = vadd.f32 %v1474, %v1990
  %1992 = vadd.xlane.f32.xlu0 %v1991
  %v1993 = vpop.xlane.xlu0 %1992
  %v1994 = vsel %vm393, %v1477, 0.0
  %v1995 = vadd.f32 %v1476, %v1994
  %1996 = vadd.xlane.f32.xlu0 %v1995
  %v1997 = vpop.xlane.xlu0 %1996
  %v1998 = vsel %vm393, %v1479, 0.0
  %v1999 = vadd.f32 %v1478, %v1998
  %2000 = vadd.xlane.f32.xlu0 %v1999
  %v2001 = vpop.xlane.xlu0 %2000
  %v2002 = vsel %vm393, %v1481, 0.0
  %v2003 = vadd.f32 %v1480, %v2002
  %2004 = vadd.xlane.f32.xlu0 %v2003
  %v2005 = vpop.xlane.xlu0 %2004
  %v2006 = vsel %vm393, %v1483, 0.0
  %v2007 = vadd.f32 %v1482, %v2006
  %2008 = vadd.xlane.f32.xlu0 %v2007
  %v2009 = vpop.xlane.xlu0 %2008
  %v2010 = vsel %vm393, %v1485, 0.0
  %v2011 = vadd.f32 %v1484, %v2010
  %2012 = vadd.xlane.f32.xlu0 %v2011
  %v2013 = vpop.xlane.xlu0 %2012
  %v2014 = vsel %vm393, %v1487, 0.0
  %v2015 = vadd.f32 %v1486, %v2014
  %2016 = vadd.xlane.f32.xlu0 %v2015
  %v2017 = vpop.xlane.xlu0 %2016
  %v2018 = vsel %vm393, %v1489, 0.0
  %v2019 = vadd.f32 %v1488, %v2018
  %2020 = vadd.xlane.f32.xlu0 %v2019
  %v2021 = vpop.xlane.xlu0 %2020
  %v2022 = vsel %vm393, %v1491, 0.0
  %v2023 = vadd.f32 %v1490, %v2022
  %2024 = vadd.xlane.f32.xlu0 %v2023
  %v2025 = vpop.xlane.xlu0 %2024
  %v2026 = vsel %vm393, %v1493, 0.0
  %v2027 = vadd.f32 %v1492, %v2026
  %2028 = vadd.xlane.f32.xlu0 %v2027
  %v2029 = vpop.xlane.xlu0 %2028
  %v2030 = vsel %vm393, %v1495, 0.0
  %v2031 = vadd.f32 %v1494, %v2030
  %2032 = vadd.xlane.f32.xlu0 %v2031
  %v2033 = vpop.xlane.xlu0 %2032
  %v2034 = vsel %vm393, %v1497, 0.0
  %v2035 = vadd.f32 %v1496, %v2034
  %2036 = vadd.xlane.f32.xlu0 %v2035
  %v2037 = vpop.xlane.xlu0 %2036
  %v2038 = vsel %vm393, %v1499, 0.0
  %v2039 = vadd.f32 %v1498, %v2038
  %2040 = vadd.xlane.f32.xlu0 %v2039
  %v2041 = vpop.xlane.xlu0 %2040
  %v2042 = vsel %vm393, %v1501, 0.0
  %v2043 = vadd.f32 %v1500, %v2042
  %2044 = vadd.xlane.f32.xlu0 %v2043
  %v2045 = vpop.xlane.xlu0 %2044
  %v2046 = vsel %vm393, %v1503, 0.0
  %v2047 = vadd.f32 %v1502, %v2046
  %2048 = vadd.xlane.f32.xlu0 %v2047
  %v2049 = vpop.xlane.xlu0 %2048
  %v2050 = vsel %vm393, %v1505, 0.0
  %v2051 = vadd.f32 %v1504, %v2050
  %2052 = vadd.xlane.f32.xlu0 %v2051
  %v2053 = vpop.xlane.xlu0 %2052
  %v2054 = vsel %vm393, %v1507, 0.0
  %v2055 = vadd.f32 %v1506, %v2054
  %2056 = vadd.xlane.f32.xlu0 %v2055
  %v2057 = vpop.xlane.xlu0 %2056
  %v2058 = vsel %vm393, %v1509, 0.0
  %v2059 = vadd.f32 %v1508, %v2058
  %2060 = vadd.xlane.f32.xlu0 %v2059
  %v2061 = vpop.xlane.xlu0 %2060
  %v2062 = vsel %vm393, %v1511, 0.0
  %v2063 = vadd.f32 %v1510, %v2062
  %2064 = vadd.xlane.f32.xlu0 %v2063
  %v2065 = vpop.xlane.xlu0 %2064
  %v2066 = vsel %vm393, %v1513, 0.0
  %v2067 = vadd.f32 %v1512, %v2066
  %2068 = vadd.xlane.f32.xlu0 %v2067
  %v2069 = vpop.xlane.xlu0 %2068
  %v2070 = vsel %vm393, %v1515, 0.0
  %v2071 = vadd.f32 %v1514, %v2070
  %2072 = vadd.xlane.f32.xlu0 %v2071
  %v2073 = vpop.xlane.xlu0 %2072
  %v2074 = vsel %vm393, %v1517, 0.0
  %v2075 = vadd.f32 %v1516, %v2074
  %2076 = vadd.xlane.f32.xlu0 %v2075
  %v2077 = vpop.xlane.xlu0 %2076
  %v2078 = vsel %vm393, %v1519, 0.0
  %v2079 = vadd.f32 %v1518, %v2078
  %2080 = vadd.xlane.f32.xlu0 %v2079
  %v2081 = vpop.xlane.xlu0 %2080
  %v2082 = vsel %vm393, %v1521, 0.0
  %v2083 = vadd.f32 %v1520, %v2082
  %2084 = vadd.xlane.f32.xlu0 %v2083
  %v2085 = vpop.xlane.xlu0 %2084
  %v2086 = vsel %vm393, %v1523, 0.0
  %v2087 = vadd.f32 %v1522, %v2086
  %2088 = vadd.xlane.f32.xlu0 %v2087
  %v2089 = vpop.xlane.xlu0 %2088
  %v2090 = vsel %vm393, %v1525, 0.0
  %v2091 = vadd.f32 %v1524, %v2090
  %2092 = vadd.xlane.f32.xlu0 %v2091
  %v2093 = vpop.xlane.xlu0 %2092
  %v2094 = vsel %vm393, %v1527, 0.0
  %v2095 = vadd.f32 %v1526, %v2094
  %2096 = vadd.xlane.f32.xlu0 %v2095
  %v2097 = vpop.xlane.xlu0 %2096
  %v2098 = vsel %vm393, %v1529, 0.0
  %v2099 = vadd.f32 %v1528, %v2098
  %2100 = vadd.xlane.f32.xlu0 %v2099
  %v2101 = vpop.xlane.xlu0 %2100
  %v2102 = vsel %vm393, %v1531, 0.0
  %v2103 = vadd.f32 %v1530, %v2102
  %2104 = vadd.xlane.f32.xlu0 %v2103
  %v2105 = vpop.xlane.xlu0 %2104
  %v2106 = vsel %vm393, %v1533, 0.0
  %v2107 = vadd.f32 %v1532, %v2106
  %2108 = vadd.xlane.f32.xlu0 %v2107
  %v2109 = vpop.xlane.xlu0 %2108
  %v2110 = vsel %vm393, %v1535, 0.0
  %v2111 = vadd.f32 %v1534, %v2110
  %2112 = vadd.xlane.f32.xlu0 %v2111
  %v2113 = vpop.xlane.xlu0 %2112
  %v2114 = vsel %vm393, %v1537, 0.0
  %v2115 = vadd.f32 %v1536, %v2114
  %2116 = vadd.xlane.f32.xlu0 %v2115
  %v2117 = vpop.xlane.xlu0 %2116
  %v2118 = vsel %vm393, %v1539, 0.0
  %v2119 = vadd.f32 %v1538, %v2118
  %2120 = vadd.xlane.f32.xlu0 %v2119
  %v2121 = vpop.xlane.xlu0 %2120
  %v2122 = vsel %vm393, %v1541, 0.0
  %v2123 = vadd.f32 %v1540, %v2122
  %2124 = vadd.xlane.f32.xlu0 %v2123
  %v2125 = vpop.xlane.xlu0 %2124
  %v2126 = vsel %vm393, %v1543, 0.0
  %v2127 = vadd.f32 %v1542, %v2126
  %2128 = vadd.xlane.f32.xlu0 %v2127
  %v2129 = vpop.xlane.xlu0 %2128
  %v2130 = vsel %vm393, %v1545, 0.0
  %v2131 = vadd.f32 %v1544, %v2130
  %2132 = vadd.xlane.f32.xlu0 %v2131
  %v2133 = vpop.xlane.xlu0 %2132
  %v2134 = vsel %vm393, %v1547, 0.0
  %v2135 = vadd.f32 %v1546, %v2134
  %2136 = vadd.xlane.f32.xlu0 %v2135
  %v2137 = vpop.xlane.xlu0 %2136
  %v2138 = vsel %vm393, %v1549, 0.0
  %v2139 = vadd.f32 %v1548, %v2138
  %2140 = vadd.xlane.f32.xlu0 %v2139
  %v2141 = vpop.xlane.xlu0 %2140
  %v2142 = vsel %vm393, %v1551, 0.0
  %v2143 = vadd.f32 %v1550, %v2142
  %2144 = vadd.xlane.f32.xlu0 %v2143
  %v2145 = vpop.xlane.xlu0 %2144
  %v2146 = vsel %vm393, %v1553, 0.0
  %v2147 = vadd.f32 %v1552, %v2146
  %2148 = vadd.xlane.f32.xlu0 %v2147
  %v2149 = vpop.xlane.xlu0 %2148
  %v2150 = vsel %vm393, %v1555, 0.0
  %v2151 = vadd.f32 %v1554, %v2150
  %2152 = vadd.xlane.f32.xlu0 %v2151
  %v2153 = vpop.xlane.xlu0 %2152
  %v2154 = vsel %vm393, %v1557, 0.0
  %v2155 = vadd.f32 %v1556, %v2154
  %2156 = vadd.xlane.f32.xlu0 %v2155
  %v2157 = vpop.xlane.xlu0 %2156
  %v2158 = vsel %vm393, %v1559, 0.0
  %v2159 = vadd.f32 %v1558, %v2158
  %2160 = vadd.xlane.f32.xlu0 %v2159
  %v2161 = vpop.xlane.xlu0 %2160
  %v2162 = vsel %vm393, %v1561, 0.0
  %v2163 = vadd.f32 %v1560, %v2162
  %2164 = vadd.xlane.f32.xlu0 %v2163
  %v2165 = vpop.xlane.xlu0 %2164
  %v2166 = vsel %vm393, %v1563, 0.0
  %v2167 = vadd.f32 %v1562, %v2166
  %2168 = vadd.xlane.f32.xlu0 %v2167
  %v2169 = vpop.xlane.xlu0 %2168
  %v2170 = vsel %vm393, %v1565, 0.0
  %v2171 = vadd.f32 %v1564, %v2170
  %2172 = vadd.xlane.f32.xlu0 %v2171
  %v2173 = vpop.xlane.xlu0 %2172
  %v2174 = vsel %vm393, %v1567, 0.0
  %v2175 = vadd.f32 %v1566, %v2174
  %2176 = vadd.xlane.f32.xlu0 %v2175
  %v2177 = vpop.xlane.xlu0 %2176
  %v2178 = vsel %vm393, %v1569, 0.0
  %v2179 = vadd.f32 %v1568, %v2178
  %2180 = vadd.xlane.f32.xlu0 %v2179
  %v2181 = vpop.xlane.xlu0 %2180
  %v2182 = vsel %vm393, %v1571, 0.0
  %v2183 = vadd.f32 %v1570, %v2182
  %2184 = vadd.xlane.f32.xlu0 %v2183
  %v2185 = vpop.xlane.xlu0 %2184
  %v2186 = vsel %vm393, %v1573, 0.0
  %v2187 = vadd.f32 %v1572, %v2186
  %2188 = vadd.xlane.f32.xlu0 %v2187
  %v2189 = vpop.xlane.xlu0 %2188
  %v2190 = vsel %vm393, %v1575, 0.0
  %v2191 = vadd.f32 %v1574, %v2190
  %2192 = vadd.xlane.f32.xlu0 %v2191
  %v2193 = vpop.xlane.xlu0 %2192
  %v2194 = vsel %vm393, %v1577, 0.0
  %v2195 = vadd.f32 %v1576, %v2194
  %2196 = vadd.xlane.f32.xlu0 %v2195
  %v2197 = vpop.xlane.xlu0 %2196
  %v2198 = vsel %vm393, %v1579, 0.0
  %v2199 = vadd.f32 %v1578, %v2198
  %2200 = vadd.xlane.f32.xlu0 %v2199
  %v2201 = vpop.xlane.xlu0 %2200
  %v2202 = vsel %vm393, %v1581, 0.0
  %v2203 = vadd.f32 %v1580, %v2202
  %2204 = vadd.xlane.f32.xlu0 %v2203
  %v2205 = vpop.xlane.xlu0 %2204
  %v2206 = vsel %vm393, %v1583, 0.0
  %v2207 = vadd.f32 %v1582, %v2206
  %2208 = vadd.xlane.f32.xlu0 %v2207
  %v2209 = vpop.xlane.xlu0 %2208
  %v2210 = vsel %vm393, %v1585, 0.0
  %v2211 = vadd.f32 %v1584, %v2210
  %2212 = vadd.xlane.f32.xlu0 %v2211
  %v2213 = vpop.xlane.xlu0 %2212
  %v2214 = vsel %vm393, %v1587, 0.0
  %v2215 = vadd.f32 %v1586, %v2214
  %2216 = vadd.xlane.f32.xlu0 %v2215
  %v2217 = vpop.xlane.xlu0 %2216
  %v2218 = vsel %vm393, %v1589, 0.0
  %v2219 = vadd.f32 %v1588, %v2218
  %2220 = vadd.xlane.f32.xlu0 %v2219
  %v2221 = vpop.xlane.xlu0 %2220
  %v2222 = vsel %vm393, %v1591, 0.0
  %v2223 = vadd.f32 %v1590, %v2222
  %2224 = vadd.xlane.f32.xlu0 %v2223
  %v2225 = vpop.xlane.xlu0 %2224
  %v2226 = vsel %vm393, %v1593, 0.0
  %v2227 = vadd.f32 %v1592, %v2226
  %2228 = vadd.xlane.f32.xlu0 %v2227
  %v2229 = vpop.xlane.xlu0 %2228
  %v2230 = vsel %vm393, %v1595, 0.0
  %v2231 = vadd.f32 %v1594, %v2230
  %2232 = vadd.xlane.f32.xlu0 %v2231
  %v2233 = vpop.xlane.xlu0 %2232
  %v2234 = vsel %vm393, %v1597, 0.0
  %v2235 = vadd.f32 %v1596, %v2234
  %2236 = vadd.xlane.f32.xlu0 %v2235
  %v2237 = vpop.xlane.xlu0 %2236
  %v2238 = vsel %vm393, %v1599, 0.0
  %v2239 = vadd.f32 %v1598, %v2238
  %2240 = vadd.xlane.f32.xlu0 %v2239
  %v2241 = vpop.xlane.xlu0 %2240
  %v2242 = vsel %vm393, %v1601, 0.0
  %v2243 = vadd.f32 %v1600, %v2242
  %2244 = vadd.xlane.f32.xlu0 %v2243
  %v2245 = vpop.xlane.xlu0 %2244
  %v2246 = vsel %vm393, %v1603, 0.0
  %v2247 = vadd.f32 %v1602, %v2246
  %2248 = vadd.xlane.f32.xlu0 %v2247
  %v2249 = vpop.xlane.xlu0 %2248
  %v2250 = vsel %vm393, %v1605, 0.0
  %v2251 = vadd.f32 %v1604, %v2250
  %2252 = vadd.xlane.f32.xlu0 %v2251
  %v2253 = vpop.xlane.xlu0 %2252
  %v2254 = vsel %vm393, %v1607, 0.0
  %v2255 = vadd.f32 %v1606, %v2254
  %2256 = vadd.xlane.f32.xlu0 %v2255
  %v2257 = vpop.xlane.xlu0 %2256
  %v2258 = vsel %vm393, %v1609, 0.0
  %v2259 = vadd.f32 %v1608, %v2258
  %2260 = vadd.xlane.f32.xlu0 %v2259
  %v2261 = vpop.xlane.xlu0 %2260
  %v2262 = vsel %vm393, %v1611, 0.0
  %v2263 = vadd.f32 %v1610, %v2262
  %2264 = vadd.xlane.f32.xlu0 %v2263
  %v2265 = vpop.xlane.xlu0 %2264
  %v2266 = vsel %vm393, %v1613, 0.0
  %v2267 = vadd.f32 %v1612, %v2266
  %2268 = vadd.xlane.f32.xlu0 %v2267
  %v2269 = vpop.xlane.xlu0 %2268
  %v2270 = vsel %vm393, %v1615, 0.0
  %v2271 = vadd.f32 %v1614, %v2270
  %2272 = vadd.xlane.f32.xlu0 %v2271
  %v2273 = vpop.xlane.xlu0 %2272
  %v2274 = vsel %vm393, %v1617, 0.0
  %v2275 = vadd.f32 %v1616, %v2274
  %2276 = vadd.xlane.f32.xlu0 %v2275
  %v2277 = vpop.xlane.xlu0 %2276
  %v2278 = vsel %vm393, %v1619, 0.0
  %v2279 = vadd.f32 %v1618, %v2278
  %2280 = vadd.xlane.f32.xlu0 %v2279
  %v2281 = vpop.xlane.xlu0 %2280
  %v2282 = vsel %vm393, %v1621, 0.0
  %v2283 = vadd.f32 %v1620, %v2282
  %2284 = vadd.xlane.f32.xlu0 %v2283
  %v2285 = vpop.xlane.xlu0 %2284
  %v2286 = vsel %vm393, %v1623, 0.0
  %v2287 = vadd.f32 %v1622, %v2286
  %2288 = vadd.xlane.f32.xlu0 %v2287
  %v2289 = vpop.xlane.xlu0 %2288
  %v2290 = vsel %vm393, %v1625, 0.0
  %v2291 = vadd.f32 %v1624, %v2290
  %2292 = vadd.xlane.f32.xlu0 %v2291
  %v2293 = vpop.xlane.xlu0 %2292
  %v2294 = vsel %vm393, %v1627, 0.0
  %v2295 = vadd.f32 %v1626, %v2294
  %2296 = vadd.xlane.f32.xlu0 %v2295
  %v2297 = vpop.xlane.xlu0 %2296
  %v2298 = vsel %vm393, %v1629, 0.0
  %v2299 = vadd.f32 %v1628, %v2298
  %2300 = vadd.xlane.f32.xlu0 %v2299
  %v2301 = vpop.xlane.xlu0 %2300
  %v2302 = vsel %vm393, %v1631, 0.0
  %v2303 = vadd.f32 %v1630, %v2302
  %2304 = vadd.xlane.f32.xlu0 %v2303
  %v2305 = vpop.xlane.xlu0 %2304
  %v2306 = vsel %vm393, %v1633, 0.0
  %v2307 = vadd.f32 %v1632, %v2306
  %2308 = vadd.xlane.f32.xlu0 %v2307
  %v2309 = vpop.xlane.xlu0 %2308
  %v2310 = vsel %vm393, %v1635, 0.0
  %v2311 = vadd.f32 %v1634, %v2310
  %2312 = vadd.xlane.f32.xlu0 %v2311
  %v2313 = vpop.xlane.xlu0 %2312
  %v2314 = vsel %vm393, %v1637, 0.0
  %v2315 = vadd.f32 %v1636, %v2314
  %2316 = vadd.xlane.f32.xlu0 %v2315
  %v2317 = vpop.xlane.xlu0 %2316
  %v2318 = vsel %vm393, %v1639, 0.0
  %v2319 = vadd.f32 %v1638, %v2318
  %2320 = vadd.xlane.f32.xlu0 %v2319
  %v2321 = vpop.xlane.xlu0 %2320
  %v2322 = vsel %vm393, %v1641, 0.0
  %v2323 = vadd.f32 %v1640, %v2322
  %2324 = vadd.xlane.f32.xlu0 %v2323
  %v2325 = vpop.xlane.xlu0 %2324
  %v2326 = vsel %vm393, %v1643, 0.0
  %v2327 = vadd.f32 %v1642, %v2326
  %2328 = vadd.xlane.f32.xlu0 %v2327
  %v2329 = vpop.xlane.xlu0 %2328
  %v2330 = vsel %vm393, %v1645, 0.0
  %v2331 = vadd.f32 %v1644, %v2330
  %2332 = vadd.xlane.f32.xlu0 %v2331
  %v2333 = vpop.xlane.xlu0 %2332
  %v2334 = vsel %vm393, %v1647, 0.0
  %v2335 = vadd.f32 %v1646, %v2334
  %2336 = vadd.xlane.f32.xlu0 %v2335
  %v2337 = vpop.xlane.xlu0 %2336
  %v2338 = vsel %vm393, %v1649, 0.0
  %v2339 = vadd.f32 %v1648, %v2338
  %2340 = vadd.xlane.f32.xlu0 %v2339
  %v2341 = vpop.xlane.xlu0 %2340
  %v2342 = vsel %vm393, %v1651, 0.0
  %v2343 = vadd.f32 %v1650, %v2342
  %2344 = vadd.xlane.f32.xlu0 %v2343
  %v2345 = vpop.xlane.xlu0 %2344
  %v2346 = vsel %vm393, %v1653, 0.0
  %v2347 = vadd.f32 %v1652, %v2346
  %2348 = vadd.xlane.f32.xlu0 %v2347
  %v2349 = vpop.xlane.xlu0 %2348
  %v2350 = vsel %vm393, %v1655, 0.0
  %v2351 = vadd.f32 %v1654, %v2350
  %2352 = vadd.xlane.f32.xlu0 %v2351
  %v2353 = vpop.xlane.xlu0 %2352
  %v2354 = vsel %vm393, %v1657, 0.0
  %v2355 = vadd.f32 %v1656, %v2354
  %2356 = vadd.xlane.f32.xlu0 %v2355
  %v2357 = vpop.xlane.xlu0 %2356
  %v2358 = vsel %vm393, %v1659, 0.0
  %v2359 = vadd.f32 %v1658, %v2358
  %2360 = vadd.xlane.f32.xlu0 %v2359
  %v2361 = vpop.xlane.xlu0 %2360
  %v2362 = vsel %vm393, %v1661, 0.0
  %v2363 = vadd.f32 %v1660, %v2362
  %2364 = vadd.xlane.f32.xlu0 %v2363
  %v2365 = vpop.xlane.xlu0 %2364
  %v2366 = vsel %vm393, %v1663, 0.0
  %v2367 = vadd.f32 %v1662, %v2366
  %2368 = vadd.xlane.f32.xlu0 %v2367
  %v2369 = vpop.xlane.xlu0 %2368
  %v2370 = vsel %vm393, %v1665, 0.0
  %v2371 = vadd.f32 %v1664, %v2370
  %2372 = vadd.xlane.f32.xlu0 %v2371
  %v2373 = vpop.xlane.xlu0 %2372
  %v2374 = vsel %vm393, %v1667, 0.0
  %v2375 = vadd.f32 %v1666, %v2374
  %2376 = vadd.xlane.f32.xlu0 %v2375
  %v2377 = vpop.xlane.xlu0 %2376
  %v2378 = vsel %vm393, %v1669, 0.0
  %v2379 = vadd.f32 %v1668, %v2378
  %2380 = vadd.xlane.f32.xlu0 %v2379
  %v2381 = vpop.xlane.xlu0 %2380
  %v2382 = vsel %vm393, %v1671, 0.0
  %v2383 = vadd.f32 %v1670, %v2382
  %2384 = vadd.xlane.f32.xlu0 %v2383
  %v2385 = vpop.xlane.xlu0 %2384
  %v2386 = vsel %vm393, %v1673, 0.0
  %v2387 = vadd.f32 %v1672, %v2386
  %2388 = vadd.xlane.f32.xlu0 %v2387
  %v2389 = vpop.xlane.xlu0 %2388
  %v2390 = vsel %vm393, %v1675, 0.0
  %v2391 = vadd.f32 %v1674, %v2390
  %2392 = vadd.xlane.f32.xlu0 %v2391
  %v2393 = vpop.xlane.xlu0 %2392
  %v2394 = vsel %vm393, %v1677, 0.0
  %v2395 = vadd.f32 %v1676, %v2394
  %2396 = vadd.xlane.f32.xlu0 %v2395
  %v2397 = vpop.xlane.xlu0 %2396
  %v2398 = vsel %vm393, %v1679, 0.0
  %v2399 = vadd.f32 %v1678, %v2398
  %2400 = vadd.xlane.f32.xlu0 %v2399
  %v2401 = vpop.xlane.xlu0 %2400
  %v2402 = vsel %vm393, %v1681, 0.0
  %v2403 = vadd.f32 %v1680, %v2402
  %2404 = vadd.xlane.f32.xlu0 %v2403
  %v2405 = vpop.xlane.xlu0 %2404
  %v2406 = vsel %vm393, %v1683, 0.0
  %v2407 = vadd.f32 %v1682, %v2406
  %2408 = vadd.xlane.f32.xlu0 %v2407
  %v2409 = vpop.xlane.xlu0 %2408
  %v2410 = vsel %vm393, %v1685, 0.0
  %v2411 = vadd.f32 %v1684, %v2410
  %2412 = vadd.xlane.f32.xlu0 %v2411
  %v2413 = vpop.xlane.xlu0 %2412
  %v2414 = vsel %vm393, %v1687, 0.0
  %v2415 = vadd.f32 %v1686, %v2414
  %2416 = vadd.xlane.f32.xlu0 %v2415
  %v2417 = vpop.xlane.xlu0 %2416
  %v2418 = vsel %vm393, %v1689, 0.0
  %v2419 = vadd.f32 %v1688, %v2418
  %2420 = vadd.xlane.f32.xlu0 %v2419
  %v2421 = vpop.xlane.xlu0 %2420
  %v2422 = vsel %vm393, %v1691, 0.0
  %v2423 = vadd.f32 %v1690, %v2422
  %2424 = vadd.xlane.f32.xlu0 %v2423
  %v2425 = vpop.xlane.xlu0 %2424
  %v2426 = vsel %vm393, %v1693, 0.0
  %v2427 = vadd.f32 %v1692, %v2426
  %2428 = vadd.xlane.f32.xlu0 %v2427
  %v2429 = vpop.xlane.xlu0 %2428
  %v2430 = vsel %vm393, %v1695, 0.0
  %v2431 = vadd.f32 %v1694, %v2430
  %2432 = vadd.xlane.f32.xlu0 %v2431
  %v2433 = vpop.xlane.xlu0 %2432
  %v2434 = vsel %vm393, %v1697, 0.0
  %v2435 = vadd.f32 %v1696, %v2434
  %2436 = vadd.xlane.f32.xlu0 %v2435
  %v2437 = vpop.xlane.xlu0 %2436
  %v2438 = vsel %vm393, %v1699, 0.0
  %v2439 = vadd.f32 %v1698, %v2438
  %2440 = vadd.xlane.f32.xlu0 %v2439
  %v2441 = vpop.xlane.xlu0 %2440
  %v2442 = vsel %vm393, %v1701, 0.0
  %v2443 = vadd.f32 %v1700, %v2442
  %2444 = vadd.xlane.f32.xlu0 %v2443
  %v2445 = vpop.xlane.xlu0 %2444
  %v2446 = vsel %vm393, %v1703, 0.0
  %v2447 = vadd.f32 %v1702, %v2446
  %2448 = vadd.xlane.f32.xlu0 %v2447
  %v2449 = vpop.xlane.xlu0 %2448
  %v2450 = vsel %vm393, %v1705, 0.0
  %v2451 = vadd.f32 %v1704, %v2450
  %2452 = vadd.xlane.f32.xlu0 %v2451
  %v2453 = vpop.xlane.xlu0 %2452
  %v2454 = vsel %vm393, %v1707, 0.0
  %v2455 = vadd.f32 %v1706, %v2454
  %2456 = vadd.xlane.f32.xlu0 %v2455
  %v2457 = vpop.xlane.xlu0 %2456
  %v2458 = vsel %vm393, %v1709, 0.0
  %v2459 = vadd.f32 %v1708, %v2458
  %2460 = vadd.xlane.f32.xlu0 %v2459
  %v2461 = vpop.xlane.xlu0 %2460
  %v2462 = vmul.f32 %v1713, 0.0051020407
  %v2463 = vmul.f32 %v1717, 0.0051020407
  %v2464 = vmul.f32 %v1721, 0.0051020407
  %v2465 = vmul.f32 %v1725, 0.0051020407
  %v2466 = vmul.f32 %v1729, 0.0051020407
  %v2467 = vmul.f32 %v1733, 0.0051020407
  %v2468 = vmul.f32 %v1737, 0.0051020407
  %v2469 = vmul.f32 %v1741, 0.0051020407
  %v2470 = vmul.f32 %v1745, 0.0051020407
  %v2471 = vmul.f32 %v1749, 0.0051020407
  %v2472 = vmul.f32 %v1753, 0.0051020407
  %v2473 = vmul.f32 %v1757, 0.0051020407
  %v2474 = vmul.f32 %v1761, 0.0051020407
  %v2475 = vmul.f32 %v1765, 0.0051020407
  %v2476 = vmul.f32 %v1769, 0.0051020407
  %v2477 = vmul.f32 %v1773, 0.0051020407
  %v2478 = vmul.f32 %v1777, 0.0051020407
  %v2479 = vmul.f32 %v1781, 0.0051020407
  %v2480 = vmul.f32 %v1785, 0.0051020407
  %v2481 = vmul.f32 %v1789, 0.0051020407
  %v2482 = vmul.f32 %v1793, 0.0051020407
  %v2483 = vmul.f32 %v1797, 0.0051020407
  %v2484 = vmul.f32 %v1801, 0.0051020407
  %v2485 = vmul.f32 %v1805, 0.0051020407
  %v2486 = vmul.f32 %v1809, 0.0051020407
  %v2487 = vmul.f32 %v1813, 0.0051020407
  %v2488 = vmul.f32 %v1817, 0.0051020407
  %v2489 = vmul.f32 %v1821, 0.0051020407
  %v2490 = vmul.f32 %v1825, 0.0051020407
  %v2491 = vmul.f32 %v1829, 0.0051020407
  %v2492 = vmul.f32 %v1833, 0.0051020407
  %v2493 = vmul.f32 %v1837, 0.0051020407
  %v2494 = vmul.f32 %v1841, 0.0051020407
  %v2495 = vmul.f32 %v1845, 0.0051020407
  %v2496 = vmul.f32 %v1849, 0.0051020407
  %v2497 = vmul.f32 %v1853, 0.0051020407
  %v2498 = vmul.f32 %v1857, 0.0051020407
  %v2499 = vmul.f32 %v1861, 0.0051020407
  %v2500 = vmul.f32 %v1865, 0.0051020407
  %v2501 = vmul.f32 %v1869, 0.0051020407
  %v2502 = vmul.f32 %v1873, 0.0051020407
  %v2503 = vmul.f32 %v1877, 0.0051020407
  %v2504 = vmul.f32 %v1881, 0.0051020407
  %v2505 = vmul.f32 %v1885, 0.0051020407
  %v2506 = vmul.f32 %v1889, 0.0051020407
  %v2507 = vmul.f32 %v1893, 0.0051020407
  %v2508 = vmul.f32 %v1897, 0.0051020407
  %v2509 = vmul.f32 %v1901, 0.0051020407
  %v2510 = vmul.f32 %v1905, 0.0051020407
  %v2511 = vmul.f32 %v1909, 0.0051020407
  %v2512 = vmul.f32 %v1913, 0.0051020407
  %v2513 = vmul.f32 %v1917, 0.0051020407
  %v2514 = vmul.f32 %v1921, 0.0051020407
  %v2515 = vmul.f32 %v1925, 0.0051020407
  %v2516 = vmul.f32 %v1929, 0.0051020407
  %v2517 = vmul.f32 %v1933, 0.0051020407
  %v2518 = vmul.f32 %v1937, 0.0051020407
  %v2519 = vmul.f32 %v1941, 0.0051020407
  %v2520 = vmul.f32 %v1945, 0.0051020407
  %v2521 = vmul.f32 %v1949, 0.0051020407
  %v2522 = vmul.f32 %v1953, 0.0051020407
  %v2523 = vmul.f32 %v1957, 0.0051020407
  %v2524 = vmul.f32 %v1961, 0.0051020407
  %v2525 = vmul.f32 %v1965, 0.0051020407
  %v2526 = vmul.f32 %v1969, 0.0051020407
  %v2527 = vmul.f32 %v1973, 0.0051020407
  %v2528 = vmul.f32 %v1977, 0.0051020407
  %v2529 = vmul.f32 %v1981, 0.0051020407
  %v2530 = vmul.f32 %v1985, 0.0051020407
  %v2531 = vmul.f32 %v1989, 0.0051020407
  %v2532 = vmul.f32 %v1993, 0.0051020407
  %v2533 = vmul.f32 %v1997, 0.0051020407
  %v2534 = vmul.f32 %v2001, 0.0051020407
  %v2535 = vmul.f32 %v2005, 0.0051020407
  %v2536 = vmul.f32 %v2009, 0.0051020407
  %v2537 = vmul.f32 %v2013, 0.0051020407
  %v2538 = vmul.f32 %v2017, 0.0051020407
  %v2539 = vmul.f32 %v2021, 0.0051020407
  %v2540 = vmul.f32 %v2025, 0.0051020407
  %v2541 = vmul.f32 %v2029, 0.0051020407
  %v2542 = vmul.f32 %v2033, 0.0051020407
  %v2543 = vmul.f32 %v2037, 0.0051020407
  %v2544 = vmul.f32 %v2041, 0.0051020407
  %v2545 = vmul.f32 %v2045, 0.0051020407
  %v2546 = vmul.f32 %v2049, 0.0051020407
  %v2547 = vmul.f32 %v2053, 0.0051020407
  %v2548 = vmul.f32 %v2057, 0.0051020407
  %v2549 = vmul.f32 %v2061, 0.0051020407
  %v2550 = vmul.f32 %v2065, 0.0051020407
  %v2551 = vmul.f32 %v2069, 0.0051020407
  %v2552 = vmul.f32 %v2073, 0.0051020407
  %v2553 = vmul.f32 %v2077, 0.0051020407
  %v2554 = vmul.f32 %v2081, 0.0051020407
  %v2555 = vmul.f32 %v2085, 0.0051020407
  %v2556 = vmul.f32 %v2089, 0.0051020407
  %v2557 = vmul.f32 %v2093, 0.0051020407
  %v2558 = vmul.f32 %v2097, 0.0051020407
  %v2559 = vmul.f32 %v2101, 0.0051020407
  %v2560 = vmul.f32 %v2105, 0.0051020407
  %v2561 = vmul.f32 %v2109, 0.0051020407
  %v2562 = vmul.f32 %v2113, 0.0051020407
  %v2563 = vmul.f32 %v2117, 0.0051020407
  %v2564 = vmul.f32 %v2121, 0.0051020407
  %v2565 = vmul.f32 %v2125, 0.0051020407
  %v2566 = vmul.f32 %v2129, 0.0051020407
  %v2567 = vmul.f32 %v2133, 0.0051020407
  %v2568 = vmul.f32 %v2137, 0.0051020407
  %v2569 = vmul.f32 %v2141, 0.0051020407
  %v2570 = vmul.f32 %v2145, 0.0051020407
  %v2571 = vmul.f32 %v2149, 0.0051020407
  %v2572 = vmul.f32 %v2153, 0.0051020407
  %v2573 = vmul.f32 %v2157, 0.0051020407
  %v2574 = vmul.f32 %v2161, 0.0051020407
  %v2575 = vmul.f32 %v2165, 0.0051020407
  %v2576 = vmul.f32 %v2169, 0.0051020407
  %v2577 = vmul.f32 %v2173, 0.0051020407
  %v2578 = vmul.f32 %v2177, 0.0051020407
  %v2579 = vmul.f32 %v2181, 0.0051020407
  %v2580 = vmul.f32 %v2185, 0.0051020407
  %v2581 = vmul.f32 %v2189, 0.0051020407
  %v2582 = vmul.f32 %v2193, 0.0051020407
  %v2583 = vmul.f32 %v2197, 0.0051020407
  %v2584 = vmul.f32 %v2201, 0.0051020407
  %v2585 = vmul.f32 %v2205, 0.0051020407
  %v2586 = vmul.f32 %v2209, 0.0051020407
  %v2587 = vmul.f32 %v2213, 0.0051020407
  %v2588 = vmul.f32 %v2217, 0.0051020407
  %v2589 = vmul.f32 %v2221, 0.0051020407
  %v2590 = vmul.f32 %v2225, 0.0051020407
  %v2591 = vmul.f32 %v2229, 0.0051020407
  %v2592 = vmul.f32 %v2233, 0.0051020407
  %v2593 = vmul.f32 %v2237, 0.0051020407
  %v2594 = vmul.f32 %v2241, 0.0051020407
  %v2595 = vmul.f32 %v2245, 0.0051020407
  %v2596 = vmul.f32 %v2249, 0.0051020407
  %v2597 = vmul.f32 %v2253, 0.0051020407
  %v2598 = vmul.f32 %v2257, 0.0051020407
  %v2599 = vmul.f32 %v2261, 0.0051020407
  %v2600 = vmul.f32 %v2265, 0.0051020407
  %v2601 = vmul.f32 %v2269, 0.0051020407
  %v2602 = vmul.f32 %v2273, 0.0051020407
  %v2603 = vmul.f32 %v2277, 0.0051020407
  %v2604 = vmul.f32 %v2281, 0.0051020407
  %v2605 = vmul.f32 %v2285, 0.0051020407
  %v2606 = vmul.f32 %v2289, 0.0051020407
  %v2607 = vmul.f32 %v2293, 0.0051020407
  %v2608 = vmul.f32 %v2297, 0.0051020407
  %v2609 = vmul.f32 %v2301, 0.0051020407
  %v2610 = vmul.f32 %v2305, 0.0051020407
  %v2611 = vmul.f32 %v2309, 0.0051020407
  %v2612 = vmul.f32 %v2313, 0.0051020407
  %v2613 = vmul.f32 %v2317, 0.0051020407
  %v2614 = vmul.f32 %v2321, 0.0051020407
  %v2615 = vmul.f32 %v2325, 0.0051020407
  %v2616 = vmul.f32 %v2329, 0.0051020407
  %v2617 = vmul.f32 %v2333, 0.0051020407
  %v2618 = vmul.f32 %v2337, 0.0051020407
  %v2619 = vmul.f32 %v2341, 0.0051020407
  %v2620 = vmul.f32 %v2345, 0.0051020407
  %v2621 = vmul.f32 %v2349, 0.0051020407
  %v2622 = vmul.f32 %v2353, 0.0051020407
  %v2623 = vmul.f32 %v2357, 0.0051020407
  %v2624 = vmul.f32 %v2361, 0.0051020407
  %v2625 = vmul.f32 %v2365, 0.0051020407
  %v2626 = vmul.f32 %v2369, 0.0051020407
  %v2627 = vmul.f32 %v2373, 0.0051020407
  %v2628 = vmul.f32 %v2377, 0.0051020407
  %v2629 = vmul.f32 %v2381, 0.0051020407
  %v2630 = vmul.f32 %v2385, 0.0051020407
  %v2631 = vmul.f32 %v2389, 0.0051020407
  %v2632 = vmul.f32 %v2393, 0.0051020407
  %v2633 = vmul.f32 %v2397, 0.0051020407
  %v2634 = vmul.f32 %v2401, 0.0051020407
  %v2635 = vmul.f32 %v2405, 0.0051020407
  %v2636 = vmul.f32 %v2409, 0.0051020407
  %v2637 = vmul.f32 %v2413, 0.0051020407
  %v2638 = vmul.f32 %v2417, 0.0051020407
  %v2639 = vmul.f32 %v2421, 0.0051020407
  %v2640 = vmul.f32 %v2425, 0.0051020407
  %v2641 = vmul.f32 %v2429, 0.0051020407
  %v2642 = vmul.f32 %v2433, 0.0051020407
  %v2643 = vmul.f32 %v2437, 0.0051020407
  %v2644 = vmul.f32 %v2441, 0.0051020407
  %v2645 = vmul.f32 %v2445, 0.0051020407
  %v2646 = vmul.f32 %v2449, 0.0051020407
  %v2647 = vmul.f32 %v2453, 0.0051020407
  %v2648 = vmul.f32 %v2457, 0.0051020407
  %v2649 = vmul.f32 %v2461, 0.0051020407
  %v2650 = vmul.f32 %v1146, %v1146
  %v2651 = vmul.f32 %v1147, %v1147
  %v2652 = vmul.f32 %v1148, %v1148
  %v2653 = vmul.f32 %v1149, %v1149
  %v2654 = vmul.f32 %v1150, %v1150
  %v2655 = vmul.f32 %v1151, %v1151
  %v2656 = vmul.f32 %v1152, %v1152
  %v2657 = vmul.f32 %v1153, %v1153
  %v2658 = vmul.f32 %v1154, %v1154
  %v2659 = vmul.f32 %v1155, %v1155
  %v2660 = vmul.f32 %v1156, %v1156
  %v2661 = vmul.f32 %v1157, %v1157
  %v2662 = vmul.f32 %v1158, %v1158
  %v2663 = vmul.f32 %v1159, %v1159
  %v2664 = vmul.f32 %v1160, %v1160
  %v2665 = vmul.f32 %v1161, %v1161
  %v2666 = vmul.f32 %v1162, %v1162
  %v2667 = vmul.f32 %v1163, %v1163
  %v2668 = vmul.f32 %v1164, %v1164
  %v2669 = vmul.f32 %v1165, %v1165
  %v2670 = vmul.f32 %v1166, %v1166
  %v2671 = vmul.f32 %v1167, %v1167
  %v2672 = vmul.f32 %v1168, %v1168
  %v2673 = vmul.f32 %v1169, %v1169
  %v2674 = vmul.f32 %v1170, %v1170
  %v2675 = vmul.f32 %v1171, %v1171
  %v2676 = vmul.f32 %v1172, %v1172
  %v2677 = vmul.f32 %v1173, %v1173
  %v2678 = vmul.f32 %v1174, %v1174
  %v2679 = vmul.f32 %v1175, %v1175
  %v2680 = vmul.f32 %v1176, %v1176
  %v2681 = vmul.f32 %v1177, %v1177
  %v2682 = vmul.f32 %v1178, %v1178
  %v2683 = vmul.f32 %v1179, %v1179
  %v2684 = vmul.f32 %v1180, %v1180
  %v2685 = vmul.f32 %v1181, %v1181
  %v2686 = vmul.f32 %v1182, %v1182
  %v2687 = vmul.f32 %v1183, %v1183
  %v2688 = vmul.f32 %v1184, %v1184
  %v2689 = vmul.f32 %v1185, %v1185
  %v2690 = vmul.f32 %v1186, %v1186
  %v2691 = vmul.f32 %v1187, %v1187
  %v2692 = vmul.f32 %v1188, %v1188
  %v2693 = vmul.f32 %v1189, %v1189
  %v2694 = vmul.f32 %v1190, %v1190
  %v2695 = vmul.f32 %v1191, %v1191
  %v2696 = vmul.f32 %v1192, %v1192
  %v2697 = vmul.f32 %v1193, %v1193
  %v2698 = vmul.f32 %v1194, %v1194
  %v2699 = vmul.f32 %v1195, %v1195
  %v2700 = vmul.f32 %v1196, %v1196
  %v2701 = vmul.f32 %v1197, %v1197
  %v2702 = vmul.f32 %v1198, %v1198
  %v2703 = vmul.f32 %v1199, %v1199
  %v2704 = vmul.f32 %v1200, %v1200
  %v2705 = vmul.f32 %v1201, %v1201
  %v2706 = vmul.f32 %v1202, %v1202
  %v2707 = vmul.f32 %v1203, %v1203
  %v2708 = vmul.f32 %v1204, %v1204
  %v2709 = vmul.f32 %v1205, %v1205
  %v2710 = vmul.f32 %v1206, %v1206
  %v2711 = vmul.f32 %v1207, %v1207
  %v2712 = vmul.f32 %v1208, %v1208
  %v2713 = vmul.f32 %v1209, %v1209
  %v2714 = vmul.f32 %v1210, %v1210
  %v2715 = vmul.f32 %v1211, %v1211
  %v2716 = vmul.f32 %v1212, %v1212
  %v2717 = vmul.f32 %v1213, %v1213
  %v2718 = vmul.f32 %v1214, %v1214
  %v2719 = vmul.f32 %v1215, %v1215
  %v2720 = vmul.f32 %v1216, %v1216
  %v2721 = vmul.f32 %v1217, %v1217
  %v2722 = vmul.f32 %v1218, %v1218
  %v2723 = vmul.f32 %v1219, %v1219
  %v2724 = vmul.f32 %v1220, %v1220
  %v2725 = vmul.f32 %v1221, %v1221
  %v2726 = vmul.f32 %v1222, %v1222
  %v2727 = vmul.f32 %v1223, %v1223
  %v2728 = vmul.f32 %v1224, %v1224
  %v2729 = vmul.f32 %v1225, %v1225
  %v2730 = vmul.f32 %v1226, %v1226
  %v2731 = vmul.f32 %v1227, %v1227
  %v2732 = vmul.f32 %v1228, %v1228
  %v2733 = vmul.f32 %v1229, %v1229
  %v2734 = vmul.f32 %v1230, %v1230
  %v2735 = vmul.f32 %v1231, %v1231
  %v2736 = vmul.f32 %v1232, %v1232
  %v2737 = vmul.f32 %v1233, %v1233
  %v2738 = vmul.f32 %v1234, %v1234
  %v2739 = vmul.f32 %v1235, %v1235
  %v2740 = vmul.f32 %v1236, %v1236
  %v2741 = vmul.f32 %v1237, %v1237
  %v2742 = vmul.f32 %v1238, %v1238
  %v2743 = vmul.f32 %v1239, %v1239
  %v2744 = vmul.f32 %v1240, %v1240
  %v2745 = vmul.f32 %v1241, %v1241
  %v2746 = vmul.f32 %v1242, %v1242
  %v2747 = vmul.f32 %v1243, %v1243
  %v2748 = vmul.f32 %v1244, %v1244
  %v2749 = vmul.f32 %v1245, %v1245
  %v2750 = vmul.f32 %v1246, %v1246
  %v2751 = vmul.f32 %v1247, %v1247
  %v2752 = vmul.f32 %v1248, %v1248
  %v2753 = vmul.f32 %v1249, %v1249
  %v2754 = vmul.f32 %v1250, %v1250
  %v2755 = vmul.f32 %v1251, %v1251
  %v2756 = vmul.f32 %v1252, %v1252
  %v2757 = vmul.f32 %v1253, %v1253
  %v2758 = vmul.f32 %v1254, %v1254
  %v2759 = vmul.f32 %v1255, %v1255
  %v2760 = vmul.f32 %v1256, %v1256
  %v2761 = vmul.f32 %v1257, %v1257
  %v2762 = vmul.f32 %v1258, %v1258
  %v2763 = vmul.f32 %v1259, %v1259
  %v2764 = vmul.f32 %v1260, %v1260
  %v2765 = vmul.f32 %v1261, %v1261
  %v2766 = vmul.f32 %v1262, %v1262
  %v2767 = vmul.f32 %v1263, %v1263
  %v2768 = vmul.f32 %v1264, %v1264
  %v2769 = vmul.f32 %v1265, %v1265
  %v2770 = vmul.f32 %v1266, %v1266
  %v2771 = vmul.f32 %v1267, %v1267
  %v2772 = vmul.f32 %v1268, %v1268
  %v2773 = vmul.f32 %v1269, %v1269
  %v2774 = vmul.f32 %v1270, %v1270
  %v2775 = vmul.f32 %v1271, %v1271
  %v2776 = vmul.f32 %v1272, %v1272
  %v2777 = vmul.f32 %v1273, %v1273
  %v2778 = vmul.f32 %v1274, %v1274
  %v2779 = vmul.f32 %v1275, %v1275
  %v2780 = vmul.f32 %v1276, %v1276
  %v2781 = vmul.f32 %v1277, %v1277
  %v2782 = vmul.f32 %v1278, %v1278
  %v2783 = vmul.f32 %v1279, %v1279
  %v2784 = vmul.f32 %v1280, %v1280
  %v2785 = vmul.f32 %v1281, %v1281
  %v2786 = vmul.f32 %v1282, %v1282
  %v2787 = vmul.f32 %v1283, %v1283
  %v2788 = vmul.f32 %v1284, %v1284
  %v2789 = vmul.f32 %v1285, %v1285
  %v2790 = vmul.f32 %v1286, %v1286
  %v2791 = vmul.f32 %v1287, %v1287
  %v2792 = vmul.f32 %v1288, %v1288
  %v2793 = vmul.f32 %v1289, %v1289
  %v2794 = vmul.f32 %v1290, %v1290
  %v2795 = vmul.f32 %v1291, %v1291
  %v2796 = vmul.f32 %v1292, %v1292
  %v2797 = vmul.f32 %v1293, %v1293
  %v2798 = vmul.f32 %v1294, %v1294
  %v2799 = vmul.f32 %v1295, %v1295
  %v2800 = vmul.f32 %v1296, %v1296
  %v2801 = vmul.f32 %v1297, %v1297
  %v2802 = vmul.f32 %v1298, %v1298
  %v2803 = vmul.f32 %v1299, %v1299
  %v2804 = vmul.f32 %v1300, %v1300
  %v2805 = vmul.f32 %v1301, %v1301
  %v2806 = vmul.f32 %v1302, %v1302
  %v2807 = vmul.f32 %v1303, %v1303
  %v2808 = vmul.f32 %v1304, %v1304
  %v2809 = vmul.f32 %v1305, %v1305
  %v2810 = vmul.f32 %v1306, %v1306
  %v2811 = vmul.f32 %v1307, %v1307
  %v2812 = vmul.f32 %v1308, %v1308
  %v2813 = vmul.f32 %v1309, %v1309
  %v2814 = vmul.f32 %v1310, %v1310
  %v2815 = vmul.f32 %v1311, %v1311
  %v2816 = vmul.f32 %v1312, %v1312
  %v2817 = vmul.f32 %v1313, %v1313
  %v2818 = vmul.f32 %v1314, %v1314
  %v2819 = vmul.f32 %v1315, %v1315
  %v2820 = vmul.f32 %v1316, %v1316
  %v2821 = vmul.f32 %v1317, %v1317
  %v2822 = vmul.f32 %v1318, %v1318
  %v2823 = vmul.f32 %v1319, %v1319
  %v2824 = vmul.f32 %v1320, %v1320
  %v2825 = vmul.f32 %v1321, %v1321
  %v2826 = vmul.f32 %v1322, %v1322
  %v2827 = vmul.f32 %v1323, %v1323
  %v2828 = vmul.f32 %v1324, %v1324
  %v2829 = vmul.f32 %v1325, %v1325
  %v2830 = vmul.f32 %v1326, %v1326
  %v2831 = vmul.f32 %v1327, %v1327
  %v2832 = vmul.f32 %v1328, %v1328
  %v2833 = vmul.f32 %v1329, %v1329
  %v2834 = vmul.f32 %v1330, %v1330
  %v2835 = vmul.f32 %v1331, %v1331
  %v2836 = vmul.f32 %v1332, %v1332
  %v2837 = vmul.f32 %v1333, %v1333
  %v2838 = vsub.f32 %v2462, %v2650
  %v2839 = vsub.f32 %v2463, %v2651
  %v2840 = vsub.f32 %v2464, %v2652
  %v2841 = vsub.f32 %v2465, %v2653
  %v2842 = vsub.f32 %v2466, %v2654
  %v2843 = vsub.f32 %v2467, %v2655
  %v2844 = vsub.f32 %v2468, %v2656
  %v2845 = vsub.f32 %v2469, %v2657
  %v2846 = vsub.f32 %v2470, %v2658
  %v2847 = vsub.f32 %v2471, %v2659
  %v2848 = vsub.f32 %v2472, %v2660
  %v2849 = vsub.f32 %v2473, %v2661
  %v2850 = vsub.f32 %v2474, %v2662
  %v2851 = vsub.f32 %v2475, %v2663
  %v2852 = vsub.f32 %v2476, %v2664
  %v2853 = vsub.f32 %v2477, %v2665
  %v2854 = vsub.f32 %v2478, %v2666
  %v2855 = vsub.f32 %v2479, %v2667
  %v2856 = vsub.f32 %v2480, %v2668
  %v2857 = vsub.f32 %v2481, %v2669
  %v2858 = vsub.f32 %v2482, %v2670
  %v2859 = vsub.f32 %v2483, %v2671
  %v2860 = vsub.f32 %v2484, %v2672
  %v2861 = vsub.f32 %v2485, %v2673
  %v2862 = vsub.f32 %v2486, %v2674
  %v2863 = vsub.f32 %v2487, %v2675
  %v2864 = vsub.f32 %v2488, %v2676
  %v2865 = vsub.f32 %v2489, %v2677
  %v2866 = vsub.f32 %v2490, %v2678
  %v2867 = vsub.f32 %v2491, %v2679
  %v2868 = vsub.f32 %v2492, %v2680
  %v2869 = vsub.f32 %v2493, %v2681
  %v2870 = vsub.f32 %v2494, %v2682
  %v2871 = vsub.f32 %v2495, %v2683
  %v2872 = vsub.f32 %v2496, %v2684
  %v2873 = vsub.f32 %v2497, %v2685
  %v2874 = vsub.f32 %v2498, %v2686
  %v2875 = vsub.f32 %v2499, %v2687
  %v2876 = vsub.f32 %v2500, %v2688
  %v2877 = vsub.f32 %v2501, %v2689
  %v2878 = vsub.f32 %v2502, %v2690
  %v2879 = vsub.f32 %v2503, %v2691
  %v2880 = vsub.f32 %v2504, %v2692
  %v2881 = vsub.f32 %v2505, %v2693
  %v2882 = vsub.f32 %v2506, %v2694
  %v2883 = vsub.f32 %v2507, %v2695
  %v2884 = vsub.f32 %v2508, %v2696
  %v2885 = vsub.f32 %v2509, %v2697
  %v2886 = vsub.f32 %v2510, %v2698
  %v2887 = vsub.f32 %v2511, %v2699
  %v2888 = vsub.f32 %v2512, %v2700
  %v2889 = vsub.f32 %v2513, %v2701
  %v2890 = vsub.f32 %v2514, %v2702
  %v2891 = vsub.f32 %v2515, %v2703
  %v2892 = vsub.f32 %v2516, %v2704
  %v2893 = vsub.f32 %v2517, %v2705
  %v2894 = vsub.f32 %v2518, %v2706
  %v2895 = vsub.f32 %v2519, %v2707
  %v2896 = vsub.f32 %v2520, %v2708
  %v2897 = vsub.f32 %v2521, %v2709
  %v2898 = vsub.f32 %v2522, %v2710
  %v2899 = vsub.f32 %v2523, %v2711
  %v2900 = vsub.f32 %v2524, %v2712
  %v2901 = vsub.f32 %v2525, %v2713
  %v2902 = vsub.f32 %v2526, %v2714
  %v2903 = vsub.f32 %v2527, %v2715
  %v2904 = vsub.f32 %v2528, %v2716
  %v2905 = vsub.f32 %v2529, %v2717
  %v2906 = vsub.f32 %v2530, %v2718
  %v2907 = vsub.f32 %v2531, %v2719
  %v2908 = vsub.f32 %v2532, %v2720
  %v2909 = vsub.f32 %v2533, %v2721
  %v2910 = vsub.f32 %v2534, %v2722
  %v2911 = vsub.f32 %v2535, %v2723
  %v2912 = vsub.f32 %v2536, %v2724
  %v2913 = vsub.f32 %v2537, %v2725
  %v2914 = vsub.f32 %v2538, %v2726
  %v2915 = vsub.f32 %v2539, %v2727
  %v2916 = vsub.f32 %v2540, %v2728
  %v2917 = vsub.f32 %v2541, %v2729
  %v2918 = vsub.f32 %v2542, %v2730
  %v2919 = vsub.f32 %v2543, %v2731
  %v2920 = vsub.f32 %v2544, %v2732
  %v2921 = vsub.f32 %v2545, %v2733
  %v2922 = vsub.f32 %v2546, %v2734
  %v2923 = vsub.f32 %v2547, %v2735
  %v2924 = vsub.f32 %v2548, %v2736
  %v2925 = vsub.f32 %v2549, %v2737
  %v2926 = vsub.f32 %v2550, %v2738
  %v2927 = vsub.f32 %v2551, %v2739
  %v2928 = vsub.f32 %v2552, %v2740
  %v2929 = vsub.f32 %v2553, %v2741
  %v2930 = vsub.f32 %v2554, %v2742
  %v2931 = vsub.f32 %v2555, %v2743
  %v2932 = vsub.f32 %v2556, %v2744
  %v2933 = vsub.f32 %v2557, %v2745
  %v2934 = vsub.f32 %v2558, %v2746
  %v2935 = vsub.f32 %v2559, %v2747
  %v2936 = vsub.f32 %v2560, %v2748
  %v2937 = vsub.f32 %v2561, %v2749
  %v2938 = vsub.f32 %v2562, %v2750
  %v2939 = vsub.f32 %v2563, %v2751
  %v2940 = vsub.f32 %v2564, %v2752
  %v2941 = vsub.f32 %v2565, %v2753
  %v2942 = vsub.f32 %v2566, %v2754
  %v2943 = vsub.f32 %v2567, %v2755
  %v2944 = vsub.f32 %v2568, %v2756
  %v2945 = vsub.f32 %v2569, %v2757
  %v2946 = vsub.f32 %v2570, %v2758
  %v2947 = vsub.f32 %v2571, %v2759
  %v2948 = vsub.f32 %v2572, %v2760
  %v2949 = vsub.f32 %v2573, %v2761
  %v2950 = vsub.f32 %v2574, %v2762
  %v2951 = vsub.f32 %v2575, %v2763
  %v2952 = vsub.f32 %v2576, %v2764
  %v2953 = vsub.f32 %v2577, %v2765
  %v2954 = vsub.f32 %v2578, %v2766
  %v2955 = vsub.f32 %v2579, %v2767
  %v2956 = vsub.f32 %v2580, %v2768
  %v2957 = vsub.f32 %v2581, %v2769
  %v2958 = vsub.f32 %v2582, %v2770
  %v2959 = vsub.f32 %v2583, %v2771
  %v2960 = vsub.f32 %v2584, %v2772
  %v2961 = vsub.f32 %v2585, %v2773
  %v2962 = vsub.f32 %v2586, %v2774
  %v2963 = vsub.f32 %v2587, %v2775
  %v2964 = vsub.f32 %v2588, %v2776
  %v2965 = vsub.f32 %v2589, %v2777
  %v2966 = vsub.f32 %v2590, %v2778
  %v2967 = vsub.f32 %v2591, %v2779
  %v2968 = vsub.f32 %v2592, %v2780
  %v2969 = vsub.f32 %v2593, %v2781
  %v2970 = vsub.f32 %v2594, %v2782
  %v2971 = vsub.f32 %v2595, %v2783
  %v2972 = vsub.f32 %v2596, %v2784
  %v2973 = vsub.f32 %v2597, %v2785
  %v2974 = vsub.f32 %v2598, %v2786
  %v2975 = vsub.f32 %v2599, %v2787
  %v2976 = vsub.f32 %v2600, %v2788
  %v2977 = vsub.f32 %v2601, %v2789
  %v2978 = vsub.f32 %v2602, %v2790
  %v2979 = vsub.f32 %v2603, %v2791
  %v2980 = vsub.f32 %v2604, %v2792
  %v2981 = vsub.f32 %v2605, %v2793
  %v2982 = vsub.f32 %v2606, %v2794
  %v2983 = vsub.f32 %v2607, %v2795
  %v2984 = vsub.f32 %v2608, %v2796
  %v2985 = vsub.f32 %v2609, %v2797
  %v2986 = vsub.f32 %v2610, %v2798
  %v2987 = vsub.f32 %v2611, %v2799
  %v2988 = vsub.f32 %v2612, %v2800
  %v2989 = vsub.f32 %v2613, %v2801
  %v2990 = vsub.f32 %v2614, %v2802
  %v2991 = vsub.f32 %v2615, %v2803
  %v2992 = vsub.f32 %v2616, %v2804
  %v2993 = vsub.f32 %v2617, %v2805
  %v2994 = vsub.f32 %v2618, %v2806
  %v2995 = vsub.f32 %v2619, %v2807
  %v2996 = vsub.f32 %v2620, %v2808
  %v2997 = vsub.f32 %v2621, %v2809
  %v2998 = vsub.f32 %v2622, %v2810
  %v2999 = vsub.f32 %v2623, %v2811
  %v3000 = vsub.f32 %v2624, %v2812
  %v3001 = vsub.f32 %v2625, %v2813
  %v3002 = vsub.f32 %v2626, %v2814
  %v3003 = vsub.f32 %v2627, %v2815
  %v3004 = vsub.f32 %v2628, %v2816
  %v3005 = vsub.f32 %v2629, %v2817
  %v3006 = vsub.f32 %v2630, %v2818
  %v3007 = vsub.f32 %v2631, %v2819
  %v3008 = vsub.f32 %v2632, %v2820
  %v3009 = vsub.f32 %v2633, %v2821
  %v3010 = vsub.f32 %v2634, %v2822
  %v3011 = vsub.f32 %v2635, %v2823
  %v3012 = vsub.f32 %v2636, %v2824
  %v3013 = vsub.f32 %v2637, %v2825
  %v3014 = vsub.f32 %v2638, %v2826
  %v3015 = vsub.f32 %v2639, %v2827
  %v3016 = vsub.f32 %v2640, %v2828
  %v3017 = vsub.f32 %v2641, %v2829
  %v3018 = vsub.f32 %v2642, %v2830
  %v3019 = vsub.f32 %v2643, %v2831
  %v3020 = vsub.f32 %v2644, %v2832
  %v3021 = vsub.f32 %v2645, %v2833
  %v3022 = vsub.f32 %v2646, %v2834
  %v3023 = vsub.f32 %v2647, %v2835
  %v3024 = vsub.f32 %v2648, %v2836
  %v3025 = vsub.f32 %v2649, %v2837
  %v3026 = vld [vmem:[%s1] sm:$0xff]
  %v3027 = vld [vmem:[%s1 + $0x8] sm:$0xff]
  %v3028 = vld [vmem:[%s1 + $0x10] sm:$0xff]
  %v3029 = vld [vmem:[%s1 + $0x18] sm:$0xff]
  %v3030 = vld [vmem:[%s1 + $0x20] sm:$0xff]
  %v3031 = vld [vmem:[%s1 + $0x28] sm:$0xff]
  %v3032 = vld [vmem:[%s1 + $0x30] sm:$0xff]
  %v3033 = vld [vmem:[%s1 + $0x38] sm:$0xff]
  %v3034 = vld [vmem:[%s1 + $0x40] sm:$0xff]
  %v3035 = vld [vmem:[%s1 + $0x48] sm:$0xff]
  %v3036 = vld [vmem:[%s1 + $0x50] sm:$0xff]
  %v3037 = vld [vmem:[%s1 + $0x58] sm:$0xff]
  %v3038 = vld [vmem:[%s1 + $0x60] sm:$0xff]
  %v3039 = vld [vmem:[%s1 + $0x68] sm:$0xff]
  %v3040 = vld [vmem:[%s1 + $0x70] sm:$0xff]
  %v3041 = vld [vmem:[%s1 + $0x78] sm:$0xff]
  %v3042 = vld [vmem:[%s1 + $0x80] sm:$0xff]
  %v3043 = vld [vmem:[%s1 + $0x88] sm:$0xff]
  %v3044 = vld [vmem:[%s1 + $0x90] sm:$0xff]
  %v3045 = vld [vmem:[%s1 + $0x98] sm:$0xff]
  %v3046 = vld [vmem:[%s1 + $0xa0] sm:$0xff]
  %v3047 = vld [vmem:[%s1 + $0xa8] sm:$0xff]
  %v3048 = vld [vmem:[%s1 + $0xb0] sm:$0xff]
  %v3049 = vld [vmem:[%s1 + $0xb8] sm:$0xff]
  %v3050 = vld [vmem:[%s1 + $0xc0] sm:$0xff]
  %v3051 = vld [vmem:[%s1 + $0xc8] sm:$0xff]
  %v3052 = vld [vmem:[%s1 + $0xd0] sm:$0xff]
  %v3053 = vld [vmem:[%s1 + $0xd8] sm:$0xff]
  %v3054 = vld [vmem:[%s1 + $0xe0] sm:$0xff]
  %v3055 = vld [vmem:[%s1 + $0xe8] sm:$0xff]
  %v3056 = vld [vmem:[%s1 + $0xf0] sm:$0xff]
  %v3057 = vld [vmem:[%s1 + $0xf8] sm:$0xff]
  %v3058 = vld [vmem:[%s1 + $0x100] sm:$0xff]
  %v3059 = vld [vmem:[%s1 + $0x108] sm:$0xff]
  %v3060 = vld [vmem:[%s1 + $0x110] sm:$0xff]
  %v3061 = vld [vmem:[%s1 + $0x118] sm:$0xff]
  %v3062 = vld [vmem:[%s1 + $0x120] sm:$0xff]
  %v3063 = vld [vmem:[%s1 + $0x128] sm:$0xff]
  %v3064 = vld [vmem:[%s1 + $0x130] sm:$0xff]
  %v3065 = vld [vmem:[%s1 + $0x138] sm:$0xff]
  %v3066 = vld [vmem:[%s1 + $0x140] sm:$0xff]
  %v3067 = vld [vmem:[%s1 + $0x148] sm:$0xff]
  %v3068 = vld [vmem:[%s1 + $0x150] sm:$0xff]
  %v3069 = vld [vmem:[%s1 + $0x158] sm:$0xff]
  %v3070 = vld [vmem:[%s1 + $0x160] sm:$0xff]
  %v3071 = vld [vmem:[%s1 + $0x168] sm:$0xff]
  %v3072 = vld [vmem:[%s1 + $0x170] sm:$0xff]
  %v3073 = vld [vmem:[%s1 + $0x178] sm:$0xff]
  %v3074 = vld [vmem:[%s1 + $0x180] sm:$0xff]
  %v3075 = vld [vmem:[%s1 + $0x188] sm:$0xff]
  %v3076 = vld [vmem:[%s1 + $0x190] sm:$0xff]
  %v3077 = vld [vmem:[%s1 + $0x198] sm:$0xff]
  %v3078 = vld [vmem:[%s1 + $0x1a0] sm:$0xff]
  %v3079 = vld [vmem:[%s1 + $0x1a8] sm:$0xff]
  %v3080 = vld [vmem:[%s1 + $0x1b0] sm:$0xff]
  %v3081 = vld [vmem:[%s1 + $0x1b8] sm:$0xff]
  %v3082 = vld [vmem:[%s1 + $0x1c0] sm:$0xff]
  %v3083 = vld [vmem:[%s1 + $0x1c8] sm:$0xff]
  %v3084 = vld [vmem:[%s1 + $0x1d0] sm:$0xff]
  %v3085 = vld [vmem:[%s1 + $0x1d8] sm:$0xff]
  %v3086 = vld [vmem:[%s1 + $0x1e0] sm:$0xff]
  %v3087 = vld [vmem:[%s1 + $0x1e8] sm:$0xff]
  %v3088 = vld [vmem:[%s1 + $0x1f0] sm:$0xff]
  %v3089 = vld [vmem:[%s1 + $0x1f8] sm:$0xff]
  %v3090 = vld [vmem:[%s1 + $0x200] sm:$0xff]
  %v3091 = vld [vmem:[%s1 + $0x208] sm:$0xff]
  %v3092 = vld [vmem:[%s1 + $0x210] sm:$0xff]
  %v3093 = vld [vmem:[%s1 + $0x218] sm:$0xff]
  %v3094 = vld [vmem:[%s1 + $0x220] sm:$0xff]
  %v3095 = vld [vmem:[%s1 + $0x228] sm:$0xff]
  %v3096 = vld [vmem:[%s1 + $0x230] sm:$0xff]
  %v3097 = vld [vmem:[%s1 + $0x238] sm:$0xff]
  %v3098 = vld [vmem:[%s1 + $0x240] sm:$0xff]
  %v3099 = vld [vmem:[%s1 + $0x248] sm:$0xff]
  %v3100 = vld [vmem:[%s1 + $0x250] sm:$0xff]
  %v3101 = vld [vmem:[%s1 + $0x258] sm:$0xff]
  %v3102 = vld [vmem:[%s1 + $0x260] sm:$0xff]
  %v3103 = vld [vmem:[%s1 + $0x268] sm:$0xff]
  %v3104 = vld [vmem:[%s1 + $0x270] sm:$0xff]
  %v3105 = vld [vmem:[%s1 + $0x278] sm:$0xff]
  %v3106 = vld [vmem:[%s1 + $0x280] sm:$0xff]
  %v3107 = vld [vmem:[%s1 + $0x288] sm:$0xff]
  %v3108 = vld [vmem:[%s1 + $0x290] sm:$0xff]
  %v3109 = vld [vmem:[%s1 + $0x298] sm:$0xff]
  %v3110 = vld [vmem:[%s1 + $0x2a0] sm:$0xff]
  %v3111 = vld [vmem:[%s1 + $0x2a8] sm:$0xff]
  %v3112 = vld [vmem:[%s1 + $0x2b0] sm:$0xff]
  %v3113 = vld [vmem:[%s1 + $0x2b8] sm:$0xff]
  %v3114 = vld [vmem:[%s1 + $0x2c0] sm:$0xff]
  %v3115 = vld [vmem:[%s1 + $0x2c8] sm:$0xff]
  %v3116 = vld [vmem:[%s1 + $0x2d0] sm:$0xff]
  %v3117 = vld [vmem:[%s1 + $0x2d8] sm:$0xff]
  %v3118 = vld [vmem:[%s1 + $0x2e0] sm:$0xff]
  %v3119 = vld [vmem:[%s1 + $0x2e8] sm:$0xff]
  %v3120 = vld [vmem:[%s1 + $0x2f0] sm:$0xff]
  %v3121 = vld [vmem:[%s1 + $0x2f8] sm:$0xff]
  %v3122 = vld [vmem:[%s1 + $0x300] sm:$0xff]
  %v3123 = vld [vmem:[%s1 + $0x308] sm:$0xff]
  %v3124 = vld [vmem:[%s1 + $0x310] sm:$0xff]
  %v3125 = vld [vmem:[%s1 + $0x318] sm:$0xff]
  %v3126 = vld [vmem:[%s1 + $0x320] sm:$0xff]
  %v3127 = vld [vmem:[%s1 + $0x328] sm:$0xff]
  %v3128 = vld [vmem:[%s1 + $0x330] sm:$0xff]
  %v3129 = vld [vmem:[%s1 + $0x338] sm:$0xff]
  %v3130 = vld [vmem:[%s1 + $0x340] sm:$0xff]
  %v3131 = vld [vmem:[%s1 + $0x348] sm:$0xff]
  %v3132 = vld [vmem:[%s1 + $0x350] sm:$0xff]
  %v3133 = vld [vmem:[%s1 + $0x358] sm:$0xff]
  %v3134 = vld [vmem:[%s1 + $0x360] sm:$0xff]
  %v3135 = vld [vmem:[%s1 + $0x368] sm:$0xff]
  %v3136 = vld [vmem:[%s1 + $0x370] sm:$0xff]
  %v3137 = vld [vmem:[%s1 + $0x378] sm:$0xff]
  %v3138 = vld [vmem:[%s1 + $0x380] sm:$0xff]
  %v3139 = vld [vmem:[%s1 + $0x388] sm:$0xff]
  %v3140 = vld [vmem:[%s1 + $0x390] sm:$0xff]
  %v3141 = vld [vmem:[%s1 + $0x398] sm:$0xff]
  %v3142 = vld [vmem:[%s1 + $0x3a0] sm:$0xff]
  %v3143 = vld [vmem:[%s1 + $0x3a8] sm:$0xff]
  %v3144 = vld [vmem:[%s1 + $0x3b0] sm:$0xff]
  %v3145 = vld [vmem:[%s1 + $0x3b8] sm:$0xff]
  %v3146 = vld [vmem:[%s1 + $0x3c0] sm:$0xff]
  %v3147 = vld [vmem:[%s1 + $0x3c8] sm:$0xff]
  %v3148 = vld [vmem:[%s1 + $0x3d0] sm:$0xff]
  %v3149 = vld [vmem:[%s1 + $0x3d8] sm:$0xff]
  %v3150 = vld [vmem:[%s1 + $0x3e0] sm:$0xff]
  %v3151 = vld [vmem:[%s1 + $0x3e8] sm:$0xff]
  %v3152 = vld [vmem:[%s1 + $0x3f0] sm:$0xff]
  %v3153 = vld [vmem:[%s1 + $0x3f8] sm:$0xff]
  %v3154 = vld [vmem:[%s1 + $0x400] sm:$0xff]
  %v3155 = vld [vmem:[%s1 + $0x408] sm:$0xff]
  %v3156 = vld [vmem:[%s1 + $0x410] sm:$0xff]
  %v3157 = vld [vmem:[%s1 + $0x418] sm:$0xff]
  %v3158 = vld [vmem:[%s1 + $0x420] sm:$0xff]
  %v3159 = vld [vmem:[%s1 + $0x428] sm:$0xff]
  %v3160 = vld [vmem:[%s1 + $0x430] sm:$0xff]
  %v3161 = vld [vmem:[%s1 + $0x438] sm:$0xff]
  %v3162 = vld [vmem:[%s1 + $0x440] sm:$0xff]
  %v3163 = vld [vmem:[%s1 + $0x448] sm:$0xff]
  %v3164 = vld [vmem:[%s1 + $0x450] sm:$0xff]
  %v3165 = vld [vmem:[%s1 + $0x458] sm:$0xff]
  %v3166 = vld [vmem:[%s1 + $0x460] sm:$0xff]
  %v3167 = vld [vmem:[%s1 + $0x468] sm:$0xff]
  %v3168 = vld [vmem:[%s1 + $0x470] sm:$0xff]
  %v3169 = vld [vmem:[%s1 + $0x478] sm:$0xff]
  %v3170 = vld [vmem:[%s1 + $0x480] sm:$0xff]
  %v3171 = vld [vmem:[%s1 + $0x488] sm:$0xff]
  %v3172 = vld [vmem:[%s1 + $0x490] sm:$0xff]
  %v3173 = vld [vmem:[%s1 + $0x498] sm:$0xff]
  %v3174 = vld [vmem:[%s1 + $0x4a0] sm:$0xff]
  %v3175 = vld [vmem:[%s1 + $0x4a8] sm:$0xff]
  %v3176 = vld [vmem:[%s1 + $0x4b0] sm:$0xff]
  %v3177 = vld [vmem:[%s1 + $0x4b8] sm:$0xff]
  %v3178 = vld [vmem:[%s1 + $0x4c0] sm:$0xff]
  %v3179 = vld [vmem:[%s1 + $0x4c8] sm:$0xff]
  %v3180 = vld [vmem:[%s1 + $0x4d0] sm:$0xff]
  %v3181 = vld [vmem:[%s1 + $0x4d8] sm:$0xff]
  %v3182 = vld [vmem:[%s1 + $0x4e0] sm:$0xff]
  %v3183 = vld [vmem:[%s1 + $0x4e8] sm:$0xff]
  %v3184 = vld [vmem:[%s1 + $0x4f0] sm:$0xff]
  %v3185 = vld [vmem:[%s1 + $0x4f8] sm:$0xff]
  %v3186 = vld [vmem:[%s1 + $0x500] sm:$0xff]
  %v3187 = vld [vmem:[%s1 + $0x508] sm:$0xff]
  %v3188 = vld [vmem:[%s1 + $0x510] sm:$0xff]
  %v3189 = vld [vmem:[%s1 + $0x518] sm:$0xff]
  %v3190 = vld [vmem:[%s1 + $0x520] sm:$0xff]
  %v3191 = vld [vmem:[%s1 + $0x528] sm:$0xff]
  %v3192 = vld [vmem:[%s1 + $0x530] sm:$0xff]
  %v3193 = vld [vmem:[%s1 + $0x538] sm:$0xff]
  %v3194 = vld [vmem:[%s1 + $0x540] sm:$0xff]
  %v3195 = vld [vmem:[%s1 + $0x548] sm:$0xff]
  %v3196 = vld [vmem:[%s1 + $0x550] sm:$0xff]
  %v3197 = vld [vmem:[%s1 + $0x558] sm:$0xff]
  %v3198 = vld [vmem:[%s1 + $0x560] sm:$0xff]
  %v3199 = vld [vmem:[%s1 + $0x568] sm:$0xff]
  %v3200 = vld [vmem:[%s1 + $0x570] sm:$0xff]
  %v3201 = vld [vmem:[%s1 + $0x578] sm:$0xff]
  %v3202 = vld [vmem:[%s1 + $0x580] sm:$0xff]
  %v3203 = vld [vmem:[%s1 + $0x588] sm:$0xff]
  %v3204 = vld [vmem:[%s1 + $0x590] sm:$0xff]
  %v3205 = vld [vmem:[%s1 + $0x598] sm:$0xff]
  %v3206 = vld [vmem:[%s1 + $0x5a0] sm:$0xff]
  %v3207 = vld [vmem:[%s1 + $0x5a8] sm:$0xff]
  %v3208 = vld [vmem:[%s1 + $0x5b0] sm:$0xff]
  %v3209 = vld [vmem:[%s1 + $0x5b8] sm:$0xff]
  %v3210 = vld [vmem:[%s1 + $0x5c0] sm:$0xff]
  %v3211 = vld [vmem:[%s1 + $0x5c8] sm:$0xff]
  %v3212 = vld [vmem:[%s1 + $0x5d0] sm:$0xff]
  %v3213 = vld [vmem:[%s1 + $0x5d8] sm:$0xff]
  %v3214 = vadd.f32 %v2838, 1e-05
  %v3215 = vadd.f32 %v2839, 1e-05
  %v3216 = vadd.f32 %v2840, 1e-05
  %v3217 = vadd.f32 %v2841, 1e-05
  %v3218 = vadd.f32 %v2842, 1e-05
  %v3219 = vadd.f32 %v2843, 1e-05
  %v3220 = vadd.f32 %v2844, 1e-05
  %v3221 = vadd.f32 %v2845, 1e-05
  %v3222 = vadd.f32 %v2846, 1e-05
  %v3223 = vadd.f32 %v2847, 1e-05
  %v3224 = vadd.f32 %v2848, 1e-05
  %v3225 = vadd.f32 %v2849, 1e-05
  %v3226 = vadd.f32 %v2850, 1e-05
  %v3227 = vadd.f32 %v2851, 1e-05
  %v3228 = vadd.f32 %v2852, 1e-05
  %v3229 = vadd.f32 %v2853, 1e-05
  %v3230 = vadd.f32 %v2854, 1e-05
  %v3231 = vadd.f32 %v2855, 1e-05
  %v3232 = vadd.f32 %v2856, 1e-05
  %v3233 = vadd.f32 %v2857, 1e-05
  %v3234 = vadd.f32 %v2858, 1e-05
  %v3235 = vadd.f32 %v2859, 1e-05
  %v3236 = vadd.f32 %v2860, 1e-05
  %v3237 = vadd.f32 %v2861, 1e-05
  %v3238 = vadd.f32 %v2862, 1e-05
  %v3239 = vadd.f32 %v2863, 1e-05
  %v3240 = vadd.f32 %v2864, 1e-05
  %v3241 = vadd.f32 %v2865, 1e-05
  %v3242 = vadd.f32 %v2866, 1e-05
  %v3243 = vadd.f32 %v2867, 1e-05
  %v3244 = vadd.f32 %v2868, 1e-05
  %v3245 = vadd.f32 %v2869, 1e-05
  %v3246 = vadd.f32 %v2870, 1e-05
  %v3247 = vadd.f32 %v2871, 1e-05
  %v3248 = vadd.f32 %v2872, 1e-05
  %v3249 = vadd.f32 %v2873, 1e-05
  %v3250 = vadd.f32 %v2874, 1e-05
  %v3251 = vadd.f32 %v2875, 1e-05
  %v3252 = vadd.f32 %v2876, 1e-05
  %v3253 = vadd.f32 %v2877, 1e-05
  %v3254 = vadd.f32 %v2878, 1e-05
  %v3255 = vadd.f32 %v2879, 1e-05
  %v3256 = vadd.f32 %v2880, 1e-05
  %v3257 = vadd.f32 %v2881, 1e-05
  %v3258 = vadd.f32 %v2882, 1e-05
  %v3259 = vadd.f32 %v2883, 1e-05
  %v3260 = vadd.f32 %v2884, 1e-05
  %v3261 = vadd.f32 %v2885, 1e-05
  %v3262 = vadd.f32 %v2886, 1e-05
  %v3263 = vadd.f32 %v2887, 1e-05
  %v3264 = vadd.f32 %v2888, 1e-05
  %v3265 = vadd.f32 %v2889, 1e-05
  %v3266 = vadd.f32 %v2890, 1e-05
  %v3267 = vadd.f32 %v2891, 1e-05
  %v3268 = vadd.f32 %v2892, 1e-05
  %v3269 = vadd.f32 %v2893, 1e-05
  %v3270 = vadd.f32 %v2894, 1e-05
  %v3271 = vadd.f32 %v2895, 1e-05
  %v3272 = vadd.f32 %v2896, 1e-05
  %v3273 = vadd.f32 %v2897, 1e-05
  %v3274 = vadd.f32 %v2898, 1e-05
  %v3275 = vadd.f32 %v2899, 1e-05
  %v3276 = vadd.f32 %v2900, 1e-05
  %v3277 = vadd.f32 %v2901, 1e-05
  %v3278 = vadd.f32 %v2902, 1e-05
  %v3279 = vadd.f32 %v2903, 1e-05
  %v3280 = vadd.f32 %v2904, 1e-05
  %v3281 = vadd.f32 %v2905, 1e-05
  %v3282 = vadd.f32 %v2906, 1e-05
  %v3283 = vadd.f32 %v2907, 1e-05
  %v3284 = vadd.f32 %v2908, 1e-05
  %v3285 = vadd.f32 %v2909, 1e-05
  %v3286 = vadd.f32 %v2910, 1e-05
  %v3287 = vadd.f32 %v2911, 1e-05
  %v3288 = vadd.f32 %v2912, 1e-05
  %v3289 = vadd.f32 %v2913, 1e-05
  %v3290 = vadd.f32 %v2914, 1e-05
  %v3291 = vadd.f32 %v2915, 1e-05
  %v3292 = vadd.f32 %v2916, 1e-05
  %v3293 = vadd.f32 %v2917, 1e-05
  %v3294 = vadd.f32 %v2918, 1e-05
  %v3295 = vadd.f32 %v2919, 1e-05
  %v3296 = vadd.f32 %v2920, 1e-05
  %v3297 = vadd.f32 %v2921, 1e-05
  %v3298 = vadd.f32 %v2922, 1e-05
  %v3299 = vadd.f32 %v2923, 1e-05
  %v3300 = vadd.f32 %v2924, 1e-05
  %v3301 = vadd.f32 %v2925, 1e-05
  %v3302 = vadd.f32 %v2926, 1e-05
  %v3303 = vadd.f32 %v2927, 1e-05
  %v3304 = vadd.f32 %v2928, 1e-05
  %v3305 = vadd.f32 %v2929, 1e-05
  %v3306 = vadd.f32 %v2930, 1e-05
  %v3307 = vadd.f32 %v2931, 1e-05
  %v3308 = vadd.f32 %v2932, 1e-05
  %v3309 = vadd.f32 %v2933, 1e-05
  %v3310 = vadd.f32 %v2934, 1e-05
  %v3311 = vadd.f32 %v2935, 1e-05
  %v3312 = vadd.f32 %v2936, 1e-05
  %v3313 = vadd.f32 %v2937, 1e-05
  %v3314 = vadd.f32 %v2938, 1e-05
  %v3315 = vadd.f32 %v2939, 1e-05
  %v3316 = vadd.f32 %v2940, 1e-05
  %v3317 = vadd.f32 %v2941, 1e-05
  %v3318 = vadd.f32 %v2942, 1e-05
  %v3319 = vadd.f32 %v2943, 1e-05
  %v3320 = vadd.f32 %v2944, 1e-05
  %v3321 = vadd.f32 %v2945, 1e-05
  %v3322 = vadd.f32 %v2946, 1e-05
  %v3323 = vadd.f32 %v2947, 1e-05
  %v3324 = vadd.f32 %v2948, 1e-05
  %v3325 = vadd.f32 %v2949, 1e-05
  %v3326 = vadd.f32 %v2950, 1e-05
  %v3327 = vadd.f32 %v2951, 1e-05
  %v3328 = vadd.f32 %v2952, 1e-05
  %v3329 = vadd.f32 %v2953, 1e-05
  %v3330 = vadd.f32 %v2954, 1e-05
  %v3331 = vadd.f32 %v2955, 1e-05
  %v3332 = vadd.f32 %v2956, 1e-05
  %v3333 = vadd.f32 %v2957, 1e-05
  %v3334 = vadd.f32 %v2958, 1e-05
  %v3335 = vadd.f32 %v2959, 1e-05
  %v3336 = vadd.f32 %v2960, 1e-05
  %v3337 = vadd.f32 %v2961, 1e-05
  %v3338 = vadd.f32 %v2962, 1e-05
  %v3339 = vadd.f32 %v2963, 1e-05
  %v3340 = vadd.f32 %v2964, 1e-05
  %v3341 = vadd.f32 %v2965, 1e-05
  %v3342 = vadd.f32 %v2966, 1e-05
  %v3343 = vadd.f32 %v2967, 1e-05
  %v3344 = vadd.f32 %v2968, 1e-05
  %v3345 = vadd.f32 %v2969, 1e-05
  %v3346 = vadd.f32 %v2970, 1e-05
  %v3347 = vadd.f32 %v2971, 1e-05
  %v3348 = vadd.f32 %v2972, 1e-05
  %v3349 = vadd.f32 %v2973, 1e-05
  %v3350 = vadd.f32 %v2974, 1e-05
  %v3351 = vadd.f32 %v2975, 1e-05
  %v3352 = vadd.f32 %v2976, 1e-05
  %v3353 = vadd.f32 %v2977, 1e-05
  %v3354 = vadd.f32 %v2978, 1e-05
  %v3355 = vadd.f32 %v2979, 1e-05
  %v3356 = vadd.f32 %v2980, 1e-05
  %v3357 = vadd.f32 %v2981, 1e-05
  %v3358 = vadd.f32 %v2982, 1e-05
  %v3359 = vadd.f32 %v2983, 1e-05
  %v3360 = vadd.f32 %v2984, 1e-05
  %v3361 = vadd.f32 %v2985, 1e-05
  %v3362 = vadd.f32 %v2986, 1e-05
  %v3363 = vadd.f32 %v2987, 1e-05
  %v3364 = vadd.f32 %v2988, 1e-05
  %v3365 = vadd.f32 %v2989, 1e-05
  %v3366 = vadd.f32 %v2990, 1e-05
  %v3367 = vadd.f32 %v2991, 1e-05
  %v3368 = vadd.f32 %v2992, 1e-05
  %v3369 = vadd.f32 %v2993, 1e-05
  %v3370 = vadd.f32 %v2994, 1e-05
  %v3371 = vadd.f32 %v2995, 1e-05
  %v3372 = vadd.f32 %v2996, 1e-05
  %v3373 = vadd.f32 %v2997, 1e-05
  %v3374 = vadd.f32 %v2998, 1e-05
  %v3375 = vadd.f32 %v2999, 1e-05
  %v3376 = vadd.f32 %v3000, 1e-05
  %v3377 = vadd.f32 %v3001, 1e-05
  %v3378 = vadd.f32 %v3002, 1e-05
  %v3379 = vadd.f32 %v3003, 1e-05
  %v3380 = vadd.f32 %v3004, 1e-05
  %v3381 = vadd.f32 %v3005, 1e-05
  %v3382 = vadd.f32 %v3006, 1e-05
  %v3383 = vadd.f32 %v3007, 1e-05
  %v3384 = vadd.f32 %v3008, 1e-05
  %v3385 = vadd.f32 %v3009, 1e-05
  %v3386 = vadd.f32 %v3010, 1e-05
  %v3387 = vadd.f32 %v3011, 1e-05
  %v3388 = vadd.f32 %v3012, 1e-05
  %v3389 = vadd.f32 %v3013, 1e-05
  %v3390 = vadd.f32 %v3014, 1e-05
  %v3391 = vadd.f32 %v3015, 1e-05
  %v3392 = vadd.f32 %v3016, 1e-05
  %v3393 = vadd.f32 %v3017, 1e-05
  %v3394 = vadd.f32 %v3018, 1e-05
  %v3395 = vadd.f32 %v3019, 1e-05
  %v3396 = vadd.f32 %v3020, 1e-05
  %v3397 = vadd.f32 %v3021, 1e-05
  %v3398 = vadd.f32 %v3022, 1e-05
  %v3399 = vadd.f32 %v3023, 1e-05
  %v3400 = vadd.f32 %v3024, 1e-05
  %v3401 = vadd.f32 %v3025, 1e-05
  %v3402 = vrsqrt.pop %v3214
  %v3403 = vrsqrt.pop %v3215
  %v3404 = vrsqrt.pop %v3216
  %v3405 = vrsqrt.pop %v3217
  %v3406 = vrsqrt.pop %v3218
  %v3407 = vrsqrt.pop %v3219
  %v3408 = vrsqrt.pop %v3220
  %v3409 = vrsqrt.pop %v3221
  %v3410 = vrsqrt.pop %v3222
  %v3411 = vrsqrt.pop %v3223
  %v3412 = vrsqrt.pop %v3224
  %v3413 = vrsqrt.pop %v3225
  %v3414 = vrsqrt.pop %v3226
  %v3415 = vrsqrt.pop %v3227
  %v3416 = vrsqrt.pop %v3228
  %v3417 = vrsqrt.pop %v3229
  %v3418 = vrsqrt.pop %v3230
  %v3419 = vrsqrt.pop %v3231
  %v3420 = vrsqrt.pop %v3232
  %v3421 = vrsqrt.pop %v3233
  %v3422 = vrsqrt.pop %v3234
  %v3423 = vrsqrt.pop %v3235
  %v3424 = vrsqrt.pop %v3236
  %v3425 = vrsqrt.pop %v3237
  %v3426 = vrsqrt.pop %v3238
  %v3427 = vrsqrt.pop %v3239
  %v3428 = vrsqrt.pop %v3240
  %v3429 = vrsqrt.pop %v3241
  %v3430 = vrsqrt.pop %v3242
  %v3431 = vrsqrt.pop %v3243
  %v3432 = vrsqrt.pop %v3244
  %v3433 = vrsqrt.pop %v3245
  %v3434 = vrsqrt.pop %v3246
  %v3435 = vrsqrt.pop %v3247
  %v3436 = vrsqrt.pop %v3248
  %v3437 = vrsqrt.pop %v3249
  %v3438 = vrsqrt.pop %v3250
  %v3439 = vrsqrt.pop %v3251
  %v3440 = vrsqrt.pop %v3252
  %v3441 = vrsqrt.pop %v3253
  %v3442 = vrsqrt.pop %v3254
  %v3443 = vrsqrt.pop %v3255
  %v3444 = vrsqrt.pop %v3256
  %v3445 = vrsqrt.pop %v3257
  %v3446 = vrsqrt.pop %v3258
  %v3447 = vrsqrt.pop %v3259
  %v3448 = vrsqrt.pop %v3260
  %v3449 = vrsqrt.pop %v3261
  %v3450 = vrsqrt.pop %v3262
  %v3451 = vrsqrt.pop %v3263
  %v3452 = vrsqrt.pop %v3264
  %v3453 = vrsqrt.pop %v3265
  %v3454 = vrsqrt.pop %v3266
  %v3455 = vrsqrt.pop %v3267
  %v3456 = vrsqrt.pop %v3268
  %v3457 = vrsqrt.pop %v3269
  %v3458 = vrsqrt.pop %v3270
  %v3459 = vrsqrt.pop %v3271
  %v3460 = vrsqrt.pop %v3272
  %v3461 = vrsqrt.pop %v3273
  %v3462 = vrsqrt.pop %v3274
  %v3463 = vrsqrt.pop %v3275
  %v3464 = vrsqrt.pop %v3276
  %v3465 = vrsqrt.pop %v3277
  %v3466 = vrsqrt.pop %v3278
  %v3467 = vrsqrt.pop %v3279
  %v3468 = vrsqrt.pop %v3280
  %v3469 = vrsqrt.pop %v3281
  %v3470 = vrsqrt.pop %v3282
  %v3471 = vrsqrt.pop %v3283
  %v3472 = vrsqrt.pop %v3284
  %v3473 = vrsqrt.pop %v3285
  %v3474 = vrsqrt.pop %v3286
  %v3475 = vrsqrt.pop %v3287
  %v3476 = vrsqrt.pop %v3288
  %v3477 = vrsqrt.pop %v3289
  %v3478 = vrsqrt.pop %v3290
  %v3479 = vrsqrt.pop %v3291
  %v3480 = vrsqrt.pop %v3292
  %v3481 = vrsqrt.pop %v3293
  %v3482 = vrsqrt.pop %v3294
  %v3483 = vrsqrt.pop %v3295
  %v3484 = vrsqrt.pop %v3296
  %v3485 = vrsqrt.pop %v3297
  %v3486 = vrsqrt.pop %v3298
  %v3487 = vrsqrt.pop %v3299
  %v3488 = vrsqrt.pop %v3300
  %v3489 = vrsqrt.pop %v3301
  %v3490 = vrsqrt.pop %v3302
  %v3491 = vrsqrt.pop %v3303
  %v3492 = vrsqrt.pop %v3304
  %v3493 = vrsqrt.pop %v3305
  %v3494 = vrsqrt.pop %v3306
  %v3495 = vrsqrt.pop %v3307
  %v3496 = vrsqrt.pop %v3308
  %v3497 = vrsqrt.pop %v3309
  %v3498 = vrsqrt.pop %v3310
  %v3499 = vrsqrt.pop %v3311
  %v3500 = vrsqrt.pop %v3312
  %v3501 = vrsqrt.pop %v3313
  %v3502 = vrsqrt.pop %v3314
  %v3503 = vrsqrt.pop %v3315
  %v3504 = vrsqrt.pop %v3316
  %v3505 = vrsqrt.pop %v3317
  %v3506 = vrsqrt.pop %v3318
  %v3507 = vrsqrt.pop %v3319
  %v3508 = vrsqrt.pop %v3320
  %v3509 = vrsqrt.pop %v3321
  %v3510 = vrsqrt.pop %v3322
  %v3511 = vrsqrt.pop %v3323
  %v3512 = vrsqrt.pop %v3324
  %v3513 = vrsqrt.pop %v3325
  %v3514 = vrsqrt.pop %v3326
  %v3515 = vrsqrt.pop %v3327
  %v3516 = vrsqrt.pop %v3328
  %v3517 = vrsqrt.pop %v3329
  %v3518 = vrsqrt.pop %v3330
  %v3519 = vrsqrt.pop %v3331
  %v3520 = vrsqrt.pop %v3332
  %v3521 = vrsqrt.pop %v3333
  %v3522 = vrsqrt.pop %v3334
  %v3523 = vrsqrt.pop %v3335
  %v3524 = vrsqrt.pop %v3336
  %v3525 = vrsqrt.pop %v3337
  %v3526 = vrsqrt.pop %v3338
  %v3527 = vrsqrt.pop %v3339
  %v3528 = vrsqrt.pop %v3340
  %v3529 = vrsqrt.pop %v3341
  %v3530 = vrsqrt.pop %v3342
  %v3531 = vrsqrt.pop %v3343
  %v3532 = vrsqrt.pop %v3344
  %v3533 = vrsqrt.pop %v3345
  %v3534 = vrsqrt.pop %v3346
  %v3535 = vrsqrt.pop %v3347
  %v3536 = vrsqrt.pop %v3348
  %v3537 = vrsqrt.pop %v3349
  %v3538 = vrsqrt.pop %v3350
  %v3539 = vrsqrt.pop %v3351
  %v3540 = vrsqrt.pop %v3352
  %v3541 = vrsqrt.pop %v3353
  %v3542 = vrsqrt.pop %v3354
  %v3543 = vrsqrt.pop %v3355
  %v3544 = vrsqrt.pop %v3356
  %v3545 = vrsqrt.pop %v3357
  %v3546 = vrsqrt.pop %v3358
  %v3547 = vrsqrt.pop %v3359
  %v3548 = vrsqrt.pop %v3360
  %v3549 = vrsqrt.pop %v3361
  %v3550 = vrsqrt.pop %v3362
  %v3551 = vrsqrt.pop %v3363
  %v3552 = vrsqrt.pop %v3364
  %v3553 = vrsqrt.pop %v3365
  %v3554 = vrsqrt.pop %v3366
  %v3555 = vrsqrt.pop %v3367
  %v3556 = vrsqrt.pop %v3368
  %v3557 = vrsqrt.pop %v3369
  %v3558 = vrsqrt.pop %v3370
  %v3559 = vrsqrt.pop %v3371
  %v3560 = vrsqrt.pop %v3372
  %v3561 = vrsqrt.pop %v3373
  %v3562 = vrsqrt.pop %v3374
  %v3563 = vrsqrt.pop %v3375
  %v3564 = vrsqrt.pop %v3376
  %v3565 = vrsqrt.pop %v3377
  %v3566 = vrsqrt.pop %v3378
  %v3567 = vrsqrt.pop %v3379
  %v3568 = vrsqrt.pop %v3380
  %v3569 = vrsqrt.pop %v3381
  %v3570 = vrsqrt.pop %v3382
  %v3571 = vrsqrt.pop %v3383
  %v3572 = vrsqrt.pop %v3384
  %v3573 = vrsqrt.pop %v3385
  %v3574 = vrsqrt.pop %v3386
  %v3575 = vrsqrt.pop %v3387
  %v3576 = vrsqrt.pop %v3388
  %v3577 = vrsqrt.pop %v3389
  %v3578 = vrsqrt.pop %v3390
  %v3579 = vrsqrt.pop %v3391
  %v3580 = vrsqrt.pop %v3392
  %v3581 = vrsqrt.pop %v3393
  %v3582 = vrsqrt.pop %v3394
  %v3583 = vrsqrt.pop %v3395
  %v3584 = vrsqrt.pop %v3396
  %v3585 = vrsqrt.pop %v3397
  %v3586 = vrsqrt.pop %v3398
  %v3587 = vrsqrt.pop %v3399
  %v3588 = vrsqrt.pop %v3400
  %v3589 = vrsqrt.pop %v3401
  %v3590 = vmul.f32 %v3026, %v3402
  %v3591 = vmul.f32 %v3027, %v3403
  %v3592 = vmul.f32 %v3028, %v3404
  %v3593 = vmul.f32 %v3029, %v3405
  %v3594 = vmul.f32 %v3030, %v3406
  %v3595 = vmul.f32 %v3031, %v3407
  %v3596 = vmul.f32 %v3032, %v3408
  %v3597 = vmul.f32 %v3033, %v3409
  %v3598 = vmul.f32 %v3034, %v3410
  %v3599 = vmul.f32 %v3035, %v3411
  %v3600 = vmul.f32 %v3036, %v3412
  %v3601 = vmul.f32 %v3037, %v3413
  %v3602 = vmul.f32 %v3038, %v3414
  %v3603 = vmul.f32 %v3039, %v3415
  %v3604 = vmul.f32 %v3040, %v3416
  %v3605 = vmul.f32 %v3041, %v3417
  %v3606 = vmul.f32 %v3042, %v3418
  %v3607 = vmul.f32 %v3043, %v3419
  %v3608 = vmul.f32 %v3044, %v3420
  %v3609 = vmul.f32 %v3045, %v3421
  %v3610 = vmul.f32 %v3046, %v3422
  %v3611 = vmul.f32 %v3047, %v3423
  %v3612 = vmul.f32 %v3048, %v3424
  %v3613 = vmul.f32 %v3049, %v3425
  %v3614 = vmul.f32 %v3050, %v3426
  %v3615 = vmul.f32 %v3051, %v3427
  %v3616 = vmul.f32 %v3052, %v3428
  %v3617 = vmul.f32 %v3053, %v3429
  %v3618 = vmul.f32 %v3054, %v3430
  %v3619 = vmul.f32 %v3055, %v3431
  %v3620 = vmul.f32 %v3056, %v3432
  %v3621 = vmul.f32 %v3057, %v3433
  %v3622 = vmul.f32 %v3058, %v3434
  %v3623 = vmul.f32 %v3059, %v3435
  %v3624 = vmul.f32 %v3060, %v3436
  %v3625 = vmul.f32 %v3061, %v3437
  %v3626 = vmul.f32 %v3062, %v3438
  %v3627 = vmul.f32 %v3063, %v3439
  %v3628 = vmul.f32 %v3064, %v3440
  %v3629 = vmul.f32 %v3065, %v3441
  %v3630 = vmul.f32 %v3066, %v3442
  %v3631 = vmul.f32 %v3067, %v3443
  %v3632 = vmul.f32 %v3068, %v3444
  %v3633 = vmul.f32 %v3069, %v3445
  %v3634 = vmul.f32 %v3070, %v3446
  %v3635 = vmul.f32 %v3071, %v3447
  %v3636 = vmul.f32 %v3072, %v3448
  %v3637 = vmul.f32 %v3073, %v3449
  %v3638 = vmul.f32 %v3074, %v3450
  %v3639 = vmul.f32 %v3075, %v3451
  %v3640 = vmul.f32 %v3076, %v3452
  %v3641 = vmul.f32 %v3077, %v3453
  %v3642 = vmul.f32 %v3078, %v3454
  %v3643 = vmul.f32 %v3079, %v3455
  %v3644 = vmul.f32 %v3080, %v3456
  %v3645 = vmul.f32 %v3081, %v3457
  %v3646 = vmul.f32 %v3082, %v3458
  %v3647 = vmul.f32 %v3083, %v3459
  %v3648 = vmul.f32 %v3084, %v3460
  %v3649 = vmul.f32 %v3085, %v3461
  %v3650 = vmul.f32 %v3086, %v3462
  %v3651 = vmul.f32 %v3087, %v3463
  %v3652 = vmul.f32 %v3088, %v3464
  %v3653 = vmul.f32 %v3089, %v3465
  %v3654 = vmul.f32 %v3090, %v3466
  %v3655 = vmul.f32 %v3091, %v3467
  %v3656 = vmul.f32 %v3092, %v3468
  %v3657 = vmul.f32 %v3093, %v3469
  %v3658 = vmul.f32 %v3094, %v3470
  %v3659 = vmul.f32 %v3095, %v3471
  %v3660 = vmul.f32 %v3096, %v3472
  %v3661 = vmul.f32 %v3097, %v3473
  %v3662 = vmul.f32 %v3098, %v3474
  %v3663 = vmul.f32 %v3099, %v3475
  %v3664 = vmul.f32 %v3100, %v3476
  %v3665 = vmul.f32 %v3101, %v3477
  %v3666 = vmul.f32 %v3102, %v3478
  %v3667 = vmul.f32 %v3103, %v3479
  %v3668 = vmul.f32 %v3104, %v3480
  %v3669 = vmul.f32 %v3105, %v3481
  %v3670 = vmul.f32 %v3106, %v3482
  %v3671 = vmul.f32 %v3107, %v3483
  %v3672 = vmul.f32 %v3108, %v3484
  %v3673 = vmul.f32 %v3109, %v3485
  %v3674 = vmul.f32 %v3110, %v3486
  %v3675 = vmul.f32 %v3111, %v3487
  %v3676 = vmul.f32 %v3112, %v3488
  %v3677 = vmul.f32 %v3113, %v3489
  %v3678 = vmul.f32 %v3114, %v3490
  %v3679 = vmul.f32 %v3115, %v3491
  %v3680 = vmul.f32 %v3116, %v3492
  %v3681 = vmul.f32 %v3117, %v3493
  %v3682 = vmul.f32 %v3118, %v3494
  %v3683 = vmul.f32 %v3119, %v3495
  %v3684 = vmul.f32 %v3120, %v3496
  %v3685 = vmul.f32 %v3121, %v3497
  %v3686 = vmul.f32 %v3122, %v3498
  %v3687 = vmul.f32 %v3123, %v3499
  %v3688 = vmul.f32 %v3124, %v3500
  %v3689 = vmul.f32 %v3125, %v3501
  %v3690 = vmul.f32 %v3126, %v3502
  %v3691 = vmul.f32 %v3127, %v3503
  %v3692 = vmul.f32 %v3128, %v3504
  %v3693 = vmul.f32 %v3129, %v3505
  %v3694 = vmul.f32 %v3130, %v3506
  %v3695 = vmul.f32 %v3131, %v3507
  %v3696 = vmul.f32 %v3132, %v3508
  %v3697 = vmul.f32 %v3133, %v3509
  %v3698 = vmul.f32 %v3134, %v3510
  %v3699 = vmul.f32 %v3135, %v3511
  %v3700 = vmul.f32 %v3136, %v3512
  %v3701 = vmul.f32 %v3137, %v3513
  %v3702 = vmul.f32 %v3138, %v3514
  %v3703 = vmul.f32 %v3139, %v3515
  %v3704 = vmul.f32 %v3140, %v3516
  %v3705 = vmul.f32 %v3141, %v3517
  %v3706 = vmul.f32 %v3142, %v3518
  %v3707 = vmul.f32 %v3143, %v3519
  %v3708 = vmul.f32 %v3144, %v3520
  %v3709 = vmul.f32 %v3145, %v3521
  %v3710 = vmul.f32 %v3146, %v3522
  %v3711 = vmul.f32 %v3147, %v3523
  %v3712 = vmul.f32 %v3148, %v3524
  %v3713 = vmul.f32 %v3149, %v3525
  %v3714 = vmul.f32 %v3150, %v3526
  %v3715 = vmul.f32 %v3151, %v3527
  %v3716 = vmul.f32 %v3152, %v3528
  %v3717 = vmul.f32 %v3153, %v3529
  %v3718 = vmul.f32 %v3154, %v3530
  %v3719 = vmul.f32 %v3155, %v3531
  %v3720 = vmul.f32 %v3156, %v3532
  %v3721 = vmul.f32 %v3157, %v3533
  %v3722 = vmul.f32 %v3158, %v3534
  %v3723 = vmul.f32 %v3159, %v3535
  %v3724 = vmul.f32 %v3160, %v3536
  %v3725 = vmul.f32 %v3161, %v3537
  %v3726 = vmul.f32 %v3162, %v3538
  %v3727 = vmul.f32 %v3163, %v3539
  %v3728 = vmul.f32 %v3164, %v3540
  %v3729 = vmul.f32 %v3165, %v3541
  %v3730 = vmul.f32 %v3166, %v3542
  %v3731 = vmul.f32 %v3167, %v3543
  %v3732 = vmul.f32 %v3168, %v3544
  %v3733 = vmul.f32 %v3169, %v3545
  %v3734 = vmul.f32 %v3170, %v3546
  %v3735 = vmul.f32 %v3171, %v3547
  %v3736 = vmul.f32 %v3172, %v3548
  %v3737 = vmul.f32 %v3173, %v3549
  %v3738 = vmul.f32 %v3174, %v3550
  %v3739 = vmul.f32 %v3175, %v3551
  %v3740 = vmul.f32 %v3176, %v3552
  %v3741 = vmul.f32 %v3177, %v3553
  %v3742 = vmul.f32 %v3178, %v3554
  %v3743 = vmul.f32 %v3179, %v3555
  %v3744 = vmul.f32 %v3180, %v3556
  %v3745 = vmul.f32 %v3181, %v3557
  %v3746 = vmul.f32 %v3182, %v3558
  %v3747 = vmul.f32 %v3183, %v3559
  %v3748 = vmul.f32 %v3184, %v3560
  %v3749 = vmul.f32 %v3185, %v3561
  %v3750 = vmul.f32 %v3186, %v3562
  %v3751 = vmul.f32 %v3187, %v3563
  %v3752 = vmul.f32 %v3188, %v3564
  %v3753 = vmul.f32 %v3189, %v3565
  %v3754 = vmul.f32 %v3190, %v3566
  %v3755 = vmul.f32 %v3191, %v3567
  %v3756 = vmul.f32 %v3192, %v3568
  %v3757 = vmul.f32 %v3193, %v3569
  %v3758 = vmul.f32 %v3194, %v3570
  %v3759 = vmul.f32 %v3195, %v3571
  %v3760 = vmul.f32 %v3196, %v3572
  %v3761 = vmul.f32 %v3197, %v3573
  %v3762 = vmul.f32 %v3198, %v3574
  %v3763 = vmul.f32 %v3199, %v3575
  %v3764 = vmul.f32 %v3200, %v3576
  %v3765 = vmul.f32 %v3201, %v3577
  %v3766 = vmul.f32 %v3202, %v3578
  %v3767 = vmul.f32 %v3203, %v3579
  %v3768 = vmul.f32 %v3204, %v3580
  %v3769 = vmul.f32 %v3205, %v3581
  %v3770 = vmul.f32 %v3206, %v3582
  %v3771 = vmul.f32 %v3207, %v3583
  %v3772 = vmul.f32 %v3208, %v3584
  %v3773 = vmul.f32 %v3209, %v3585
  %v3774 = vmul.f32 %v3210, %v3586
  %v3775 = vmul.f32 %v3211, %v3587
  %v3776 = vmul.f32 %v3212, %v3588
  %v3777 = vmul.f32 %v3213, %v3589
  %v3778 = vmul.f32 %v1146, %v3590
  %v3779 = vmul.f32 %v1147, %v3591
  %v3780 = vmul.f32 %v1148, %v3592
  %v3781 = vmul.f32 %v1149, %v3593
  %v3782 = vmul.f32 %v1150, %v3594
  %v3783 = vmul.f32 %v1151, %v3595
  %v3784 = vmul.f32 %v1152, %v3596
  %v3785 = vmul.f32 %v1153, %v3597
  %v3786 = vmul.f32 %v1154, %v3598
  %v3787 = vmul.f32 %v1155, %v3599
  %v3788 = vmul.f32 %v1156, %v3600
  %v3789 = vmul.f32 %v1157, %v3601
  %v3790 = vmul.f32 %v1158, %v3602
  %v3791 = vmul.f32 %v1159, %v3603
  %v3792 = vmul.f32 %v1160, %v3604
  %v3793 = vmul.f32 %v1161, %v3605
  %v3794 = vmul.f32 %v1162, %v3606
  %v3795 = vmul.f32 %v1163, %v3607
  %v3796 = vmul.f32 %v1164, %v3608
  %v3797 = vmul.f32 %v1165, %v3609
  %v3798 = vmul.f32 %v1166, %v3610
  %v3799 = vmul.f32 %v1167, %v3611
  %v3800 = vmul.f32 %v1168, %v3612
  %v3801 = vmul.f32 %v1169, %v3613
  %v3802 = vmul.f32 %v1170, %v3614
  %v3803 = vmul.f32 %v1171, %v3615
  %v3804 = vmul.f32 %v1172, %v3616
  %v3805 = vmul.f32 %v1173, %v3617
  %v3806 = vmul.f32 %v1174, %v3618
  %v3807 = vmul.f32 %v1175, %v3619
  %v3808 = vmul.f32 %v1176, %v3620
  %v3809 = vmul.f32 %v1177, %v3621
  %v3810 = vmul.f32 %v1178, %v3622
  %v3811 = vmul.f32 %v1179, %v3623
  %v3812 = vmul.f32 %v1180, %v3624
  %v3813 = vmul.f32 %v1181, %v3625
  %v3814 = vmul.f32 %v1182, %v3626
  %v3815 = vmul.f32 %v1183, %v3627
  %v3816 = vmul.f32 %v1184, %v3628
  %v3817 = vmul.f32 %v1185, %v3629
  %v3818 = vmul.f32 %v1186, %v3630
  %v3819 = vmul.f32 %v1187, %v3631
  %v3820 = vmul.f32 %v1188, %v3632
  %v3821 = vmul.f32 %v1189, %v3633
  %v3822 = vmul.f32 %v1190, %v3634
  %v3823 = vmul.f32 %v1191, %v3635
  %v3824 = vmul.f32 %v1192, %v3636
  %v3825 = vmul.f32 %v1193, %v3637
  %v3826 = vmul.f32 %v1194, %v3638
  %v3827 = vmul.f32 %v1195, %v3639
  %v3828 = vmul.f32 %v1196, %v3640
  %v3829 = vmul.f32 %v1197, %v3641
  %v3830 = vmul.f32 %v1198, %v3642
  %v3831 = vmul.f32 %v1199, %v3643
  %v3832 = vmul.f32 %v1200, %v3644
  %v3833 = vmul.f32 %v1201, %v3645
  %v3834 = vmul.f32 %v1202, %v3646
  %v3835 = vmul.f32 %v1203, %v3647
  %v3836 = vmul.f32 %v1204, %v3648
  %v3837 = vmul.f32 %v1205, %v3649
  %v3838 = vmul.f32 %v1206, %v3650
  %v3839 = vmul.f32 %v1207, %v3651
  %v3840 = vmul.f32 %v1208, %v3652
  %v3841 = vmul.f32 %v1209, %v3653
  %v3842 = vmul.f32 %v1210, %v3654
  %v3843 = vmul.f32 %v1211, %v3655
  %v3844 = vmul.f32 %v1212, %v3656
  %v3845 = vmul.f32 %v1213, %v3657
  %v3846 = vmul.f32 %v1214, %v3658
  %v3847 = vmul.f32 %v1215, %v3659
  %v3848 = vmul.f32 %v1216, %v3660
  %v3849 = vmul.f32 %v1217, %v3661
  %v3850 = vmul.f32 %v1218, %v3662
  %v3851 = vmul.f32 %v1219, %v3663
  %v3852 = vmul.f32 %v1220, %v3664
  %v3853 = vmul.f32 %v1221, %v3665
  %v3854 = vmul.f32 %v1222, %v3666
  %v3855 = vmul.f32 %v1223, %v3667
  %v3856 = vmul.f32 %v1224, %v3668
  %v3857 = vmul.f32 %v1225, %v3669
  %v3858 = vmul.f32 %v1226, %v3670
  %v3859 = vmul.f32 %v1227, %v3671
  %v3860 = vmul.f32 %v1228, %v3672
  %v3861 = vmul.f32 %v1229, %v3673
  %v3862 = vmul.f32 %v1230, %v3674
  %v3863 = vmul.f32 %v1231, %v3675
  %v3864 = vmul.f32 %v1232, %v3676
  %v3865 = vmul.f32 %v1233, %v3677
  %v3866 = vmul.f32 %v1234, %v3678
  %v3867 = vmul.f32 %v1235, %v3679
  %v3868 = vmul.f32 %v1236, %v3680
  %v3869 = vmul.f32 %v1237, %v3681
  %v3870 = vmul.f32 %v1238, %v3682
  %v3871 = vmul.f32 %v1239, %v3683
  %v3872 = vmul.f32 %v1240, %v3684
  %v3873 = vmul.f32 %v1241, %v3685
  %v3874 = vmul.f32 %v1242, %v3686
  %v3875 = vmul.f32 %v1243, %v3687
  %v3876 = vmul.f32 %v1244, %v3688
  %v3877 = vmul.f32 %v1245, %v3689
  %v3878 = vmul.f32 %v1246, %v3690
  %v3879 = vmul.f32 %v1247, %v3691
  %v3880 = vmul.f32 %v1248, %v3692
  %v3881 = vmul.f32 %v1249, %v3693
  %v3882 = vmul.f32 %v1250, %v3694
  %v3883 = vmul.f32 %v1251, %v3695
  %v3884 = vmul.f32 %v1252, %v3696
  %v3885 = vmul.f32 %v1253, %v3697
  %v3886 = vmul.f32 %v1254, %v3698
  %v3887 = vmul.f32 %v1255, %v3699
  %v3888 = vmul.f32 %v1256, %v3700
  %v3889 = vmul.f32 %v1257, %v3701
  %v3890 = vmul.f32 %v1258, %v3702
  %v3891 = vmul.f32 %v1259, %v3703
  %v3892 = vmul.f32 %v1260, %v3704
  %v3893 = vmul.f32 %v1261, %v3705
  %v3894 = vmul.f32 %v1262, %v3706
  %v3895 = vmul.f32 %v1263, %v3707
  %v3896 = vmul.f32 %v1264, %v3708
  %v3897 = vmul.f32 %v1265, %v3709
  %v3898 = vmul.f32 %v1266, %v3710
  %v3899 = vmul.f32 %v1267, %v3711
  %v3900 = vmul.f32 %v1268, %v3712
  %v3901 = vmul.f32 %v1269, %v3713
  %v3902 = vmul.f32 %v1270, %v3714
  %v3903 = vmul.f32 %v1271, %v3715
  %v3904 = vmul.f32 %v1272, %v3716
  %v3905 = vmul.f32 %v1273, %v3717
  %v3906 = vmul.f32 %v1274, %v3718
  %v3907 = vmul.f32 %v1275, %v3719
  %v3908 = vmul.f32 %v1276, %v3720
  %v3909 = vmul.f32 %v1277, %v3721
  %v3910 = vmul.f32 %v1278, %v3722
  %v3911 = vmul.f32 %v1279, %v3723
  %v3912 = vmul.f32 %v1280, %v3724
  %v3913 = vmul.f32 %v1281, %v3725
  %v3914 = vmul.f32 %v1282, %v3726
  %v3915 = vmul.f32 %v1283, %v3727
  %v3916 = vmul.f32 %v1284, %v3728
  %v3917 = vmul.f32 %v1285, %v3729
  %v3918 = vmul.f32 %v1286, %v3730
  %v3919 = vmul.f32 %v1287, %v3731
  %v3920 = vmul.f32 %v1288, %v3732
  %v3921 = vmul.f32 %v1289, %v3733
  %v3922 = vmul.f32 %v1290, %v3734
  %v3923 = vmul.f32 %v1291, %v3735
  %v3924 = vmul.f32 %v1292, %v3736
  %v3925 = vmul.f32 %v1293, %v3737
  %v3926 = vmul.f32 %v1294, %v3738
  %v3927 = vmul.f32 %v1295, %v3739
  %v3928 = vmul.f32 %v1296, %v3740
  %v3929 = vmul.f32 %v1297, %v3741
  %v3930 = vmul.f32 %v1298, %v3742
  %v3931 = vmul.f32 %v1299, %v3743
  %v3932 = vmul.f32 %v1300, %v3744
  %v3933 = vmul.f32 %v1301, %v3745
  %v3934 = vmul.f32 %v1302, %v3746
  %v3935 = vmul.f32 %v1303, %v3747
  %v3936 = vmul.f32 %v1304, %v3748
  %v3937 = vmul.f32 %v1305, %v3749
  %v3938 = vmul.f32 %v1306, %v3750
  %v3939 = vmul.f32 %v1307, %v3751
  %v3940 = vmul.f32 %v1308, %v3752
  %v3941 = vmul.f32 %v1309, %v3753
  %v3942 = vmul.f32 %v1310, %v3754
  %v3943 = vmul.f32 %v1311, %v3755
  %v3944 = vmul.f32 %v1312, %v3756
  %v3945 = vmul.f32 %v1313, %v3757
  %v3946 = vmul.f32 %v1314, %v3758
  %v3947 = vmul.f32 %v1315, %v3759
  %v3948 = vmul.f32 %v1316, %v3760
  %v3949 = vmul.f32 %v1317, %v3761
  %v3950 = vmul.f32 %v1318, %v3762
  %v3951 = vmul.f32 %v1319, %v3763
  %v3952 = vmul.f32 %v1320, %v3764
  %v3953 = vmul.f32 %v1321, %v3765
  %v3954 = vmul.f32 %v1322, %v3766
  %v3955 = vmul.f32 %v1323, %v3767
  %v3956 = vmul.f32 %v1324, %v3768
  %v3957 = vmul.f32 %v1325, %v3769
  %v3958 = vmul.f32 %v1326, %v3770
  %v3959 = vmul.f32 %v1327, %v3771
  %v3960 = vmul.f32 %v1328, %v3772
  %v3961 = vmul.f32 %v1329, %v3773
  %v3962 = vmul.f32 %v1330, %v3774
  %v3963 = vmul.f32 %v1331, %v3775
  %v3964 = vmul.f32 %v1332, %v3776
  %v3965 = vmul.f32 %v1333, %v3777
  %4154 = vrot.lane.b32.xlu0 %v3778, 1
  %v4155 = vpop.permute.xlu0 %4154
  %4156 = vrot.lane.b32.xlu0 %v3779, 1
  %v4157 = vpop.permute.xlu0 %4156
  %4158 = vrot.lane.b32.xlu0 %v3780, 1
  %v4159 = vpop.permute.xlu0 %4158
  %4160 = vrot.lane.b32.xlu0 %v3781, 1
  %v4161 = vpop.permute.xlu0 %4160
  %4162 = vrot.lane.b32.xlu0 %v3782, 1
  %v4163 = vpop.permute.xlu0 %4162
  %4164 = vrot.lane.b32.xlu0 %v3783, 1
  %v4165 = vpop.permute.xlu0 %4164
  %4166 = vrot.lane.b32.xlu0 %v3784, 1
  %v4167 = vpop.permute.xlu0 %4166
  %4168 = vrot.lane.b32.xlu0 %v3785, 1
  %v4169 = vpop.permute.xlu0 %4168
  %4170 = vrot.lane.b32.xlu0 %v3786, 1
  %v4171 = vpop.permute.xlu0 %4170
  %4172 = vrot.lane.b32.xlu0 %v3787, 1
  %v4173 = vpop.permute.xlu0 %4172
  %4174 = vrot.lane.b32.xlu0 %v3788, 1
  %v4175 = vpop.permute.xlu0 %4174
  %4176 = vrot.lane.b32.xlu0 %v3789, 1
  %v4177 = vpop.permute.xlu0 %4176
  %4178 = vrot.lane.b32.xlu0 %v3790, 1
  %v4179 = vpop.permute.xlu0 %4178
  %4180 = vrot.lane.b32.xlu0 %v3791, 1
  %v4181 = vpop.permute.xlu0 %4180
  %4182 = vrot.lane.b32.xlu0 %v3792, 1
  %v4183 = vpop.permute.xlu0 %4182
  %4184 = vrot.lane.b32.xlu0 %v3793, 1
  %v4185 = vpop.permute.xlu0 %4184
  %4186 = vrot.lane.b32.xlu0 %v3794, 1
  %v4187 = vpop.permute.xlu0 %4186
  %4188 = vrot.lane.b32.xlu0 %v3795, 1
  %v4189 = vpop.permute.xlu0 %4188
  %4190 = vrot.lane.b32.xlu0 %v3796, 1
  %v4191 = vpop.permute.xlu0 %4190
  %4192 = vrot.lane.b32.xlu0 %v3797, 1
  %v4193 = vpop.permute.xlu0 %4192
  %4194 = vrot.lane.b32.xlu0 %v3798, 1
  %v4195 = vpop.permute.xlu0 %4194
  %4196 = vrot.lane.b32.xlu0 %v3799, 1
  %v4197 = vpop.permute.xlu0 %4196
  %4198 = vrot.lane.b32.xlu0 %v3800, 1
  %v4199 = vpop.permute.xlu0 %4198
  %4200 = vrot.lane.b32.xlu0 %v3801, 1
  %v4201 = vpop.permute.xlu0 %4200
  %4202 = vrot.lane.b32.xlu0 %v3802, 1
  %v4203 = vpop.permute.xlu0 %4202
  %4204 = vrot.lane.b32.xlu0 %v3803, 1
  %v4205 = vpop.permute.xlu0 %4204
  %4206 = vrot.lane.b32.xlu0 %v3804, 1
  %v4207 = vpop.permute.xlu0 %4206
  %4208 = vrot.lane.b32.xlu0 %v3805, 1
  %v4209 = vpop.permute.xlu0 %4208
  %4210 = vrot.lane.b32.xlu0 %v3806, 1
  %v4211 = vpop.permute.xlu0 %4210
  %4212 = vrot.lane.b32.xlu0 %v3807, 1
  %v4213 = vpop.permute.xlu0 %4212
  %4214 = vrot.lane.b32.xlu0 %v3808, 1
  %v4215 = vpop.permute.xlu0 %4214
  %4216 = vrot.lane.b32.xlu0 %v3809, 1
  %v4217 = vpop.permute.xlu0 %4216
  %4218 = vrot.lane.b32.xlu0 %v3810, 1
  %v4219 = vpop.permute.xlu0 %4218
  %4220 = vrot.lane.b32.xlu0 %v3811, 1
  %v4221 = vpop.permute.xlu0 %4220
  %4222 = vrot.lane.b32.xlu0 %v3812, 1
  %v4223 = vpop.permute.xlu0 %4222
  %4224 = vrot.lane.b32.xlu0 %v3813, 1
  %v4225 = vpop.permute.xlu0 %4224
  %4226 = vrot.lane.b32.xlu0 %v3814, 1
  %v4227 = vpop.permute.xlu0 %4226
  %4228 = vrot.lane.b32.xlu0 %v3815, 1
  %v4229 = vpop.permute.xlu0 %4228
  %4230 = vrot.lane.b32.xlu0 %v3816, 1
  %v4231 = vpop.permute.xlu0 %4230
  %4232 = vrot.lane.b32.xlu0 %v3817, 1
  %v4233 = vpop.permute.xlu0 %4232
  %4234 = vrot.lane.b32.xlu0 %v3818, 1
  %v4235 = vpop.permute.xlu0 %4234
  %4236 = vrot.lane.b32.xlu0 %v3819, 1
  %v4237 = vpop.permute.xlu0 %4236
  %4238 = vrot.lane.b32.xlu0 %v3820, 1
  %v4239 = vpop.permute.xlu0 %4238
  %4240 = vrot.lane.b32.xlu0 %v3821, 1
  %v4241 = vpop.permute.xlu0 %4240
  %4242 = vrot.lane.b32.xlu0 %v3822, 1
  %v4243 = vpop.permute.xlu0 %4242
  %4244 = vrot.lane.b32.xlu0 %v3823, 1
  %v4245 = vpop.permute.xlu0 %4244
  %4246 = vrot.lane.b32.xlu0 %v3824, 1
  %v4247 = vpop.permute.xlu0 %4246
  %4248 = vrot.lane.b32.xlu0 %v3825, 1
  %v4249 = vpop.permute.xlu0 %4248
  %4250 = vrot.lane.b32.xlu0 %v3826, 1
  %v4251 = vpop.permute.xlu0 %4250
  %4252 = vrot.lane.b32.xlu0 %v3827, 1
  %v4253 = vpop.permute.xlu0 %4252
  %4254 = vrot.lane.b32.xlu0 %v3828, 1
  %v4255 = vpop.permute.xlu0 %4254
  %4256 = vrot.lane.b32.xlu0 %v3829, 1
  %v4257 = vpop.permute.xlu0 %4256
  %4258 = vrot.lane.b32.xlu0 %v3830, 1
  %v4259 = vpop.permute.xlu0 %4258
  %4260 = vrot.lane.b32.xlu0 %v3831, 1
  %v4261 = vpop.permute.xlu0 %4260
  %4262 = vrot.lane.b32.xlu0 %v3832, 1
  %v4263 = vpop.permute.xlu0 %4262
  %4264 = vrot.lane.b32.xlu0 %v3833, 1
  %v4265 = vpop.permute.xlu0 %4264
  %4266 = vrot.lane.b32.xlu0 %v3834, 1
  %v4267 = vpop.permute.xlu0 %4266
  %4268 = vrot.lane.b32.xlu0 %v3835, 1
  %v4269 = vpop.permute.xlu0 %4268
  %4270 = vrot.lane.b32.xlu0 %v3836, 1
  %v4271 = vpop.permute.xlu0 %4270
  %4272 = vrot.lane.b32.xlu0 %v3837, 1
  %v4273 = vpop.permute.xlu0 %4272
  %4274 = vrot.lane.b32.xlu0 %v3838, 1
  %v4275 = vpop.permute.xlu0 %4274
  %4276 = vrot.lane.b32.xlu0 %v3839, 1
  %v4277 = vpop.permute.xlu0 %4276
  %4278 = vrot.lane.b32.xlu0 %v3840, 1
  %v4279 = vpop.permute.xlu0 %4278
  %4280 = vrot.lane.b32.xlu0 %v3841, 1
  %v4281 = vpop.permute.xlu0 %4280
  %4282 = vrot.lane.b32.xlu0 %v3842, 1
  %v4283 = vpop.permute.xlu0 %4282
  %4284 = vrot.lane.b32.xlu0 %v3843, 1
  %v4285 = vpop.permute.xlu0 %4284
  %4286 = vrot.lane.b32.xlu0 %v3844, 1
  %v4287 = vpop.permute.xlu0 %4286
  %4288 = vrot.lane.b32.xlu0 %v3845, 1
  %v4289 = vpop.permute.xlu0 %4288
  %4290 = vrot.lane.b32.xlu0 %v3846, 1
  %v4291 = vpop.permute.xlu0 %4290
  %4292 = vrot.lane.b32.xlu0 %v3847, 1
  %v4293 = vpop.permute.xlu0 %4292
  %4294 = vrot.lane.b32.xlu0 %v3848, 1
  %v4295 = vpop.permute.xlu0 %4294
  %4296 = vrot.lane.b32.xlu0 %v3849, 1
  %v4297 = vpop.permute.xlu0 %4296
  %4298 = vrot.lane.b32.xlu0 %v3850, 1
  %v4299 = vpop.permute.xlu0 %4298
  %4300 = vrot.lane.b32.xlu0 %v3851, 1
  %v4301 = vpop.permute.xlu0 %4300
  %4302 = vrot.lane.b32.xlu0 %v3852, 1
  %v4303 = vpop.permute.xlu0 %4302
  %4304 = vrot.lane.b32.xlu0 %v3853, 1
  %v4305 = vpop.permute.xlu0 %4304
  %4306 = vrot.lane.b32.xlu0 %v3854, 1
  %v4307 = vpop.permute.xlu0 %4306
  %4308 = vrot.lane.b32.xlu0 %v3855, 1
  %v4309 = vpop.permute.xlu0 %4308
  %4310 = vrot.lane.b32.xlu0 %v3856, 1
  %v4311 = vpop.permute.xlu0 %4310
  %4312 = vrot.lane.b32.xlu0 %v3857, 1
  %v4313 = vpop.permute.xlu0 %4312
  %4314 = vrot.lane.b32.xlu0 %v3858, 1
  %v4315 = vpop.permute.xlu0 %4314
  %4316 = vrot.lane.b32.xlu0 %v3859, 1
  %v4317 = vpop.permute.xlu0 %4316
  %4318 = vrot.lane.b32.xlu0 %v3860, 1
  %v4319 = vpop.permute.xlu0 %4318
  %4320 = vrot.lane.b32.xlu0 %v3861, 1
  %v4321 = vpop.permute.xlu0 %4320
  %4322 = vrot.lane.b32.xlu0 %v3862, 1
  %v4323 = vpop.permute.xlu0 %4322
  %4324 = vrot.lane.b32.xlu0 %v3863, 1
  %v4325 = vpop.permute.xlu0 %4324
  %4326 = vrot.lane.b32.xlu0 %v3864, 1
  %v4327 = vpop.permute.xlu0 %4326
  %4328 = vrot.lane.b32.xlu0 %v3865, 1
  %v4329 = vpop.permute.xlu0 %4328
  %4330 = vrot.lane.b32.xlu0 %v3866, 1
  %v4331 = vpop.permute.xlu0 %4330
  %4332 = vrot.lane.b32.xlu0 %v3867, 1
  %v4333 = vpop.permute.xlu0 %4332
  %4334 = vrot.lane.b32.xlu0 %v3868, 1
  %v4335 = vpop.permute.xlu0 %4334
  %4336 = vrot.lane.b32.xlu0 %v3869, 1
  %v4337 = vpop.permute.xlu0 %4336
  %4338 = vrot.lane.b32.xlu0 %v3870, 1
  %v4339 = vpop.permute.xlu0 %4338
  %4340 = vrot.lane.b32.xlu0 %v3871, 1
  %v4341 = vpop.permute.xlu0 %4340
  %4342 = vrot.lane.b32.xlu0 %v3872, 1
  %v4343 = vpop.permute.xlu0 %4342
  %4344 = vrot.lane.b32.xlu0 %v3873, 1
  %v4345 = vpop.permute.xlu0 %4344
  %4346 = vrot.lane.b32.xlu0 %v3874, 1
  %v4347 = vpop.permute.xlu0 %4346
  %4348 = vrot.lane.b32.xlu0 %v3875, 1
  %v4349 = vpop.permute.xlu0 %4348
  %4350 = vrot.lane.b32.xlu0 %v3876, 1
  %v4351 = vpop.permute.xlu0 %4350
  %4352 = vrot.lane.b32.xlu0 %v3877, 1
  %v4353 = vpop.permute.xlu0 %4352
  %4354 = vrot.lane.b32.xlu0 %v3878, 1
  %v4355 = vpop.permute.xlu0 %4354
  %4356 = vrot.lane.b32.xlu0 %v3879, 1
  %v4357 = vpop.permute.xlu0 %4356
  %4358 = vrot.lane.b32.xlu0 %v3880, 1
  %v4359 = vpop.permute.xlu0 %4358
  %4360 = vrot.lane.b32.xlu0 %v3881, 1
  %v4361 = vpop.permute.xlu0 %4360
  %4362 = vrot.lane.b32.xlu0 %v3882, 1
  %v4363 = vpop.permute.xlu0 %4362
  %4364 = vrot.lane.b32.xlu0 %v3883, 1
  %v4365 = vpop.permute.xlu0 %4364
  %4366 = vrot.lane.b32.xlu0 %v3884, 1
  %v4367 = vpop.permute.xlu0 %4366
  %4368 = vrot.lane.b32.xlu0 %v3885, 1
  %v4369 = vpop.permute.xlu0 %4368
  %4370 = vrot.lane.b32.xlu0 %v3886, 1
  %v4371 = vpop.permute.xlu0 %4370
  %4372 = vrot.lane.b32.xlu0 %v3887, 1
  %v4373 = vpop.permute.xlu0 %4372
  %4374 = vrot.lane.b32.xlu0 %v3888, 1
  %v4375 = vpop.permute.xlu0 %4374
  %4376 = vrot.lane.b32.xlu0 %v3889, 1
  %v4377 = vpop.permute.xlu0 %4376
  %4378 = vrot.lane.b32.xlu0 %v3890, 1
  %v4379 = vpop.permute.xlu0 %4378
  %4380 = vrot.lane.b32.xlu0 %v3891, 1
  %v4381 = vpop.permute.xlu0 %4380
  %4382 = vrot.lane.b32.xlu0 %v3892, 1
  %v4383 = vpop.permute.xlu0 %4382
  %4384 = vrot.lane.b32.xlu0 %v3893, 1
  %v4385 = vpop.permute.xlu0 %4384
  %4386 = vrot.lane.b32.xlu0 %v3894, 1
  %v4387 = vpop.permute.xlu0 %4386
  %4388 = vrot.lane.b32.xlu0 %v3895, 1
  %v4389 = vpop.permute.xlu0 %4388
  %4390 = vrot.lane.b32.xlu0 %v3896, 1
  %v4391 = vpop.permute.xlu0 %4390
  %4392 = vrot.lane.b32.xlu0 %v3897, 1
  %v4393 = vpop.permute.xlu0 %4392
  %4394 = vrot.lane.b32.xlu0 %v3898, 1
  %v4395 = vpop.permute.xlu0 %4394
  %4396 = vrot.lane.b32.xlu0 %v3899, 1
  %v4397 = vpop.permute.xlu0 %4396
  %4398 = vrot.lane.b32.xlu0 %v3900, 1
  %v4399 = vpop.permute.xlu0 %4398
  %4400 = vrot.lane.b32.xlu0 %v3901, 1
  %v4401 = vpop.permute.xlu0 %4400
  %4402 = vrot.lane.b32.xlu0 %v3902, 1
  %v4403 = vpop.permute.xlu0 %4402
  %4404 = vrot.lane.b32.xlu0 %v3903, 1
  %v4405 = vpop.permute.xlu0 %4404
  %4406 = vrot.lane.b32.xlu0 %v3904, 1
  %v4407 = vpop.permute.xlu0 %4406
  %4408 = vrot.lane.b32.xlu0 %v3905, 1
  %v4409 = vpop.permute.xlu0 %4408
  %4410 = vrot.lane.b32.xlu0 %v3906, 1
  %v4411 = vpop.permute.xlu0 %4410
  %4412 = vrot.lane.b32.xlu0 %v3907, 1
  %v4413 = vpop.permute.xlu0 %4412
  %4414 = vrot.lane.b32.xlu0 %v3908, 1
  %v4415 = vpop.permute.xlu0 %4414
  %4416 = vrot.lane.b32.xlu0 %v3909, 1
  %v4417 = vpop.permute.xlu0 %4416
  %4418 = vrot.lane.b32.xlu0 %v3910, 1
  %v4419 = vpop.permute.xlu0 %4418
  %4420 = vrot.lane.b32.xlu0 %v3911, 1
  %v4421 = vpop.permute.xlu0 %4420
  %4422 = vrot.lane.b32.xlu0 %v3912, 1
  %v4423 = vpop.permute.xlu0 %4422
  %4424 = vrot.lane.b32.xlu0 %v3913, 1
  %v4425 = vpop.permute.xlu0 %4424
  %4426 = vrot.lane.b32.xlu0 %v3914, 1
  %v4427 = vpop.permute.xlu0 %4426
  %4428 = vrot.lane.b32.xlu0 %v3915, 1
  %v4429 = vpop.permute.xlu0 %4428
  %4430 = vrot.lane.b32.xlu0 %v3916, 1
  %v4431 = vpop.permute.xlu0 %4430
  %4432 = vrot.lane.b32.xlu0 %v3917, 1
  %v4433 = vpop.permute.xlu0 %4432
  %4434 = vrot.lane.b32.xlu0 %v3918, 1
  %v4435 = vpop.permute.xlu0 %4434
  %4436 = vrot.lane.b32.xlu0 %v3919, 1
  %v4437 = vpop.permute.xlu0 %4436
  %4438 = vrot.lane.b32.xlu0 %v3920, 1
  %v4439 = vpop.permute.xlu0 %4438
  %4440 = vrot.lane.b32.xlu0 %v3921, 1
  %v4441 = vpop.permute.xlu0 %4440
  %4442 = vrot.lane.b32.xlu0 %v3922, 1
  %v4443 = vpop.permute.xlu0 %4442
  %4444 = vrot.lane.b32.xlu0 %v3923, 1
  %v4445 = vpop.permute.xlu0 %4444
  %4446 = vrot.lane.b32.xlu0 %v3924, 1
  %v4447 = vpop.permute.xlu0 %4446
  %4448 = vrot.lane.b32.xlu0 %v3925, 1
  %v4449 = vpop.permute.xlu0 %4448
  %4450 = vrot.lane.b32.xlu0 %v3926, 1
  %v4451 = vpop.permute.xlu0 %4450
  %4452 = vrot.lane.b32.xlu0 %v3927, 1
  %v4453 = vpop.permute.xlu0 %4452
  %4454 = vrot.lane.b32.xlu0 %v3928, 1
  %v4455 = vpop.permute.xlu0 %4454
  %4456 = vrot.lane.b32.xlu0 %v3929, 1
  %v4457 = vpop.permute.xlu0 %4456
  %4458 = vrot.lane.b32.xlu0 %v3930, 1
  %v4459 = vpop.permute.xlu0 %4458
  %4460 = vrot.lane.b32.xlu0 %v3931, 1
  %v4461 = vpop.permute.xlu0 %4460
  %4462 = vrot.lane.b32.xlu0 %v3932, 1
  %v4463 = vpop.permute.xlu0 %4462
  %4464 = vrot.lane.b32.xlu0 %v3933, 1
  %v4465 = vpop.permute.xlu0 %4464
  %4466 = vrot.lane.b32.xlu0 %v3934, 1
  %v4467 = vpop.permute.xlu0 %4466
  %4468 = vrot.lane.b32.xlu0 %v3935, 1
  %v4469 = vpop.permute.xlu0 %4468
  %4470 = vrot.lane.b32.xlu0 %v3936, 1
  %v4471 = vpop.permute.xlu0 %4470
  %4472 = vrot.lane.b32.xlu0 %v3937, 1
  %v4473 = vpop.permute.xlu0 %4472
  %4474 = vrot.lane.b32.xlu0 %v3938, 1
  %v4475 = vpop.permute.xlu0 %4474
  %4476 = vrot.lane.b32.xlu0 %v3939, 1
  %v4477 = vpop.permute.xlu0 %4476
  %4478 = vrot.lane.b32.xlu0 %v3940, 1
  %v4479 = vpop.permute.xlu0 %4478
  %4480 = vrot.lane.b32.xlu0 %v3941, 1
  %v4481 = vpop.permute.xlu0 %4480
  %4482 = vrot.lane.b32.xlu0 %v3942, 1
  %v4483 = vpop.permute.xlu0 %4482
  %4484 = vrot.lane.b32.xlu0 %v3943, 1
  %v4485 = vpop.permute.xlu0 %4484
  %4486 = vrot.lane.b32.xlu0 %v3944, 1
  %v4487 = vpop.permute.xlu0 %4486
  %4488 = vrot.lane.b32.xlu0 %v3945, 1
  %v4489 = vpop.permute.xlu0 %4488
  %4490 = vrot.lane.b32.xlu0 %v3946, 1
  %v4491 = vpop.permute.xlu0 %4490
  %4492 = vrot.lane.b32.xlu0 %v3947, 1
  %v4493 = vpop.permute.xlu0 %4492
  %4494 = vrot.lane.b32.xlu0 %v3948, 1
  %v4495 = vpop.permute.xlu0 %4494
  %4496 = vrot.lane.b32.xlu0 %v3949, 1
  %v4497 = vpop.permute.xlu0 %4496
  %4498 = vrot.lane.b32.xlu0 %v3950, 1
  %v4499 = vpop.permute.xlu0 %4498
  %4500 = vrot.lane.b32.xlu0 %v3951, 1
  %v4501 = vpop.permute.xlu0 %4500
  %4502 = vrot.lane.b32.xlu0 %v3952, 1
  %v4503 = vpop.permute.xlu0 %4502
  %4504 = vrot.lane.b32.xlu0 %v3953, 1
  %v4505 = vpop.permute.xlu0 %4504
  %4506 = vrot.lane.b32.xlu0 %v3954, 1
  %v4507 = vpop.permute.xlu0 %4506
  %4508 = vrot.lane.b32.xlu0 %v3955, 1
  %v4509 = vpop.permute.xlu0 %4508
  %4510 = vrot.lane.b32.xlu0 %v3956, 1
  %v4511 = vpop.permute.xlu0 %4510
  %4512 = vrot.lane.b32.xlu0 %v3957, 1
  %v4513 = vpop.permute.xlu0 %4512
  %4514 = vrot.lane.b32.xlu0 %v3958, 1
  %v4515 = vpop.permute.xlu0 %4514
  %4516 = vrot.lane.b32.xlu0 %v3959, 1
  %v4517 = vpop.permute.xlu0 %4516
  %4518 = vrot.lane.b32.xlu0 %v3960, 1
  %v4519 = vpop.permute.xlu0 %4518
  %4520 = vrot.lane.b32.xlu0 %v3961, 1
  %v4521 = vpop.permute.xlu0 %4520
  %4522 = vrot.lane.b32.xlu0 %v3962, 1
  %v4523 = vpop.permute.xlu0 %4522
  %4524 = vrot.lane.b32.xlu0 %v3963, 1
  %v4525 = vpop.permute.xlu0 %4524
  %4526 = vrot.lane.b32.xlu0 %v3964, 1
  %v4527 = vpop.permute.xlu0 %4526
  %4528 = vrot.lane.b32.xlu0 %v3965, 1
  %v4529 = vpop.permute.xlu0 %4528
  %v4718 = vsub.f32 %v3026, %v4155
  %v4719 = vsub.f32 %v3027, %v4157
  %v4720 = vsub.f32 %v3028, %v4159
  %v4721 = vsub.f32 %v3029, %v4161
  %v4722 = vsub.f32 %v3030, %v4163
  %v4723 = vsub.f32 %v3031, %v4165
  %v4724 = vsub.f32 %v3032, %v4167
  %v4725 = vsub.f32 %v3033, %v4169
  %v4726 = vsub.f32 %v3034, %v4171
  %v4727 = vsub.f32 %v3035, %v4173
  %v4728 = vsub.f32 %v3036, %v4175
  %v4729 = vsub.f32 %v3037, %v4177
  %v4730 = vsub.f32 %v3038, %v4179
  %v4731 = vsub.f32 %v3039, %v4181
  %v4732 = vsub.f32 %v3040, %v4183
  %v4733 = vsub.f32 %v3041, %v4185
  %v4734 = vsub.f32 %v3042, %v4187
  %v4735 = vsub.f32 %v3043, %v4189
  %v4736 = vsub.f32 %v3044, %v4191
  %v4737 = vsub.f32 %v3045, %v4193
  %v4738 = vsub.f32 %v3046, %v4195
  %v4739 = vsub.f32 %v3047, %v4197
  %v4740 = vsub.f32 %v3048, %v4199
  %v4741 = vsub.f32 %v3049, %v4201
  %v4742 = vsub.f32 %v3050, %v4203
  %v4743 = vsub.f32 %v3051, %v4205
  %v4744 = vsub.f32 %v3052, %v4207
  %v4745 = vsub.f32 %v3053, %v4209
  %v4746 = vsub.f32 %v3054, %v4211
  %v4747 = vsub.f32 %v3055, %v4213
  %v4748 = vsub.f32 %v3056, %v4215
  %v4749 = vsub.f32 %v3057, %v4217
  %v4750 = vsub.f32 %v3058, %v4219
  %v4751 = vsub.f32 %v3059, %v4221
  %v4752 = vsub.f32 %v3060, %v4223
  %v4753 = vsub.f32 %v3061, %v4225
  %v4754 = vsub.f32 %v3062, %v4227
  %v4755 = vsub.f32 %v3063, %v4229
  %v4756 = vsub.f32 %v3064, %v4231
  %v4757 = vsub.f32 %v3065, %v4233
  %v4758 = vsub.f32 %v3066, %v4235
  %v4759 = vsub.f32 %v3067, %v4237
  %v4760 = vsub.f32 %v3068, %v4239
  %v4761 = vsub.f32 %v3069, %v4241
  %v4762 = vsub.f32 %v3070, %v4243
  %v4763 = vsub.f32 %v3071, %v4245
  %v4764 = vsub.f32 %v3072, %v4247
  %v4765 = vsub.f32 %v3073, %v4249
  %v4766 = vsub.f32 %v3074, %v4251
  %v4767 = vsub.f32 %v3075, %v4253
  %v4768 = vsub.f32 %v3076, %v4255
  %v4769 = vsub.f32 %v3077, %v4257
  %v4770 = vsub.f32 %v3078, %v4259
  %v4771 = vsub.f32 %v3079, %v4261
  %v4772 = vsub.f32 %v3080, %v4263
  %v4773 = vsub.f32 %v3081, %v4265
  %v4774 = vsub.f32 %v3082, %v4267
  %v4775 = vsub.f32 %v3083, %v4269
  %v4776 = vsub.f32 %v3084, %v4271
  %v4777 = vsub.f32 %v3085, %v4273
  %v4778 = vsub.f32 %v3086, %v4275
  %v4779 = vsub.f32 %v3087, %v4277
  %v4780 = vsub.f32 %v3088, %v4279
  %v4781 = vsub.f32 %v3089, %v4281
  %v4782 = vsub.f32 %v3090, %v4283
  %v4783 = vsub.f32 %v3091, %v4285
  %v4784 = vsub.f32 %v3092, %v4287
  %v4785 = vsub.f32 %v3093, %v4289
  %v4786 = vsub.f32 %v3094, %v4291
  %v4787 = vsub.f32 %v3095, %v4293
  %v4788 = vsub.f32 %v3096, %v4295
  %v4789 = vsub.f32 %v3097, %v4297
  %v4790 = vsub.f32 %v3098, %v4299
  %v4791 = vsub.f32 %v3099, %v4301
  %v4792 = vsub.f32 %v3100, %v4303
  %v4793 = vsub.f32 %v3101, %v4305
  %v4794 = vsub.f32 %v3102, %v4307
  %v4795 = vsub.f32 %v3103, %v4309
  %v4796 = vsub.f32 %v3104, %v4311
  %v4797 = vsub.f32 %v3105, %v4313
  %v4798 = vsub.f32 %v3106, %v4315
  %v4799 = vsub.f32 %v3107, %v4317
  %v4800 = vsub.f32 %v3108, %v4319
  %v4801 = vsub.f32 %v3109, %v4321
  %v4802 = vsub.f32 %v3110, %v4323
  %v4803 = vsub.f32 %v3111, %v4325
  %v4804 = vsub.f32 %v3112, %v4327
  %v4805 = vsub.f32 %v3113, %v4329
  %v4806 = vsub.f32 %v3114, %v4331
  %v4807 = vsub.f32 %v3115, %v4333
  %v4808 = vsub.f32 %v3116, %v4335
  %v4809 = vsub.f32 %v3117, %v4337
  %v4810 = vsub.f32 %v3118, %v4339
  %v4811 = vsub.f32 %v3119, %v4341
  %v4812 = vsub.f32 %v3120, %v4343
  %v4813 = vsub.f32 %v3121, %v4345
  %v4814 = vsub.f32 %v3122, %v4347
  %v4815 = vsub.f32 %v3123, %v4349
  %v4816 = vsub.f32 %v3124, %v4351
  %v4817 = vsub.f32 %v3125, %v4353
  %v4818 = vsub.f32 %v3126, %v4355
  %v4819 = vsub.f32 %v3127, %v4357
  %v4820 = vsub.f32 %v3128, %v4359
  %v4821 = vsub.f32 %v3129, %v4361
  %v4822 = vsub.f32 %v3130, %v4363
  %v4823 = vsub.f32 %v3131, %v4365
  %v4824 = vsub.f32 %v3132, %v4367
  %v4825 = vsub.f32 %v3133, %v4369
  %v4826 = vsub.f32 %v3134, %v4371
  %v4827 = vsub.f32 %v3135, %v4373
  %v4828 = vsub.f32 %v3136, %v4375
  %v4829 = vsub.f32 %v3137, %v4377
  %v4830 = vsub.f32 %v3138, %v4379
  %v4831 = vsub.f32 %v3139, %v4381
  %v4832 = vsub.f32 %v3140, %v4383
  %v4833 = vsub.f32 %v3141, %v4385
  %v4834 = vsub.f32 %v3142, %v4387
  %v4835 = vsub.f32 %v3143, %v4389
  %v4836 = vsub.f32 %v3144, %v4391
  %v4837 = vsub.f32 %v3145, %v4393
  %v4838 = vsub.f32 %v3146, %v4395
  %v4839 = vsub.f32 %v3147, %v4397
  %v4840 = vsub.f32 %v3148, %v4399
  %v4841 = vsub.f32 %v3149, %v4401
  %v4842 = vsub.f32 %v3150, %v4403
  %v4843 = vsub.f32 %v3151, %v4405
  %v4844 = vsub.f32 %v3152, %v4407
  %v4845 = vsub.f32 %v3153, %v4409
  %v4846 = vsub.f32 %v3154, %v4411
  %v4847 = vsub.f32 %v3155, %v4413
  %v4848 = vsub.f32 %v3156, %v4415
  %v4849 = vsub.f32 %v3157, %v4417
  %v4850 = vsub.f32 %v3158, %v4419
  %v4851 = vsub.f32 %v3159, %v4421
  %v4852 = vsub.f32 %v3160, %v4423
  %v4853 = vsub.f32 %v3161, %v4425
  %v4854 = vsub.f32 %v3162, %v4427
  %v4855 = vsub.f32 %v3163, %v4429
  %v4856 = vsub.f32 %v3164, %v4431
  %v4857 = vsub.f32 %v3165, %v4433
  %v4858 = vsub.f32 %v3166, %v4435
  %v4859 = vsub.f32 %v3167, %v4437
  %v4860 = vsub.f32 %v3168, %v4439
  %v4861 = vsub.f32 %v3169, %v4441
  %v4862 = vsub.f32 %v3170, %v4443
  %v4863 = vsub.f32 %v3171, %v4445
  %v4864 = vsub.f32 %v3172, %v4447
  %v4865 = vsub.f32 %v3173, %v4449
  %v4866 = vsub.f32 %v3174, %v4451
  %v4867 = vsub.f32 %v3175, %v4453
  %v4868 = vsub.f32 %v3176, %v4455
  %v4869 = vsub.f32 %v3177, %v4457
  %v4870 = vsub.f32 %v3178, %v4459
  %v4871 = vsub.f32 %v3179, %v4461
  %v4872 = vsub.f32 %v3180, %v4463
  %v4873 = vsub.f32 %v3181, %v4465
  %v4874 = vsub.f32 %v3182, %v4467
  %v4875 = vsub.f32 %v3183, %v4469
  %v4876 = vsub.f32 %v3184, %v4471
  %v4877 = vsub.f32 %v3185, %v4473
  %v4878 = vsub.f32 %v3186, %v4475
  %v4879 = vsub.f32 %v3187, %v4477
  %v4880 = vsub.f32 %v3188, %v4479
  %v4881 = vsub.f32 %v3189, %v4481
  %v4882 = vsub.f32 %v3190, %v4483
  %v4883 = vsub.f32 %v3191, %v4485
  %v4884 = vsub.f32 %v3192, %v4487
  %v4885 = vsub.f32 %v3193, %v4489
  %v4886 = vsub.f32 %v3194, %v4491
  %v4887 = vsub.f32 %v3195, %v4493
  %v4888 = vsub.f32 %v3196, %v4495
  %v4889 = vsub.f32 %v3197, %v4497
  %v4890 = vsub.f32 %v3198, %v4499
  %v4891 = vsub.f32 %v3199, %v4501
  %v4892 = vsub.f32 %v3200, %v4503
  %v4893 = vsub.f32 %v3201, %v4505
  %v4894 = vsub.f32 %v3202, %v4507
  %v4895 = vsub.f32 %v3203, %v4509
  %v4896 = vsub.f32 %v3204, %v4511
  %v4897 = vsub.f32 %v3205, %v4513
  %v4898 = vsub.f32 %v3206, %v4515
  %v4899 = vsub.f32 %v3207, %v4517
  %v4900 = vsub.f32 %v3208, %v4519
  %v4901 = vsub.f32 %v3209, %v4521
  %v4902 = vsub.f32 %v3210, %v4523
  %v4903 = vsub.f32 %v3211, %v4525
  %v4904 = vsub.f32 %v3212, %v4527
  %v4905 = vsub.f32 %v3213, %v4529
  %4907 = vset.pattern.permute.xlu0 0
  %4908 = vperm.xlu0 %4907, %v3590
  %v4909 = vpop.permute.xlu0 %4908
  %4912 = vset.pattern.permute.xlu0 0
  %4913 = vperm.xlu0 %4912, %v3591
  %v4914 = vpop.permute.xlu0 %4913
  %4917 = vset.pattern.permute.xlu0 0
  %4918 = vperm.xlu0 %4917, %v3592
  %v4919 = vpop.permute.xlu0 %4918
  %4922 = vset.pattern.permute.xlu0 0
  %4923 = vperm.xlu0 %4922, %v3593
  %v4924 = vpop.permute.xlu0 %4923
  %4927 = vset.pattern.permute.xlu0 0
  %4928 = vperm.xlu0 %4927, %v3594
  %v4929 = vpop.permute.xlu0 %4928
  %4932 = vset.pattern.permute.xlu0 0
  %4933 = vperm.xlu0 %4932, %v3595
  %v4934 = vpop.permute.xlu0 %4933
  %4937 = vset.pattern.permute.xlu0 0
  %4938 = vperm.xlu0 %4937, %v3596
  %v4939 = vpop.permute.xlu0 %4938
  %4942 = vset.pattern.permute.xlu0 0
  %4943 = vperm.xlu0 %4942, %v3597
  %v4944 = vpop.permute.xlu0 %4943
  %4947 = vset.pattern.permute.xlu0 0
  %4948 = vperm.xlu0 %4947, %v3598
  %v4949 = vpop.permute.xlu0 %4948
  %4952 = vset.pattern.permute.xlu0 0
  %4953 = vperm.xlu0 %4952, %v3599
  %v4954 = vpop.permute.xlu0 %4953
  %4957 = vset.pattern.permute.xlu0 0
  %4958 = vperm.xlu0 %4957, %v3600
  %v4959 = vpop.permute.xlu0 %4958
  %4962 = vset.pattern.permute.xlu0 0
  %4963 = vperm.xlu0 %4962, %v3601
  %v4964 = vpop.permute.xlu0 %4963
  %4967 = vset.pattern.permute.xlu0 0
  %4968 = vperm.xlu0 %4967, %v3602
  %v4969 = vpop.permute.xlu0 %4968
  %4972 = vset.pattern.permute.xlu0 0
  %4973 = vperm.xlu0 %4972, %v3603
  %v4974 = vpop.permute.xlu0 %4973
  %4977 = vset.pattern.permute.xlu0 0
  %4978 = vperm.xlu0 %4977, %v3604
  %v4979 = vpop.permute.xlu0 %4978
  %4982 = vset.pattern.permute.xlu0 0
  %4983 = vperm.xlu0 %4982, %v3605
  %v4984 = vpop.permute.xlu0 %4983
  %4987 = vset.pattern.permute.xlu0 0
  %4988 = vperm.xlu0 %4987, %v3606
  %v4989 = vpop.permute.xlu0 %4988
  %4992 = vset.pattern.permute.xlu0 0
  %4993 = vperm.xlu0 %4992, %v3607
  %v4994 = vpop.permute.xlu0 %4993
  %4997 = vset.pattern.permute.xlu0 0
  %4998 = vperm.xlu0 %4997, %v3608
  %v4999 = vpop.permute.xlu0 %4998
  %5002 = vset.pattern.permute.xlu0 0
  %5003 = vperm.xlu0 %5002, %v3609
  %v5004 = vpop.permute.xlu0 %5003
  %5007 = vset.pattern.permute.xlu0 0
  %5008 = vperm.xlu0 %5007, %v3610
  %v5009 = vpop.permute.xlu0 %5008
  %5012 = vset.pattern.permute.xlu0 0
  %5013 = vperm.xlu0 %5012, %v3611
  %v5014 = vpop.permute.xlu0 %5013
  %5017 = vset.pattern.permute.xlu0 0
  %5018 = vperm.xlu0 %5017, %v3612
  %v5019 = vpop.permute.xlu0 %5018
  %5022 = vset.pattern.permute.xlu0 0
  %5023 = vperm.xlu0 %5022, %v3613
  %v5024 = vpop.permute.xlu0 %5023
  %5027 = vset.pattern.permute.xlu0 0
  %5028 = vperm.xlu0 %5027, %v3614
  %v5029 = vpop.permute.xlu0 %5028
  %5032 = vset.pattern.permute.xlu0 0
  %5033 = vperm.xlu0 %5032, %v3615
  %v5034 = vpop.permute.xlu0 %5033
  %5037 = vset.pattern.permute.xlu0 0
  %5038 = vperm.xlu0 %5037, %v3616
  %v5039 = vpop.permute.xlu0 %5038
  %5042 = vset.pattern.permute.xlu0 0
  %5043 = vperm.xlu0 %5042, %v3617
  %v5044 = vpop.permute.xlu0 %5043
  %5047 = vset.pattern.permute.xlu0 0
  %5048 = vperm.xlu0 %5047, %v3618
  %v5049 = vpop.permute.xlu0 %5048
  %5052 = vset.pattern.permute.xlu0 0
  %5053 = vperm.xlu0 %5052, %v3619
  %v5054 = vpop.permute.xlu0 %5053
  %5057 = vset.pattern.permute.xlu0 0
  %5058 = vperm.xlu0 %5057, %v3620
  %v5059 = vpop.permute.xlu0 %5058
  %5062 = vset.pattern.permute.xlu0 0
  %5063 = vperm.xlu0 %5062, %v3621
  %v5064 = vpop.permute.xlu0 %5063
  %5067 = vset.pattern.permute.xlu0 0
  %5068 = vperm.xlu0 %5067, %v3622
  %v5069 = vpop.permute.xlu0 %5068
  %5072 = vset.pattern.permute.xlu0 0
  %5073 = vperm.xlu0 %5072, %v3623
  %v5074 = vpop.permute.xlu0 %5073
  %5077 = vset.pattern.permute.xlu0 0
  %5078 = vperm.xlu0 %5077, %v3624
  %v5079 = vpop.permute.xlu0 %5078
  %5082 = vset.pattern.permute.xlu0 0
  %5083 = vperm.xlu0 %5082, %v3625
  %v5084 = vpop.permute.xlu0 %5083
  %5087 = vset.pattern.permute.xlu0 0
  %5088 = vperm.xlu0 %5087, %v3626
  %v5089 = vpop.permute.xlu0 %5088
  %5092 = vset.pattern.permute.xlu0 0
  %5093 = vperm.xlu0 %5092, %v3627
  %v5094 = vpop.permute.xlu0 %5093
  %5097 = vset.pattern.permute.xlu0 0
  %5098 = vperm.xlu0 %5097, %v3628
  %v5099 = vpop.permute.xlu0 %5098
  %5102 = vset.pattern.permute.xlu0 0
  %5103 = vperm.xlu0 %5102, %v3629
  %v5104 = vpop.permute.xlu0 %5103
  %5107 = vset.pattern.permute.xlu0 0
  %5108 = vperm.xlu0 %5107, %v3630
  %v5109 = vpop.permute.xlu0 %5108
  %5112 = vset.pattern.permute.xlu0 0
  %5113 = vperm.xlu0 %5112, %v3631
  %v5114 = vpop.permute.xlu0 %5113
  %5117 = vset.pattern.permute.xlu0 0
  %5118 = vperm.xlu0 %5117, %v3632
  %v5119 = vpop.permute.xlu0 %5118
  %5122 = vset.pattern.permute.xlu0 0
  %5123 = vperm.xlu0 %5122, %v3633
  %v5124 = vpop.permute.xlu0 %5123
  %5127 = vset.pattern.permute.xlu0 0
  %5128 = vperm.xlu0 %5127, %v3634
  %v5129 = vpop.permute.xlu0 %5128
  %5132 = vset.pattern.permute.xlu0 0
  %5133 = vperm.xlu0 %5132, %v3635
  %v5134 = vpop.permute.xlu0 %5133
  %5137 = vset.pattern.permute.xlu0 0
  %5138 = vperm.xlu0 %5137, %v3636
  %v5139 = vpop.permute.xlu0 %5138
  %5142 = vset.pattern.permute.xlu0 0
  %5143 = vperm.xlu0 %5142, %v3637
  %v5144 = vpop.permute.xlu0 %5143
  %5147 = vset.pattern.permute.xlu0 0
  %5148 = vperm.xlu0 %5147, %v3638
  %v5149 = vpop.permute.xlu0 %5148
  %5152 = vset.pattern.permute.xlu0 0
  %5153 = vperm.xlu0 %5152, %v3639
  %v5154 = vpop.permute.xlu0 %5153
  %5157 = vset.pattern.permute.xlu0 0
  %5158 = vperm.xlu0 %5157, %v3640
  %v5159 = vpop.permute.xlu0 %5158
  %5162 = vset.pattern.permute.xlu0 0
  %5163 = vperm.xlu0 %5162, %v3641
  %v5164 = vpop.permute.xlu0 %5163
  %5167 = vset.pattern.permute.xlu0 0
  %5168 = vperm.xlu0 %5167, %v3642
  %v5169 = vpop.permute.xlu0 %5168
  %5172 = vset.pattern.permute.xlu0 0
  %5173 = vperm.xlu0 %5172, %v3643
  %v5174 = vpop.permute.xlu0 %5173
  %5177 = vset.pattern.permute.xlu0 0
  %5178 = vperm.xlu0 %5177, %v3644
  %v5179 = vpop.permute.xlu0 %5178
  %5182 = vset.pattern.permute.xlu0 0
  %5183 = vperm.xlu0 %5182, %v3645
  %v5184 = vpop.permute.xlu0 %5183
  %5187 = vset.pattern.permute.xlu0 0
  %5188 = vperm.xlu0 %5187, %v3646
  %v5189 = vpop.permute.xlu0 %5188
  %5192 = vset.pattern.permute.xlu0 0
  %5193 = vperm.xlu0 %5192, %v3647
  %v5194 = vpop.permute.xlu0 %5193
  %5197 = vset.pattern.permute.xlu0 0
  %5198 = vperm.xlu0 %5197, %v3648
  %v5199 = vpop.permute.xlu0 %5198
  %5202 = vset.pattern.permute.xlu0 0
  %5203 = vperm.xlu0 %5202, %v3649
  %v5204 = vpop.permute.xlu0 %5203
  %5207 = vset.pattern.permute.xlu0 0
  %5208 = vperm.xlu0 %5207, %v3650
  %v5209 = vpop.permute.xlu0 %5208
  %5212 = vset.pattern.permute.xlu0 0
  %5213 = vperm.xlu0 %5212, %v3651
  %v5214 = vpop.permute.xlu0 %5213
  %5217 = vset.pattern.permute.xlu0 0
  %5218 = vperm.xlu0 %5217, %v3652
  %v5219 = vpop.permute.xlu0 %5218
  %5222 = vset.pattern.permute.xlu0 0
  %5223 = vperm.xlu0 %5222, %v3653
  %v5224 = vpop.permute.xlu0 %5223
  %5227 = vset.pattern.permute.xlu0 0
  %5228 = vperm.xlu0 %5227, %v3654
  %v5229 = vpop.permute.xlu0 %5228
  %5232 = vset.pattern.permute.xlu0 0
  %5233 = vperm.xlu0 %5232, %v3655
  %v5234 = vpop.permute.xlu0 %5233
  %5237 = vset.pattern.permute.xlu0 0
  %5238 = vperm.xlu0 %5237, %v3656
  %v5239 = vpop.permute.xlu0 %5238
  %5242 = vset.pattern.permute.xlu0 0
  %5243 = vperm.xlu0 %5242, %v3657
  %v5244 = vpop.permute.xlu0 %5243
  %5247 = vset.pattern.permute.xlu0 0
  %5248 = vperm.xlu0 %5247, %v3658
  %v5249 = vpop.permute.xlu0 %5248
  %5252 = vset.pattern.permute.xlu0 0
  %5253 = vperm.xlu0 %5252, %v3659
  %v5254 = vpop.permute.xlu0 %5253
  %5257 = vset.pattern.permute.xlu0 0
  %5258 = vperm.xlu0 %5257, %v3660
  %v5259 = vpop.permute.xlu0 %5258
  %5262 = vset.pattern.permute.xlu0 0
  %5263 = vperm.xlu0 %5262, %v3661
  %v5264 = vpop.permute.xlu0 %5263
  %5267 = vset.pattern.permute.xlu0 0
  %5268 = vperm.xlu0 %5267, %v3662
  %v5269 = vpop.permute.xlu0 %5268
  %5272 = vset.pattern.permute.xlu0 0
  %5273 = vperm.xlu0 %5272, %v3663
  %v5274 = vpop.permute.xlu0 %5273
  %5277 = vset.pattern.permute.xlu0 0
  %5278 = vperm.xlu0 %5277, %v3664
  %v5279 = vpop.permute.xlu0 %5278
  %5282 = vset.pattern.permute.xlu0 0
  %5283 = vperm.xlu0 %5282, %v3665
  %v5284 = vpop.permute.xlu0 %5283
  %5287 = vset.pattern.permute.xlu0 0
  %5288 = vperm.xlu0 %5287, %v3666
  %v5289 = vpop.permute.xlu0 %5288
  %5292 = vset.pattern.permute.xlu0 0
  %5293 = vperm.xlu0 %5292, %v3667
  %v5294 = vpop.permute.xlu0 %5293
  %5297 = vset.pattern.permute.xlu0 0
  %5298 = vperm.xlu0 %5297, %v3668
  %v5299 = vpop.permute.xlu0 %5298
  %5302 = vset.pattern.permute.xlu0 0
  %5303 = vperm.xlu0 %5302, %v3669
  %v5304 = vpop.permute.xlu0 %5303
  %5307 = vset.pattern.permute.xlu0 0
  %5308 = vperm.xlu0 %5307, %v3670
  %v5309 = vpop.permute.xlu0 %5308
  %5312 = vset.pattern.permute.xlu0 0
  %5313 = vperm.xlu0 %5312, %v3671
  %v5314 = vpop.permute.xlu0 %5313
  %5317 = vset.pattern.permute.xlu0 0
  %5318 = vperm.xlu0 %5317, %v3672
  %v5319 = vpop.permute.xlu0 %5318
  %5322 = vset.pattern.permute.xlu0 0
  %5323 = vperm.xlu0 %5322, %v3673
  %v5324 = vpop.permute.xlu0 %5323
  %5327 = vset.pattern.permute.xlu0 0
  %5328 = vperm.xlu0 %5327, %v3674
  %v5329 = vpop.permute.xlu0 %5328
  %5332 = vset.pattern.permute.xlu0 0
  %5333 = vperm.xlu0 %5332, %v3675
  %v5334 = vpop.permute.xlu0 %5333
  %5337 = vset.pattern.permute.xlu0 0
  %5338 = vperm.xlu0 %5337, %v3676
  %v5339 = vpop.permute.xlu0 %5338
  %5342 = vset.pattern.permute.xlu0 0
  %5343 = vperm.xlu0 %5342, %v3677
  %v5344 = vpop.permute.xlu0 %5343
  %5347 = vset.pattern.permute.xlu0 0
  %5348 = vperm.xlu0 %5347, %v3678
  %v5349 = vpop.permute.xlu0 %5348
  %5352 = vset.pattern.permute.xlu0 0
  %5353 = vperm.xlu0 %5352, %v3679
  %v5354 = vpop.permute.xlu0 %5353
  %5357 = vset.pattern.permute.xlu0 0
  %5358 = vperm.xlu0 %5357, %v3680
  %v5359 = vpop.permute.xlu0 %5358
  %5362 = vset.pattern.permute.xlu0 0
  %5363 = vperm.xlu0 %5362, %v3681
  %v5364 = vpop.permute.xlu0 %5363
  %5367 = vset.pattern.permute.xlu0 0
  %5368 = vperm.xlu0 %5367, %v3682
  %v5369 = vpop.permute.xlu0 %5368
  %5372 = vset.pattern.permute.xlu0 0
  %5373 = vperm.xlu0 %5372, %v3683
  %v5374 = vpop.permute.xlu0 %5373
  %5377 = vset.pattern.permute.xlu0 0
  %5378 = vperm.xlu0 %5377, %v3684
  %v5379 = vpop.permute.xlu0 %5378
  %5382 = vset.pattern.permute.xlu0 0
  %5383 = vperm.xlu0 %5382, %v3685
  %v5384 = vpop.permute.xlu0 %5383
  %5387 = vset.pattern.permute.xlu0 0
  %5388 = vperm.xlu0 %5387, %v3686
  %v5389 = vpop.permute.xlu0 %5388
  %5392 = vset.pattern.permute.xlu0 0
  %5393 = vperm.xlu0 %5392, %v3687
  %v5394 = vpop.permute.xlu0 %5393
  %5397 = vset.pattern.permute.xlu0 0
  %5398 = vperm.xlu0 %5397, %v3688
  %v5399 = vpop.permute.xlu0 %5398
  %5402 = vset.pattern.permute.xlu0 0
  %5403 = vperm.xlu0 %5402, %v3689
  %v5404 = vpop.permute.xlu0 %5403
  %5407 = vset.pattern.permute.xlu0 0
  %5408 = vperm.xlu0 %5407, %v3690
  %v5409 = vpop.permute.xlu0 %5408
  %5412 = vset.pattern.permute.xlu0 0
  %5413 = vperm.xlu0 %5412, %v3691
  %v5414 = vpop.permute.xlu0 %5413
  %5417 = vset.pattern.permute.xlu0 0
  %5418 = vperm.xlu0 %5417, %v3692
  %v5419 = vpop.permute.xlu0 %5418
  %5422 = vset.pattern.permute.xlu0 0
  %5423 = vperm.xlu0 %5422, %v3693
  %v5424 = vpop.permute.xlu0 %5423
  %5427 = vset.pattern.permute.xlu0 0
  %5428 = vperm.xlu0 %5427, %v3694
  %v5429 = vpop.permute.xlu0 %5428
  %5432 = vset.pattern.permute.xlu0 0
  %5433 = vperm.xlu0 %5432, %v3695
  %v5434 = vpop.permute.xlu0 %5433
  %5437 = vset.pattern.permute.xlu0 0
  %5438 = vperm.xlu0 %5437, %v3696
  %v5439 = vpop.permute.xlu0 %5438
  %5442 = vset.pattern.permute.xlu0 0
  %5443 = vperm.xlu0 %5442, %v3697
  %v5444 = vpop.permute.xlu0 %5443
  %5447 = vset.pattern.permute.xlu0 0
  %5448 = vperm.xlu0 %5447, %v3698
  %v5449 = vpop.permute.xlu0 %5448
  %5452 = vset.pattern.permute.xlu0 0
  %5453 = vperm.xlu0 %5452, %v3699
  %v5454 = vpop.permute.xlu0 %5453
  %5457 = vset.pattern.permute.xlu0 0
  %5458 = vperm.xlu0 %5457, %v3700
  %v5459 = vpop.permute.xlu0 %5458
  %5462 = vset.pattern.permute.xlu0 0
  %5463 = vperm.xlu0 %5462, %v3701
  %v5464 = vpop.permute.xlu0 %5463
  %5467 = vset.pattern.permute.xlu0 0
  %5468 = vperm.xlu0 %5467, %v3702
  %v5469 = vpop.permute.xlu0 %5468
  %5472 = vset.pattern.permute.xlu0 0
  %5473 = vperm.xlu0 %5472, %v3703
  %v5474 = vpop.permute.xlu0 %5473
  %5477 = vset.pattern.permute.xlu0 0
  %5478 = vperm.xlu0 %5477, %v3704
  %v5479 = vpop.permute.xlu0 %5478
  %5482 = vset.pattern.permute.xlu0 0
  %5483 = vperm.xlu0 %5482, %v3705
  %v5484 = vpop.permute.xlu0 %5483
  %5487 = vset.pattern.permute.xlu0 0
  %5488 = vperm.xlu0 %5487, %v3706
  %v5489 = vpop.permute.xlu0 %5488
  %5492 = vset.pattern.permute.xlu0 0
  %5493 = vperm.xlu0 %5492, %v3707
  %v5494 = vpop.permute.xlu0 %5493
  %5497 = vset.pattern.permute.xlu0 0
  %5498 = vperm.xlu0 %5497, %v3708
  %v5499 = vpop.permute.xlu0 %5498
  %5502 = vset.pattern.permute.xlu0 0
  %5503 = vperm.xlu0 %5502, %v3709
  %v5504 = vpop.permute.xlu0 %5503
  %5507 = vset.pattern.permute.xlu0 0
  %5508 = vperm.xlu0 %5507, %v3710
  %v5509 = vpop.permute.xlu0 %5508
  %5512 = vset.pattern.permute.xlu0 0
  %5513 = vperm.xlu0 %5512, %v3711
  %v5514 = vpop.permute.xlu0 %5513
  %5517 = vset.pattern.permute.xlu0 0
  %5518 = vperm.xlu0 %5517, %v3712
  %v5519 = vpop.permute.xlu0 %5518
  %5522 = vset.pattern.permute.xlu0 0
  %5523 = vperm.xlu0 %5522, %v3713
  %v5524 = vpop.permute.xlu0 %5523
  %5527 = vset.pattern.permute.xlu0 0
  %5528 = vperm.xlu0 %5527, %v3714
  %v5529 = vpop.permute.xlu0 %5528
  %5532 = vset.pattern.permute.xlu0 0
  %5533 = vperm.xlu0 %5532, %v3715
  %v5534 = vpop.permute.xlu0 %5533
  %5537 = vset.pattern.permute.xlu0 0
  %5538 = vperm.xlu0 %5537, %v3716
  %v5539 = vpop.permute.xlu0 %5538
  %5542 = vset.pattern.permute.xlu0 0
  %5543 = vperm.xlu0 %5542, %v3717
  %v5544 = vpop.permute.xlu0 %5543
  %5547 = vset.pattern.permute.xlu0 0
  %5548 = vperm.xlu0 %5547, %v3718
  %v5549 = vpop.permute.xlu0 %5548
  %5552 = vset.pattern.permute.xlu0 0
  %5553 = vperm.xlu0 %5552, %v3719
  %v5554 = vpop.permute.xlu0 %5553
  %5557 = vset.pattern.permute.xlu0 0
  %5558 = vperm.xlu0 %5557, %v3720
  %v5559 = vpop.permute.xlu0 %5558
  %5562 = vset.pattern.permute.xlu0 0
  %5563 = vperm.xlu0 %5562, %v3721
  %v5564 = vpop.permute.xlu0 %5563
  %5567 = vset.pattern.permute.xlu0 0
  %5568 = vperm.xlu0 %5567, %v3722
  %v5569 = vpop.permute.xlu0 %5568
  %5572 = vset.pattern.permute.xlu0 0
  %5573 = vperm.xlu0 %5572, %v3723
  %v5574 = vpop.permute.xlu0 %5573
  %5577 = vset.pattern.permute.xlu0 0
  %5578 = vperm.xlu0 %5577, %v3724
  %v5579 = vpop.permute.xlu0 %5578
  %5582 = vset.pattern.permute.xlu0 0
  %5583 = vperm.xlu0 %5582, %v3725
  %v5584 = vpop.permute.xlu0 %5583
  %5587 = vset.pattern.permute.xlu0 0
  %5588 = vperm.xlu0 %5587, %v3726
  %v5589 = vpop.permute.xlu0 %5588
  %5592 = vset.pattern.permute.xlu0 0
  %5593 = vperm.xlu0 %5592, %v3727
  %v5594 = vpop.permute.xlu0 %5593
  %5597 = vset.pattern.permute.xlu0 0
  %5598 = vperm.xlu0 %5597, %v3728
  %v5599 = vpop.permute.xlu0 %5598
  %5602 = vset.pattern.permute.xlu0 0
  %5603 = vperm.xlu0 %5602, %v3729
  %v5604 = vpop.permute.xlu0 %5603
  %5607 = vset.pattern.permute.xlu0 0
  %5608 = vperm.xlu0 %5607, %v3730
  %v5609 = vpop.permute.xlu0 %5608
  %5612 = vset.pattern.permute.xlu0 0
  %5613 = vperm.xlu0 %5612, %v3731
  %v5614 = vpop.permute.xlu0 %5613
  %5617 = vset.pattern.permute.xlu0 0
  %5618 = vperm.xlu0 %5617, %v3732
  %v5619 = vpop.permute.xlu0 %5618
  %5622 = vset.pattern.permute.xlu0 0
  %5623 = vperm.xlu0 %5622, %v3733
  %v5624 = vpop.permute.xlu0 %5623
  %5627 = vset.pattern.permute.xlu0 0
  %5628 = vperm.xlu0 %5627, %v3734
  %v5629 = vpop.permute.xlu0 %5628
  %5632 = vset.pattern.permute.xlu0 0
  %5633 = vperm.xlu0 %5632, %v3735
  %v5634 = vpop.permute.xlu0 %5633
  %5637 = vset.pattern.permute.xlu0 0
  %5638 = vperm.xlu0 %5637, %v3736
  %v5639 = vpop.permute.xlu0 %5638
  %5642 = vset.pattern.permute.xlu0 0
  %5643 = vperm.xlu0 %5642, %v3737
  %v5644 = vpop.permute.xlu0 %5643
  %5647 = vset.pattern.permute.xlu0 0
  %5648 = vperm.xlu0 %5647, %v3738
  %v5649 = vpop.permute.xlu0 %5648
  %5652 = vset.pattern.permute.xlu0 0
  %5653 = vperm.xlu0 %5652, %v3739
  %v5654 = vpop.permute.xlu0 %5653
  %5657 = vset.pattern.permute.xlu0 0
  %5658 = vperm.xlu0 %5657, %v3740
  %v5659 = vpop.permute.xlu0 %5658
  %5662 = vset.pattern.permute.xlu0 0
  %5663 = vperm.xlu0 %5662, %v3741
  %v5664 = vpop.permute.xlu0 %5663
  %5667 = vset.pattern.permute.xlu0 0
  %5668 = vperm.xlu0 %5667, %v3742
  %v5669 = vpop.permute.xlu0 %5668
  %5672 = vset.pattern.permute.xlu0 0
  %5673 = vperm.xlu0 %5672, %v3743
  %v5674 = vpop.permute.xlu0 %5673
  %5677 = vset.pattern.permute.xlu0 0
  %5678 = vperm.xlu0 %5677, %v3744
  %v5679 = vpop.permute.xlu0 %5678
  %5682 = vset.pattern.permute.xlu0 0
  %5683 = vperm.xlu0 %5682, %v3745
  %v5684 = vpop.permute.xlu0 %5683
  %5687 = vset.pattern.permute.xlu0 0
  %5688 = vperm.xlu0 %5687, %v3746
  %v5689 = vpop.permute.xlu0 %5688
  %5692 = vset.pattern.permute.xlu0 0
  %5693 = vperm.xlu0 %5692, %v3747
  %v5694 = vpop.permute.xlu0 %5693
  %5697 = vset.pattern.permute.xlu0 0
  %5698 = vperm.xlu0 %5697, %v3748
  %v5699 = vpop.permute.xlu0 %5698
  %5702 = vset.pattern.permute.xlu0 0
  %5703 = vperm.xlu0 %5702, %v3749
  %v5704 = vpop.permute.xlu0 %5703
  %5707 = vset.pattern.permute.xlu0 0
  %5708 = vperm.xlu0 %5707, %v3750
  %v5709 = vpop.permute.xlu0 %5708
  %5712 = vset.pattern.permute.xlu0 0
  %5713 = vperm.xlu0 %5712, %v3751
  %v5714 = vpop.permute.xlu0 %5713
  %5717 = vset.pattern.permute.xlu0 0
  %5718 = vperm.xlu0 %5717, %v3752
  %v5719 = vpop.permute.xlu0 %5718
  %5722 = vset.pattern.permute.xlu0 0
  %5723 = vperm.xlu0 %5722, %v3753
  %v5724 = vpop.permute.xlu0 %5723
  %5727 = vset.pattern.permute.xlu0 0
  %5728 = vperm.xlu0 %5727, %v3754
  %v5729 = vpop.permute.xlu0 %5728
  %5732 = vset.pattern.permute.xlu0 0
  %5733 = vperm.xlu0 %5732, %v3755
  %v5734 = vpop.permute.xlu0 %5733
  %5737 = vset.pattern.permute.xlu0 0
  %5738 = vperm.xlu0 %5737, %v3756
  %v5739 = vpop.permute.xlu0 %5738
  %5742 = vset.pattern.permute.xlu0 0
  %5743 = vperm.xlu0 %5742, %v3757
  %v5744 = vpop.permute.xlu0 %5743
  %5747 = vset.pattern.permute.xlu0 0
  %5748 = vperm.xlu0 %5747, %v3758
  %v5749 = vpop.permute.xlu0 %5748
  %5752 = vset.pattern.permute.xlu0 0
  %5753 = vperm.xlu0 %5752, %v3759
  %v5754 = vpop.permute.xlu0 %5753
  %5757 = vset.pattern.permute.xlu0 0
  %5758 = vperm.xlu0 %5757, %v3760
  %v5759 = vpop.permute.xlu0 %5758
  %5762 = vset.pattern.permute.xlu0 0
  %5763 = vperm.xlu0 %5762, %v3761
  %v5764 = vpop.permute.xlu0 %5763
  %5767 = vset.pattern.permute.xlu0 0
  %5768 = vperm.xlu0 %5767, %v3762
  %v5769 = vpop.permute.xlu0 %5768
  %5772 = vset.pattern.permute.xlu0 0
  %5773 = vperm.xlu0 %5772, %v3763
  %v5774 = vpop.permute.xlu0 %5773
  %5777 = vset.pattern.permute.xlu0 0
  %5778 = vperm.xlu0 %5777, %v3764
  %v5779 = vpop.permute.xlu0 %5778
  %5782 = vset.pattern.permute.xlu0 0
  %5783 = vperm.xlu0 %5782, %v3765
  %v5784 = vpop.permute.xlu0 %5783
  %5787 = vset.pattern.permute.xlu0 0
  %5788 = vperm.xlu0 %5787, %v3766
  %v5789 = vpop.permute.xlu0 %5788
  %5792 = vset.pattern.permute.xlu0 0
  %5793 = vperm.xlu0 %5792, %v3767
  %v5794 = vpop.permute.xlu0 %5793
  %5797 = vset.pattern.permute.xlu0 0
  %5798 = vperm.xlu0 %5797, %v3768
  %v5799 = vpop.permute.xlu0 %5798
  %5802 = vset.pattern.permute.xlu0 0
  %5803 = vperm.xlu0 %5802, %v3769
  %v5804 = vpop.permute.xlu0 %5803
  %5807 = vset.pattern.permute.xlu0 0
  %5808 = vperm.xlu0 %5807, %v3770
  %v5809 = vpop.permute.xlu0 %5808
  %5812 = vset.pattern.permute.xlu0 0
  %5813 = vperm.xlu0 %5812, %v3771
  %v5814 = vpop.permute.xlu0 %5813
  %5817 = vset.pattern.permute.xlu0 0
  %5818 = vperm.xlu0 %5817, %v3772
  %v5819 = vpop.permute.xlu0 %5818
  %5822 = vset.pattern.permute.xlu0 0
  %5823 = vperm.xlu0 %5822, %v3773
  %v5824 = vpop.permute.xlu0 %5823
  %5827 = vset.pattern.permute.xlu0 0
  %5828 = vperm.xlu0 %5827, %v3774
  %v5829 = vpop.permute.xlu0 %5828
  %5832 = vset.pattern.permute.xlu0 0
  %5833 = vperm.xlu0 %5832, %v3775
  %v5834 = vpop.permute.xlu0 %5833
  %5837 = vset.pattern.permute.xlu0 0
  %5838 = vperm.xlu0 %5837, %v3776
  %v5839 = vpop.permute.xlu0 %5838
  %5842 = vset.pattern.permute.xlu0 0
  %5843 = vperm.xlu0 %5842, %v3777
  %v5844 = vpop.permute.xlu0 %5843
  %v5846 = vmul.f32 %v17, %v4909
  %v5847 = vmul.f32 %v18, %v4909
  %v5848 = vmul.f32 %v19, %v4914
  %v5849 = vmul.f32 %v20, %v4914
  %v5850 = vmul.f32 %v21, %v4919
  %v5851 = vmul.f32 %v22, %v4919
  %v5852 = vmul.f32 %v23, %v4924
  %v5853 = vmul.f32 %v24, %v4924
  %v5854 = vmul.f32 %v25, %v4929
  %v5855 = vmul.f32 %v26, %v4929
  %v5856 = vmul.f32 %v27, %v4934
  %v5857 = vmul.f32 %v28, %v4934
  %v5858 = vmul.f32 %v29, %v4939
  %v5859 = vmul.f32 %v30, %v4939
  %v5860 = vmul.f32 %v31, %v4944
  %v5861 = vmul.f32 %v32, %v4944
  %v5862 = vmul.f32 %v33, %v4949
  %v5863 = vmul.f32 %v34, %v4949
  %v5864 = vmul.f32 %v35, %v4954
  %v5865 = vmul.f32 %v36, %v4954
  %v5866 = vmul.f32 %v37, %v4959
  %v5867 = vmul.f32 %v38, %v4959
  %v5868 = vmul.f32 %v39, %v4964
  %v5869 = vmul.f32 %v40, %v4964
  %v5870 = vmul.f32 %v41, %v4969
  %v5871 = vmul.f32 %v42, %v4969
  %v5872 = vmul.f32 %v43, %v4974
  %v5873 = vmul.f32 %v44, %v4974
  %v5874 = vmul.f32 %v45, %v4979
  %v5875 = vmul.f32 %v46, %v4979
  %v5876 = vmul.f32 %v47, %v4984
  %v5877 = vmul.f32 %v48, %v4984
  %v5878 = vmul.f32 %v49, %v4989
  %v5879 = vmul.f32 %v50, %v4989
  %v5880 = vmul.f32 %v51, %v4994
  %v5881 = vmul.f32 %v52, %v4994
  %v5882 = vmul.f32 %v53, %v4999
  %v5883 = vmul.f32 %v54, %v4999
  %v5884 = vmul.f32 %v55, %v5004
  %v5885 = vmul.f32 %v56, %v5004
  %v5886 = vmul.f32 %v57, %v5009
  %v5887 = vmul.f32 %v58, %v5009
  %v5888 = vmul.f32 %v59, %v5014
  %v5889 = vmul.f32 %v60, %v5014
  %v5890 = vmul.f32 %v61, %v5019
  %v5891 = vmul.f32 %v62, %v5019
  %v5892 = vmul.f32 %v63, %v5024
  %v5893 = vmul.f32 %v64, %v5024
  %v5894 = vmul.f32 %v65, %v5029
  %v5895 = vmul.f32 %v66, %v5029
  %v5896 = vmul.f32 %v67, %v5034
  %v5897 = vmul.f32 %v68, %v5034
  %v5898 = vmul.f32 %v69, %v5039
  %v5899 = vmul.f32 %v70, %v5039
  %v5900 = vmul.f32 %v71, %v5044
  %v5901 = vmul.f32 %v72, %v5044
  %v5902 = vmul.f32 %v73, %v5049
  %v5903 = vmul.f32 %v74, %v5049
  %v5904 = vmul.f32 %v75, %v5054
  %v5905 = vmul.f32 %v76, %v5054
  %v5906 = vmul.f32 %v77, %v5059
  %v5907 = vmul.f32 %v78, %v5059
  %v5908 = vmul.f32 %v79, %v5064
  %v5909 = vmul.f32 %v80, %v5064
  %v5910 = vmul.f32 %v81, %v5069
  %v5911 = vmul.f32 %v82, %v5069
  %v5912 = vmul.f32 %v83, %v5074
  %v5913 = vmul.f32 %v84, %v5074
  %v5914 = vmul.f32 %v85, %v5079
  %v5915 = vmul.f32 %v86, %v5079
  %v5916 = vmul.f32 %v87, %v5084
  %v5917 = vmul.f32 %v88, %v5084
  %v5918 = vmul.f32 %v89, %v5089
  %v5919 = vmul.f32 %v90, %v5089
  %v5920 = vmul.f32 %v91, %v5094
  %v5921 = vmul.f32 %v92, %v5094
  %v5922 = vmul.f32 %v93, %v5099
  %v5923 = vmul.f32 %v94, %v5099
  %v5924 = vmul.f32 %v95, %v5104
  %v5925 = vmul.f32 %v96, %v5104
  %v5926 = vmul.f32 %v97, %v5109
  %v5927 = vmul.f32 %v98, %v5109
  %v5928 = vmul.f32 %v99, %v5114
  %v5929 = vmul.f32 %v100, %v5114
  %v5930 = vmul.f32 %v101, %v5119
  %v5931 = vmul.f32 %v102, %v5119
  %v5932 = vmul.f32 %v103, %v5124
  %v5933 = vmul.f32 %v104, %v5124
  %v5934 = vmul.f32 %v105, %v5129
  %v5935 = vmul.f32 %v106, %v5129
  %v5936 = vmul.f32 %v107, %v5134
  %v5937 = vmul.f32 %v108, %v5134
  %v5938 = vmul.f32 %v109, %v5139
  %v5939 = vmul.f32 %v110, %v5139
  %v5940 = vmul.f32 %v111, %v5144
  %v5941 = vmul.f32 %v112, %v5144
  %v5942 = vmul.f32 %v113, %v5149
  %v5943 = vmul.f32 %v114, %v5149
  %v5944 = vmul.f32 %v115, %v5154
  %v5945 = vmul.f32 %v116, %v5154
  %v5946 = vmul.f32 %v117, %v5159
  %v5947 = vmul.f32 %v118, %v5159
  %v5948 = vmul.f32 %v119, %v5164
  %v5949 = vmul.f32 %v120, %v5164
  %v5950 = vmul.f32 %v121, %v5169
  %v5951 = vmul.f32 %v122, %v5169
  %v5952 = vmul.f32 %v123, %v5174
  %v5953 = vmul.f32 %v124, %v5174
  %v5954 = vmul.f32 %v125, %v5179
  %v5955 = vmul.f32 %v126, %v5179
  %v5956 = vmul.f32 %v127, %v5184
  %v5957 = vmul.f32 %v128, %v5184
  %v5958 = vmul.f32 %v129, %v5189
  %v5959 = vmul.f32 %v130, %v5189
  %v5960 = vmul.f32 %v131, %v5194
  %v5961 = vmul.f32 %v132, %v5194
  %v5962 = vmul.f32 %v133, %v5199
  %v5963 = vmul.f32 %v134, %v5199
  %v5964 = vmul.f32 %v135, %v5204
  %v5965 = vmul.f32 %v136, %v5204
  %v5966 = vmul.f32 %v137, %v5209
  %v5967 = vmul.f32 %v138, %v5209
  %v5968 = vmul.f32 %v139, %v5214
  %v5969 = vmul.f32 %v140, %v5214
  %v5970 = vmul.f32 %v141, %v5219
  %v5971 = vmul.f32 %v142, %v5219
  %v5972 = vmul.f32 %v143, %v5224
  %v5973 = vmul.f32 %v144, %v5224
  %v5974 = vmul.f32 %v145, %v5229
  %v5975 = vmul.f32 %v146, %v5229
  %v5976 = vmul.f32 %v147, %v5234
  %v5977 = vmul.f32 %v148, %v5234
  %v5978 = vmul.f32 %v149, %v5239
  %v5979 = vmul.f32 %v150, %v5239
  %v5980 = vmul.f32 %v151, %v5244
  %v5981 = vmul.f32 %v152, %v5244
  %v5982 = vmul.f32 %v153, %v5249
  %v5983 = vmul.f32 %v154, %v5249
  %v5984 = vmul.f32 %v155, %v5254
  %v5985 = vmul.f32 %v156, %v5254
  %v5986 = vmul.f32 %v157, %v5259
  %v5987 = vmul.f32 %v158, %v5259
  %v5988 = vmul.f32 %v159, %v5264
  %v5989 = vmul.f32 %v160, %v5264
  %v5990 = vmul.f32 %v161, %v5269
  %v5991 = vmul.f32 %v162, %v5269
  %v5992 = vmul.f32 %v163, %v5274
  %v5993 = vmul.f32 %v164, %v5274
  %v5994 = vmul.f32 %v165, %v5279
  %v5995 = vmul.f32 %v166, %v5279
  %v5996 = vmul.f32 %v167, %v5284
  %v5997 = vmul.f32 %v168, %v5284
  %v5998 = vmul.f32 %v169, %v5289
  %v5999 = vmul.f32 %v170, %v5289
  %v6000 = vmul.f32 %v171, %v5294
  %v6001 = vmul.f32 %v172, %v5294
  %v6002 = vmul.f32 %v173, %v5299
  %v6003 = vmul.f32 %v174, %v5299
  %v6004 = vmul.f32 %v175, %v5304
  %v6005 = vmul.f32 %v176, %v5304
  %v6006 = vmul.f32 %v177, %v5309
  %v6007 = vmul.f32 %v178, %v5309
  %v6008 = vmul.f32 %v179, %v5314
  %v6009 = vmul.f32 %v180, %v5314
  %v6010 = vmul.f32 %v181, %v5319
  %v6011 = vmul.f32 %v182, %v5319
  %v6012 = vmul.f32 %v183, %v5324
  %v6013 = vmul.f32 %v184, %v5324
  %v6014 = vmul.f32 %v185, %v5329
  %v6015 = vmul.f32 %v186, %v5329
  %v6016 = vmul.f32 %v187, %v5334
  %v6017 = vmul.f32 %v188, %v5334
  %v6018 = vmul.f32 %v189, %v5339
  %v6019 = vmul.f32 %v190, %v5339
  %v6020 = vmul.f32 %v191, %v5344
  %v6021 = vmul.f32 %v192, %v5344
  %v6022 = vmul.f32 %v193, %v5349
  %v6023 = vmul.f32 %v194, %v5349
  %v6024 = vmul.f32 %v195, %v5354
  %v6025 = vmul.f32 %v196, %v5354
  %v6026 = vmul.f32 %v197, %v5359
  %v6027 = vmul.f32 %v198, %v5359
  %v6028 = vmul.f32 %v199, %v5364
  %v6029 = vmul.f32 %v200, %v5364
  %v6030 = vmul.f32 %v201, %v5369
  %v6031 = vmul.f32 %v202, %v5369
  %v6032 = vmul.f32 %v203, %v5374
  %v6033 = vmul.f32 %v204, %v5374
  %v6034 = vmul.f32 %v205, %v5379
  %v6035 = vmul.f32 %v206, %v5379
  %v6036 = vmul.f32 %v207, %v5384
  %v6037 = vmul.f32 %v208, %v5384
  %v6038 = vmul.f32 %v209, %v5389
  %v6039 = vmul.f32 %v210, %v5389
  %v6040 = vmul.f32 %v211, %v5394
  %v6041 = vmul.f32 %v212, %v5394
  %v6042 = vmul.f32 %v213, %v5399
  %v6043 = vmul.f32 %v214, %v5399
  %v6044 = vmul.f32 %v215, %v5404
  %v6045 = vmul.f32 %v216, %v5404
  %v6046 = vmul.f32 %v217, %v5409
  %v6047 = vmul.f32 %v218, %v5409
  %v6048 = vmul.f32 %v219, %v5414
  %v6049 = vmul.f32 %v220, %v5414
  %v6050 = vmul.f32 %v221, %v5419
  %v6051 = vmul.f32 %v222, %v5419
  %v6052 = vmul.f32 %v223, %v5424
  %v6053 = vmul.f32 %v224, %v5424
  %v6054 = vmul.f32 %v225, %v5429
  %v6055 = vmul.f32 %v226, %v5429
  %v6056 = vmul.f32 %v227, %v5434
  %v6057 = vmul.f32 %v228, %v5434
  %v6058 = vmul.f32 %v229, %v5439
  %v6059 = vmul.f32 %v230, %v5439
  %v6060 = vmul.f32 %v231, %v5444
  %v6061 = vmul.f32 %v232, %v5444
  %v6062 = vmul.f32 %v233, %v5449
  %v6063 = vmul.f32 %v234, %v5449
  %v6064 = vmul.f32 %v235, %v5454
  %v6065 = vmul.f32 %v236, %v5454
  %v6066 = vmul.f32 %v237, %v5459
  %v6067 = vmul.f32 %v238, %v5459
  %v6068 = vmul.f32 %v239, %v5464
  %v6069 = vmul.f32 %v240, %v5464
  %v6070 = vmul.f32 %v241, %v5469
  %v6071 = vmul.f32 %v242, %v5469
  %v6072 = vmul.f32 %v243, %v5474
  %v6073 = vmul.f32 %v244, %v5474
  %v6074 = vmul.f32 %v245, %v5479
  %v6075 = vmul.f32 %v246, %v5479
  %v6076 = vmul.f32 %v247, %v5484
  %v6077 = vmul.f32 %v248, %v5484
  %v6078 = vmul.f32 %v249, %v5489
  %v6079 = vmul.f32 %v250, %v5489
  %v6080 = vmul.f32 %v251, %v5494
  %v6081 = vmul.f32 %v252, %v5494
  %v6082 = vmul.f32 %v253, %v5499
  %v6083 = vmul.f32 %v254, %v5499
  %v6084 = vmul.f32 %v255, %v5504
  %v6085 = vmul.f32 %v256, %v5504
  %v6086 = vmul.f32 %v257, %v5509
  %v6087 = vmul.f32 %v258, %v5509
  %v6088 = vmul.f32 %v259, %v5514
  %v6089 = vmul.f32 %v260, %v5514
  %v6090 = vmul.f32 %v261, %v5519
  %v6091 = vmul.f32 %v262, %v5519
  %v6092 = vmul.f32 %v263, %v5524
  %v6093 = vmul.f32 %v264, %v5524
  %v6094 = vmul.f32 %v265, %v5529
  %v6095 = vmul.f32 %v266, %v5529
  %v6096 = vmul.f32 %v267, %v5534
  %v6097 = vmul.f32 %v268, %v5534
  %v6098 = vmul.f32 %v269, %v5539
  %v6099 = vmul.f32 %v270, %v5539
  %v6100 = vmul.f32 %v271, %v5544
  %v6101 = vmul.f32 %v272, %v5544
  %v6102 = vmul.f32 %v273, %v5549
  %v6103 = vmul.f32 %v274, %v5549
  %v6104 = vmul.f32 %v275, %v5554
  %v6105 = vmul.f32 %v276, %v5554
  %v6106 = vmul.f32 %v277, %v5559
  %v6107 = vmul.f32 %v278, %v5559
  %v6108 = vmul.f32 %v279, %v5564
  %v6109 = vmul.f32 %v280, %v5564
  %v6110 = vmul.f32 %v281, %v5569
  %v6111 = vmul.f32 %v282, %v5569
  %v6112 = vmul.f32 %v283, %v5574
  %v6113 = vmul.f32 %v284, %v5574
  %v6114 = vmul.f32 %v285, %v5579
  %v6115 = vmul.f32 %v286, %v5579
  %v6116 = vmul.f32 %v287, %v5584
  %v6117 = vmul.f32 %v288, %v5584
  %v6118 = vmul.f32 %v289, %v5589
  %v6119 = vmul.f32 %v290, %v5589
  %v6120 = vmul.f32 %v291, %v5594
  %v6121 = vmul.f32 %v292, %v5594
  %v6122 = vmul.f32 %v293, %v5599
  %v6123 = vmul.f32 %v294, %v5599
  %v6124 = vmul.f32 %v295, %v5604
  %v6125 = vmul.f32 %v296, %v5604
  %v6126 = vmul.f32 %v297, %v5609
  %v6127 = vmul.f32 %v298, %v5609
  %v6128 = vmul.f32 %v299, %v5614
  %v6129 = vmul.f32 %v300, %v5614
  %v6130 = vmul.f32 %v301, %v5619
  %v6131 = vmul.f32 %v302, %v5619
  %v6132 = vmul.f32 %v303, %v5624
  %v6133 = vmul.f32 %v304, %v5624
  %v6134 = vmul.f32 %v305, %v5629
  %v6135 = vmul.f32 %v306, %v5629
  %v6136 = vmul.f32 %v307, %v5634
  %v6137 = vmul.f32 %v308, %v5634
  %v6138 = vmul.f32 %v309, %v5639
  %v6139 = vmul.f32 %v310, %v5639
  %v6140 = vmul.f32 %v311, %v5644
  %v6141 = vmul.f32 %v312, %v5644
  %v6142 = vmul.f32 %v313, %v5649
  %v6143 = vmul.f32 %v314, %v5649
  %v6144 = vmul.f32 %v315, %v5654
  %v6145 = vmul.f32 %v316, %v5654
  %v6146 = vmul.f32 %v317, %v5659
  %v6147 = vmul.f32 %v318, %v5659
  %v6148 = vmul.f32 %v319, %v5664
  %v6149 = vmul.f32 %v320, %v5664
  %v6150 = vmul.f32 %v321, %v5669
  %v6151 = vmul.f32 %v322, %v5669
  %v6152 = vmul.f32 %v323, %v5674
  %v6153 = vmul.f32 %v324, %v5674
  %v6154 = vmul.f32 %v325, %v5679
  %v6155 = vmul.f32 %v326, %v5679
  %v6156 = vmul.f32 %v327, %v5684
  %v6157 = vmul.f32 %v328, %v5684
  %v6158 = vmul.f32 %v329, %v5689
  %v6159 = vmul.f32 %v330, %v5689
  %v6160 = vmul.f32 %v331, %v5694
  %v6161 = vmul.f32 %v332, %v5694
  %v6162 = vmul.f32 %v333, %v5699
  %v6163 = vmul.f32 %v334, %v5699
  %v6164 = vmul.f32 %v335, %v5704
  %v6165 = vmul.f32 %v336, %v5704
  %v6166 = vmul.f32 %v337, %v5709
  %v6167 = vmul.f32 %v338, %v5709
  %v6168 = vmul.f32 %v339, %v5714
  %v6169 = vmul.f32 %v340, %v5714
  %v6170 = vmul.f32 %v341, %v5719
  %v6171 = vmul.f32 %v342, %v5719
  %v6172 = vmul.f32 %v343, %v5724
  %v6173 = vmul.f32 %v344, %v5724
  %v6174 = vmul.f32 %v345, %v5729
  %v6175 = vmul.f32 %v346, %v5729
  %v6176 = vmul.f32 %v347, %v5734
  %v6177 = vmul.f32 %v348, %v5734
  %v6178 = vmul.f32 %v349, %v5739
  %v6179 = vmul.f32 %v350, %v5739
  %v6180 = vmul.f32 %v351, %v5744
  %v6181 = vmul.f32 %v352, %v5744
  %v6182 = vmul.f32 %v353, %v5749
  %v6183 = vmul.f32 %v354, %v5749
  %v6184 = vmul.f32 %v355, %v5754
  %v6185 = vmul.f32 %v356, %v5754
  %v6186 = vmul.f32 %v357, %v5759
  %v6187 = vmul.f32 %v358, %v5759
  %v6188 = vmul.f32 %v359, %v5764
  %v6189 = vmul.f32 %v360, %v5764
  %v6190 = vmul.f32 %v361, %v5769
  %v6191 = vmul.f32 %v362, %v5769
  %v6192 = vmul.f32 %v363, %v5774
  %v6193 = vmul.f32 %v364, %v5774
  %v6194 = vmul.f32 %v365, %v5779
  %v6195 = vmul.f32 %v366, %v5779
  %v6196 = vmul.f32 %v367, %v5784
  %v6197 = vmul.f32 %v368, %v5784
  %v6198 = vmul.f32 %v369, %v5789
  %v6199 = vmul.f32 %v370, %v5789
  %v6200 = vmul.f32 %v371, %v5794
  %v6201 = vmul.f32 %v372, %v5794
  %v6202 = vmul.f32 %v373, %v5799
  %v6203 = vmul.f32 %v374, %v5799
  %v6204 = vmul.f32 %v375, %v5804
  %v6205 = vmul.f32 %v376, %v5804
  %v6206 = vmul.f32 %v377, %v5809
  %v6207 = vmul.f32 %v378, %v5809
  %v6208 = vmul.f32 %v379, %v5814
  %v6209 = vmul.f32 %v380, %v5814
  %v6210 = vmul.f32 %v381, %v5819
  %v6211 = vmul.f32 %v382, %v5819
  %v6212 = vmul.f32 %v383, %v5824
  %v6213 = vmul.f32 %v384, %v5824
  %v6214 = vmul.f32 %v385, %v5829
  %v6215 = vmul.f32 %v386, %v5829
  %v6216 = vmul.f32 %v387, %v5834
  %v6217 = vmul.f32 %v388, %v5834
  %v6218 = vmul.f32 %v389, %v5839
  %v6219 = vmul.f32 %v390, %v5839
  %v6220 = vmul.f32 %v391, %v5844
  %v6221 = vmul.f32 %v392, %v5844
  %6223 = vset.pattern.permute.xlu0 1
  %6224 = vperm.xlu0 %6223, %v4718
  %v6225 = vpop.permute.xlu0 %6224
  %6228 = vset.pattern.permute.xlu0 1
  %6229 = vperm.xlu0 %6228, %v4719
  %v6230 = vpop.permute.xlu0 %6229
  %6233 = vset.pattern.permute.xlu0 1
  %6234 = vperm.xlu0 %6233, %v4720
  %v6235 = vpop.permute.xlu0 %6234
  %6238 = vset.pattern.permute.xlu0 1
  %6239 = vperm.xlu0 %6238, %v4721
  %v6240 = vpop.permute.xlu0 %6239
  %6243 = vset.pattern.permute.xlu0 1
  %6244 = vperm.xlu0 %6243, %v4722
  %v6245 = vpop.permute.xlu0 %6244
  %6248 = vset.pattern.permute.xlu0 1
  %6249 = vperm.xlu0 %6248, %v4723
  %v6250 = vpop.permute.xlu0 %6249
  %6253 = vset.pattern.permute.xlu0 1
  %6254 = vperm.xlu0 %6253, %v4724
  %v6255 = vpop.permute.xlu0 %6254
  %6258 = vset.pattern.permute.xlu0 1
  %6259 = vperm.xlu0 %6258, %v4725
  %v6260 = vpop.permute.xlu0 %6259
  %6263 = vset.pattern.permute.xlu0 1
  %6264 = vperm.xlu0 %6263, %v4726
  %v6265 = vpop.permute.xlu0 %6264
  %6268 = vset.pattern.permute.xlu0 1
  %6269 = vperm.xlu0 %6268, %v4727
  %v6270 = vpop.permute.xlu0 %6269
  %6273 = vset.pattern.permute.xlu0 1
  %6274 = vperm.xlu0 %6273, %v4728
  %v6275 = vpop.permute.xlu0 %6274
  %6278 = vset.pattern.permute.xlu0 1
  %6279 = vperm.xlu0 %6278, %v4729
  %v6280 = vpop.permute.xlu0 %6279
  %6283 = vset.pattern.permute.xlu0 1
  %6284 = vperm.xlu0 %6283, %v4730
  %v6285 = vpop.permute.xlu0 %6284
  %6288 = vset.pattern.permute.xlu0 1
  %6289 = vperm.xlu0 %6288, %v4731
  %v6290 = vpop.permute.xlu0 %6289
  %6293 = vset.pattern.permute.xlu0 1
  %6294 = vperm.xlu0 %6293, %v4732
  %v6295 = vpop.permute.xlu0 %6294
  %6298 = vset.pattern.permute.xlu0 1
  %6299 = vperm.xlu0 %6298, %v4733
  %v6300 = vpop.permute.xlu0 %6299
  %6303 = vset.pattern.permute.xlu0 1
  %6304 = vperm.xlu0 %6303, %v4734
  %v6305 = vpop.permute.xlu0 %6304
  %6308 = vset.pattern.permute.xlu0 1
  %6309 = vperm.xlu0 %6308, %v4735
  %v6310 = vpop.permute.xlu0 %6309
  %6313 = vset.pattern.permute.xlu0 1
  %6314 = vperm.xlu0 %6313, %v4736
  %v6315 = vpop.permute.xlu0 %6314
  %6318 = vset.pattern.permute.xlu0 1
  %6319 = vperm.xlu0 %6318, %v4737
  %v6320 = vpop.permute.xlu0 %6319
  %6323 = vset.pattern.permute.xlu0 1
  %6324 = vperm.xlu0 %6323, %v4738
  %v6325 = vpop.permute.xlu0 %6324
  %6328 = vset.pattern.permute.xlu0 1
  %6329 = vperm.xlu0 %6328, %v4739
  %v6330 = vpop.permute.xlu0 %6329
  %6333 = vset.pattern.permute.xlu0 1
  %6334 = vperm.xlu0 %6333, %v4740
  %v6335 = vpop.permute.xlu0 %6334
  %6338 = vset.pattern.permute.xlu0 1
  %6339 = vperm.xlu0 %6338, %v4741
  %v6340 = vpop.permute.xlu0 %6339
  %6343 = vset.pattern.permute.xlu0 1
  %6344 = vperm.xlu0 %6343, %v4742
  %v6345 = vpop.permute.xlu0 %6344
  %6348 = vset.pattern.permute.xlu0 1
  %6349 = vperm.xlu0 %6348, %v4743
  %v6350 = vpop.permute.xlu0 %6349
  %6353 = vset.pattern.permute.xlu0 1
  %6354 = vperm.xlu0 %6353, %v4744
  %v6355 = vpop.permute.xlu0 %6354
  %6358 = vset.pattern.permute.xlu0 1
  %6359 = vperm.xlu0 %6358, %v4745
  %v6360 = vpop.permute.xlu0 %6359
  %6363 = vset.pattern.permute.xlu0 1
  %6364 = vperm.xlu0 %6363, %v4746
  %v6365 = vpop.permute.xlu0 %6364
  %6368 = vset.pattern.permute.xlu0 1
  %6369 = vperm.xlu0 %6368, %v4747
  %v6370 = vpop.permute.xlu0 %6369
  %6373 = vset.pattern.permute.xlu0 1
  %6374 = vperm.xlu0 %6373, %v4748
  %v6375 = vpop.permute.xlu0 %6374
  %6378 = vset.pattern.permute.xlu0 1
  %6379 = vperm.xlu0 %6378, %v4749
  %v6380 = vpop.permute.xlu0 %6379
  %6383 = vset.pattern.permute.xlu0 1
  %6384 = vperm.xlu0 %6383, %v4750
  %v6385 = vpop.permute.xlu0 %6384
  %6388 = vset.pattern.permute.xlu0 1
  %6389 = vperm.xlu0 %6388, %v4751
  %v6390 = vpop.permute.xlu0 %6389
  %6393 = vset.pattern.permute.xlu0 1
  %6394 = vperm.xlu0 %6393, %v4752
  %v6395 = vpop.permute.xlu0 %6394
  %6398 = vset.pattern.permute.xlu0 1
  %6399 = vperm.xlu0 %6398, %v4753
  %v6400 = vpop.permute.xlu0 %6399
  %6403 = vset.pattern.permute.xlu0 1
  %6404 = vperm.xlu0 %6403, %v4754
  %v6405 = vpop.permute.xlu0 %6404
  %6408 = vset.pattern.permute.xlu0 1
  %6409 = vperm.xlu0 %6408, %v4755
  %v6410 = vpop.permute.xlu0 %6409
  %6413 = vset.pattern.permute.xlu0 1
  %6414 = vperm.xlu0 %6413, %v4756
  %v6415 = vpop.permute.xlu0 %6414
  %6418 = vset.pattern.permute.xlu0 1
  %6419 = vperm.xlu0 %6418, %v4757
  %v6420 = vpop.permute.xlu0 %6419
  %6423 = vset.pattern.permute.xlu0 1
  %6424 = vperm.xlu0 %6423, %v4758
  %v6425 = vpop.permute.xlu0 %6424
  %6428 = vset.pattern.permute.xlu0 1
  %6429 = vperm.xlu0 %6428, %v4759
  %v6430 = vpop.permute.xlu0 %6429
  %6433 = vset.pattern.permute.xlu0 1
  %6434 = vperm.xlu0 %6433, %v4760
  %v6435 = vpop.permute.xlu0 %6434
  %6438 = vset.pattern.permute.xlu0 1
  %6439 = vperm.xlu0 %6438, %v4761
  %v6440 = vpop.permute.xlu0 %6439
  %6443 = vset.pattern.permute.xlu0 1
  %6444 = vperm.xlu0 %6443, %v4762
  %v6445 = vpop.permute.xlu0 %6444
  %6448 = vset.pattern.permute.xlu0 1
  %6449 = vperm.xlu0 %6448, %v4763
  %v6450 = vpop.permute.xlu0 %6449
  %6453 = vset.pattern.permute.xlu0 1
  %6454 = vperm.xlu0 %6453, %v4764
  %v6455 = vpop.permute.xlu0 %6454
  %6458 = vset.pattern.permute.xlu0 1
  %6459 = vperm.xlu0 %6458, %v4765
  %v6460 = vpop.permute.xlu0 %6459
  %6463 = vset.pattern.permute.xlu0 1
  %6464 = vperm.xlu0 %6463, %v4766
  %v6465 = vpop.permute.xlu0 %6464
  %6468 = vset.pattern.permute.xlu0 1
  %6469 = vperm.xlu0 %6468, %v4767
  %v6470 = vpop.permute.xlu0 %6469
  %6473 = vset.pattern.permute.xlu0 1
  %6474 = vperm.xlu0 %6473, %v4768
  %v6475 = vpop.permute.xlu0 %6474
  %6478 = vset.pattern.permute.xlu0 1
  %6479 = vperm.xlu0 %6478, %v4769
  %v6480 = vpop.permute.xlu0 %6479
  %6483 = vset.pattern.permute.xlu0 1
  %6484 = vperm.xlu0 %6483, %v4770
  %v6485 = vpop.permute.xlu0 %6484
  %6488 = vset.pattern.permute.xlu0 1
  %6489 = vperm.xlu0 %6488, %v4771
  %v6490 = vpop.permute.xlu0 %6489
  %6493 = vset.pattern.permute.xlu0 1
  %6494 = vperm.xlu0 %6493, %v4772
  %v6495 = vpop.permute.xlu0 %6494
  %6498 = vset.pattern.permute.xlu0 1
  %6499 = vperm.xlu0 %6498, %v4773
  %v6500 = vpop.permute.xlu0 %6499
  %6503 = vset.pattern.permute.xlu0 1
  %6504 = vperm.xlu0 %6503, %v4774
  %v6505 = vpop.permute.xlu0 %6504
  %6508 = vset.pattern.permute.xlu0 1
  %6509 = vperm.xlu0 %6508, %v4775
  %v6510 = vpop.permute.xlu0 %6509
  %6513 = vset.pattern.permute.xlu0 1
  %6514 = vperm.xlu0 %6513, %v4776
  %v6515 = vpop.permute.xlu0 %6514
  %6518 = vset.pattern.permute.xlu0 1
  %6519 = vperm.xlu0 %6518, %v4777
  %v6520 = vpop.permute.xlu0 %6519
  %6523 = vset.pattern.permute.xlu0 1
  %6524 = vperm.xlu0 %6523, %v4778
  %v6525 = vpop.permute.xlu0 %6524
  %6528 = vset.pattern.permute.xlu0 1
  %6529 = vperm.xlu0 %6528, %v4779
  %v6530 = vpop.permute.xlu0 %6529
  %6533 = vset.pattern.permute.xlu0 1
  %6534 = vperm.xlu0 %6533, %v4780
  %v6535 = vpop.permute.xlu0 %6534
  %6538 = vset.pattern.permute.xlu0 1
  %6539 = vperm.xlu0 %6538, %v4781
  %v6540 = vpop.permute.xlu0 %6539
  %6543 = vset.pattern.permute.xlu0 1
  %6544 = vperm.xlu0 %6543, %v4782
  %v6545 = vpop.permute.xlu0 %6544
  %6548 = vset.pattern.permute.xlu0 1
  %6549 = vperm.xlu0 %6548, %v4783
  %v6550 = vpop.permute.xlu0 %6549
  %6553 = vset.pattern.permute.xlu0 1
  %6554 = vperm.xlu0 %6553, %v4784
  %v6555 = vpop.permute.xlu0 %6554
  %6558 = vset.pattern.permute.xlu0 1
  %6559 = vperm.xlu0 %6558, %v4785
  %v6560 = vpop.permute.xlu0 %6559
  %6563 = vset.pattern.permute.xlu0 1
  %6564 = vperm.xlu0 %6563, %v4786
  %v6565 = vpop.permute.xlu0 %6564
  %6568 = vset.pattern.permute.xlu0 1
  %6569 = vperm.xlu0 %6568, %v4787
  %v6570 = vpop.permute.xlu0 %6569
  %6573 = vset.pattern.permute.xlu0 1
  %6574 = vperm.xlu0 %6573, %v4788
  %v6575 = vpop.permute.xlu0 %6574
  %6578 = vset.pattern.permute.xlu0 1
  %6579 = vperm.xlu0 %6578, %v4789
  %v6580 = vpop.permute.xlu0 %6579
  %6583 = vset.pattern.permute.xlu0 1
  %6584 = vperm.xlu0 %6583, %v4790
  %v6585 = vpop.permute.xlu0 %6584
  %6588 = vset.pattern.permute.xlu0 1
  %6589 = vperm.xlu0 %6588, %v4791
  %v6590 = vpop.permute.xlu0 %6589
  %6593 = vset.pattern.permute.xlu0 1
  %6594 = vperm.xlu0 %6593, %v4792
  %v6595 = vpop.permute.xlu0 %6594
  %6598 = vset.pattern.permute.xlu0 1
  %6599 = vperm.xlu0 %6598, %v4793
  %v6600 = vpop.permute.xlu0 %6599
  %6603 = vset.pattern.permute.xlu0 1
  %6604 = vperm.xlu0 %6603, %v4794
  %v6605 = vpop.permute.xlu0 %6604
  %6608 = vset.pattern.permute.xlu0 1
  %6609 = vperm.xlu0 %6608, %v4795
  %v6610 = vpop.permute.xlu0 %6609
  %6613 = vset.pattern.permute.xlu0 1
  %6614 = vperm.xlu0 %6613, %v4796
  %v6615 = vpop.permute.xlu0 %6614
  %6618 = vset.pattern.permute.xlu0 1
  %6619 = vperm.xlu0 %6618, %v4797
  %v6620 = vpop.permute.xlu0 %6619
  %6623 = vset.pattern.permute.xlu0 1
  %6624 = vperm.xlu0 %6623, %v4798
  %v6625 = vpop.permute.xlu0 %6624
  %6628 = vset.pattern.permute.xlu0 1
  %6629 = vperm.xlu0 %6628, %v4799
  %v6630 = vpop.permute.xlu0 %6629
  %6633 = vset.pattern.permute.xlu0 1
  %6634 = vperm.xlu0 %6633, %v4800
  %v6635 = vpop.permute.xlu0 %6634
  %6638 = vset.pattern.permute.xlu0 1
  %6639 = vperm.xlu0 %6638, %v4801
  %v6640 = vpop.permute.xlu0 %6639
  %6643 = vset.pattern.permute.xlu0 1
  %6644 = vperm.xlu0 %6643, %v4802
  %v6645 = vpop.permute.xlu0 %6644
  %6648 = vset.pattern.permute.xlu0 1
  %6649 = vperm.xlu0 %6648, %v4803
  %v6650 = vpop.permute.xlu0 %6649
  %6653 = vset.pattern.permute.xlu0 1
  %6654 = vperm.xlu0 %6653, %v4804
  %v6655 = vpop.permute.xlu0 %6654
  %6658 = vset.pattern.permute.xlu0 1
  %6659 = vperm.xlu0 %6658, %v4805
  %v6660 = vpop.permute.xlu0 %6659
  %6663 = vset.pattern.permute.xlu0 1
  %6664 = vperm.xlu0 %6663, %v4806
  %v6665 = vpop.permute.xlu0 %6664
  %6668 = vset.pattern.permute.xlu0 1
  %6669 = vperm.xlu0 %6668, %v4807
  %v6670 = vpop.permute.xlu0 %6669
  %6673 = vset.pattern.permute.xlu0 1
  %6674 = vperm.xlu0 %6673, %v4808
  %v6675 = vpop.permute.xlu0 %6674
  %6678 = vset.pattern.permute.xlu0 1
  %6679 = vperm.xlu0 %6678, %v4809
  %v6680 = vpop.permute.xlu0 %6679
  %6683 = vset.pattern.permute.xlu0 1
  %6684 = vperm.xlu0 %6683, %v4810
  %v6685 = vpop.permute.xlu0 %6684
  %6688 = vset.pattern.permute.xlu0 1
  %6689 = vperm.xlu0 %6688, %v4811
  %v6690 = vpop.permute.xlu0 %6689
  %6693 = vset.pattern.permute.xlu0 1
  %6694 = vperm.xlu0 %6693, %v4812
  %v6695 = vpop.permute.xlu0 %6694
  %6698 = vset.pattern.permute.xlu0 1
  %6699 = vperm.xlu0 %6698, %v4813
  %v6700 = vpop.permute.xlu0 %6699
  %6703 = vset.pattern.permute.xlu0 1
  %6704 = vperm.xlu0 %6703, %v4814
  %v6705 = vpop.permute.xlu0 %6704
  %6708 = vset.pattern.permute.xlu0 1
  %6709 = vperm.xlu0 %6708, %v4815
  %v6710 = vpop.permute.xlu0 %6709
  %6713 = vset.pattern.permute.xlu0 1
  %6714 = vperm.xlu0 %6713, %v4816
  %v6715 = vpop.permute.xlu0 %6714
  %6718 = vset.pattern.permute.xlu0 1
  %6719 = vperm.xlu0 %6718, %v4817
  %v6720 = vpop.permute.xlu0 %6719
  %6723 = vset.pattern.permute.xlu0 1
  %6724 = vperm.xlu0 %6723, %v4818
  %v6725 = vpop.permute.xlu0 %6724
  %6728 = vset.pattern.permute.xlu0 1
  %6729 = vperm.xlu0 %6728, %v4819
  %v6730 = vpop.permute.xlu0 %6729
  %6733 = vset.pattern.permute.xlu0 1
  %6734 = vperm.xlu0 %6733, %v4820
  %v6735 = vpop.permute.xlu0 %6734
  %6738 = vset.pattern.permute.xlu0 1
  %6739 = vperm.xlu0 %6738, %v4821
  %v6740 = vpop.permute.xlu0 %6739
  %6743 = vset.pattern.permute.xlu0 1
  %6744 = vperm.xlu0 %6743, %v4822
  %v6745 = vpop.permute.xlu0 %6744
  %6748 = vset.pattern.permute.xlu0 1
  %6749 = vperm.xlu0 %6748, %v4823
  %v6750 = vpop.permute.xlu0 %6749
  %6753 = vset.pattern.permute.xlu0 1
  %6754 = vperm.xlu0 %6753, %v4824
  %v6755 = vpop.permute.xlu0 %6754
  %6758 = vset.pattern.permute.xlu0 1
  %6759 = vperm.xlu0 %6758, %v4825
  %v6760 = vpop.permute.xlu0 %6759
  %6763 = vset.pattern.permute.xlu0 1
  %6764 = vperm.xlu0 %6763, %v4826
  %v6765 = vpop.permute.xlu0 %6764
  %6768 = vset.pattern.permute.xlu0 1
  %6769 = vperm.xlu0 %6768, %v4827
  %v6770 = vpop.permute.xlu0 %6769
  %6773 = vset.pattern.permute.xlu0 1
  %6774 = vperm.xlu0 %6773, %v4828
  %v6775 = vpop.permute.xlu0 %6774
  %6778 = vset.pattern.permute.xlu0 1
  %6779 = vperm.xlu0 %6778, %v4829
  %v6780 = vpop.permute.xlu0 %6779
  %6783 = vset.pattern.permute.xlu0 1
  %6784 = vperm.xlu0 %6783, %v4830
  %v6785 = vpop.permute.xlu0 %6784
  %6788 = vset.pattern.permute.xlu0 1
  %6789 = vperm.xlu0 %6788, %v4831
  %v6790 = vpop.permute.xlu0 %6789
  %6793 = vset.pattern.permute.xlu0 1
  %6794 = vperm.xlu0 %6793, %v4832
  %v6795 = vpop.permute.xlu0 %6794
  %6798 = vset.pattern.permute.xlu0 1
  %6799 = vperm.xlu0 %6798, %v4833
  %v6800 = vpop.permute.xlu0 %6799
  %6803 = vset.pattern.permute.xlu0 1
  %6804 = vperm.xlu0 %6803, %v4834
  %v6805 = vpop.permute.xlu0 %6804
  %6808 = vset.pattern.permute.xlu0 1
  %6809 = vperm.xlu0 %6808, %v4835
  %v6810 = vpop.permute.xlu0 %6809
  %6813 = vset.pattern.permute.xlu0 1
  %6814 = vperm.xlu0 %6813, %v4836
  %v6815 = vpop.permute.xlu0 %6814
  %6818 = vset.pattern.permute.xlu0 1
  %6819 = vperm.xlu0 %6818, %v4837
  %v6820 = vpop.permute.xlu0 %6819
  %6823 = vset.pattern.permute.xlu0 1
  %6824 = vperm.xlu0 %6823, %v4838
  %v6825 = vpop.permute.xlu0 %6824
  %6828 = vset.pattern.permute.xlu0 1
  %6829 = vperm.xlu0 %6828, %v4839
  %v6830 = vpop.permute.xlu0 %6829
  %6833 = vset.pattern.permute.xlu0 1
  %6834 = vperm.xlu0 %6833, %v4840
  %v6835 = vpop.permute.xlu0 %6834
  %6838 = vset.pattern.permute.xlu0 1
  %6839 = vperm.xlu0 %6838, %v4841
  %v6840 = vpop.permute.xlu0 %6839
  %6843 = vset.pattern.permute.xlu0 1
  %6844 = vperm.xlu0 %6843, %v4842
  %v6845 = vpop.permute.xlu0 %6844
  %6848 = vset.pattern.permute.xlu0 1
  %6849 = vperm.xlu0 %6848, %v4843
  %v6850 = vpop.permute.xlu0 %6849
  %6853 = vset.pattern.permute.xlu0 1
  %6854 = vperm.xlu0 %6853, %v4844
  %v6855 = vpop.permute.xlu0 %6854
  %6858 = vset.pattern.permute.xlu0 1
  %6859 = vperm.xlu0 %6858, %v4845
  %v6860 = vpop.permute.xlu0 %6859
  %6863 = vset.pattern.permute.xlu0 1
  %6864 = vperm.xlu0 %6863, %v4846
  %v6865 = vpop.permute.xlu0 %6864
  %6868 = vset.pattern.permute.xlu0 1
  %6869 = vperm.xlu0 %6868, %v4847
  %v6870 = vpop.permute.xlu0 %6869
  %6873 = vset.pattern.permute.xlu0 1
  %6874 = vperm.xlu0 %6873, %v4848
  %v6875 = vpop.permute.xlu0 %6874
  %6878 = vset.pattern.permute.xlu0 1
  %6879 = vperm.xlu0 %6878, %v4849
  %v6880 = vpop.permute.xlu0 %6879
  %6883 = vset.pattern.permute.xlu0 1
  %6884 = vperm.xlu0 %6883, %v4850
  %v6885 = vpop.permute.xlu0 %6884
  %6888 = vset.pattern.permute.xlu0 1
  %6889 = vperm.xlu0 %6888, %v4851
  %v6890 = vpop.permute.xlu0 %6889
  %6893 = vset.pattern.permute.xlu0 1
  %6894 = vperm.xlu0 %6893, %v4852
  %v6895 = vpop.permute.xlu0 %6894
  %6898 = vset.pattern.permute.xlu0 1
  %6899 = vperm.xlu0 %6898, %v4853
  %v6900 = vpop.permute.xlu0 %6899
  %6903 = vset.pattern.permute.xlu0 1
  %6904 = vperm.xlu0 %6903, %v4854
  %v6905 = vpop.permute.xlu0 %6904
  %6908 = vset.pattern.permute.xlu0 1
  %6909 = vperm.xlu0 %6908, %v4855
  %v6910 = vpop.permute.xlu0 %6909
  %6913 = vset.pattern.permute.xlu0 1
  %6914 = vperm.xlu0 %6913, %v4856
  %v6915 = vpop.permute.xlu0 %6914
  %6918 = vset.pattern.permute.xlu0 1
  %6919 = vperm.xlu0 %6918, %v4857
  %v6920 = vpop.permute.xlu0 %6919
  %6923 = vset.pattern.permute.xlu0 1
  %6924 = vperm.xlu0 %6923, %v4858
  %v6925 = vpop.permute.xlu0 %6924
  %6928 = vset.pattern.permute.xlu0 1
  %6929 = vperm.xlu0 %6928, %v4859
  %v6930 = vpop.permute.xlu0 %6929
  %6933 = vset.pattern.permute.xlu0 1
  %6934 = vperm.xlu0 %6933, %v4860
  %v6935 = vpop.permute.xlu0 %6934
  %6938 = vset.pattern.permute.xlu0 1
  %6939 = vperm.xlu0 %6938, %v4861
  %v6940 = vpop.permute.xlu0 %6939
  %6943 = vset.pattern.permute.xlu0 1
  %6944 = vperm.xlu0 %6943, %v4862
  %v6945 = vpop.permute.xlu0 %6944
  %6948 = vset.pattern.permute.xlu0 1
  %6949 = vperm.xlu0 %6948, %v4863
  %v6950 = vpop.permute.xlu0 %6949
  %6953 = vset.pattern.permute.xlu0 1
  %6954 = vperm.xlu0 %6953, %v4864
  %v6955 = vpop.permute.xlu0 %6954
  %6958 = vset.pattern.permute.xlu0 1
  %6959 = vperm.xlu0 %6958, %v4865
  %v6960 = vpop.permute.xlu0 %6959
  %6963 = vset.pattern.permute.xlu0 1
  %6964 = vperm.xlu0 %6963, %v4866
  %v6965 = vpop.permute.xlu0 %6964
  %6968 = vset.pattern.permute.xlu0 1
  %6969 = vperm.xlu0 %6968, %v4867
  %v6970 = vpop.permute.xlu0 %6969
  %6973 = vset.pattern.permute.xlu0 1
  %6974 = vperm.xlu0 %6973, %v4868
  %v6975 = vpop.permute.xlu0 %6974
  %6978 = vset.pattern.permute.xlu0 1
  %6979 = vperm.xlu0 %6978, %v4869
  %v6980 = vpop.permute.xlu0 %6979
  %6983 = vset.pattern.permute.xlu0 1
  %6984 = vperm.xlu0 %6983, %v4870
  %v6985 = vpop.permute.xlu0 %6984
  %6988 = vset.pattern.permute.xlu0 1
  %6989 = vperm.xlu0 %6988, %v4871
  %v6990 = vpop.permute.xlu0 %6989
  %6993 = vset.pattern.permute.xlu0 1
  %6994 = vperm.xlu0 %6993, %v4872
  %v6995 = vpop.permute.xlu0 %6994
  %6998 = vset.pattern.permute.xlu0 1
  %6999 = vperm.xlu0 %6998, %v4873
  %v7000 = vpop.permute.xlu0 %6999
  %7003 = vset.pattern.permute.xlu0 1
  %7004 = vperm.xlu0 %7003, %v4874
  %v7005 = vpop.permute.xlu0 %7004
  %7008 = vset.pattern.permute.xlu0 1
  %7009 = vperm.xlu0 %7008, %v4875
  %v7010 = vpop.permute.xlu0 %7009
  %7013 = vset.pattern.permute.xlu0 1
  %7014 = vperm.xlu0 %7013, %v4876
  %v7015 = vpop.permute.xlu0 %7014
  %7018 = vset.pattern.permute.xlu0 1
  %7019 = vperm.xlu0 %7018, %v4877
  %v7020 = vpop.permute.xlu0 %7019
  %7023 = vset.pattern.permute.xlu0 1
  %7024 = vperm.xlu0 %7023, %v4878
  %v7025 = vpop.permute.xlu0 %7024
  %7028 = vset.pattern.permute.xlu0 1
  %7029 = vperm.xlu0 %7028, %v4879
  %v7030 = vpop.permute.xlu0 %7029
  %7033 = vset.pattern.permute.xlu0 1
  %7034 = vperm.xlu0 %7033, %v4880
  %v7035 = vpop.permute.xlu0 %7034
  %7038 = vset.pattern.permute.xlu0 1
  %7039 = vperm.xlu0 %7038, %v4881
  %v7040 = vpop.permute.xlu0 %7039
  %7043 = vset.pattern.permute.xlu0 1
  %7044 = vperm.xlu0 %7043, %v4882
  %v7045 = vpop.permute.xlu0 %7044
  %7048 = vset.pattern.permute.xlu0 1
  %7049 = vperm.xlu0 %7048, %v4883
  %v7050 = vpop.permute.xlu0 %7049
  %7053 = vset.pattern.permute.xlu0 1
  %7054 = vperm.xlu0 %7053, %v4884
  %v7055 = vpop.permute.xlu0 %7054
  %7058 = vset.pattern.permute.xlu0 1
  %7059 = vperm.xlu0 %7058, %v4885
  %v7060 = vpop.permute.xlu0 %7059
  %7063 = vset.pattern.permute.xlu0 1
  %7064 = vperm.xlu0 %7063, %v4886
  %v7065 = vpop.permute.xlu0 %7064
  %7068 = vset.pattern.permute.xlu0 1
  %7069 = vperm.xlu0 %7068, %v4887
  %v7070 = vpop.permute.xlu0 %7069
  %7073 = vset.pattern.permute.xlu0 1
  %7074 = vperm.xlu0 %7073, %v4888
  %v7075 = vpop.permute.xlu0 %7074
  %7078 = vset.pattern.permute.xlu0 1
  %7079 = vperm.xlu0 %7078, %v4889
  %v7080 = vpop.permute.xlu0 %7079
  %7083 = vset.pattern.permute.xlu0 1
  %7084 = vperm.xlu0 %7083, %v4890
  %v7085 = vpop.permute.xlu0 %7084
  %7088 = vset.pattern.permute.xlu0 1
  %7089 = vperm.xlu0 %7088, %v4891
  %v7090 = vpop.permute.xlu0 %7089
  %7093 = vset.pattern.permute.xlu0 1
  %7094 = vperm.xlu0 %7093, %v4892
  %v7095 = vpop.permute.xlu0 %7094
  %7098 = vset.pattern.permute.xlu0 1
  %7099 = vperm.xlu0 %7098, %v4893
  %v7100 = vpop.permute.xlu0 %7099
  %7103 = vset.pattern.permute.xlu0 1
  %7104 = vperm.xlu0 %7103, %v4894
  %v7105 = vpop.permute.xlu0 %7104
  %7108 = vset.pattern.permute.xlu0 1
  %7109 = vperm.xlu0 %7108, %v4895
  %v7110 = vpop.permute.xlu0 %7109
  %7113 = vset.pattern.permute.xlu0 1
  %7114 = vperm.xlu0 %7113, %v4896
  %v7115 = vpop.permute.xlu0 %7114
  %7118 = vset.pattern.permute.xlu0 1
  %7119 = vperm.xlu0 %7118, %v4897
  %v7120 = vpop.permute.xlu0 %7119
  %7123 = vset.pattern.permute.xlu0 1
  %7124 = vperm.xlu0 %7123, %v4898
  %v7125 = vpop.permute.xlu0 %7124
  %7128 = vset.pattern.permute.xlu0 1
  %7129 = vperm.xlu0 %7128, %v4899
  %v7130 = vpop.permute.xlu0 %7129
  %7133 = vset.pattern.permute.xlu0 1
  %7134 = vperm.xlu0 %7133, %v4900
  %v7135 = vpop.permute.xlu0 %7134
  %7138 = vset.pattern.permute.xlu0 1
  %7139 = vperm.xlu0 %7138, %v4901
  %v7140 = vpop.permute.xlu0 %7139
  %7143 = vset.pattern.permute.xlu0 1
  %7144 = vperm.xlu0 %7143, %v4902
  %v7145 = vpop.permute.xlu0 %7144
  %7148 = vset.pattern.permute.xlu0 1
  %7149 = vperm.xlu0 %7148, %v4903
  %v7150 = vpop.permute.xlu0 %7149
  %7153 = vset.pattern.permute.xlu0 1
  %7154 = vperm.xlu0 %7153, %v4904
  %v7155 = vpop.permute.xlu0 %7154
  %7158 = vset.pattern.permute.xlu0 1
  %7159 = vperm.xlu0 %7158, %v4905
  %v7160 = vpop.permute.xlu0 %7159
  %v7162 = vadd.f32 %v5846, %v6225
  %v7163 = vadd.f32 %v5847, %v6225
  %v7164 = vadd.f32 %v5848, %v6230
  %v7165 = vadd.f32 %v5849, %v6230
  %v7166 = vadd.f32 %v5850, %v6235
  %v7167 = vadd.f32 %v5851, %v6235
  %v7168 = vadd.f32 %v5852, %v6240
  %v7169 = vadd.f32 %v5853, %v6240
  %v7170 = vadd.f32 %v5854, %v6245
  %v7171 = vadd.f32 %v5855, %v6245
  %v7172 = vadd.f32 %v5856, %v6250
  %v7173 = vadd.f32 %v5857, %v6250
  %v7174 = vadd.f32 %v5858, %v6255
  %v7175 = vadd.f32 %v5859, %v6255
  %v7176 = vadd.f32 %v5860, %v6260
  %v7177 = vadd.f32 %v5861, %v6260
  %v7178 = vadd.f32 %v5862, %v6265
  %v7179 = vadd.f32 %v5863, %v6265
  %v7180 = vadd.f32 %v5864, %v6270
  %v7181 = vadd.f32 %v5865, %v6270
  %v7182 = vadd.f32 %v5866, %v6275
  %v7183 = vadd.f32 %v5867, %v6275
  %v7184 = vadd.f32 %v5868, %v6280
  %v7185 = vadd.f32 %v5869, %v6280
  %v7186 = vadd.f32 %v5870, %v6285
  %v7187 = vadd.f32 %v5871, %v6285
  %v7188 = vadd.f32 %v5872, %v6290
  %v7189 = vadd.f32 %v5873, %v6290
  %v7190 = vadd.f32 %v5874, %v6295
  %v7191 = vadd.f32 %v5875, %v6295
  %v7192 = vadd.f32 %v5876, %v6300
  %v7193 = vadd.f32 %v5877, %v6300
  %v7194 = vadd.f32 %v5878, %v6305
  %v7195 = vadd.f32 %v5879, %v6305
  %v7196 = vadd.f32 %v5880, %v6310
  %v7197 = vadd.f32 %v5881, %v6310
  %v7198 = vadd.f32 %v5882, %v6315
  %v7199 = vadd.f32 %v5883, %v6315
  %v7200 = vadd.f32 %v5884, %v6320
  %v7201 = vadd.f32 %v5885, %v6320
  %v7202 = vadd.f32 %v5886, %v6325
  %v7203 = vadd.f32 %v5887, %v6325
  %v7204 = vadd.f32 %v5888, %v6330
  %v7205 = vadd.f32 %v5889, %v6330
  %v7206 = vadd.f32 %v5890, %v6335
  %v7207 = vadd.f32 %v5891, %v6335
  %v7208 = vadd.f32 %v5892, %v6340
  %v7209 = vadd.f32 %v5893, %v6340
  %v7210 = vadd.f32 %v5894, %v6345
  %v7211 = vadd.f32 %v5895, %v6345
  %v7212 = vadd.f32 %v5896, %v6350
  %v7213 = vadd.f32 %v5897, %v6350
  %v7214 = vadd.f32 %v5898, %v6355
  %v7215 = vadd.f32 %v5899, %v6355
  %v7216 = vadd.f32 %v5900, %v6360
  %v7217 = vadd.f32 %v5901, %v6360
  %v7218 = vadd.f32 %v5902, %v6365
  %v7219 = vadd.f32 %v5903, %v6365
  %v7220 = vadd.f32 %v5904, %v6370
  %v7221 = vadd.f32 %v5905, %v6370
  %v7222 = vadd.f32 %v5906, %v6375
  %v7223 = vadd.f32 %v5907, %v6375
  %v7224 = vadd.f32 %v5908, %v6380
  %v7225 = vadd.f32 %v5909, %v6380
  %v7226 = vadd.f32 %v5910, %v6385
  %v7227 = vadd.f32 %v5911, %v6385
  %v7228 = vadd.f32 %v5912, %v6390
  %v7229 = vadd.f32 %v5913, %v6390
  %v7230 = vadd.f32 %v5914, %v6395
  %v7231 = vadd.f32 %v5915, %v6395
  %v7232 = vadd.f32 %v5916, %v6400
  %v7233 = vadd.f32 %v5917, %v6400
  %v7234 = vadd.f32 %v5918, %v6405
  %v7235 = vadd.f32 %v5919, %v6405
  %v7236 = vadd.f32 %v5920, %v6410
  %v7237 = vadd.f32 %v5921, %v6410
  %v7238 = vadd.f32 %v5922, %v6415
  %v7239 = vadd.f32 %v5923, %v6415
  %v7240 = vadd.f32 %v5924, %v6420
  %v7241 = vadd.f32 %v5925, %v6420
  %v7242 = vadd.f32 %v5926, %v6425
  %v7243 = vadd.f32 %v5927, %v6425
  %v7244 = vadd.f32 %v5928, %v6430
  %v7245 = vadd.f32 %v5929, %v6430
  %v7246 = vadd.f32 %v5930, %v6435
  %v7247 = vadd.f32 %v5931, %v6435
  %v7248 = vadd.f32 %v5932, %v6440
  %v7249 = vadd.f32 %v5933, %v6440
  %v7250 = vadd.f32 %v5934, %v6445
  %v7251 = vadd.f32 %v5935, %v6445
  %v7252 = vadd.f32 %v5936, %v6450
  %v7253 = vadd.f32 %v5937, %v6450
  %v7254 = vadd.f32 %v5938, %v6455
  %v7255 = vadd.f32 %v5939, %v6455
  %v7256 = vadd.f32 %v5940, %v6460
  %v7257 = vadd.f32 %v5941, %v6460
  %v7258 = vadd.f32 %v5942, %v6465
  %v7259 = vadd.f32 %v5943, %v6465
  %v7260 = vadd.f32 %v5944, %v6470
  %v7261 = vadd.f32 %v5945, %v6470
  %v7262 = vadd.f32 %v5946, %v6475
  %v7263 = vadd.f32 %v5947, %v6475
  %v7264 = vadd.f32 %v5948, %v6480
  %v7265 = vadd.f32 %v5949, %v6480
  %v7266 = vadd.f32 %v5950, %v6485
  %v7267 = vadd.f32 %v5951, %v6485
  %v7268 = vadd.f32 %v5952, %v6490
  %v7269 = vadd.f32 %v5953, %v6490
  %v7270 = vadd.f32 %v5954, %v6495
  %v7271 = vadd.f32 %v5955, %v6495
  %v7272 = vadd.f32 %v5956, %v6500
  %v7273 = vadd.f32 %v5957, %v6500
  %v7274 = vadd.f32 %v5958, %v6505
  %v7275 = vadd.f32 %v5959, %v6505
  %v7276 = vadd.f32 %v5960, %v6510
  %v7277 = vadd.f32 %v5961, %v6510
  %v7278 = vadd.f32 %v5962, %v6515
  %v7279 = vadd.f32 %v5963, %v6515
  %v7280 = vadd.f32 %v5964, %v6520
  %v7281 = vadd.f32 %v5965, %v6520
  %v7282 = vadd.f32 %v5966, %v6525
  %v7283 = vadd.f32 %v5967, %v6525
  %v7284 = vadd.f32 %v5968, %v6530
  %v7285 = vadd.f32 %v5969, %v6530
  %v7286 = vadd.f32 %v5970, %v6535
  %v7287 = vadd.f32 %v5971, %v6535
  %v7288 = vadd.f32 %v5972, %v6540
  %v7289 = vadd.f32 %v5973, %v6540
  %v7290 = vadd.f32 %v5974, %v6545
  %v7291 = vadd.f32 %v5975, %v6545
  %v7292 = vadd.f32 %v5976, %v6550
  %v7293 = vadd.f32 %v5977, %v6550
  %v7294 = vadd.f32 %v5978, %v6555
  %v7295 = vadd.f32 %v5979, %v6555
  %v7296 = vadd.f32 %v5980, %v6560
  %v7297 = vadd.f32 %v5981, %v6560
  %v7298 = vadd.f32 %v5982, %v6565
  %v7299 = vadd.f32 %v5983, %v6565
  %v7300 = vadd.f32 %v5984, %v6570
  %v7301 = vadd.f32 %v5985, %v6570
  %v7302 = vadd.f32 %v5986, %v6575
  %v7303 = vadd.f32 %v5987, %v6575
  %v7304 = vadd.f32 %v5988, %v6580
  %v7305 = vadd.f32 %v5989, %v6580
  %v7306 = vadd.f32 %v5990, %v6585
  %v7307 = vadd.f32 %v5991, %v6585
  %v7308 = vadd.f32 %v5992, %v6590
  %v7309 = vadd.f32 %v5993, %v6590
  %v7310 = vadd.f32 %v5994, %v6595
  %v7311 = vadd.f32 %v5995, %v6595
  %v7312 = vadd.f32 %v5996, %v6600
  %v7313 = vadd.f32 %v5997, %v6600
  %v7314 = vadd.f32 %v5998, %v6605
  %v7315 = vadd.f32 %v5999, %v6605
  %v7316 = vadd.f32 %v6000, %v6610
  %v7317 = vadd.f32 %v6001, %v6610
  %v7318 = vadd.f32 %v6002, %v6615
  %v7319 = vadd.f32 %v6003, %v6615
  %v7320 = vadd.f32 %v6004, %v6620
  %v7321 = vadd.f32 %v6005, %v6620
  %v7322 = vadd.f32 %v6006, %v6625
  %v7323 = vadd.f32 %v6007, %v6625
  %v7324 = vadd.f32 %v6008, %v6630
  %v7325 = vadd.f32 %v6009, %v6630
  %v7326 = vadd.f32 %v6010, %v6635
  %v7327 = vadd.f32 %v6011, %v6635
  %v7328 = vadd.f32 %v6012, %v6640
  %v7329 = vadd.f32 %v6013, %v6640
  %v7330 = vadd.f32 %v6014, %v6645
  %v7331 = vadd.f32 %v6015, %v6645
  %v7332 = vadd.f32 %v6016, %v6650
  %v7333 = vadd.f32 %v6017, %v6650
  %v7334 = vadd.f32 %v6018, %v6655
  %v7335 = vadd.f32 %v6019, %v6655
  %v7336 = vadd.f32 %v6020, %v6660
  %v7337 = vadd.f32 %v6021, %v6660
  %v7338 = vadd.f32 %v6022, %v6665
  %v7339 = vadd.f32 %v6023, %v6665
  %v7340 = vadd.f32 %v6024, %v6670
  %v7341 = vadd.f32 %v6025, %v6670
  %v7342 = vadd.f32 %v6026, %v6675
  %v7343 = vadd.f32 %v6027, %v6675
  %v7344 = vadd.f32 %v6028, %v6680
  %v7345 = vadd.f32 %v6029, %v6680
  %v7346 = vadd.f32 %v6030, %v6685
  %v7347 = vadd.f32 %v6031, %v6685
  %v7348 = vadd.f32 %v6032, %v6690
  %v7349 = vadd.f32 %v6033, %v6690
  %v7350 = vadd.f32 %v6034, %v6695
  %v7351 = vadd.f32 %v6035, %v6695
  %v7352 = vadd.f32 %v6036, %v6700
  %v7353 = vadd.f32 %v6037, %v6700
  %v7354 = vadd.f32 %v6038, %v6705
  %v7355 = vadd.f32 %v6039, %v6705
  %v7356 = vadd.f32 %v6040, %v6710
  %v7357 = vadd.f32 %v6041, %v6710
  %v7358 = vadd.f32 %v6042, %v6715
  %v7359 = vadd.f32 %v6043, %v6715
  %v7360 = vadd.f32 %v6044, %v6720
  %v7361 = vadd.f32 %v6045, %v6720
  %v7362 = vadd.f32 %v6046, %v6725
  %v7363 = vadd.f32 %v6047, %v6725
  %v7364 = vadd.f32 %v6048, %v6730
  %v7365 = vadd.f32 %v6049, %v6730
  %v7366 = vadd.f32 %v6050, %v6735
  %v7367 = vadd.f32 %v6051, %v6735
  %v7368 = vadd.f32 %v6052, %v6740
  %v7369 = vadd.f32 %v6053, %v6740
  %v7370 = vadd.f32 %v6054, %v6745
  %v7371 = vadd.f32 %v6055, %v6745
  %v7372 = vadd.f32 %v6056, %v6750
  %v7373 = vadd.f32 %v6057, %v6750
  %v7374 = vadd.f32 %v6058, %v6755
  %v7375 = vadd.f32 %v6059, %v6755
  %v7376 = vadd.f32 %v6060, %v6760
  %v7377 = vadd.f32 %v6061, %v6760
  %v7378 = vadd.f32 %v6062, %v6765
  %v7379 = vadd.f32 %v6063, %v6765
  %v7380 = vadd.f32 %v6064, %v6770
  %v7381 = vadd.f32 %v6065, %v6770
  %v7382 = vadd.f32 %v6066, %v6775
  %v7383 = vadd.f32 %v6067, %v6775
  %v7384 = vadd.f32 %v6068, %v6780
  %v7385 = vadd.f32 %v6069, %v6780
  %v7386 = vadd.f32 %v6070, %v6785
  %v7387 = vadd.f32 %v6071, %v6785
  %v7388 = vadd.f32 %v6072, %v6790
  %v7389 = vadd.f32 %v6073, %v6790
  %v7390 = vadd.f32 %v6074, %v6795
  %v7391 = vadd.f32 %v6075, %v6795
  %v7392 = vadd.f32 %v6076, %v6800
  %v7393 = vadd.f32 %v6077, %v6800
  %v7394 = vadd.f32 %v6078, %v6805
  %v7395 = vadd.f32 %v6079, %v6805
  %v7396 = vadd.f32 %v6080, %v6810
  %v7397 = vadd.f32 %v6081, %v6810
  %v7398 = vadd.f32 %v6082, %v6815
  %v7399 = vadd.f32 %v6083, %v6815
  %v7400 = vadd.f32 %v6084, %v6820
  %v7401 = vadd.f32 %v6085, %v6820
  %v7402 = vadd.f32 %v6086, %v6825
  %v7403 = vadd.f32 %v6087, %v6825
  %v7404 = vadd.f32 %v6088, %v6830
  %v7405 = vadd.f32 %v6089, %v6830
  %v7406 = vadd.f32 %v6090, %v6835
  %v7407 = vadd.f32 %v6091, %v6835
  %v7408 = vadd.f32 %v6092, %v6840
  %v7409 = vadd.f32 %v6093, %v6840
  %v7410 = vadd.f32 %v6094, %v6845
  %v7411 = vadd.f32 %v6095, %v6845
  %v7412 = vadd.f32 %v6096, %v6850
  %v7413 = vadd.f32 %v6097, %v6850
  %v7414 = vadd.f32 %v6098, %v6855
  %v7415 = vadd.f32 %v6099, %v6855
  %v7416 = vadd.f32 %v6100, %v6860
  %v7417 = vadd.f32 %v6101, %v6860
  %v7418 = vadd.f32 %v6102, %v6865
  %v7419 = vadd.f32 %v6103, %v6865
  %v7420 = vadd.f32 %v6104, %v6870
  %v7421 = vadd.f32 %v6105, %v6870
  %v7422 = vadd.f32 %v6106, %v6875
  %v7423 = vadd.f32 %v6107, %v6875
  %v7424 = vadd.f32 %v6108, %v6880
  %v7425 = vadd.f32 %v6109, %v6880
  %v7426 = vadd.f32 %v6110, %v6885
  %v7427 = vadd.f32 %v6111, %v6885
  %v7428 = vadd.f32 %v6112, %v6890
  %v7429 = vadd.f32 %v6113, %v6890
  %v7430 = vadd.f32 %v6114, %v6895
  %v7431 = vadd.f32 %v6115, %v6895
  %v7432 = vadd.f32 %v6116, %v6900
  %v7433 = vadd.f32 %v6117, %v6900
  %v7434 = vadd.f32 %v6118, %v6905
  %v7435 = vadd.f32 %v6119, %v6905
  %v7436 = vadd.f32 %v6120, %v6910
  %v7437 = vadd.f32 %v6121, %v6910
  %v7438 = vadd.f32 %v6122, %v6915
  %v7439 = vadd.f32 %v6123, %v6915
  %v7440 = vadd.f32 %v6124, %v6920
  %v7441 = vadd.f32 %v6125, %v6920
  %v7442 = vadd.f32 %v6126, %v6925
  %v7443 = vadd.f32 %v6127, %v6925
  %v7444 = vadd.f32 %v6128, %v6930
  %v7445 = vadd.f32 %v6129, %v6930
  %v7446 = vadd.f32 %v6130, %v6935
  %v7447 = vadd.f32 %v6131, %v6935
  %v7448 = vadd.f32 %v6132, %v6940
  %v7449 = vadd.f32 %v6133, %v6940
  %v7450 = vadd.f32 %v6134, %v6945
  %v7451 = vadd.f32 %v6135, %v6945
  %v7452 = vadd.f32 %v6136, %v6950
  %v7453 = vadd.f32 %v6137, %v6950
  %v7454 = vadd.f32 %v6138, %v6955
  %v7455 = vadd.f32 %v6139, %v6955
  %v7456 = vadd.f32 %v6140, %v6960
  %v7457 = vadd.f32 %v6141, %v6960
  %v7458 = vadd.f32 %v6142, %v6965
  %v7459 = vadd.f32 %v6143, %v6965
  %v7460 = vadd.f32 %v6144, %v6970
  %v7461 = vadd.f32 %v6145, %v6970
  %v7462 = vadd.f32 %v6146, %v6975
  %v7463 = vadd.f32 %v6147, %v6975
  %v7464 = vadd.f32 %v6148, %v6980
  %v7465 = vadd.f32 %v6149, %v6980
  %v7466 = vadd.f32 %v6150, %v6985
  %v7467 = vadd.f32 %v6151, %v6985
  %v7468 = vadd.f32 %v6152, %v6990
  %v7469 = vadd.f32 %v6153, %v6990
  %v7470 = vadd.f32 %v6154, %v6995
  %v7471 = vadd.f32 %v6155, %v6995
  %v7472 = vadd.f32 %v6156, %v7000
  %v7473 = vadd.f32 %v6157, %v7000
  %v7474 = vadd.f32 %v6158, %v7005
  %v7475 = vadd.f32 %v6159, %v7005
  %v7476 = vadd.f32 %v6160, %v7010
  %v7477 = vadd.f32 %v6161, %v7010
  %v7478 = vadd.f32 %v6162, %v7015
  %v7479 = vadd.f32 %v6163, %v7015
  %v7480 = vadd.f32 %v6164, %v7020
  %v7481 = vadd.f32 %v6165, %v7020
  %v7482 = vadd.f32 %v6166, %v7025
  %v7483 = vadd.f32 %v6167, %v7025
  %v7484 = vadd.f32 %v6168, %v7030
  %v7485 = vadd.f32 %v6169, %v7030
  %v7486 = vadd.f32 %v6170, %v7035
  %v7487 = vadd.f32 %v6171, %v7035
  %v7488 = vadd.f32 %v6172, %v7040
  %v7489 = vadd.f32 %v6173, %v7040
  %v7490 = vadd.f32 %v6174, %v7045
  %v7491 = vadd.f32 %v6175, %v7045
  %v7492 = vadd.f32 %v6176, %v7050
  %v7493 = vadd.f32 %v6177, %v7050
  %v7494 = vadd.f32 %v6178, %v7055
  %v7495 = vadd.f32 %v6179, %v7055
  %v7496 = vadd.f32 %v6180, %v7060
  %v7497 = vadd.f32 %v6181, %v7060
  %v7498 = vadd.f32 %v6182, %v7065
  %v7499 = vadd.f32 %v6183, %v7065
  %v7500 = vadd.f32 %v6184, %v7070
  %v7501 = vadd.f32 %v6185, %v7070
  %v7502 = vadd.f32 %v6186, %v7075
  %v7503 = vadd.f32 %v6187, %v7075
  %v7504 = vadd.f32 %v6188, %v7080
  %v7505 = vadd.f32 %v6189, %v7080
  %v7506 = vadd.f32 %v6190, %v7085
  %v7507 = vadd.f32 %v6191, %v7085
  %v7508 = vadd.f32 %v6192, %v7090
  %v7509 = vadd.f32 %v6193, %v7090
  %v7510 = vadd.f32 %v6194, %v7095
  %v7511 = vadd.f32 %v6195, %v7095
  %v7512 = vadd.f32 %v6196, %v7100
  %v7513 = vadd.f32 %v6197, %v7100
  %v7514 = vadd.f32 %v6198, %v7105
  %v7515 = vadd.f32 %v6199, %v7105
  %v7516 = vadd.f32 %v6200, %v7110
  %v7517 = vadd.f32 %v6201, %v7110
  %v7518 = vadd.f32 %v6202, %v7115
  %v7519 = vadd.f32 %v6203, %v7115
  %v7520 = vadd.f32 %v6204, %v7120
  %v7521 = vadd.f32 %v6205, %v7120
  %v7522 = vadd.f32 %v6206, %v7125
  %v7523 = vadd.f32 %v6207, %v7125
  %v7524 = vadd.f32 %v6208, %v7130
  %v7525 = vadd.f32 %v6209, %v7130
  %v7526 = vadd.f32 %v6210, %v7135
  %v7527 = vadd.f32 %v6211, %v7135
  %v7528 = vadd.f32 %v6212, %v7140
  %v7529 = vadd.f32 %v6213, %v7140
  %v7530 = vadd.f32 %v6214, %v7145
  %v7531 = vadd.f32 %v6215, %v7145
  %v7532 = vadd.f32 %v6216, %v7150
  %v7533 = vadd.f32 %v6217, %v7150
  %v7534 = vadd.f32 %v6218, %v7155
  %v7535 = vadd.f32 %v6219, %v7155
  %v7536 = vadd.f32 %v6220, %v7160
  %v7537 = vadd.f32 %v6221, %v7160
  %v7538 = vmax.f32 %v7162, 0.0
  %v7539 = vmax.f32 %v7163, 0.0
  %v7540 = vmax.f32 %v7164, 0.0
  %v7541 = vmax.f32 %v7165, 0.0
  %v7542 = vmax.f32 %v7166, 0.0
  %v7543 = vmax.f32 %v7167, 0.0
  %v7544 = vmax.f32 %v7168, 0.0
  %v7545 = vmax.f32 %v7169, 0.0
  %v7546 = vmax.f32 %v7170, 0.0
  %v7547 = vmax.f32 %v7171, 0.0
  %v7548 = vmax.f32 %v7172, 0.0
  %v7549 = vmax.f32 %v7173, 0.0
  %v7550 = vmax.f32 %v7174, 0.0
  %v7551 = vmax.f32 %v7175, 0.0
  %v7552 = vmax.f32 %v7176, 0.0
  %v7553 = vmax.f32 %v7177, 0.0
  %v7554 = vmax.f32 %v7178, 0.0
  %v7555 = vmax.f32 %v7179, 0.0
  %v7556 = vmax.f32 %v7180, 0.0
  %v7557 = vmax.f32 %v7181, 0.0
  %v7558 = vmax.f32 %v7182, 0.0
  %v7559 = vmax.f32 %v7183, 0.0
  %v7560 = vmax.f32 %v7184, 0.0
  %v7561 = vmax.f32 %v7185, 0.0
  %v7562 = vmax.f32 %v7186, 0.0
  %v7563 = vmax.f32 %v7187, 0.0
  %v7564 = vmax.f32 %v7188, 0.0
  %v7565 = vmax.f32 %v7189, 0.0
  %v7566 = vmax.f32 %v7190, 0.0
  %v7567 = vmax.f32 %v7191, 0.0
  %v7568 = vmax.f32 %v7192, 0.0
  %v7569 = vmax.f32 %v7193, 0.0
  %v7570 = vmax.f32 %v7194, 0.0
  %v7571 = vmax.f32 %v7195, 0.0
  %v7572 = vmax.f32 %v7196, 0.0
  %v7573 = vmax.f32 %v7197, 0.0
  %v7574 = vmax.f32 %v7198, 0.0
  %v7575 = vmax.f32 %v7199, 0.0
  %v7576 = vmax.f32 %v7200, 0.0
  %v7577 = vmax.f32 %v7201, 0.0
  %v7578 = vmax.f32 %v7202, 0.0
  %v7579 = vmax.f32 %v7203, 0.0
  %v7580 = vmax.f32 %v7204, 0.0
  %v7581 = vmax.f32 %v7205, 0.0
  %v7582 = vmax.f32 %v7206, 0.0
  %v7583 = vmax.f32 %v7207, 0.0
  %v7584 = vmax.f32 %v7208, 0.0
  %v7585 = vmax.f32 %v7209, 0.0
  %v7586 = vmax.f32 %v7210, 0.0
  %v7587 = vmax.f32 %v7211, 0.0
  %v7588 = vmax.f32 %v7212, 0.0
  %v7589 = vmax.f32 %v7213, 0.0
  %v7590 = vmax.f32 %v7214, 0.0
  %v7591 = vmax.f32 %v7215, 0.0
  %v7592 = vmax.f32 %v7216, 0.0
  %v7593 = vmax.f32 %v7217, 0.0
  %v7594 = vmax.f32 %v7218, 0.0
  %v7595 = vmax.f32 %v7219, 0.0
  %v7596 = vmax.f32 %v7220, 0.0
  %v7597 = vmax.f32 %v7221, 0.0
  %v7598 = vmax.f32 %v7222, 0.0
  %v7599 = vmax.f32 %v7223, 0.0
  %v7600 = vmax.f32 %v7224, 0.0
  %v7601 = vmax.f32 %v7225, 0.0
  %v7602 = vmax.f32 %v7226, 0.0
  %v7603 = vmax.f32 %v7227, 0.0
  %v7604 = vmax.f32 %v7228, 0.0
  %v7605 = vmax.f32 %v7229, 0.0
  %v7606 = vmax.f32 %v7230, 0.0
  %v7607 = vmax.f32 %v7231, 0.0
  %v7608 = vmax.f32 %v7232, 0.0
  %v7609 = vmax.f32 %v7233, 0.0
  %v7610 = vmax.f32 %v7234, 0.0
  %v7611 = vmax.f32 %v7235, 0.0
  %v7612 = vmax.f32 %v7236, 0.0
  %v7613 = vmax.f32 %v7237, 0.0
  %v7614 = vmax.f32 %v7238, 0.0
  %v7615 = vmax.f32 %v7239, 0.0
  %v7616 = vmax.f32 %v7240, 0.0
  %v7617 = vmax.f32 %v7241, 0.0
  %v7618 = vmax.f32 %v7242, 0.0
  %v7619 = vmax.f32 %v7243, 0.0
  %v7620 = vmax.f32 %v7244, 0.0
  %v7621 = vmax.f32 %v7245, 0.0
  %v7622 = vmax.f32 %v7246, 0.0
  %v7623 = vmax.f32 %v7247, 0.0
  %v7624 = vmax.f32 %v7248, 0.0
  %v7625 = vmax.f32 %v7249, 0.0
  %v7626 = vmax.f32 %v7250, 0.0
  %v7627 = vmax.f32 %v7251, 0.0
  %v7628 = vmax.f32 %v7252, 0.0
  %v7629 = vmax.f32 %v7253, 0.0
  %v7630 = vmax.f32 %v7254, 0.0
  %v7631 = vmax.f32 %v7255, 0.0
  %v7632 = vmax.f32 %v7256, 0.0
  %v7633 = vmax.f32 %v7257, 0.0
  %v7634 = vmax.f32 %v7258, 0.0
  %v7635 = vmax.f32 %v7259, 0.0
  %v7636 = vmax.f32 %v7260, 0.0
  %v7637 = vmax.f32 %v7261, 0.0
  %v7638 = vmax.f32 %v7262, 0.0
  %v7639 = vmax.f32 %v7263, 0.0
  %v7640 = vmax.f32 %v7264, 0.0
  %v7641 = vmax.f32 %v7265, 0.0
  %v7642 = vmax.f32 %v7266, 0.0
  %v7643 = vmax.f32 %v7267, 0.0
  %v7644 = vmax.f32 %v7268, 0.0
  %v7645 = vmax.f32 %v7269, 0.0
  %v7646 = vmax.f32 %v7270, 0.0
  %v7647 = vmax.f32 %v7271, 0.0
  %v7648 = vmax.f32 %v7272, 0.0
  %v7649 = vmax.f32 %v7273, 0.0
  %v7650 = vmax.f32 %v7274, 0.0
  %v7651 = vmax.f32 %v7275, 0.0
  %v7652 = vmax.f32 %v7276, 0.0
  %v7653 = vmax.f32 %v7277, 0.0
  %v7654 = vmax.f32 %v7278, 0.0
  %v7655 = vmax.f32 %v7279, 0.0
  %v7656 = vmax.f32 %v7280, 0.0
  %v7657 = vmax.f32 %v7281, 0.0
  %v7658 = vmax.f32 %v7282, 0.0
  %v7659 = vmax.f32 %v7283, 0.0
  %v7660 = vmax.f32 %v7284, 0.0
  %v7661 = vmax.f32 %v7285, 0.0
  %v7662 = vmax.f32 %v7286, 0.0
  %v7663 = vmax.f32 %v7287, 0.0
  %v7664 = vmax.f32 %v7288, 0.0
  %v7665 = vmax.f32 %v7289, 0.0
  %v7666 = vmax.f32 %v7290, 0.0
  %v7667 = vmax.f32 %v7291, 0.0
  %v7668 = vmax.f32 %v7292, 0.0
  %v7669 = vmax.f32 %v7293, 0.0
  %v7670 = vmax.f32 %v7294, 0.0
  %v7671 = vmax.f32 %v7295, 0.0
  %v7672 = vmax.f32 %v7296, 0.0
  %v7673 = vmax.f32 %v7297, 0.0
  %v7674 = vmax.f32 %v7298, 0.0
  %v7675 = vmax.f32 %v7299, 0.0
  %v7676 = vmax.f32 %v7300, 0.0
  %v7677 = vmax.f32 %v7301, 0.0
  %v7678 = vmax.f32 %v7302, 0.0
  %v7679 = vmax.f32 %v7303, 0.0
  %v7680 = vmax.f32 %v7304, 0.0
  %v7681 = vmax.f32 %v7305, 0.0
  %v7682 = vmax.f32 %v7306, 0.0
  %v7683 = vmax.f32 %v7307, 0.0
  %v7684 = vmax.f32 %v7308, 0.0
  %v7685 = vmax.f32 %v7309, 0.0
  %v7686 = vmax.f32 %v7310, 0.0
  %v7687 = vmax.f32 %v7311, 0.0
  %v7688 = vmax.f32 %v7312, 0.0
  %v7689 = vmax.f32 %v7313, 0.0
  %v7690 = vmax.f32 %v7314, 0.0
  %v7691 = vmax.f32 %v7315, 0.0
  %v7692 = vmax.f32 %v7316, 0.0
  %v7693 = vmax.f32 %v7317, 0.0
  %v7694 = vmax.f32 %v7318, 0.0
  %v7695 = vmax.f32 %v7319, 0.0
  %v7696 = vmax.f32 %v7320, 0.0
  %v7697 = vmax.f32 %v7321, 0.0
  %v7698 = vmax.f32 %v7322, 0.0
  %v7699 = vmax.f32 %v7323, 0.0
  %v7700 = vmax.f32 %v7324, 0.0
  %v7701 = vmax.f32 %v7325, 0.0
  %v7702 = vmax.f32 %v7326, 0.0
  %v7703 = vmax.f32 %v7327, 0.0
  %v7704 = vmax.f32 %v7328, 0.0
  %v7705 = vmax.f32 %v7329, 0.0
  %v7706 = vmax.f32 %v7330, 0.0
  %v7707 = vmax.f32 %v7331, 0.0
  %v7708 = vmax.f32 %v7332, 0.0
  %v7709 = vmax.f32 %v7333, 0.0
  %v7710 = vmax.f32 %v7334, 0.0
  %v7711 = vmax.f32 %v7335, 0.0
  %v7712 = vmax.f32 %v7336, 0.0
  %v7713 = vmax.f32 %v7337, 0.0
  %v7714 = vmax.f32 %v7338, 0.0
  %v7715 = vmax.f32 %v7339, 0.0
  %v7716 = vmax.f32 %v7340, 0.0
  %v7717 = vmax.f32 %v7341, 0.0
  %v7718 = vmax.f32 %v7342, 0.0
  %v7719 = vmax.f32 %v7343, 0.0
  %v7720 = vmax.f32 %v7344, 0.0
  %v7721 = vmax.f32 %v7345, 0.0
  %v7722 = vmax.f32 %v7346, 0.0
  %v7723 = vmax.f32 %v7347, 0.0
  %v7724 = vmax.f32 %v7348, 0.0
  %v7725 = vmax.f32 %v7349, 0.0
  %v7726 = vmax.f32 %v7350, 0.0
  %v7727 = vmax.f32 %v7351, 0.0
  %v7728 = vmax.f32 %v7352, 0.0
  %v7729 = vmax.f32 %v7353, 0.0
  %v7730 = vmax.f32 %v7354, 0.0
  %v7731 = vmax.f32 %v7355, 0.0
  %v7732 = vmax.f32 %v7356, 0.0
  %v7733 = vmax.f32 %v7357, 0.0
  %v7734 = vmax.f32 %v7358, 0.0
  %v7735 = vmax.f32 %v7359, 0.0
  %v7736 = vmax.f32 %v7360, 0.0
  %v7737 = vmax.f32 %v7361, 0.0
  %v7738 = vmax.f32 %v7362, 0.0
  %v7739 = vmax.f32 %v7363, 0.0
  %v7740 = vmax.f32 %v7364, 0.0
  %v7741 = vmax.f32 %v7365, 0.0
  %v7742 = vmax.f32 %v7366, 0.0
  %v7743 = vmax.f32 %v7367, 0.0
  %v7744 = vmax.f32 %v7368, 0.0
  %v7745 = vmax.f32 %v7369, 0.0
  %v7746 = vmax.f32 %v7370, 0.0
  %v7747 = vmax.f32 %v7371, 0.0
  %v7748 = vmax.f32 %v7372, 0.0
  %v7749 = vmax.f32 %v7373, 0.0
  %v7750 = vmax.f32 %v7374, 0.0
  %v7751 = vmax.f32 %v7375, 0.0
  %v7752 = vmax.f32 %v7376, 0.0
  %v7753 = vmax.f32 %v7377, 0.0
  %v7754 = vmax.f32 %v7378, 0.0
  %v7755 = vmax.f32 %v7379, 0.0
  %v7756 = vmax.f32 %v7380, 0.0
  %v7757 = vmax.f32 %v7381, 0.0
  %v7758 = vmax.f32 %v7382, 0.0
  %v7759 = vmax.f32 %v7383, 0.0
  %v7760 = vmax.f32 %v7384, 0.0
  %v7761 = vmax.f32 %v7385, 0.0
  %v7762 = vmax.f32 %v7386, 0.0
  %v7763 = vmax.f32 %v7387, 0.0
  %v7764 = vmax.f32 %v7388, 0.0
  %v7765 = vmax.f32 %v7389, 0.0
  %v7766 = vmax.f32 %v7390, 0.0
  %v7767 = vmax.f32 %v7391, 0.0
  %v7768 = vmax.f32 %v7392, 0.0
  %v7769 = vmax.f32 %v7393, 0.0
  %v7770 = vmax.f32 %v7394, 0.0
  %v7771 = vmax.f32 %v7395, 0.0
  %v7772 = vmax.f32 %v7396, 0.0
  %v7773 = vmax.f32 %v7397, 0.0
  %v7774 = vmax.f32 %v7398, 0.0
  %v7775 = vmax.f32 %v7399, 0.0
  %v7776 = vmax.f32 %v7400, 0.0
  %v7777 = vmax.f32 %v7401, 0.0
  %v7778 = vmax.f32 %v7402, 0.0
  %v7779 = vmax.f32 %v7403, 0.0
  %v7780 = vmax.f32 %v7404, 0.0
  %v7781 = vmax.f32 %v7405, 0.0
  %v7782 = vmax.f32 %v7406, 0.0
  %v7783 = vmax.f32 %v7407, 0.0
  %v7784 = vmax.f32 %v7408, 0.0
  %v7785 = vmax.f32 %v7409, 0.0
  %v7786 = vmax.f32 %v7410, 0.0
  %v7787 = vmax.f32 %v7411, 0.0
  %v7788 = vmax.f32 %v7412, 0.0
  %v7789 = vmax.f32 %v7413, 0.0
  %v7790 = vmax.f32 %v7414, 0.0
  %v7791 = vmax.f32 %v7415, 0.0
  %v7792 = vmax.f32 %v7416, 0.0
  %v7793 = vmax.f32 %v7417, 0.0
  %v7794 = vmax.f32 %v7418, 0.0
  %v7795 = vmax.f32 %v7419, 0.0
  %v7796 = vmax.f32 %v7420, 0.0
  %v7797 = vmax.f32 %v7421, 0.0
  %v7798 = vmax.f32 %v7422, 0.0
  %v7799 = vmax.f32 %v7423, 0.0
  %v7800 = vmax.f32 %v7424, 0.0
  %v7801 = vmax.f32 %v7425, 0.0
  %v7802 = vmax.f32 %v7426, 0.0
  %v7803 = vmax.f32 %v7427, 0.0
  %v7804 = vmax.f32 %v7428, 0.0
  %v7805 = vmax.f32 %v7429, 0.0
  %v7806 = vmax.f32 %v7430, 0.0
  %v7807 = vmax.f32 %v7431, 0.0
  %v7808 = vmax.f32 %v7432, 0.0
  %v7809 = vmax.f32 %v7433, 0.0
  %v7810 = vmax.f32 %v7434, 0.0
  %v7811 = vmax.f32 %v7435, 0.0
  %v7812 = vmax.f32 %v7436, 0.0
  %v7813 = vmax.f32 %v7437, 0.0
  %v7814 = vmax.f32 %v7438, 0.0
  %v7815 = vmax.f32 %v7439, 0.0
  %v7816 = vmax.f32 %v7440, 0.0
  %v7817 = vmax.f32 %v7441, 0.0
  %v7818 = vmax.f32 %v7442, 0.0
  %v7819 = vmax.f32 %v7443, 0.0
  %v7820 = vmax.f32 %v7444, 0.0
  %v7821 = vmax.f32 %v7445, 0.0
  %v7822 = vmax.f32 %v7446, 0.0
  %v7823 = vmax.f32 %v7447, 0.0
  %v7824 = vmax.f32 %v7448, 0.0
  %v7825 = vmax.f32 %v7449, 0.0
  %v7826 = vmax.f32 %v7450, 0.0
  %v7827 = vmax.f32 %v7451, 0.0
  %v7828 = vmax.f32 %v7452, 0.0
  %v7829 = vmax.f32 %v7453, 0.0
  %v7830 = vmax.f32 %v7454, 0.0
  %v7831 = vmax.f32 %v7455, 0.0
  %v7832 = vmax.f32 %v7456, 0.0
  %v7833 = vmax.f32 %v7457, 0.0
  %v7834 = vmax.f32 %v7458, 0.0
  %v7835 = vmax.f32 %v7459, 0.0
  %v7836 = vmax.f32 %v7460, 0.0
  %v7837 = vmax.f32 %v7461, 0.0
  %v7838 = vmax.f32 %v7462, 0.0
  %v7839 = vmax.f32 %v7463, 0.0
  %v7840 = vmax.f32 %v7464, 0.0
  %v7841 = vmax.f32 %v7465, 0.0
  %v7842 = vmax.f32 %v7466, 0.0
  %v7843 = vmax.f32 %v7467, 0.0
  %v7844 = vmax.f32 %v7468, 0.0
  %v7845 = vmax.f32 %v7469, 0.0
  %v7846 = vmax.f32 %v7470, 0.0
  %v7847 = vmax.f32 %v7471, 0.0
  %v7848 = vmax.f32 %v7472, 0.0
  %v7849 = vmax.f32 %v7473, 0.0
  %v7850 = vmax.f32 %v7474, 0.0
  %v7851 = vmax.f32 %v7475, 0.0
  %v7852 = vmax.f32 %v7476, 0.0
  %v7853 = vmax.f32 %v7477, 0.0
  %v7854 = vmax.f32 %v7478, 0.0
  %v7855 = vmax.f32 %v7479, 0.0
  %v7856 = vmax.f32 %v7480, 0.0
  %v7857 = vmax.f32 %v7481, 0.0
  %v7858 = vmax.f32 %v7482, 0.0
  %v7859 = vmax.f32 %v7483, 0.0
  %v7860 = vmax.f32 %v7484, 0.0
  %v7861 = vmax.f32 %v7485, 0.0
  %v7862 = vmax.f32 %v7486, 0.0
  %v7863 = vmax.f32 %v7487, 0.0
  %v7864 = vmax.f32 %v7488, 0.0
  %v7865 = vmax.f32 %v7489, 0.0
  %v7866 = vmax.f32 %v7490, 0.0
  %v7867 = vmax.f32 %v7491, 0.0
  %v7868 = vmax.f32 %v7492, 0.0
  %v7869 = vmax.f32 %v7493, 0.0
  %v7870 = vmax.f32 %v7494, 0.0
  %v7871 = vmax.f32 %v7495, 0.0
  %v7872 = vmax.f32 %v7496, 0.0
  %v7873 = vmax.f32 %v7497, 0.0
  %v7874 = vmax.f32 %v7498, 0.0
  %v7875 = vmax.f32 %v7499, 0.0
  %v7876 = vmax.f32 %v7500, 0.0
  %v7877 = vmax.f32 %v7501, 0.0
  %v7878 = vmax.f32 %v7502, 0.0
  %v7879 = vmax.f32 %v7503, 0.0
  %v7880 = vmax.f32 %v7504, 0.0
  %v7881 = vmax.f32 %v7505, 0.0
  %v7882 = vmax.f32 %v7506, 0.0
  %v7883 = vmax.f32 %v7507, 0.0
  %v7884 = vmax.f32 %v7508, 0.0
  %v7885 = vmax.f32 %v7509, 0.0
  %v7886 = vmax.f32 %v7510, 0.0
  %v7887 = vmax.f32 %v7511, 0.0
  %v7888 = vmax.f32 %v7512, 0.0
  %v7889 = vmax.f32 %v7513, 0.0
  %v7890 = vmax.f32 %v7514, 0.0
  %v7891 = vmax.f32 %v7515, 0.0
  %v7892 = vmax.f32 %v7516, 0.0
  %v7893 = vmax.f32 %v7517, 0.0
  %v7894 = vmax.f32 %v7518, 0.0
  %v7895 = vmax.f32 %v7519, 0.0
  %v7896 = vmax.f32 %v7520, 0.0
  %v7897 = vmax.f32 %v7521, 0.0
  %v7898 = vmax.f32 %v7522, 0.0
  %v7899 = vmax.f32 %v7523, 0.0
  %v7900 = vmax.f32 %v7524, 0.0
  %v7901 = vmax.f32 %v7525, 0.0
  %v7902 = vmax.f32 %v7526, 0.0
  %v7903 = vmax.f32 %v7527, 0.0
  %v7904 = vmax.f32 %v7528, 0.0
  %v7905 = vmax.f32 %v7529, 0.0
  %v7906 = vmax.f32 %v7530, 0.0
  %v7907 = vmax.f32 %v7531, 0.0
  %v7908 = vmax.f32 %v7532, 0.0
  %v7909 = vmax.f32 %v7533, 0.0
  %v7910 = vmax.f32 %v7534, 0.0
  %v7911 = vmax.f32 %v7535, 0.0
  %v7912 = vmax.f32 %v7536, 0.0
  %v7913 = vmax.f32 %v7537, 0.0
  %v7914 = vld [vmem:[%s2] sm:$0xff]
  %v7915 = vld [vmem:[%s2 + $0x8] sm:$0xff]
  %v7916 = vld [vmem:[%s2 + $0x10] sm:$0xff]
  %v7917 = vld [vmem:[%s2 + $0x18] sm:$0xff]
  %v7918 = vld [vmem:[%s2 + $0x20] sm:$0xff]
  %v7919 = vld [vmem:[%s2 + $0x28] sm:$0xff]
  %v7920 = vld [vmem:[%s2 + $0x30] sm:$0xff]
  %v7921 = vld [vmem:[%s2 + $0x38] sm:$0xff]
  %v7922 = vld [vmem:[%s2 + $0x40] sm:$0xff]
  %v7923 = vld [vmem:[%s2 + $0x48] sm:$0xff]
  %v7924 = vld [vmem:[%s2 + $0x50] sm:$0xff]
  %v7925 = vld [vmem:[%s2 + $0x58] sm:$0xff]
  %v7926 = vld [vmem:[%s2 + $0x60] sm:$0xff]
  %v7927 = vld [vmem:[%s2 + $0x68] sm:$0xff]
  %v7928 = vld [vmem:[%s2 + $0x70] sm:$0xff]
  %v7929 = vld [vmem:[%s2 + $0x78] sm:$0xff]
  %v7930 = vld [vmem:[%s2 + $0x80] sm:$0xff]
  %v7931 = vld [vmem:[%s2 + $0x88] sm:$0xff]
  %v7932 = vld [vmem:[%s2 + $0x90] sm:$0xff]
  %v7933 = vld [vmem:[%s2 + $0x98] sm:$0xff]
  %v7934 = vld [vmem:[%s2 + $0xa0] sm:$0xff]
  %v7935 = vld [vmem:[%s2 + $0xa8] sm:$0xff]
  %v7936 = vld [vmem:[%s2 + $0xb0] sm:$0xff]
  %v7937 = vld [vmem:[%s2 + $0xb8] sm:$0xff]
  %v7938 = vld [vmem:[%s2 + $0xc0] sm:$0xff]
  %v7939 = vld [vmem:[%s2 + $0xc8] sm:$0xff]
  %v7940 = vld [vmem:[%s2 + $0xd0] sm:$0xff]
  %v7941 = vld [vmem:[%s2 + $0xd8] sm:$0xff]
  %v7942 = vld [vmem:[%s2 + $0xe0] sm:$0xff]
  %v7943 = vld [vmem:[%s2 + $0xe8] sm:$0xff]
  %v7944 = vld [vmem:[%s2 + $0xf0] sm:$0xff]
  %v7945 = vld [vmem:[%s2 + $0xf8] sm:$0xff]
  %v7946 = vld [vmem:[%s2 + $0x100] sm:$0xff]
  %v7947 = vld [vmem:[%s2 + $0x108] sm:$0xff]
  %v7948 = vld [vmem:[%s2 + $0x110] sm:$0xff]
  %v7949 = vld [vmem:[%s2 + $0x118] sm:$0xff]
  %v7950 = vld [vmem:[%s2 + $0x120] sm:$0xff]
  %v7951 = vld [vmem:[%s2 + $0x128] sm:$0xff]
  %v7952 = vld [vmem:[%s2 + $0x130] sm:$0xff]
  %v7953 = vld [vmem:[%s2 + $0x138] sm:$0xff]
  %v7954 = vld [vmem:[%s2 + $0x140] sm:$0xff]
  %v7955 = vld [vmem:[%s2 + $0x148] sm:$0xff]
  %v7956 = vld [vmem:[%s2 + $0x150] sm:$0xff]
  %v7957 = vld [vmem:[%s2 + $0x158] sm:$0xff]
  %v7958 = vld [vmem:[%s2 + $0x160] sm:$0xff]
  %v7959 = vld [vmem:[%s2 + $0x168] sm:$0xff]
  %v7960 = vld [vmem:[%s2 + $0x170] sm:$0xff]
  %v7961 = vld [vmem:[%s2 + $0x178] sm:$0xff]
  %v7962 = vld [vmem:[%s2 + $0x180] sm:$0xff]
  %v7963 = vld [vmem:[%s2 + $0x188] sm:$0xff]
  %v7964 = vld [vmem:[%s2 + $0x190] sm:$0xff]
  %v7965 = vld [vmem:[%s2 + $0x198] sm:$0xff]
  %v7966 = vld [vmem:[%s2 + $0x1a0] sm:$0xff]
  %v7967 = vld [vmem:[%s2 + $0x1a8] sm:$0xff]
  %v7968 = vld [vmem:[%s2 + $0x1b0] sm:$0xff]
  %v7969 = vld [vmem:[%s2 + $0x1b8] sm:$0xff]
  %v7970 = vld [vmem:[%s2 + $0x1c0] sm:$0xff]
  %v7971 = vld [vmem:[%s2 + $0x1c8] sm:$0xff]
  %v7972 = vld [vmem:[%s2 + $0x1d0] sm:$0xff]
  %v7973 = vld [vmem:[%s2 + $0x1d8] sm:$0xff]
  %v7974 = vld [vmem:[%s2 + $0x1e0] sm:$0xff]
  %v7975 = vld [vmem:[%s2 + $0x1e8] sm:$0xff]
  %v7976 = vld [vmem:[%s2 + $0x1f0] sm:$0xff]
  %v7977 = vld [vmem:[%s2 + $0x1f8] sm:$0xff]
  %v7978 = vld [vmem:[%s2 + $0x200] sm:$0xff]
  %v7979 = vld [vmem:[%s2 + $0x208] sm:$0xff]
  %v7980 = vld [vmem:[%s2 + $0x210] sm:$0xff]
  %v7981 = vld [vmem:[%s2 + $0x218] sm:$0xff]
  %v7982 = vld [vmem:[%s2 + $0x220] sm:$0xff]
  %v7983 = vld [vmem:[%s2 + $0x228] sm:$0xff]
  %v7984 = vld [vmem:[%s2 + $0x230] sm:$0xff]
  %v7985 = vld [vmem:[%s2 + $0x238] sm:$0xff]
  %v7986 = vld [vmem:[%s2 + $0x240] sm:$0xff]
  %v7987 = vld [vmem:[%s2 + $0x248] sm:$0xff]
  %v7988 = vld [vmem:[%s2 + $0x250] sm:$0xff]
  %v7989 = vld [vmem:[%s2 + $0x258] sm:$0xff]
  %v7990 = vld [vmem:[%s2 + $0x260] sm:$0xff]
  %v7991 = vld [vmem:[%s2 + $0x268] sm:$0xff]
  %v7992 = vld [vmem:[%s2 + $0x270] sm:$0xff]
  %v7993 = vld [vmem:[%s2 + $0x278] sm:$0xff]
  %v7994 = vld [vmem:[%s2 + $0x280] sm:$0xff]
  %v7995 = vld [vmem:[%s2 + $0x288] sm:$0xff]
  %v7996 = vld [vmem:[%s2 + $0x290] sm:$0xff]
  %v7997 = vld [vmem:[%s2 + $0x298] sm:$0xff]
  %v7998 = vld [vmem:[%s2 + $0x2a0] sm:$0xff]
  %v7999 = vld [vmem:[%s2 + $0x2a8] sm:$0xff]
  %v8000 = vld [vmem:[%s2 + $0x2b0] sm:$0xff]
  %v8001 = vld [vmem:[%s2 + $0x2b8] sm:$0xff]
  %v8002 = vld [vmem:[%s2 + $0x2c0] sm:$0xff]
  %v8003 = vld [vmem:[%s2 + $0x2c8] sm:$0xff]
  %v8004 = vld [vmem:[%s2 + $0x2d0] sm:$0xff]
  %v8005 = vld [vmem:[%s2 + $0x2d8] sm:$0xff]
  %v8006 = vld [vmem:[%s2 + $0x2e0] sm:$0xff]
  %v8007 = vld [vmem:[%s2 + $0x2e8] sm:$0xff]
  %v8008 = vld [vmem:[%s2 + $0x2f0] sm:$0xff]
  %v8009 = vld [vmem:[%s2 + $0x2f8] sm:$0xff]
  %v8010 = vld [vmem:[%s2 + $0x300] sm:$0xff]
  %v8011 = vld [vmem:[%s2 + $0x308] sm:$0xff]
  %v8012 = vld [vmem:[%s2 + $0x310] sm:$0xff]
  %v8013 = vld [vmem:[%s2 + $0x318] sm:$0xff]
  %v8014 = vld [vmem:[%s2 + $0x320] sm:$0xff]
  %v8015 = vld [vmem:[%s2 + $0x328] sm:$0xff]
  %v8016 = vld [vmem:[%s2 + $0x330] sm:$0xff]
  %v8017 = vld [vmem:[%s2 + $0x338] sm:$0xff]
  %v8018 = vld [vmem:[%s2 + $0x340] sm:$0xff]
  %v8019 = vld [vmem:[%s2 + $0x348] sm:$0xff]
  %v8020 = vld [vmem:[%s2 + $0x350] sm:$0xff]
  %v8021 = vld [vmem:[%s2 + $0x358] sm:$0xff]
  %v8022 = vld [vmem:[%s2 + $0x360] sm:$0xff]
  %v8023 = vld [vmem:[%s2 + $0x368] sm:$0xff]
  %v8024 = vld [vmem:[%s2 + $0x370] sm:$0xff]
  %v8025 = vld [vmem:[%s2 + $0x378] sm:$0xff]
  %v8026 = vld [vmem:[%s2 + $0x380] sm:$0xff]
  %v8027 = vld [vmem:[%s2 + $0x388] sm:$0xff]
  %v8028 = vld [vmem:[%s2 + $0x390] sm:$0xff]
  %v8029 = vld [vmem:[%s2 + $0x398] sm:$0xff]
  %v8030 = vld [vmem:[%s2 + $0x3a0] sm:$0xff]
  %v8031 = vld [vmem:[%s2 + $0x3a8] sm:$0xff]
  %v8032 = vld [vmem:[%s2 + $0x3b0] sm:$0xff]
  %v8033 = vld [vmem:[%s2 + $0x3b8] sm:$0xff]
  %v8034 = vld [vmem:[%s2 + $0x3c0] sm:$0xff]
  %v8035 = vld [vmem:[%s2 + $0x3c8] sm:$0xff]
  %v8036 = vld [vmem:[%s2 + $0x3d0] sm:$0xff]
  %v8037 = vld [vmem:[%s2 + $0x3d8] sm:$0xff]
  %v8038 = vld [vmem:[%s2 + $0x3e0] sm:$0xff]
  %v8039 = vld [vmem:[%s2 + $0x3e8] sm:$0xff]
  %v8040 = vld [vmem:[%s2 + $0x3f0] sm:$0xff]
  %v8041 = vld [vmem:[%s2 + $0x3f8] sm:$0xff]
  %v8042 = vld [vmem:[%s2 + $0x400] sm:$0xff]
  %v8043 = vld [vmem:[%s2 + $0x408] sm:$0xff]
  %v8044 = vld [vmem:[%s2 + $0x410] sm:$0xff]
  %v8045 = vld [vmem:[%s2 + $0x418] sm:$0xff]
  %v8046 = vld [vmem:[%s2 + $0x420] sm:$0xff]
  %v8047 = vld [vmem:[%s2 + $0x428] sm:$0xff]
  %v8048 = vld [vmem:[%s2 + $0x430] sm:$0xff]
  %v8049 = vld [vmem:[%s2 + $0x438] sm:$0xff]
  %v8050 = vld [vmem:[%s2 + $0x440] sm:$0xff]
  %v8051 = vld [vmem:[%s2 + $0x448] sm:$0xff]
  %v8052 = vld [vmem:[%s2 + $0x450] sm:$0xff]
  %v8053 = vld [vmem:[%s2 + $0x458] sm:$0xff]
  %v8054 = vld [vmem:[%s2 + $0x460] sm:$0xff]
  %v8055 = vld [vmem:[%s2 + $0x468] sm:$0xff]
  %v8056 = vld [vmem:[%s2 + $0x470] sm:$0xff]
  %v8057 = vld [vmem:[%s2 + $0x478] sm:$0xff]
  %v8058 = vld [vmem:[%s2 + $0x480] sm:$0xff]
  %v8059 = vld [vmem:[%s2 + $0x488] sm:$0xff]
  %v8060 = vld [vmem:[%s2 + $0x490] sm:$0xff]
  %v8061 = vld [vmem:[%s2 + $0x498] sm:$0xff]
  %v8062 = vld [vmem:[%s2 + $0x4a0] sm:$0xff]
  %v8063 = vld [vmem:[%s2 + $0x4a8] sm:$0xff]
  %v8064 = vld [vmem:[%s2 + $0x4b0] sm:$0xff]
  %v8065 = vld [vmem:[%s2 + $0x4b8] sm:$0xff]
  %v8066 = vld [vmem:[%s2 + $0x4c0] sm:$0xff]
  %v8067 = vld [vmem:[%s2 + $0x4c8] sm:$0xff]
  %v8068 = vld [vmem:[%s2 + $0x4d0] sm:$0xff]
  %v8069 = vld [vmem:[%s2 + $0x4d8] sm:$0xff]
  %v8070 = vld [vmem:[%s2 + $0x4e0] sm:$0xff]
  %v8071 = vld [vmem:[%s2 + $0x4e8] sm:$0xff]
  %v8072 = vld [vmem:[%s2 + $0x4f0] sm:$0xff]
  %v8073 = vld [vmem:[%s2 + $0x4f8] sm:$0xff]
  %v8074 = vld [vmem:[%s2 + $0x500] sm:$0xff]
  %v8075 = vld [vmem:[%s2 + $0x508] sm:$0xff]
  %v8076 = vld [vmem:[%s2 + $0x510] sm:$0xff]
  %v8077 = vld [vmem:[%s2 + $0x518] sm:$0xff]
  %v8078 = vld [vmem:[%s2 + $0x520] sm:$0xff]
  %v8079 = vld [vmem:[%s2 + $0x528] sm:$0xff]
  %v8080 = vld [vmem:[%s2 + $0x530] sm:$0xff]
  %v8081 = vld [vmem:[%s2 + $0x538] sm:$0xff]
  %v8082 = vld [vmem:[%s2 + $0x540] sm:$0xff]
  %v8083 = vld [vmem:[%s2 + $0x548] sm:$0xff]
  %v8084 = vld [vmem:[%s2 + $0x550] sm:$0xff]
  %v8085 = vld [vmem:[%s2 + $0x558] sm:$0xff]
  %v8086 = vld [vmem:[%s2 + $0x560] sm:$0xff]
  %v8087 = vld [vmem:[%s2 + $0x568] sm:$0xff]
  %v8088 = vld [vmem:[%s2 + $0x570] sm:$0xff]
  %v8089 = vld [vmem:[%s2 + $0x578] sm:$0xff]
  %v8090 = vld [vmem:[%s2 + $0x580] sm:$0xff]
  %v8091 = vld [vmem:[%s2 + $0x588] sm:$0xff]
  %v8092 = vld [vmem:[%s2 + $0x590] sm:$0xff]
  %v8093 = vld [vmem:[%s2 + $0x598] sm:$0xff]
  %v8094 = vld [vmem:[%s2 + $0x5a0] sm:$0xff]
  %v8095 = vld [vmem:[%s2 + $0x5a8] sm:$0xff]
  %v8096 = vld [vmem:[%s2 + $0x5b0] sm:$0xff]
  %v8097 = vld [vmem:[%s2 + $0x5b8] sm:$0xff]
  %v8098 = vld [vmem:[%s2 + $0x5c0] sm:$0xff]
  %v8099 = vld [vmem:[%s2 + $0x5c8] sm:$0xff]
  %v8100 = vld [vmem:[%s2 + $0x5d0] sm:$0xff]
  %v8101 = vld [vmem:[%s2 + $0x5d8] sm:$0xff]
  %8102 = vxpose.xlu0.b32.start [1/16] %v7914, 128
  %8103 = vxpose.xlu0.b32.cont [2/16] %v7915, 128
  %8104 = vxpose.xlu0.b32.cont [3/16] %v7916, 128
  %8105 = vxpose.xlu0.b32.cont [4/16] %v7917, 128
  %8106 = vxpose.xlu0.b32.cont [5/16] %v7918, 128
  %8107 = vxpose.xlu0.b32.cont [6/16] %v7919, 128
  %8108 = vxpose.xlu0.b32.cont [7/16] %v7920, 128
  %8109 = vxpose.xlu0.b32.cont [8/16] %v7921, 128
  %8110 = vxpose.xlu0.b32.cont [9/16] %v7922, 128
  %8111 = vxpose.xlu0.b32.cont [10/16] %v7923, 128
  %8112 = vxpose.xlu0.b32.cont [11/16] %v7924, 128
  %8113 = vxpose.xlu0.b32.cont [12/16] %v7925, 128
  %8114 = vxpose.xlu0.b32.cont [13/16] %v7926, 128
  %8115 = vxpose.xlu0.b32.cont [14/16] %v7927, 128
  %8116 = vxpose.xlu0.b32.cont [15/16] %v7928, 128
  %8117 = vxpose.xlu0.b32.end [16/16] %v7929, 128
  %v8118 = vpop.trf.xlu0
  %v8119 = vpop.trf.xlu0
  %v8120 = vpop.trf.xlu0
  %v8121 = vpop.trf.xlu0
  %v8122 = vpop.trf.xlu0
  %v8123 = vpop.trf.xlu0
  %v8124 = vpop.trf.xlu0
  %v8125 = vpop.trf.xlu0
  %v8126 = vpop.trf.xlu0
  %v8127 = vpop.trf.xlu0
  %v8128 = vpop.trf.xlu0
  %v8129 = vpop.trf.xlu0
  %v8130 = vpop.trf.xlu0
  %v8131 = vpop.trf.xlu0
  %v8132 = vpop.trf.xlu0
  %v8133 = vpop.trf.xlu0
  %8134 = vxpose.xlu0.b32.start [1/16] %v7930, 128
  %8135 = vxpose.xlu0.b32.cont [2/16] %v7931, 128
  %8136 = vxpose.xlu0.b32.cont [3/16] %v7932, 128
  %8137 = vxpose.xlu0.b32.cont [4/16] %v7933, 128
  %8138 = vxpose.xlu0.b32.cont [5/16] %v7934, 128
  %8139 = vxpose.xlu0.b32.cont [6/16] %v7935, 128
  %8140 = vxpose.xlu0.b32.cont [7/16] %v7936, 128
  %8141 = vxpose.xlu0.b32.cont [8/16] %v7937, 128
  %8142 = vxpose.xlu0.b32.cont [9/16] %v7938, 128
  %8143 = vxpose.xlu0.b32.cont [10/16] %v7939, 128
  %8144 = vxpose.xlu0.b32.cont [11/16] %v7940, 128
  %8145 = vxpose.xlu0.b32.cont [12/16] %v7941, 128
  %8146 = vxpose.xlu0.b32.cont [13/16] %v7942, 128
  %8147 = vxpose.xlu0.b32.cont [14/16] %v7943, 128
  %8148 = vxpose.xlu0.b32.cont [15/16] %v7944, 128
  %8149 = vxpose.xlu0.b32.end [16/16] %v7945, 128
  %v8150 = vpop.trf.xlu0
  %v8151 = vpop.trf.xlu0
  %v8152 = vpop.trf.xlu0
  %v8153 = vpop.trf.xlu0
  %v8154 = vpop.trf.xlu0
  %v8155 = vpop.trf.xlu0
  %v8156 = vpop.trf.xlu0
  %v8157 = vpop.trf.xlu0
  %v8158 = vpop.trf.xlu0
  %v8159 = vpop.trf.xlu0
  %v8160 = vpop.trf.xlu0
  %v8161 = vpop.trf.xlu0
  %v8162 = vpop.trf.xlu0
  %v8163 = vpop.trf.xlu0
  %v8164 = vpop.trf.xlu0
  %v8165 = vpop.trf.xlu0
  %8166 = vxpose.xlu0.b32.start [1/16] %v7946, 128
  %8167 = vxpose.xlu0.b32.cont [2/16] %v7947, 128
  %8168 = vxpose.xlu0.b32.cont [3/16] %v7948, 128
  %8169 = vxpose.xlu0.b32.cont [4/16] %v7949, 128
  %8170 = vxpose.xlu0.b32.cont [5/16] %v7950, 128
  %8171 = vxpose.xlu0.b32.cont [6/16] %v7951, 128
  %8172 = vxpose.xlu0.b32.cont [7/16] %v7952, 128
  %8173 = vxpose.xlu0.b32.cont [8/16] %v7953, 128
  %8174 = vxpose.xlu0.b32.cont [9/16] %v7954, 128
  %8175 = vxpose.xlu0.b32.cont [10/16] %v7955, 128
  %8176 = vxpose.xlu0.b32.cont [11/16] %v7956, 128
  %8177 = vxpose.xlu0.b32.cont [12/16] %v7957, 128
  %8178 = vxpose.xlu0.b32.cont [13/16] %v7958, 128
  %8179 = vxpose.xlu0.b32.cont [14/16] %v7959, 128
  %8180 = vxpose.xlu0.b32.cont [15/16] %v7960, 128
  %8181 = vxpose.xlu0.b32.end [16/16] %v7961, 128
  %v8182 = vpop.trf.xlu0
  %v8183 = vpop.trf.xlu0
  %v8184 = vpop.trf.xlu0
  %v8185 = vpop.trf.xlu0
  %v8186 = vpop.trf.xlu0
  %v8187 = vpop.trf.xlu0
  %v8188 = vpop.trf.xlu0
  %v8189 = vpop.trf.xlu0
  %v8190 = vpop.trf.xlu0
  %v8191 = vpop.trf.xlu0
  %v8192 = vpop.trf.xlu0
  %v8193 = vpop.trf.xlu0
  %v8194 = vpop.trf.xlu0
  %v8195 = vpop.trf.xlu0
  %v8196 = vpop.trf.xlu0
  %v8197 = vpop.trf.xlu0
  %8198 = vxpose.xlu0.b32.start [1/16] %v7962, 128
  %8199 = vxpose.xlu0.b32.cont [2/16] %v7963, 128
  %8200 = vxpose.xlu0.b32.cont [3/16] %v7964, 128
  %8201 = vxpose.xlu0.b32.cont [4/16] %v7965, 128
  %8202 = vxpose.xlu0.b32.cont [5/16] %v7966, 128
  %8203 = vxpose.xlu0.b32.cont [6/16] %v7967, 128
  %8204 = vxpose.xlu0.b32.cont [7/16] %v7968, 128
  %8205 = vxpose.xlu0.b32.cont [8/16] %v7969, 128
  %8206 = vxpose.xlu0.b32.cont [9/16] %v7970, 128
  %8207 = vxpose.xlu0.b32.cont [10/16] %v7971, 128
  %8208 = vxpose.xlu0.b32.cont [11/16] %v7972, 128
  %8209 = vxpose.xlu0.b32.cont [12/16] %v7973, 128
  %8210 = vxpose.xlu0.b32.cont [13/16] %v7974, 128
  %8211 = vxpose.xlu0.b32.cont [14/16] %v7975, 128
  %8212 = vxpose.xlu0.b32.cont [15/16] %v7976, 128
  %8213 = vxpose.xlu0.b32.end [16/16] %v7977, 128
  %v8214 = vpop.trf.xlu0
  %v8215 = vpop.trf.xlu0
  %v8216 = vpop.trf.xlu0
  %v8217 = vpop.trf.xlu0
  %v8218 = vpop.trf.xlu0
  %v8219 = vpop.trf.xlu0
  %v8220 = vpop.trf.xlu0
  %v8221 = vpop.trf.xlu0
  %v8222 = vpop.trf.xlu0
  %v8223 = vpop.trf.xlu0
  %v8224 = vpop.trf.xlu0
  %v8225 = vpop.trf.xlu0
  %v8226 = vpop.trf.xlu0
  %v8227 = vpop.trf.xlu0
  %v8228 = vpop.trf.xlu0
  %v8229 = vpop.trf.xlu0
  %8230 = vxpose.xlu0.b32.start [1/16] %v7978, 128
  %8231 = vxpose.xlu0.b32.cont [2/16] %v7979, 128
  %8232 = vxpose.xlu0.b32.cont [3/16] %v7980, 128
  %8233 = vxpose.xlu0.b32.cont [4/16] %v7981, 128
  %8234 = vxpose.xlu0.b32.cont [5/16] %v7982, 128
  %8235 = vxpose.xlu0.b32.cont [6/16] %v7983, 128
  %8236 = vxpose.xlu0.b32.cont [7/16] %v7984, 128
  %8237 = vxpose.xlu0.b32.cont [8/16] %v7985, 128
  %8238 = vxpose.xlu0.b32.cont [9/16] %v7986, 128
  %8239 = vxpose.xlu0.b32.cont [10/16] %v7987, 128
  %8240 = vxpose.xlu0.b32.cont [11/16] %v7988, 128
  %8241 = vxpose.xlu0.b32.cont [12/16] %v7989, 128
  %8242 = vxpose.xlu0.b32.cont [13/16] %v7990, 128
  %8243 = vxpose.xlu0.b32.cont [14/16] %v7991, 128
  %8244 = vxpose.xlu0.b32.cont [15/16] %v7992, 128
  %8245 = vxpose.xlu0.b32.end [16/16] %v7993, 128
  %v8246 = vpop.trf.xlu0
  %v8247 = vpop.trf.xlu0
  %v8248 = vpop.trf.xlu0
  %v8249 = vpop.trf.xlu0
  %v8250 = vpop.trf.xlu0
  %v8251 = vpop.trf.xlu0
  %v8252 = vpop.trf.xlu0
  %v8253 = vpop.trf.xlu0
  %v8254 = vpop.trf.xlu0
  %v8255 = vpop.trf.xlu0
  %v8256 = vpop.trf.xlu0
  %v8257 = vpop.trf.xlu0
  %v8258 = vpop.trf.xlu0
  %v8259 = vpop.trf.xlu0
  %v8260 = vpop.trf.xlu0
  %v8261 = vpop.trf.xlu0
  %8262 = vxpose.xlu0.b32.start [1/16] %v7994, 128
  %8263 = vxpose.xlu0.b32.cont [2/16] %v7995, 128
  %8264 = vxpose.xlu0.b32.cont [3/16] %v7996, 128
  %8265 = vxpose.xlu0.b32.cont [4/16] %v7997, 128
  %8266 = vxpose.xlu0.b32.cont [5/16] %v7998, 128
  %8267 = vxpose.xlu0.b32.cont [6/16] %v7999, 128
  %8268 = vxpose.xlu0.b32.cont [7/16] %v8000, 128
  %8269 = vxpose.xlu0.b32.cont [8/16] %v8001, 128
  %8270 = vxpose.xlu0.b32.cont [9/16] %v8002, 128
  %8271 = vxpose.xlu0.b32.cont [10/16] %v8003, 128
  %8272 = vxpose.xlu0.b32.cont [11/16] %v8004, 128
  %8273 = vxpose.xlu0.b32.cont [12/16] %v8005, 128
  %8274 = vxpose.xlu0.b32.cont [13/16] %v8006, 128
  %8275 = vxpose.xlu0.b32.cont [14/16] %v8007, 128
  %8276 = vxpose.xlu0.b32.cont [15/16] %v8008, 128
  %8277 = vxpose.xlu0.b32.end [16/16] %v8009, 128
  %v8278 = vpop.trf.xlu0
  %v8279 = vpop.trf.xlu0
  %v8280 = vpop.trf.xlu0
  %v8281 = vpop.trf.xlu0
  %v8282 = vpop.trf.xlu0
  %v8283 = vpop.trf.xlu0
  %v8284 = vpop.trf.xlu0
  %v8285 = vpop.trf.xlu0
  %v8286 = vpop.trf.xlu0
  %v8287 = vpop.trf.xlu0
  %v8288 = vpop.trf.xlu0
  %v8289 = vpop.trf.xlu0
  %v8290 = vpop.trf.xlu0
  %v8291 = vpop.trf.xlu0
  %v8292 = vpop.trf.xlu0
  %v8293 = vpop.trf.xlu0
  %8294 = vxpose.xlu0.b32.start [1/16] %v8010, 128
  %8295 = vxpose.xlu0.b32.cont [2/16] %v8011, 128
  %8296 = vxpose.xlu0.b32.cont [3/16] %v8012, 128
  %8297 = vxpose.xlu0.b32.cont [4/16] %v8013, 128
  %8298 = vxpose.xlu0.b32.cont [5/16] %v8014, 128
  %8299 = vxpose.xlu0.b32.cont [6/16] %v8015, 128
  %8300 = vxpose.xlu0.b32.cont [7/16] %v8016, 128
  %8301 = vxpose.xlu0.b32.cont [8/16] %v8017, 128
  %8302 = vxpose.xlu0.b32.cont [9/16] %v8018, 128
  %8303 = vxpose.xlu0.b32.cont [10/16] %v8019, 128
  %8304 = vxpose.xlu0.b32.cont [11/16] %v8020, 128
  %8305 = vxpose.xlu0.b32.cont [12/16] %v8021, 128
  %8306 = vxpose.xlu0.b32.cont [13/16] %v8022, 128
  %8307 = vxpose.xlu0.b32.cont [14/16] %v8023, 128
  %8308 = vxpose.xlu0.b32.cont [15/16] %v8024, 128
  %8309 = vxpose.xlu0.b32.end [16/16] %v8025, 128
  %v8310 = vpop.trf.xlu0
  %v8311 = vpop.trf.xlu0
  %v8312 = vpop.trf.xlu0
  %v8313 = vpop.trf.xlu0
  %v8314 = vpop.trf.xlu0
  %v8315 = vpop.trf.xlu0
  %v8316 = vpop.trf.xlu0
  %v8317 = vpop.trf.xlu0
  %v8318 = vpop.trf.xlu0
  %v8319 = vpop.trf.xlu0
  %v8320 = vpop.trf.xlu0
  %v8321 = vpop.trf.xlu0
  %v8322 = vpop.trf.xlu0
  %v8323 = vpop.trf.xlu0
  %v8324 = vpop.trf.xlu0
  %v8325 = vpop.trf.xlu0
  %8326 = vxpose.xlu0.b32.start [1/16] %v8026, 128
  %8327 = vxpose.xlu0.b32.cont [2/16] %v8027, 128
  %8328 = vxpose.xlu0.b32.cont [3/16] %v8028, 128
  %8329 = vxpose.xlu0.b32.cont [4/16] %v8029, 128
  %8330 = vxpose.xlu0.b32.cont [5/16] %v8030, 128
  %8331 = vxpose.xlu0.b32.cont [6/16] %v8031, 128
  %8332 = vxpose.xlu0.b32.cont [7/16] %v8032, 128
  %8333 = vxpose.xlu0.b32.cont [8/16] %v8033, 128
  %8334 = vxpose.xlu0.b32.cont [9/16] %v8034, 128
  %8335 = vxpose.xlu0.b32.cont [10/16] %v8035, 128
  %8336 = vxpose.xlu0.b32.cont [11/16] %v8036, 128
  %8337 = vxpose.xlu0.b32.cont [12/16] %v8037, 128
  %8338 = vxpose.xlu0.b32.cont [13/16] %v8038, 128
  %8339 = vxpose.xlu0.b32.cont [14/16] %v8039, 128
  %8340 = vxpose.xlu0.b32.cont [15/16] %v8040, 128
  %8341 = vxpose.xlu0.b32.end [16/16] %v8041, 128
  %v8342 = vpop.trf.xlu0
  %v8343 = vpop.trf.xlu0
  %v8344 = vpop.trf.xlu0
  %v8345 = vpop.trf.xlu0
  %v8346 = vpop.trf.xlu0
  %v8347 = vpop.trf.xlu0
  %v8348 = vpop.trf.xlu0
  %v8349 = vpop.trf.xlu0
  %v8350 = vpop.trf.xlu0
  %v8351 = vpop.trf.xlu0
  %v8352 = vpop.trf.xlu0
  %v8353 = vpop.trf.xlu0
  %v8354 = vpop.trf.xlu0
  %v8355 = vpop.trf.xlu0
  %v8356 = vpop.trf.xlu0
  %v8357 = vpop.trf.xlu0
  %8358 = vxpose.xlu0.b32.start [1/16] %v8042, 128
  %8359 = vxpose.xlu0.b32.cont [2/16] %v8043, 128
  %8360 = vxpose.xlu0.b32.cont [3/16] %v8044, 128
  %8361 = vxpose.xlu0.b32.cont [4/16] %v8045, 128
  %8362 = vxpose.xlu0.b32.cont [5/16] %v8046, 128
  %8363 = vxpose.xlu0.b32.cont [6/16] %v8047, 128
  %8364 = vxpose.xlu0.b32.cont [7/16] %v8048, 128
  %8365 = vxpose.xlu0.b32.cont [8/16] %v8049, 128
  %8366 = vxpose.xlu0.b32.cont [9/16] %v8050, 128
  %8367 = vxpose.xlu0.b32.cont [10/16] %v8051, 128
  %8368 = vxpose.xlu0.b32.cont [11/16] %v8052, 128
  %8369 = vxpose.xlu0.b32.cont [12/16] %v8053, 128
  %8370 = vxpose.xlu0.b32.cont [13/16] %v8054, 128
  %8371 = vxpose.xlu0.b32.cont [14/16] %v8055, 128
  %8372 = vxpose.xlu0.b32.cont [15/16] %v8056, 128
  %8373 = vxpose.xlu0.b32.end [16/16] %v8057, 128
  %v8374 = vpop.trf.xlu0
  %v8375 = vpop.trf.xlu0
  %v8376 = vpop.trf.xlu0
  %v8377 = vpop.trf.xlu0
  %v8378 = vpop.trf.xlu0
  %v8379 = vpop.trf.xlu0
  %v8380 = vpop.trf.xlu0
  %v8381 = vpop.trf.xlu0
  %v8382 = vpop.trf.xlu0
  %v8383 = vpop.trf.xlu0
  %v8384 = vpop.trf.xlu0
  %v8385 = vpop.trf.xlu0
  %v8386 = vpop.trf.xlu0
  %v8387 = vpop.trf.xlu0
  %v8388 = vpop.trf.xlu0
  %v8389 = vpop.trf.xlu0
  %8390 = vxpose.xlu0.b32.start [1/16] %v8058, 128
  %8391 = vxpose.xlu0.b32.cont [2/16] %v8059, 128
  %8392 = vxpose.xlu0.b32.cont [3/16] %v8060, 128
  %8393 = vxpose.xlu0.b32.cont [4/16] %v8061, 128
  %8394 = vxpose.xlu0.b32.cont [5/16] %v8062, 128
  %8395 = vxpose.xlu0.b32.cont [6/16] %v8063, 128
  %8396 = vxpose.xlu0.b32.cont [7/16] %v8064, 128
  %8397 = vxpose.xlu0.b32.cont [8/16] %v8065, 128
  %8398 = vxpose.xlu0.b32.cont [9/16] %v8066, 128
  %8399 = vxpose.xlu0.b32.cont [10/16] %v8067, 128
  %8400 = vxpose.xlu0.b32.cont [11/16] %v8068, 128
  %8401 = vxpose.xlu0.b32.cont [12/16] %v8069, 128
  %8402 = vxpose.xlu0.b32.cont [13/16] %v8070, 128
  %8403 = vxpose.xlu0.b32.cont [14/16] %v8071, 128
  %8404 = vxpose.xlu0.b32.cont [15/16] %v8072, 128
  %8405 = vxpose.xlu0.b32.end [16/16] %v8073, 128
  %v8406 = vpop.trf.xlu0
  %v8407 = vpop.trf.xlu0
  %v8408 = vpop.trf.xlu0
  %v8409 = vpop.trf.xlu0
  %v8410 = vpop.trf.xlu0
  %v8411 = vpop.trf.xlu0
  %v8412 = vpop.trf.xlu0
  %v8413 = vpop.trf.xlu0
  %v8414 = vpop.trf.xlu0
  %v8415 = vpop.trf.xlu0
  %v8416 = vpop.trf.xlu0
  %v8417 = vpop.trf.xlu0
  %v8418 = vpop.trf.xlu0
  %v8419 = vpop.trf.xlu0
  %v8420 = vpop.trf.xlu0
  %v8421 = vpop.trf.xlu0
  %8422 = vxpose.xlu0.b32.start [1/16] %v8074, 128
  %8423 = vxpose.xlu0.b32.cont [2/16] %v8075, 128
  %8424 = vxpose.xlu0.b32.cont [3/16] %v8076, 128
  %8425 = vxpose.xlu0.b32.cont [4/16] %v8077, 128
  %8426 = vxpose.xlu0.b32.cont [5/16] %v8078, 128
  %8427 = vxpose.xlu0.b32.cont [6/16] %v8079, 128
  %8428 = vxpose.xlu0.b32.cont [7/16] %v8080, 128
  %8429 = vxpose.xlu0.b32.cont [8/16] %v8081, 128
  %8430 = vxpose.xlu0.b32.cont [9/16] %v8082, 128
  %8431 = vxpose.xlu0.b32.cont [10/16] %v8083, 128
  %8432 = vxpose.xlu0.b32.cont [11/16] %v8084, 128
  %8433 = vxpose.xlu0.b32.cont [12/16] %v8085, 128
  %8434 = vxpose.xlu0.b32.cont [13/16] %v8086, 128
  %8435 = vxpose.xlu0.b32.cont [14/16] %v8087, 128
  %8436 = vxpose.xlu0.b32.cont [15/16] %v8088, 128
  %8437 = vxpose.xlu0.b32.end [16/16] %v8089, 128
  %v8438 = vpop.trf.xlu0
  %v8439 = vpop.trf.xlu0
  %v8440 = vpop.trf.xlu0
  %v8441 = vpop.trf.xlu0
  %v8442 = vpop.trf.xlu0
  %v8443 = vpop.trf.xlu0
  %v8444 = vpop.trf.xlu0
  %v8445 = vpop.trf.xlu0
  %v8446 = vpop.trf.xlu0
  %v8447 = vpop.trf.xlu0
  %v8448 = vpop.trf.xlu0
  %v8449 = vpop.trf.xlu0
  %v8450 = vpop.trf.xlu0
  %v8451 = vpop.trf.xlu0
  %v8452 = vpop.trf.xlu0
  %v8453 = vpop.trf.xlu0
  %8454 = vxpose.xlu0.b32.start [1/16] %v8090, 128
  %8455 = vxpose.xlu0.b32.cont [2/16] %v8091, 128
  %8456 = vxpose.xlu0.b32.cont [3/16] %v8092, 128
  %8457 = vxpose.xlu0.b32.cont [4/16] %v8093, 128
  %8458 = vxpose.xlu0.b32.cont [5/16] %v8094, 128
  %8459 = vxpose.xlu0.b32.cont [6/16] %v8095, 128
  %8460 = vxpose.xlu0.b32.cont [7/16] %v8096, 128
  %8461 = vxpose.xlu0.b32.cont [8/16] %v8097, 128
  %8462 = vxpose.xlu0.b32.cont [9/16] %v8098, 128
  %8463 = vxpose.xlu0.b32.cont [10/16] %v8099, 128
  %8464 = vxpose.xlu0.b32.cont [11/16] %v8100, 128
  %8465 = vxpose.xlu0.b32.cont [12/16] %v8101, 128
  %8466 = vxpose.xlu0.b32.cont [13/16] 0.0, 128
  %8467 = vxpose.xlu0.b32.cont [14/16] 0.0, 128
  %8468 = vxpose.xlu0.b32.cont [15/16] 0.0, 128
  %8469 = vxpose.xlu0.b32.end [16/16] 0.0, 128
  %v8470 = vpop.trf.xlu0
  %v8471 = vpop.trf.xlu0
  %v8472 = vpop.trf.xlu0
  %v8473 = vpop.trf.xlu0
  %v8474 = vpop.trf.xlu0
  %v8475 = vpop.trf.xlu0
  %v8476 = vpop.trf.xlu0
  %v8477 = vpop.trf.xlu0
  %v8478 = vpop.trf.xlu0
  %v8479 = vpop.trf.xlu0
  %v8480 = vpop.trf.xlu0
  %v8481 = vpop.trf.xlu0
  %v8482 = vpop.trf.xlu0
  %v8483 = vpop.trf.xlu0
  %v8484 = vpop.trf.xlu0
  %v8485 = vpop.trf.xlu0
  %vm8486 = vcmask 785408
  %v8488 = vsel %vm8486, %v8470, 0
  %v8491 = vsel %vm8486, %v8471, 0
  %v8494 = vsel %vm8486, %v8472, 0
  %v8497 = vsel %vm8486, %v8473, 0
  %v8500 = vsel %vm8486, %v8474, 0
  %v8503 = vsel %vm8486, %v8475, 0
  %v8506 = vsel %vm8486, %v8476, 0
  %v8509 = vsel %vm8486, %v8477, 0
  %v8512 = vsel %vm8486, %v8478, 0
  %v8515 = vsel %vm8486, %v8479, 0
  %v8518 = vsel %vm8486, %v8480, 0
  %v8521 = vsel %vm8486, %v8481, 0
  %v8524 = vsel %vm8486, %v8482, 0
  %v8527 = vsel %vm8486, %v8483, 0
  %v8530 = vsel %vm8486, %v8484, 0
  %v8533 = vsel %vm8486, %v8485, 0
  %8535 = vmatprep.subr.mxu0 %v7569
  %8536 = vmatpush1.msra.mxu0 %v7568
  %8537 = vmatprep.subr.mxu0 %v7567
  %8538 = vmatpush1.msra.mxu0 %v7566
  %8539 = vmatprep.subr.mxu0 %v7565
  %8540 = vmatpush1.msra.mxu0 %v7564
  %8541 = vmatprep.subr.mxu0 %v7563
  %8542 = vmatpush1.msra.mxu0 %v7562
  %8543 = vmatprep.subr.mxu0 %v7561
  %8544 = vmatpush1.msra.mxu0 %v7560
  %8545 = vmatprep.subr.mxu0 %v7559
  %8546 = vmatpush1.msra.mxu0 %v7558
  %8547 = vmatprep.subr.mxu0 %v7557
  %8548 = vmatpush1.msra.mxu0 %v7556
  %8549 = vmatprep.subr.mxu0 %v7555
  %8550 = vmatpush1.msra.mxu0 %v7554
  %8551 = vmatprep.subr.mxu0 %v7553
  %8552 = vmatpush1.msra.mxu0 %v7552
  %8553 = vmatprep.subr.mxu0 %v7551
  %8554 = vmatpush1.msra.mxu0 %v7550
  %8555 = vmatprep.subr.mxu0 %v7549
  %8556 = vmatpush1.msra.mxu0 %v7548
  %8557 = vmatprep.subr.mxu0 %v7547
  %8558 = vmatpush1.msra.mxu0 %v7546
  %8559 = vmatprep.subr.mxu0 %v7545
  %8560 = vmatpush1.msra.mxu0 %v7544
  %8561 = vmatprep.subr.mxu0 %v7543
  %8562 = vmatpush1.msra.mxu0 %v7542
  %8563 = vmatprep.subr.mxu0 %v7541
  %8564 = vmatpush1.msra.mxu0 %v7540
  %8565 = vmatprep.subr.mxu0 %v7539
  %8566 = vmatpush1.msra.mxu0 %v7538
  %8567 = vmatprep.subr.mxu0 %v7601
  %8568 = vmatpush2.msra.mxu0 %v7600
  %8569 = vmatprep.subr.mxu0 %v7599
  %8570 = vmatpush2.msra.mxu0 %v7598
  %8571 = vmatprep.subr.mxu0 %v7597
  %8572 = vmatpush2.msra.mxu0 %v7596
  %8573 = vmatprep.subr.mxu0 %v7595
  %8574 = vmatpush2.msra.mxu0 %v7594
  %8575 = vmatprep.subr.mxu0 %v7593
  %8576 = vmatpush2.msra.mxu0 %v7592
  %8577 = vmatprep.subr.mxu0 %v7591
  %8578 = vmatpush2.msra.mxu0 %v7590
  %8579 = vmatprep.subr.mxu0 %v7589
  %8580 = vmatpush2.msra.mxu0 %v7588
  %8581 = vmatprep.subr.mxu0 %v7587
  %8582 = vmatpush2.msra.mxu0 %v7586
  %8583 = vmatprep.subr.mxu0 %v7585
  %8584 = vmatpush2.msra.mxu0 %v7584
  %8585 = vmatprep.subr.mxu0 %v7583
  %8586 = vmatpush2.msra.mxu0 %v7582
  %8587 = vmatprep.subr.mxu0 %v7581
  %8588 = vmatpush2.msra.mxu0 %v7580
  %8589 = vmatprep.subr.mxu0 %v7579
  %8590 = vmatpush2.msra.mxu0 %v7578
  %8591 = vmatprep.subr.mxu0 %v7577
  %8592 = vmatpush2.msra.mxu0 %v7576
  %8593 = vmatprep.subr.mxu0 %v7575
  %8594 = vmatpush2.msra.mxu0 %v7574
  %8595 = vmatprep.subr.mxu0 %v7573
  %8596 = vmatpush2.msra.mxu0 %v7572
  %8597 = vmatprep.subr.mxu0 %v7571
  %8598 = vmatpush2.msra.mxu0 %v7570
  %8599 = vmatprep.mubr.f32.mxu0 %v8150
  %8600 = vmatmul.mubr.f32.gmra.mxu0 %v8118
  %v8601 = vpop.f32.mrf.mxu0
  %v8602 = vadd.f32 0.0, %v8601
  %v8603 = vpop.f32.mrf.mxu0
  %v8604 = vadd.f32 0.0, %v8603
  %8605 = vmatprep.mubr.f32.mxu0 %v8151
  %8606 = vmatmul.mubr.f32.gmra.mxu0 %v8119
  %v8607 = vpop.f32.mrf.mxu0
  %v8608 = vadd.f32 0.0, %v8607
  %v8609 = vpop.f32.mrf.mxu0
  %v8610 = vadd.f32 0.0, %v8609
  %8611 = vmatprep.mubr.f32.mxu0 %v8152
  %8612 = vmatmul.mubr.f32.gmra.mxu0 %v8120
  %v8613 = vpop.f32.mrf.mxu0
  %v8614 = vadd.f32 0.0, %v8613
  %v8615 = vpop.f32.mrf.mxu0
  %v8616 = vadd.f32 0.0, %v8615
  %8617 = vmatprep.mubr.f32.mxu0 %v8153
  %8618 = vmatmul.mubr.f32.gmra.mxu0 %v8121
  %v8619 = vpop.f32.mrf.mxu0
  %v8620 = vadd.f32 0.0, %v8619
  %v8621 = vpop.f32.mrf.mxu0
  %v8622 = vadd.f32 0.0, %v8621
  %8623 = vmatprep.mubr.f32.mxu0 %v8154
  %8624 = vmatmul.mubr.f32.gmra.mxu0 %v8122
  %v8625 = vpop.f32.mrf.mxu0
  %v8626 = vadd.f32 0.0, %v8625
  %v8627 = vpop.f32.mrf.mxu0
  %v8628 = vadd.f32 0.0, %v8627
  %8629 = vmatprep.mubr.f32.mxu0 %v8155
  %8630 = vmatmul.mubr.f32.gmra.mxu0 %v8123
  %v8631 = vpop.f32.mrf.mxu0
  %v8632 = vadd.f32 0.0, %v8631
  %v8633 = vpop.f32.mrf.mxu0
  %v8634 = vadd.f32 0.0, %v8633
  %8635 = vmatprep.mubr.f32.mxu0 %v8156
  %8636 = vmatmul.mubr.f32.gmra.mxu0 %v8124
  %v8637 = vpop.f32.mrf.mxu0
  %v8638 = vadd.f32 0.0, %v8637
  %v8639 = vpop.f32.mrf.mxu0
  %v8640 = vadd.f32 0.0, %v8639
  %8641 = vmatprep.mubr.f32.mxu0 %v8157
  %8642 = vmatmul.mubr.f32.gmra.mxu0 %v8125
  %v8643 = vpop.f32.mrf.mxu0
  %v8644 = vadd.f32 0.0, %v8643
  %v8645 = vpop.f32.mrf.mxu0
  %v8646 = vadd.f32 0.0, %v8645
  %8647 = vmatprep.mubr.f32.mxu0 %v8158
  %8648 = vmatmul.mubr.f32.gmra.mxu0 %v8126
  %v8649 = vpop.f32.mrf.mxu0
  %v8650 = vadd.f32 0.0, %v8649
  %v8651 = vpop.f32.mrf.mxu0
  %v8652 = vadd.f32 0.0, %v8651
  %8653 = vmatprep.mubr.f32.mxu0 %v8159
  %8654 = vmatmul.mubr.f32.gmra.mxu0 %v8127
  %v8655 = vpop.f32.mrf.mxu0
  %v8656 = vadd.f32 0.0, %v8655
  %v8657 = vpop.f32.mrf.mxu0
  %v8658 = vadd.f32 0.0, %v8657
  %8659 = vmatprep.mubr.f32.mxu0 %v8160
  %8660 = vmatmul.mubr.f32.gmra.mxu0 %v8128
  %v8661 = vpop.f32.mrf.mxu0
  %v8662 = vadd.f32 0.0, %v8661
  %v8663 = vpop.f32.mrf.mxu0
  %v8664 = vadd.f32 0.0, %v8663
  %8665 = vmatprep.mubr.f32.mxu0 %v8161
  %8666 = vmatmul.mubr.f32.gmra.mxu0 %v8129
  %v8667 = vpop.f32.mrf.mxu0
  %v8668 = vadd.f32 0.0, %v8667
  %v8669 = vpop.f32.mrf.mxu0
  %v8670 = vadd.f32 0.0, %v8669
  %8671 = vmatprep.mubr.f32.mxu0 %v8162
  %8672 = vmatmul.mubr.f32.gmra.mxu0 %v8130
  %v8673 = vpop.f32.mrf.mxu0
  %v8674 = vadd.f32 0.0, %v8673
  %v8675 = vpop.f32.mrf.mxu0
  %v8676 = vadd.f32 0.0, %v8675
  %8677 = vmatprep.mubr.f32.mxu0 %v8163
  %8678 = vmatmul.mubr.f32.gmra.mxu0 %v8131
  %v8679 = vpop.f32.mrf.mxu0
  %v8680 = vadd.f32 0.0, %v8679
  %v8681 = vpop.f32.mrf.mxu0
  %v8682 = vadd.f32 0.0, %v8681
  %8683 = vmatprep.mubr.f32.mxu0 %v8164
  %8684 = vmatmul.mubr.f32.gmra.mxu0 %v8132
  %v8685 = vpop.f32.mrf.mxu0
  %v8686 = vadd.f32 0.0, %v8685
  %v8687 = vpop.f32.mrf.mxu0
  %v8688 = vadd.f32 0.0, %v8687
  %8689 = vmatprep.mubr.f32.mxu0 %v8165
  %8690 = vmatmul.mubr.f32.gmra.mxu0 %v8133
  %v8691 = vpop.f32.mrf.mxu0
  %v8692 = vadd.f32 0.0, %v8691
  %v8693 = vpop.f32.mrf.mxu0
  %v8694 = vadd.f32 0.0, %v8693
  %8695 = vdwg.mxu0
  %8696 = vmatprep.subr.mxu0 %v7633
  %8697 = vmatpush1.msra.mxu0 %v7632
  %8698 = vmatprep.subr.mxu0 %v7631
  %8699 = vmatpush1.msra.mxu0 %v7630
  %8700 = vmatprep.subr.mxu0 %v7629
  %8701 = vmatpush1.msra.mxu0 %v7628
  %8702 = vmatprep.subr.mxu0 %v7627
  %8703 = vmatpush1.msra.mxu0 %v7626
  %8704 = vmatprep.subr.mxu0 %v7625
  %8705 = vmatpush1.msra.mxu0 %v7624
  %8706 = vmatprep.subr.mxu0 %v7623
  %8707 = vmatpush1.msra.mxu0 %v7622
  %8708 = vmatprep.subr.mxu0 %v7621
  %8709 = vmatpush1.msra.mxu0 %v7620
  %8710 = vmatprep.subr.mxu0 %v7619
  %8711 = vmatpush1.msra.mxu0 %v7618
  %8712 = vmatprep.subr.mxu0 %v7617
  %8713 = vmatpush1.msra.mxu0 %v7616
  %8714 = vmatprep.subr.mxu0 %v7615
  %8715 = vmatpush1.msra.mxu0 %v7614
  %8716 = vmatprep.subr.mxu0 %v7613
  %8717 = vmatpush1.msra.mxu0 %v7612
  %8718 = vmatprep.subr.mxu0 %v7611
  %8719 = vmatpush1.msra.mxu0 %v7610
  %8720 = vmatprep.subr.mxu0 %v7609
  %8721 = vmatpush1.msra.mxu0 %v7608
  %8722 = vmatprep.subr.mxu0 %v7607
  %8723 = vmatpush1.msra.mxu0 %v7606
  %8724 = vmatprep.subr.mxu0 %v7605
  %8725 = vmatpush1.msra.mxu0 %v7604
  %8726 = vmatprep.subr.mxu0 %v7603
  %8727 = vmatpush1.msra.mxu0 %v7602
  %8728 = vmatprep.subr.mxu0 %v7665
  %8729 = vmatpush2.msra.mxu0 %v7664
  %8730 = vmatprep.subr.mxu0 %v7663
  %8731 = vmatpush2.msra.mxu0 %v7662
  %8732 = vmatprep.subr.mxu0 %v7661
  %8733 = vmatpush2.msra.mxu0 %v7660
  %8734 = vmatprep.subr.mxu0 %v7659
  %8735 = vmatpush2.msra.mxu0 %v7658
  %8736 = vmatprep.subr.mxu0 %v7657
  %8737 = vmatpush2.msra.mxu0 %v7656
  %8738 = vmatprep.subr.mxu0 %v7655
  %8739 = vmatpush2.msra.mxu0 %v7654
  %8740 = vmatprep.subr.mxu0 %v7653
  %8741 = vmatpush2.msra.mxu0 %v7652
  %8742 = vmatprep.subr.mxu0 %v7651
  %8743 = vmatpush2.msra.mxu0 %v7650
  %8744 = vmatprep.subr.mxu0 %v7649
  %8745 = vmatpush2.msra.mxu0 %v7648
  %8746 = vmatprep.subr.mxu0 %v7647
  %8747 = vmatpush2.msra.mxu0 %v7646
  %8748 = vmatprep.subr.mxu0 %v7645
  %8749 = vmatpush2.msra.mxu0 %v7644
  %8750 = vmatprep.subr.mxu0 %v7643
  %8751 = vmatpush2.msra.mxu0 %v7642
  %8752 = vmatprep.subr.mxu0 %v7641
  %8753 = vmatpush2.msra.mxu0 %v7640
  %8754 = vmatprep.subr.mxu0 %v7639
  %8755 = vmatpush2.msra.mxu0 %v7638
  %8756 = vmatprep.subr.mxu0 %v7637
  %8757 = vmatpush2.msra.mxu0 %v7636
  %8758 = vmatprep.subr.mxu0 %v7635
  %8759 = vmatpush2.msra.mxu0 %v7634
  %8760 = vmatprep.mubr.f32.mxu0 %v8214
  %8761 = vmatmul.mubr.f32.gmra.mxu0 %v8182
  %v8762 = vpop.f32.mrf.mxu0
  %v8763 = vadd.f32 %v8602, %v8762
  %v8764 = vpop.f32.mrf.mxu0
  %v8765 = vadd.f32 %v8604, %v8764
  %8766 = vmatprep.mubr.f32.mxu0 %v8215
  %8767 = vmatmul.mubr.f32.gmra.mxu0 %v8183
  %v8768 = vpop.f32.mrf.mxu0
  %v8769 = vadd.f32 %v8608, %v8768
  %v8770 = vpop.f32.mrf.mxu0
  %v8771 = vadd.f32 %v8610, %v8770
  %8772 = vmatprep.mubr.f32.mxu0 %v8216
  %8773 = vmatmul.mubr.f32.gmra.mxu0 %v8184
  %v8774 = vpop.f32.mrf.mxu0
  %v8775 = vadd.f32 %v8614, %v8774
  %v8776 = vpop.f32.mrf.mxu0
  %v8777 = vadd.f32 %v8616, %v8776
  %8778 = vmatprep.mubr.f32.mxu0 %v8217
  %8779 = vmatmul.mubr.f32.gmra.mxu0 %v8185
  %v8780 = vpop.f32.mrf.mxu0
  %v8781 = vadd.f32 %v8620, %v8780
  %v8782 = vpop.f32.mrf.mxu0
  %v8783 = vadd.f32 %v8622, %v8782
  %8784 = vmatprep.mubr.f32.mxu0 %v8218
  %8785 = vmatmul.mubr.f32.gmra.mxu0 %v8186
  %v8786 = vpop.f32.mrf.mxu0
  %v8787 = vadd.f32 %v8626, %v8786
  %v8788 = vpop.f32.mrf.mxu0
  %v8789 = vadd.f32 %v8628, %v8788
  %8790 = vmatprep.mubr.f32.mxu0 %v8219
  %8791 = vmatmul.mubr.f32.gmra.mxu0 %v8187
  %v8792 = vpop.f32.mrf.mxu0
  %v8793 = vadd.f32 %v8632, %v8792
  %v8794 = vpop.f32.mrf.mxu0
  %v8795 = vadd.f32 %v8634, %v8794
  %8796 = vmatprep.mubr.f32.mxu0 %v8220
  %8797 = vmatmul.mubr.f32.gmra.mxu0 %v8188
  %v8798 = vpop.f32.mrf.mxu0
  %v8799 = vadd.f32 %v8638, %v8798
  %v8800 = vpop.f32.mrf.mxu0
  %v8801 = vadd.f32 %v8640, %v8800
  %8802 = vmatprep.mubr.f32.mxu0 %v8221
  %8803 = vmatmul.mubr.f32.gmra.mxu0 %v8189
  %v8804 = vpop.f32.mrf.mxu0
  %v8805 = vadd.f32 %v8644, %v8804
  %v8806 = vpop.f32.mrf.mxu0
  %v8807 = vadd.f32 %v8646, %v8806
  %8808 = vmatprep.mubr.f32.mxu0 %v8222
  %8809 = vmatmul.mubr.f32.gmra.mxu0 %v8190
  %v8810 = vpop.f32.mrf.mxu0
  %v8811 = vadd.f32 %v8650, %v8810
  %v8812 = vpop.f32.mrf.mxu0
  %v8813 = vadd.f32 %v8652, %v8812
  %8814 = vmatprep.mubr.f32.mxu0 %v8223
  %8815 = vmatmul.mubr.f32.gmra.mxu0 %v8191
  %v8816 = vpop.f32.mrf.mxu0
  %v8817 = vadd.f32 %v8656, %v8816
  %v8818 = vpop.f32.mrf.mxu0
  %v8819 = vadd.f32 %v8658, %v8818
  %8820 = vmatprep.mubr.f32.mxu0 %v8224
  %8821 = vmatmul.mubr.f32.gmra.mxu0 %v8192
  %v8822 = vpop.f32.mrf.mxu0
  %v8823 = vadd.f32 %v8662, %v8822
  %v8824 = vpop.f32.mrf.mxu0
  %v8825 = vadd.f32 %v8664, %v8824
  %8826 = vmatprep.mubr.f32.mxu0 %v8225
  %8827 = vmatmul.mubr.f32.gmra.mxu0 %v8193
  %v8828 = vpop.f32.mrf.mxu0
  %v8829 = vadd.f32 %v8668, %v8828
  %v8830 = vpop.f32.mrf.mxu0
  %v8831 = vadd.f32 %v8670, %v8830
  %8832 = vmatprep.mubr.f32.mxu0 %v8226
  %8833 = vmatmul.mubr.f32.gmra.mxu0 %v8194
  %v8834 = vpop.f32.mrf.mxu0
  %v8835 = vadd.f32 %v8674, %v8834
  %v8836 = vpop.f32.mrf.mxu0
  %v8837 = vadd.f32 %v8676, %v8836
  %8838 = vmatprep.mubr.f32.mxu0 %v8227
  %8839 = vmatmul.mubr.f32.gmra.mxu0 %v8195
  %v8840 = vpop.f32.mrf.mxu0
  %v8841 = vadd.f32 %v8680, %v8840
  %v8842 = vpop.f32.mrf.mxu0
  %v8843 = vadd.f32 %v8682, %v8842
  %8844 = vmatprep.mubr.f32.mxu0 %v8228
  %8845 = vmatmul.mubr.f32.gmra.mxu0 %v8196
  %v8846 = vpop.f32.mrf.mxu0
  %v8847 = vadd.f32 %v8686, %v8846
  %v8848 = vpop.f32.mrf.mxu0
  %v8849 = vadd.f32 %v8688, %v8848
  %8850 = vmatprep.mubr.f32.mxu0 %v8229
  %8851 = vmatmul.mubr.f32.gmra.mxu0 %v8197
  %v8852 = vpop.f32.mrf.mxu0
  %v8853 = vadd.f32 %v8692, %v8852
  %v8854 = vpop.f32.mrf.mxu0
  %v8855 = vadd.f32 %v8694, %v8854
  %8856 = vdwg.mxu0
  %8857 = vmatprep.subr.mxu0 %v7697
  %8858 = vmatpush1.msra.mxu0 %v7696
  %8859 = vmatprep.subr.mxu0 %v7695
  %8860 = vmatpush1.msra.mxu0 %v7694
  %8861 = vmatprep.subr.mxu0 %v7693
  %8862 = vmatpush1.msra.mxu0 %v7692
  %8863 = vmatprep.subr.mxu0 %v7691
  %8864 = vmatpush1.msra.mxu0 %v7690
  %8865 = vmatprep.subr.mxu0 %v7689
  %8866 = vmatpush1.msra.mxu0 %v7688
  %8867 = vmatprep.subr.mxu0 %v7687
  %8868 = vmatpush1.msra.mxu0 %v7686
  %8869 = vmatprep.subr.mxu0 %v7685
  %8870 = vmatpush1.msra.mxu0 %v7684
  %8871 = vmatprep.subr.mxu0 %v7683
  %8872 = vmatpush1.msra.mxu0 %v7682
  %8873 = vmatprep.subr.mxu0 %v7681
  %8874 = vmatpush1.msra.mxu0 %v7680
  %8875 = vmatprep.subr.mxu0 %v7679
  %8876 = vmatpush1.msra.mxu0 %v7678
  %8877 = vmatprep.subr.mxu0 %v7677
  %8878 = vmatpush1.msra.mxu0 %v7676
  %8879 = vmatprep.subr.mxu0 %v7675
  %8880 = vmatpush1.msra.mxu0 %v7674
  %8881 = vmatprep.subr.mxu0 %v7673
  %8882 = vmatpush1.msra.mxu0 %v7672
  %8883 = vmatprep.subr.mxu0 %v7671
  %8884 = vmatpush1.msra.mxu0 %v7670
  %8885 = vmatprep.subr.mxu0 %v7669
  %8886 = vmatpush1.msra.mxu0 %v7668
  %8887 = vmatprep.subr.mxu0 %v7667
  %8888 = vmatpush1.msra.mxu0 %v7666
  %8889 = vmatprep.subr.mxu0 %v7729
  %8890 = vmatpush2.msra.mxu0 %v7728
  %8891 = vmatprep.subr.mxu0 %v7727
  %8892 = vmatpush2.msra.mxu0 %v7726
  %8893 = vmatprep.subr.mxu0 %v7725
  %8894 = vmatpush2.msra.mxu0 %v7724
  %8895 = vmatprep.subr.mxu0 %v7723
  %8896 = vmatpush2.msra.mxu0 %v7722
  %8897 = vmatprep.subr.mxu0 %v7721
  %8898 = vmatpush2.msra.mxu0 %v7720
  %8899 = vmatprep.subr.mxu0 %v7719
  %8900 = vmatpush2.msra.mxu0 %v7718
  %8901 = vmatprep.subr.mxu0 %v7717
  %8902 = vmatpush2.msra.mxu0 %v7716
  %8903 = vmatprep.subr.mxu0 %v7715
  %8904 = vmatpush2.msra.mxu0 %v7714
  %8905 = vmatprep.subr.mxu0 %v7713
  %8906 = vmatpush2.msra.mxu0 %v7712
  %8907 = vmatprep.subr.mxu0 %v7711
  %8908 = vmatpush2.msra.mxu0 %v7710
  %8909 = vmatprep.subr.mxu0 %v7709
  %8910 = vmatpush2.msra.mxu0 %v7708
  %8911 = vmatprep.subr.mxu0 %v7707
  %8912 = vmatpush2.msra.mxu0 %v7706
  %8913 = vmatprep.subr.mxu0 %v7705
  %8914 = vmatpush2.msra.mxu0 %v7704
  %8915 = vmatprep.subr.mxu0 %v7703
  %8916 = vmatpush2.msra.mxu0 %v7702
  %8917 = vmatprep.subr.mxu0 %v7701
  %8918 = vmatpush2.msra.mxu0 %v7700
  %8919 = vmatprep.subr.mxu0 %v7699
  %8920 = vmatpush2.msra.mxu0 %v7698
  %8921 = vmatprep.mubr.f32.mxu0 %v8278
  %8922 = vmatmul.mubr.f32.gmra.mxu0 %v8246
  %v8923 = vpop.f32.mrf.mxu0
  %v8924 = vadd.f32 %v8763, %v8923
  %v8925 = vpop.f32.mrf.mxu0
  %v8926 = vadd.f32 %v8765, %v8925
  %8927 = vmatprep.mubr.f32.mxu0 %v8279
  %8928 = vmatmul.mubr.f32.gmra.mxu0 %v8247
  %v8929 = vpop.f32.mrf.mxu0
  %v8930 = vadd.f32 %v8769, %v8929
  %v8931 = vpop.f32.mrf.mxu0
  %v8932 = vadd.f32 %v8771, %v8931
  %8933 = vmatprep.mubr.f32.mxu0 %v8280
  %8934 = vmatmul.mubr.f32.gmra.mxu0 %v8248
  %v8935 = vpop.f32.mrf.mxu0
  %v8936 = vadd.f32 %v8775, %v8935
  %v8937 = vpop.f32.mrf.mxu0
  %v8938 = vadd.f32 %v8777, %v8937
  %8939 = vmatprep.mubr.f32.mxu0 %v8281
  %8940 = vmatmul.mubr.f32.gmra.mxu0 %v8249
  %v8941 = vpop.f32.mrf.mxu0
  %v8942 = vadd.f32 %v8781, %v8941
  %v8943 = vpop.f32.mrf.mxu0
  %v8944 = vadd.f32 %v8783, %v8943
  %8945 = vmatprep.mubr.f32.mxu0 %v8282
  %8946 = vmatmul.mubr.f32.gmra.mxu0 %v8250
  %v8947 = vpop.f32.mrf.mxu0
  %v8948 = vadd.f32 %v8787, %v8947
  %v8949 = vpop.f32.mrf.mxu0
  %v8950 = vadd.f32 %v8789, %v8949
  %8951 = vmatprep.mubr.f32.mxu0 %v8283
  %8952 = vmatmul.mubr.f32.gmra.mxu0 %v8251
  %v8953 = vpop.f32.mrf.mxu0
  %v8954 = vadd.f32 %v8793, %v8953
  %v8955 = vpop.f32.mrf.mxu0
  %v8956 = vadd.f32 %v8795, %v8955
  %8957 = vmatprep.mubr.f32.mxu0 %v8284
  %8958 = vmatmul.mubr.f32.gmra.mxu0 %v8252
  %v8959 = vpop.f32.mrf.mxu0
  %v8960 = vadd.f32 %v8799, %v8959
  %v8961 = vpop.f32.mrf.mxu0
  %v8962 = vadd.f32 %v8801, %v8961
  %8963 = vmatprep.mubr.f32.mxu0 %v8285
  %8964 = vmatmul.mubr.f32.gmra.mxu0 %v8253
  %v8965 = vpop.f32.mrf.mxu0
  %v8966 = vadd.f32 %v8805, %v8965
  %v8967 = vpop.f32.mrf.mxu0
  %v8968 = vadd.f32 %v8807, %v8967
  %8969 = vmatprep.mubr.f32.mxu0 %v8286
  %8970 = vmatmul.mubr.f32.gmra.mxu0 %v8254
  %v8971 = vpop.f32.mrf.mxu0
  %v8972 = vadd.f32 %v8811, %v8971
  %v8973 = vpop.f32.mrf.mxu0
  %v8974 = vadd.f32 %v8813, %v8973
  %8975 = vmatprep.mubr.f32.mxu0 %v8287
  %8976 = vmatmul.mubr.f32.gmra.mxu0 %v8255
  %v8977 = vpop.f32.mrf.mxu0
  %v8978 = vadd.f32 %v8817, %v8977
  %v8979 = vpop.f32.mrf.mxu0
  %v8980 = vadd.f32 %v8819, %v8979
  %8981 = vmatprep.mubr.f32.mxu0 %v8288
  %8982 = vmatmul.mubr.f32.gmra.mxu0 %v8256
  %v8983 = vpop.f32.mrf.mxu0
  %v8984 = vadd.f32 %v8823, %v8983
  %v8985 = vpop.f32.mrf.mxu0
  %v8986 = vadd.f32 %v8825, %v8985
  %8987 = vmatprep.mubr.f32.mxu0 %v8289
  %8988 = vmatmul.mubr.f32.gmra.mxu0 %v8257
  %v8989 = vpop.f32.mrf.mxu0
  %v8990 = vadd.f32 %v8829, %v8989
  %v8991 = vpop.f32.mrf.mxu0
  %v8992 = vadd.f32 %v8831, %v8991
  %8993 = vmatprep.mubr.f32.mxu0 %v8290
  %8994 = vmatmul.mubr.f32.gmra.mxu0 %v8258
  %v8995 = vpop.f32.mrf.mxu0
  %v8996 = vadd.f32 %v8835, %v8995
  %v8997 = vpop.f32.mrf.mxu0
  %v8998 = vadd.f32 %v8837, %v8997
  %8999 = vmatprep.mubr.f32.mxu0 %v8291
  %9000 = vmatmul.mubr.f32.gmra.mxu0 %v8259
  %v9001 = vpop.f32.mrf.mxu0
  %v9002 = vadd.f32 %v8841, %v9001
  %v9003 = vpop.f32.mrf.mxu0
  %v9004 = vadd.f32 %v8843, %v9003
  %9005 = vmatprep.mubr.f32.mxu0 %v8292
  %9006 = vmatmul.mubr.f32.gmra.mxu0 %v8260
  %v9007 = vpop.f32.mrf.mxu0
  %v9008 = vadd.f32 %v8847, %v9007
  %v9009 = vpop.f32.mrf.mxu0
  %v9010 = vadd.f32 %v8849, %v9009
  %9011 = vmatprep.mubr.f32.mxu0 %v8293
  %9012 = vmatmul.mubr.f32.gmra.mxu0 %v8261
  %v9013 = vpop.f32.mrf.mxu0
  %v9014 = vadd.f32 %v8853, %v9013
  %v9015 = vpop.f32.mrf.mxu0
  %v9016 = vadd.f32 %v8855, %v9015
  %9017 = vdwg.mxu0
  %9018 = vmatprep.subr.mxu0 %v7761
  %9019 = vmatpush1.msra.mxu0 %v7760
  %9020 = vmatprep.subr.mxu0 %v7759
  %9021 = vmatpush1.msra.mxu0 %v7758
  %9022 = vmatprep.subr.mxu0 %v7757
  %9023 = vmatpush1.msra.mxu0 %v7756
  %9024 = vmatprep.subr.mxu0 %v7755
  %9025 = vmatpush1.msra.mxu0 %v7754
  %9026 = vmatprep.subr.mxu0 %v7753
  %9027 = vmatpush1.msra.mxu0 %v7752
  %9028 = vmatprep.subr.mxu0 %v7751
  %9029 = vmatpush1.msra.mxu0 %v7750
  %9030 = vmatprep.subr.mxu0 %v7749
  %9031 = vmatpush1.msra.mxu0 %v7748
  %9032 = vmatprep.subr.mxu0 %v7747
  %9033 = vmatpush1.msra.mxu0 %v7746
  %9034 = vmatprep.subr.mxu0 %v7745
  %9035 = vmatpush1.msra.mxu0 %v7744
  %9036 = vmatprep.subr.mxu0 %v7743
  %9037 = vmatpush1.msra.mxu0 %v7742
  %9038 = vmatprep.subr.mxu0 %v7741
  %9039 = vmatpush1.msra.mxu0 %v7740
  %9040 = vmatprep.subr.mxu0 %v7739
  %9041 = vmatpush1.msra.mxu0 %v7738
  %9042 = vmatprep.subr.mxu0 %v7737
  %9043 = vmatpush1.msra.mxu0 %v7736
  %9044 = vmatprep.subr.mxu0 %v7735
  %9045 = vmatpush1.msra.mxu0 %v7734
  %9046 = vmatprep.subr.mxu0 %v7733
  %9047 = vmatpush1.msra.mxu0 %v7732
  %9048 = vmatprep.subr.mxu0 %v7731
  %9049 = vmatpush1.msra.mxu0 %v7730
  %9050 = vmatprep.subr.mxu0 %v7793
  %9051 = vmatpush2.msra.mxu0 %v7792
  %9052 = vmatprep.subr.mxu0 %v7791
  %9053 = vmatpush2.msra.mxu0 %v7790
  %9054 = vmatprep.subr.mxu0 %v7789
  %9055 = vmatpush2.msra.mxu0 %v7788
  %9056 = vmatprep.subr.mxu0 %v7787
  %9057 = vmatpush2.msra.mxu0 %v7786
  %9058 = vmatprep.subr.mxu0 %v7785
  %9059 = vmatpush2.msra.mxu0 %v7784
  %9060 = vmatprep.subr.mxu0 %v7783
  %9061 = vmatpush2.msra.mxu0 %v7782
  %9062 = vmatprep.subr.mxu0 %v7781
  %9063 = vmatpush2.msra.mxu0 %v7780
  %9064 = vmatprep.subr.mxu0 %v7779
  %9065 = vmatpush2.msra.mxu0 %v7778
  %9066 = vmatprep.subr.mxu0 %v7777
  %9067 = vmatpush2.msra.mxu0 %v7776
  %9068 = vmatprep.subr.mxu0 %v7775
  %9069 = vmatpush2.msra.mxu0 %v7774
  %9070 = vmatprep.subr.mxu0 %v7773
  %9071 = vmatpush2.msra.mxu0 %v7772
  %9072 = vmatprep.subr.mxu0 %v7771
  %9073 = vmatpush2.msra.mxu0 %v7770
  %9074 = vmatprep.subr.mxu0 %v7769
  %9075 = vmatpush2.msra.mxu0 %v7768
  %9076 = vmatprep.subr.mxu0 %v7767
  %9077 = vmatpush2.msra.mxu0 %v7766
  %9078 = vmatprep.subr.mxu0 %v7765
  %9079 = vmatpush2.msra.mxu0 %v7764
  %9080 = vmatprep.subr.mxu0 %v7763
  %9081 = vmatpush2.msra.mxu0 %v7762
  %9082 = vmatprep.mubr.f32.mxu0 %v8342
  %9083 = vmatmul.mubr.f32.gmra.mxu0 %v8310
  %v9084 = vpop.f32.mrf.mxu0
  %v9085 = vadd.f32 %v8924, %v9084
  %v9086 = vpop.f32.mrf.mxu0
  %v9087 = vadd.f32 %v8926, %v9086
  %9088 = vmatprep.mubr.f32.mxu0 %v8343
  %9089 = vmatmul.mubr.f32.gmra.mxu0 %v8311
  %v9090 = vpop.f32.mrf.mxu0
  %v9091 = vadd.f32 %v8930, %v9090
  %v9092 = vpop.f32.mrf.mxu0
  %v9093 = vadd.f32 %v8932, %v9092
  %9094 = vmatprep.mubr.f32.mxu0 %v8344
  %9095 = vmatmul.mubr.f32.gmra.mxu0 %v8312
  %v9096 = vpop.f32.mrf.mxu0
  %v9097 = vadd.f32 %v8936, %v9096
  %v9098 = vpop.f32.mrf.mxu0
  %v9099 = vadd.f32 %v8938, %v9098
  %9100 = vmatprep.mubr.f32.mxu0 %v8345
  %9101 = vmatmul.mubr.f32.gmra.mxu0 %v8313
  %v9102 = vpop.f32.mrf.mxu0
  %v9103 = vadd.f32 %v8942, %v9102
  %v9104 = vpop.f32.mrf.mxu0
  %v9105 = vadd.f32 %v8944, %v9104
  %9106 = vmatprep.mubr.f32.mxu0 %v8346
  %9107 = vmatmul.mubr.f32.gmra.mxu0 %v8314
  %v9108 = vpop.f32.mrf.mxu0
  %v9109 = vadd.f32 %v8948, %v9108
  %v9110 = vpop.f32.mrf.mxu0
  %v9111 = vadd.f32 %v8950, %v9110
  %9112 = vmatprep.mubr.f32.mxu0 %v8347
  %9113 = vmatmul.mubr.f32.gmra.mxu0 %v8315
  %v9114 = vpop.f32.mrf.mxu0
  %v9115 = vadd.f32 %v8954, %v9114
  %v9116 = vpop.f32.mrf.mxu0
  %v9117 = vadd.f32 %v8956, %v9116
  %9118 = vmatprep.mubr.f32.mxu0 %v8348
  %9119 = vmatmul.mubr.f32.gmra.mxu0 %v8316
  %v9120 = vpop.f32.mrf.mxu0
  %v9121 = vadd.f32 %v8960, %v9120
  %v9122 = vpop.f32.mrf.mxu0
  %v9123 = vadd.f32 %v8962, %v9122
  %9124 = vmatprep.mubr.f32.mxu0 %v8349
  %9125 = vmatmul.mubr.f32.gmra.mxu0 %v8317
  %v9126 = vpop.f32.mrf.mxu0
  %v9127 = vadd.f32 %v8966, %v9126
  %v9128 = vpop.f32.mrf.mxu0
  %v9129 = vadd.f32 %v8968, %v9128
  %9130 = vmatprep.mubr.f32.mxu0 %v8350
  %9131 = vmatmul.mubr.f32.gmra.mxu0 %v8318
  %v9132 = vpop.f32.mrf.mxu0
  %v9133 = vadd.f32 %v8972, %v9132
  %v9134 = vpop.f32.mrf.mxu0
  %v9135 = vadd.f32 %v8974, %v9134
  %9136 = vmatprep.mubr.f32.mxu0 %v8351
  %9137 = vmatmul.mubr.f32.gmra.mxu0 %v8319
  %v9138 = vpop.f32.mrf.mxu0
  %v9139 = vadd.f32 %v8978, %v9138
  %v9140 = vpop.f32.mrf.mxu0
  %v9141 = vadd.f32 %v8980, %v9140
  %9142 = vmatprep.mubr.f32.mxu0 %v8352
  %9143 = vmatmul.mubr.f32.gmra.mxu0 %v8320
  %v9144 = vpop.f32.mrf.mxu0
  %v9145 = vadd.f32 %v8984, %v9144
  %v9146 = vpop.f32.mrf.mxu0
  %v9147 = vadd.f32 %v8986, %v9146
  %9148 = vmatprep.mubr.f32.mxu0 %v8353
  %9149 = vmatmul.mubr.f32.gmra.mxu0 %v8321
  %v9150 = vpop.f32.mrf.mxu0
  %v9151 = vadd.f32 %v8990, %v9150
  %v9152 = vpop.f32.mrf.mxu0
  %v9153 = vadd.f32 %v8992, %v9152
  %9154 = vmatprep.mubr.f32.mxu0 %v8354
  %9155 = vmatmul.mubr.f32.gmra.mxu0 %v8322
  %v9156 = vpop.f32.mrf.mxu0
  %v9157 = vadd.f32 %v8996, %v9156
  %v9158 = vpop.f32.mrf.mxu0
  %v9159 = vadd.f32 %v8998, %v9158
  %9160 = vmatprep.mubr.f32.mxu0 %v8355
  %9161 = vmatmul.mubr.f32.gmra.mxu0 %v8323
  %v9162 = vpop.f32.mrf.mxu0
  %v9163 = vadd.f32 %v9002, %v9162
  %v9164 = vpop.f32.mrf.mxu0
  %v9165 = vadd.f32 %v9004, %v9164
  %9166 = vmatprep.mubr.f32.mxu0 %v8356
  %9167 = vmatmul.mubr.f32.gmra.mxu0 %v8324
  %v9168 = vpop.f32.mrf.mxu0
  %v9169 = vadd.f32 %v9008, %v9168
  %v9170 = vpop.f32.mrf.mxu0
  %v9171 = vadd.f32 %v9010, %v9170
  %9172 = vmatprep.mubr.f32.mxu0 %v8357
  %9173 = vmatmul.mubr.f32.gmra.mxu0 %v8325
  %v9174 = vpop.f32.mrf.mxu0
  %v9175 = vadd.f32 %v9014, %v9174
  %v9176 = vpop.f32.mrf.mxu0
  %v9177 = vadd.f32 %v9016, %v9176
  %9178 = vdwg.mxu0
  %9179 = vmatprep.subr.mxu0 %v7825
  %9180 = vmatpush1.msra.mxu0 %v7824
  %9181 = vmatprep.subr.mxu0 %v7823
  %9182 = vmatpush1.msra.mxu0 %v7822
  %9183 = vmatprep.subr.mxu0 %v7821
  %9184 = vmatpush1.msra.mxu0 %v7820
  %9185 = vmatprep.subr.mxu0 %v7819
  %9186 = vmatpush1.msra.mxu0 %v7818
  %9187 = vmatprep.subr.mxu0 %v7817
  %9188 = vmatpush1.msra.mxu0 %v7816
  %9189 = vmatprep.subr.mxu0 %v7815
  %9190 = vmatpush1.msra.mxu0 %v7814
  %9191 = vmatprep.subr.mxu0 %v7813
  %9192 = vmatpush1.msra.mxu0 %v7812
  %9193 = vmatprep.subr.mxu0 %v7811
  %9194 = vmatpush1.msra.mxu0 %v7810
  %9195 = vmatprep.subr.mxu0 %v7809
  %9196 = vmatpush1.msra.mxu0 %v7808
  %9197 = vmatprep.subr.mxu0 %v7807
  %9198 = vmatpush1.msra.mxu0 %v7806
  %9199 = vmatprep.subr.mxu0 %v7805
  %9200 = vmatpush1.msra.mxu0 %v7804
  %9201 = vmatprep.subr.mxu0 %v7803
  %9202 = vmatpush1.msra.mxu0 %v7802
  %9203 = vmatprep.subr.mxu0 %v7801
  %9204 = vmatpush1.msra.mxu0 %v7800
  %9205 = vmatprep.subr.mxu0 %v7799
  %9206 = vmatpush1.msra.mxu0 %v7798
  %9207 = vmatprep.subr.mxu0 %v7797
  %9208 = vmatpush1.msra.mxu0 %v7796
  %9209 = vmatprep.subr.mxu0 %v7795
  %9210 = vmatpush1.msra.mxu0 %v7794
  %9211 = vmatprep.subr.mxu0 %v7857
  %9212 = vmatpush2.msra.mxu0 %v7856
  %9213 = vmatprep.subr.mxu0 %v7855
  %9214 = vmatpush2.msra.mxu0 %v7854
  %9215 = vmatprep.subr.mxu0 %v7853
  %9216 = vmatpush2.msra.mxu0 %v7852
  %9217 = vmatprep.subr.mxu0 %v7851
  %9218 = vmatpush2.msra.mxu0 %v7850
  %9219 = vmatprep.subr.mxu0 %v7849
  %9220 = vmatpush2.msra.mxu0 %v7848
  %9221 = vmatprep.subr.mxu0 %v7847
  %9222 = vmatpush2.msra.mxu0 %v7846
  %9223 = vmatprep.subr.mxu0 %v7845
  %9224 = vmatpush2.msra.mxu0 %v7844
  %9225 = vmatprep.subr.mxu0 %v7843
  %9226 = vmatpush2.msra.mxu0 %v7842
  %9227 = vmatprep.subr.mxu0 %v7841
  %9228 = vmatpush2.msra.mxu0 %v7840
  %9229 = vmatprep.subr.mxu0 %v7839
  %9230 = vmatpush2.msra.mxu0 %v7838
  %9231 = vmatprep.subr.mxu0 %v7837
  %9232 = vmatpush2.msra.mxu0 %v7836
  %9233 = vmatprep.subr.mxu0 %v7835
  %9234 = vmatpush2.msra.mxu0 %v7834
  %9235 = vmatprep.subr.mxu0 %v7833
  %9236 = vmatpush2.msra.mxu0 %v7832
  %9237 = vmatprep.subr.mxu0 %v7831
  %9238 = vmatpush2.msra.mxu0 %v7830
  %9239 = vmatprep.subr.mxu0 %v7829
  %9240 = vmatpush2.msra.mxu0 %v7828
  %9241 = vmatprep.subr.mxu0 %v7827
  %9242 = vmatpush2.msra.mxu0 %v7826
  %9243 = vmatprep.mubr.f32.mxu0 %v8406
  %9244 = vmatmul.mubr.f32.gmra.mxu0 %v8374
  %v9245 = vpop.f32.mrf.mxu0
  %v9246 = vadd.f32 %v9085, %v9245
  %v9247 = vpop.f32.mrf.mxu0
  %v9248 = vadd.f32 %v9087, %v9247
  %9249 = vmatprep.mubr.f32.mxu0 %v8407
  %9250 = vmatmul.mubr.f32.gmra.mxu0 %v8375
  %v9251 = vpop.f32.mrf.mxu0
  %v9252 = vadd.f32 %v9091, %v9251
  %v9253 = vpop.f32.mrf.mxu0
  %v9254 = vadd.f32 %v9093, %v9253
  %9255 = vmatprep.mubr.f32.mxu0 %v8408
  %9256 = vmatmul.mubr.f32.gmra.mxu0 %v8376
  %v9257 = vpop.f32.mrf.mxu0
  %v9258 = vadd.f32 %v9097, %v9257
  %v9259 = vpop.f32.mrf.mxu0
  %v9260 = vadd.f32 %v9099, %v9259
  %9261 = vmatprep.mubr.f32.mxu0 %v8409
  %9262 = vmatmul.mubr.f32.gmra.mxu0 %v8377
  %v9263 = vpop.f32.mrf.mxu0
  %v9264 = vadd.f32 %v9103, %v9263
  %v9265 = vpop.f32.mrf.mxu0
  %v9266 = vadd.f32 %v9105, %v9265
  %9267 = vmatprep.mubr.f32.mxu0 %v8410
  %9268 = vmatmul.mubr.f32.gmra.mxu0 %v8378
  %v9269 = vpop.f32.mrf.mxu0
  %v9270 = vadd.f32 %v9109, %v9269
  %v9271 = vpop.f32.mrf.mxu0
  %v9272 = vadd.f32 %v9111, %v9271
  %9273 = vmatprep.mubr.f32.mxu0 %v8411
  %9274 = vmatmul.mubr.f32.gmra.mxu0 %v8379
  %v9275 = vpop.f32.mrf.mxu0
  %v9276 = vadd.f32 %v9115, %v9275
  %v9277 = vpop.f32.mrf.mxu0
  %v9278 = vadd.f32 %v9117, %v9277
  %9279 = vmatprep.mubr.f32.mxu0 %v8412
  %9280 = vmatmul.mubr.f32.gmra.mxu0 %v8380
  %v9281 = vpop.f32.mrf.mxu0
  %v9282 = vadd.f32 %v9121, %v9281
  %v9283 = vpop.f32.mrf.mxu0
  %v9284 = vadd.f32 %v9123, %v9283
  %9285 = vmatprep.mubr.f32.mxu0 %v8413
  %9286 = vmatmul.mubr.f32.gmra.mxu0 %v8381
  %v9287 = vpop.f32.mrf.mxu0
  %v9288 = vadd.f32 %v9127, %v9287
  %v9289 = vpop.f32.mrf.mxu0
  %v9290 = vadd.f32 %v9129, %v9289
  %9291 = vmatprep.mubr.f32.mxu0 %v8414
  %9292 = vmatmul.mubr.f32.gmra.mxu0 %v8382
  %v9293 = vpop.f32.mrf.mxu0
  %v9294 = vadd.f32 %v9133, %v9293
  %v9295 = vpop.f32.mrf.mxu0
  %v9296 = vadd.f32 %v9135, %v9295
  %9297 = vmatprep.mubr.f32.mxu0 %v8415
  %9298 = vmatmul.mubr.f32.gmra.mxu0 %v8383
  %v9299 = vpop.f32.mrf.mxu0
  %v9300 = vadd.f32 %v9139, %v9299
  %v9301 = vpop.f32.mrf.mxu0
  %v9302 = vadd.f32 %v9141, %v9301
  %9303 = vmatprep.mubr.f32.mxu0 %v8416
  %9304 = vmatmul.mubr.f32.gmra.mxu0 %v8384
  %v9305 = vpop.f32.mrf.mxu0
  %v9306 = vadd.f32 %v9145, %v9305
  %v9307 = vpop.f32.mrf.mxu0
  %v9308 = vadd.f32 %v9147, %v9307
  %9309 = vmatprep.mubr.f32.mxu0 %v8417
  %9310 = vmatmul.mubr.f32.gmra.mxu0 %v8385
  %v9311 = vpop.f32.mrf.mxu0
  %v9312 = vadd.f32 %v9151, %v9311
  %v9313 = vpop.f32.mrf.mxu0
  %v9314 = vadd.f32 %v9153, %v9313
  %9315 = vmatprep.mubr.f32.mxu0 %v8418
  %9316 = vmatmul.mubr.f32.gmra.mxu0 %v8386
  %v9317 = vpop.f32.mrf.mxu0
  %v9318 = vadd.f32 %v9157, %v9317
  %v9319 = vpop.f32.mrf.mxu0
  %v9320 = vadd.f32 %v9159, %v9319
  %9321 = vmatprep.mubr.f32.mxu0 %v8419
  %9322 = vmatmul.mubr.f32.gmra.mxu0 %v8387
  %v9323 = vpop.f32.mrf.mxu0
  %v9324 = vadd.f32 %v9163, %v9323
  %v9325 = vpop.f32.mrf.mxu0
  %v9326 = vadd.f32 %v9165, %v9325
  %9327 = vmatprep.mubr.f32.mxu0 %v8420
  %9328 = vmatmul.mubr.f32.gmra.mxu0 %v8388
  %v9329 = vpop.f32.mrf.mxu0
  %v9330 = vadd.f32 %v9169, %v9329
  %v9331 = vpop.f32.mrf.mxu0
  %v9332 = vadd.f32 %v9171, %v9331
  %9333 = vmatprep.mubr.f32.mxu0 %v8421
  %9334 = vmatmul.mubr.f32.gmra.mxu0 %v8389
  %v9335 = vpop.f32.mrf.mxu0
  %v9336 = vadd.f32 %v9175, %v9335
  %v9337 = vpop.f32.mrf.mxu0
  %v9338 = vadd.f32 %v9177, %v9337
  %9339 = vdwg.mxu0
  %9340 = vmatprep.subr.mxu0 %v7889
  %9341 = vmatpush1.msra.mxu0 %v7888
  %9342 = vmatprep.subr.mxu0 %v7887
  %9343 = vmatpush1.msra.mxu0 %v7886
  %9344 = vmatprep.subr.mxu0 %v7885
  %9345 = vmatpush1.msra.mxu0 %v7884
  %9346 = vmatprep.subr.mxu0 %v7883
  %9347 = vmatpush1.msra.mxu0 %v7882
  %9348 = vmatprep.subr.mxu0 %v7881
  %9349 = vmatpush1.msra.mxu0 %v7880
  %9350 = vmatprep.subr.mxu0 %v7879
  %9351 = vmatpush1.msra.mxu0 %v7878
  %9352 = vmatprep.subr.mxu0 %v7877
  %9353 = vmatpush1.msra.mxu0 %v7876
  %9354 = vmatprep.subr.mxu0 %v7875
  %9355 = vmatpush1.msra.mxu0 %v7874
  %9356 = vmatprep.subr.mxu0 %v7873
  %9357 = vmatpush1.msra.mxu0 %v7872
  %9358 = vmatprep.subr.mxu0 %v7871
  %9359 = vmatpush1.msra.mxu0 %v7870
  %9360 = vmatprep.subr.mxu0 %v7869
  %9361 = vmatpush1.msra.mxu0 %v7868
  %9362 = vmatprep.subr.mxu0 %v7867
  %9363 = vmatpush1.msra.mxu0 %v7866
  %9364 = vmatprep.subr.mxu0 %v7865
  %9365 = vmatpush1.msra.mxu0 %v7864
  %9366 = vmatprep.subr.mxu0 %v7863
  %9367 = vmatpush1.msra.mxu0 %v7862
  %9368 = vmatprep.subr.mxu0 %v7861
  %9369 = vmatpush1.msra.mxu0 %v7860
  %9370 = vmatprep.subr.mxu0 %v7859
  %9371 = vmatpush1.msra.mxu0 %v7858
  %9372 = vmatprep.subr.mxu0 0.0
  %9373 = vmatpush2.msra.mxu0 0.0
  %9374 = vmatprep.subr.mxu0 0.0
  %9375 = vmatpush2.msra.mxu0 0.0
  %9376 = vmatprep.subr.mxu0 0.0
  %9377 = vmatpush2.msra.mxu0 0.0
  %9378 = vmatprep.subr.mxu0 0.0
  %9379 = vmatpush2.msra.mxu0 0.0
  %9380 = vmatprep.subr.mxu0 %v7913
  %9381 = vmatpush2.msra.mxu0 %v7912
  %9382 = vmatprep.subr.mxu0 %v7911
  %9383 = vmatpush2.msra.mxu0 %v7910
  %9384 = vmatprep.subr.mxu0 %v7909
  %9385 = vmatpush2.msra.mxu0 %v7908
  %9386 = vmatprep.subr.mxu0 %v7907
  %9387 = vmatpush2.msra.mxu0 %v7906
  %9388 = vmatprep.subr.mxu0 %v7905
  %9389 = vmatpush2.msra.mxu0 %v7904
  %9390 = vmatprep.subr.mxu0 %v7903
  %9391 = vmatpush2.msra.mxu0 %v7902
  %9392 = vmatprep.subr.mxu0 %v7901
  %9393 = vmatpush2.msra.mxu0 %v7900
  %9394 = vmatprep.subr.mxu0 %v7899
  %9395 = vmatpush2.msra.mxu0 %v7898
  %9396 = vmatprep.subr.mxu0 %v7897
  %9397 = vmatpush2.msra.mxu0 %v7896
  %9398 = vmatprep.subr.mxu0 %v7895
  %9399 = vmatpush2.msra.mxu0 %v7894
  %9400 = vmatprep.subr.mxu0 %v7893
  %9401 = vmatpush2.msra.mxu0 %v7892
  %9402 = vmatprep.subr.mxu0 %v7891
  %9403 = vmatpush2.msra.mxu0 %v7890
  %9404 = vmatprep.mubr.f32.mxu0 %v8488
  %9405 = vmatmul.mubr.f32.gmra.mxu0 %v8438
  %v9406 = vpop.f32.mrf.mxu0
  %v9407 = vadd.f32 %v9246, %v9406
  %v9408 = vpop.f32.mrf.mxu0
  %v9409 = vadd.f32 %v9248, %v9408
  %9410 = vmatprep.mubr.f32.mxu0 %v8491
  %9411 = vmatmul.mubr.f32.gmra.mxu0 %v8439
  %v9412 = vpop.f32.mrf.mxu0
  %v9413 = vadd.f32 %v9252, %v9412
  %v9414 = vpop.f32.mrf.mxu0
  %v9415 = vadd.f32 %v9254, %v9414
  %9416 = vmatprep.mubr.f32.mxu0 %v8494
  %9417 = vmatmul.mubr.f32.gmra.mxu0 %v8440
  %v9418 = vpop.f32.mrf.mxu0
  %v9419 = vadd.f32 %v9258, %v9418
  %v9420 = vpop.f32.mrf.mxu0
  %v9421 = vadd.f32 %v9260, %v9420
  %9422 = vmatprep.mubr.f32.mxu0 %v8497
  %9423 = vmatmul.mubr.f32.gmra.mxu0 %v8441
  %v9424 = vpop.f32.mrf.mxu0
  %v9425 = vadd.f32 %v9264, %v9424
  %v9426 = vpop.f32.mrf.mxu0
  %v9427 = vadd.f32 %v9266, %v9426
  %9428 = vmatprep.mubr.f32.mxu0 %v8500
  %9429 = vmatmul.mubr.f32.gmra.mxu0 %v8442
  %v9430 = vpop.f32.mrf.mxu0
  %v9431 = vadd.f32 %v9270, %v9430
  %v9432 = vpop.f32.mrf.mxu0
  %v9433 = vadd.f32 %v9272, %v9432
  %9434 = vmatprep.mubr.f32.mxu0 %v8503
  %9435 = vmatmul.mubr.f32.gmra.mxu0 %v8443
  %v9436 = vpop.f32.mrf.mxu0
  %v9437 = vadd.f32 %v9276, %v9436
  %v9438 = vpop.f32.mrf.mxu0
  %v9439 = vadd.f32 %v9278, %v9438
  %9440 = vmatprep.mubr.f32.mxu0 %v8506
  %9441 = vmatmul.mubr.f32.gmra.mxu0 %v8444
  %v9442 = vpop.f32.mrf.mxu0
  %v9443 = vadd.f32 %v9282, %v9442
  %v9444 = vpop.f32.mrf.mxu0
  %v9445 = vadd.f32 %v9284, %v9444
  %9446 = vmatprep.mubr.f32.mxu0 %v8509
  %9447 = vmatmul.mubr.f32.gmra.mxu0 %v8445
  %v9448 = vpop.f32.mrf.mxu0
  %v9449 = vadd.f32 %v9288, %v9448
  %v9450 = vpop.f32.mrf.mxu0
  %v9451 = vadd.f32 %v9290, %v9450
  %9452 = vmatprep.mubr.f32.mxu0 %v8512
  %9453 = vmatmul.mubr.f32.gmra.mxu0 %v8446
  %v9454 = vpop.f32.mrf.mxu0
  %v9455 = vadd.f32 %v9294, %v9454
  %v9456 = vpop.f32.mrf.mxu0
  %v9457 = vadd.f32 %v9296, %v9456
  %9458 = vmatprep.mubr.f32.mxu0 %v8515
  %9459 = vmatmul.mubr.f32.gmra.mxu0 %v8447
  %v9460 = vpop.f32.mrf.mxu0
  %v9461 = vadd.f32 %v9300, %v9460
  %v9462 = vpop.f32.mrf.mxu0
  %v9463 = vadd.f32 %v9302, %v9462
  %9464 = vmatprep.mubr.f32.mxu0 %v8518
  %9465 = vmatmul.mubr.f32.gmra.mxu0 %v8448
  %v9466 = vpop.f32.mrf.mxu0
  %v9467 = vadd.f32 %v9306, %v9466
  %v9468 = vpop.f32.mrf.mxu0
  %v9469 = vadd.f32 %v9308, %v9468
  %9470 = vmatprep.mubr.f32.mxu0 %v8521
  %9471 = vmatmul.mubr.f32.gmra.mxu0 %v8449
  %v9472 = vpop.f32.mrf.mxu0
  %v9473 = vadd.f32 %v9312, %v9472
  %v9474 = vpop.f32.mrf.mxu0
  %v9475 = vadd.f32 %v9314, %v9474
  %9476 = vmatprep.mubr.f32.mxu0 %v8524
  %9477 = vmatmul.mubr.f32.gmra.mxu0 %v8450
  %v9478 = vpop.f32.mrf.mxu0
  %v9479 = vadd.f32 %v9318, %v9478
  %v9480 = vpop.f32.mrf.mxu0
  %v9481 = vadd.f32 %v9320, %v9480
  %9482 = vmatprep.mubr.f32.mxu0 %v8527
  %9483 = vmatmul.mubr.f32.gmra.mxu0 %v8451
  %v9484 = vpop.f32.mrf.mxu0
  %v9485 = vadd.f32 %v9324, %v9484
  %v9486 = vpop.f32.mrf.mxu0
  %v9487 = vadd.f32 %v9326, %v9486
  %9488 = vmatprep.mubr.f32.mxu0 %v8530
  %9489 = vmatmul.mubr.f32.gmra.mxu0 %v8452
  %v9490 = vpop.f32.mrf.mxu0
  %v9491 = vadd.f32 %v9330, %v9490
  %v9492 = vpop.f32.mrf.mxu0
  %v9493 = vadd.f32 %v9332, %v9492
  %9494 = vmatprep.mubr.f32.mxu0 %v8533
  %9495 = vmatmul.mubr.f32.gmra.mxu0 %v8453
  %v9496 = vpop.f32.mrf.mxu0
  %v9497 = vadd.f32 %v9336, %v9496
  %v9498 = vpop.f32.mrf.mxu0
  %v9499 = vadd.f32 %v9338, %v9498
  %9500 = vdwg.mxu0
  %p9501 = scmp.eq.s32.totalorder 0, 0
  // Predicated region
  $region18: #{tpu_custom_call.1} parent=0 // pred_check
    %p9502 = pneg %p9501
  $region19: #{tpu_custom_call.1} parent=0 // pred_check_branch
    %9504 = sbr.rel (%p9502) target = $region21
  $region20: #{tpu_custom_call.1} parent=0 // pred_region
    %9505 = vst [vmem:[%s4] sm:$0xff] %v9407
    %9506 = vst.msk [vmem:[%s4 + $0x8] sm:$0xff] %vm393, %v9409
    %9507 = vst [vmem:[%s4 + $0x10] sm:$0xff] %v9413
    %9508 = vst.msk [vmem:[%s4 + $0x18] sm:$0xff] %vm393, %v9415
    %9509 = vst [vmem:[%s4 + $0x20] sm:$0xff] %v9419
    %9510 = vst.msk [vmem:[%s4 + $0x28] sm:$0xff] %vm393, %v9421
    %9511 = vst [vmem:[%s4 + $0x30] sm:$0xff] %v9425
    %9512 = vst.msk [vmem:[%s4 + $0x38] sm:$0xff] %vm393, %v9427
    %9513 = vst [vmem:[%s4 + $0x40] sm:$0xff] %v9431
    %9514 = vst.msk [vmem:[%s4 + $0x48] sm:$0xff] %vm393, %v9433
    %9515 = vst [vmem:[%s4 + $0x50] sm:$0xff] %v9437
    %9516 = vst.msk [vmem:[%s4 + $0x58] sm:$0xff] %vm393, %v9439
    %9517 = vst [vmem:[%s4 + $0x60] sm:$0xff] %v9443
    %9518 = vst.msk [vmem:[%s4 + $0x68] sm:$0xff] %vm393, %v9445
    %9519 = vst [vmem:[%s4 + $0x70] sm:$0xff] %v9449
    %9520 = vst.msk [vmem:[%s4 + $0x78] sm:$0xff] %vm393, %v9451
    %9521 = vst [vmem:[%s4 + $0x80] sm:$0xff] %v9455
    %9522 = vst.msk [vmem:[%s4 + $0x88] sm:$0xff] %vm393, %v9457
    %9523 = vst [vmem:[%s4 + $0x90] sm:$0xff] %v9461
    %9524 = vst.msk [vmem:[%s4 + $0x98] sm:$0xff] %vm393, %v9463
    %9525 = vst [vmem:[%s4 + $0xa0] sm:$0xff] %v9467
    %9526 = vst.msk [vmem:[%s4 + $0xa8] sm:$0xff] %vm393, %v9469
    %9527 = vst [vmem:[%s4 + $0xb0] sm:$0xff] %v9473
    %9528 = vst.msk [vmem:[%s4 + $0xb8] sm:$0xff] %vm393, %v9475
    %9529 = vst [vmem:[%s4 + $0xc0] sm:$0xff] %v9479
    %9530 = vst.msk [vmem:[%s4 + $0xc8] sm:$0xff] %vm393, %v9481
    %9531 = vst [vmem:[%s4 + $0xd0] sm:$0xff] %v9485
    %9532 = vst.msk [vmem:[%s4 + $0xd8] sm:$0xff] %vm393, %v9487
    %9533 = vst [vmem:[%s4 + $0xe0] sm:$0xff] %v9491
    %9534 = vst.msk [vmem:[%s4 + $0xe8] sm:$0xff] %vm393, %v9493
    %9535 = vst [vmem:[%s4 + $0xf0] sm:$0xff] %v9497
    %9536 = vst.msk [vmem:[%s4 + $0xf8] sm:$0xff] %vm393, %v9499
  $region21: #{tpu_custom_call.1} parent=0 // pred_fallthru
    _
  %p9537 = scmp.gt.s32.totalorder 0, 0
  // Predicated region
  $region22: #{tpu_custom_call.1} parent=0 // pred_check
    %p9538 = pneg %p9537
  $region23: #{tpu_custom_call.1} parent=0 // pred_check_branch
    %9540 = sbr.rel (%p9538) target = $region25
  $region24: #{tpu_custom_call.1} parent=0 // pred_region
    %v9541 = vld [vmem:[%s4] sm:$0xff]
    %v9542 = vld [vmem:[%s4 + $0x8] sm:$0xff]
    %v9543 = vld [vmem:[%s4 + $0x10] sm:$0xff]
    %v9544 = vld [vmem:[%s4 + $0x18] sm:$0xff]
    %v9545 = vld [vmem:[%s4 + $0x20] sm:$0xff]
    %v9546 = vld [vmem:[%s4 + $0x28] sm:$0xff]
    %v9547 = vld [vmem:[%s4 + $0x30] sm:$0xff]
    %v9548 = vld [vmem:[%s4 + $0x38] sm:$0xff]
    %v9549 = vld [vmem:[%s4 + $0x40] sm:$0xff]
    %v9550 = vld [vmem:[%s4 + $0x48] sm:$0xff]
    %v9551 = vld [vmem:[%s4 + $0x50] sm:$0xff]
    %v9552 = vld [vmem:[%s4 + $0x58] sm:$0xff]
    %v9553 = vld [vmem:[%s4 + $0x60] sm:$0xff]
    %v9554 = vld [vmem:[%s4 + $0x68] sm:$0xff]
    %v9555 = vld [vmem:[%s4 + $0x70] sm:$0xff]
    %v9556 = vld [vmem:[%s4 + $0x78] sm:$0xff]
    %v9557 = vld [vmem:[%s4 + $0x80] sm:$0xff]
    %v9558 = vld [vmem:[%s4 + $0x88] sm:$0xff]
    %v9559 = vld [vmem:[%s4 + $0x90] sm:$0xff]
    %v9560 = vld [vmem:[%s4 + $0x98] sm:$0xff]
    %v9561 = vld [vmem:[%s4 + $0xa0] sm:$0xff]
    %v9562 = vld [vmem:[%s4 + $0xa8] sm:$0xff]
    %v9563 = vld [vmem:[%s4 + $0xb0] sm:$0xff]
    %v9564 = vld [vmem:[%s4 + $0xb8] sm:$0xff]
    %v9565 = vld [vmem:[%s4 + $0xc0] sm:$0xff]
    %v9566 = vld [vmem:[%s4 + $0xc8] sm:$0xff]
    %v9567 = vld [vmem:[%s4 + $0xd0] sm:$0xff]
    %v9568 = vld [vmem:[%s4 + $0xd8] sm:$0xff]
    %v9569 = vld [vmem:[%s4 + $0xe0] sm:$0xff]
    %v9570 = vld [vmem:[%s4 + $0xe8] sm:$0xff]
    %v9571 = vld [vmem:[%s4 + $0xf0] sm:$0xff]
    %v9572 = vld [vmem:[%s4 + $0xf8] sm:$0xff]
    %v9573 = vadd.f32 %v9541, %v9407
    %v9574 = vadd.f32 %v9542, %v9409
    %v9575 = vadd.f32 %v9543, %v9413
    %v9576 = vadd.f32 %v9544, %v9415
    %v9577 = vadd.f32 %v9545, %v9419
    %v9578 = vadd.f32 %v9546, %v9421
    %v9579 = vadd.f32 %v9547, %v9425
    %v9580 = vadd.f32 %v9548, %v9427
    %v9581 = vadd.f32 %v9549, %v9431
    %v9582 = vadd.f32 %v9550, %v9433
    %v9583 = vadd.f32 %v9551, %v9437
    %v9584 = vadd.f32 %v9552, %v9439
    %v9585 = vadd.f32 %v9553, %v9443
    %v9586 = vadd.f32 %v9554, %v9445
    %v9587 = vadd.f32 %v9555, %v9449
    %v9588 = vadd.f32 %v9556, %v9451
    %v9589 = vadd.f32 %v9557, %v9455
    %v9590 = vadd.f32 %v9558, %v9457
    %v9591 = vadd.f32 %v9559, %v9461
    %v9592 = vadd.f32 %v9560, %v9463
    %v9593 = vadd.f32 %v9561, %v9467
    %v9594 = vadd.f32 %v9562, %v9469
    %v9595 = vadd.f32 %v9563, %v9473
    %v9596 = vadd.f32 %v9564, %v9475
    %v9597 = vadd.f32 %v9565, %v9479
    %v9598 = vadd.f32 %v9566, %v9481
    %v9599 = vadd.f32 %v9567, %v9485
    %v9600 = vadd.f32 %v9568, %v9487
    %v9601 = vadd.f32 %v9569, %v9491
    %v9602 = vadd.f32 %v9570, %v9493
    %v9603 = vadd.f32 %v9571, %v9497
    %v9604 = vadd.f32 %v9572, %v9499
    %9605 = vst [vmem:[%s4] sm:$0xff] %v9573
    %9606 = vst.msk [vmem:[%s4 + $0x8] sm:$0xff] %vm393, %v9574
    %9607 = vst [vmem:[%s4 + $0x10] sm:$0xff] %v9575
    %9608 = vst.msk [vmem:[%s4 + $0x18] sm:$0xff] %vm393, %v9576
    %9609 = vst [vmem:[%s4 + $0x20] sm:$0xff] %v9577
    %9610 = vst.msk [vmem:[%s4 + $0x28] sm:$0xff] %vm393, %v9578
    %9611 = vst [vmem:[%s4 + $0x30] sm:$0xff] %v9579
    %9612 = vst.msk [vmem:[%s4 + $0x38] sm:$0xff] %vm393, %v9580
    %9613 = vst [vmem:[%s4 + $0x40] sm:$0xff] %v9581
    %9614 = vst.msk [vmem:[%s4 + $0x48] sm:$0xff] %vm393, %v9582
    %9615 = vst [vmem:[%s4 + $0x50] sm:$0xff] %v9583
    %9616 = vst.msk [vmem:[%s4 + $0x58] sm:$0xff] %vm393, %v9584
    %9617 = vst [vmem:[%s4 + $0x60] sm:$0xff] %v9585
    %9618 = vst.msk [vmem:[%s4 + $0x68] sm:$0xff] %vm393, %v9586
    %9619 = vst [vmem:[%s4 + $0x70] sm:$0xff] %v9587
    %9620 = vst.msk [vmem:[%s4 + $0x78] sm:$0xff] %vm393, %v9588
    %9621 = vst [vmem:[%s4 + $0x80] sm:$0xff] %v9589
    %9622 = vst.msk [vmem:[%s4 + $0x88] sm:$0xff] %vm393, %v9590
    %9623 = vst [vmem:[%s4 + $0x90] sm:$0xff] %v9591
    %9624 = vst.msk [vmem:[%s4 + $0x98] sm:$0xff] %vm393, %v9592
    %9625 = vst [vmem:[%s4 + $0xa0] sm:$0xff] %v9593
    %9626 = vst.msk [vmem:[%s4 + $0xa8] sm:$0xff] %vm393, %v9594
    %9627 = vst [vmem:[%s4 + $0xb0] sm:$0xff] %v9595
    %9628 = vst.msk [vmem:[%s4 + $0xb8] sm:$0xff] %vm393, %v9596
    %9629 = vst [vmem:[%s4 + $0xc0] sm:$0xff] %v9597
    %9630 = vst.msk [vmem:[%s4 + $0xc8] sm:$0xff] %vm393, %v9598
    %9631 = vst [vmem:[%s4 + $0xd0] sm:$0xff] %v9599
    %9632 = vst.msk [vmem:[%s4 + $0xd8] sm:$0xff] %vm393, %v9600
    %9633 = vst [vmem:[%s4 + $0xe0] sm:$0xff] %v9601
    %9634 = vst.msk [vmem:[%s4 + $0xe8] sm:$0xff] %vm393, %v9602
    %9635 = vst [vmem:[%s4 + $0xf0] sm:$0xff] %v9603
    %9636 = vst.msk [vmem:[%s4 + $0xf8] sm:$0xff] %vm393, %v9604
  $region25: #{tpu_custom_call.1} parent=0 // pred_fallthru
    _
  // Predicated region
  $region26: #{tpu_custom_call.1} parent=0 // pred_check
    %p9637 = pneg %p9501
  $region27: #{tpu_custom_call.1} parent=0 // pred_check_branch
    %9639 = sbr.rel (%p9637) target = $region29
  $region28: #{tpu_custom_call.1} parent=0 // pred_region
    %v9640 = vld [vmem:[%s4] sm:$0xff]
    %v9641 = vld [vmem:[%s4 + $0x8] sm:$0xff]
    %v9642 = vld [vmem:[%s4 + $0x10] sm:$0xff]
    %v9643 = vld [vmem:[%s4 + $0x18] sm:$0xff]
    %v9644 = vld [vmem:[%s4 + $0x20] sm:$0xff]
    %v9645 = vld [vmem:[%s4 + $0x28] sm:$0xff]
    %v9646 = vld [vmem:[%s4 + $0x30] sm:$0xff]
    %v9647 = vld [vmem:[%s4 + $0x38] sm:$0xff]
    %v9648 = vld [vmem:[%s4 + $0x40] sm:$0xff]
    %v9649 = vld [vmem:[%s4 + $0x48] sm:$0xff]
    %v9650 = vld [vmem:[%s4 + $0x50] sm:$0xff]
    %v9651 = vld [vmem:[%s4 + $0x58] sm:$0xff]
    %v9652 = vld [vmem:[%s4 + $0x60] sm:$0xff]
    %v9653 = vld [vmem:[%s4 + $0x68] sm:$0xff]
    %v9654 = vld [vmem:[%s4 + $0x70] sm:$0xff]
    %v9655 = vld [vmem:[%s4 + $0x78] sm:$0xff]
    %v9656 = vld [vmem:[%s4 + $0x80] sm:$0xff]
    %v9657 = vld [vmem:[%s4 + $0x88] sm:$0xff]
    %v9658 = vld [vmem:[%s4 + $0x90] sm:$0xff]
    %v9659 = vld [vmem:[%s4 + $0x98] sm:$0xff]
    %v9660 = vld [vmem:[%s4 + $0xa0] sm:$0xff]
    %v9661 = vld [vmem:[%s4 + $0xa8] sm:$0xff]
    %v9662 = vld [vmem:[%s4 + $0xb0] sm:$0xff]
    %v9663 = vld [vmem:[%s4 + $0xb8] sm:$0xff]
    %v9664 = vld [vmem:[%s4 + $0xc0] sm:$0xff]
    %v9665 = vld [vmem:[%s4 + $0xc8] sm:$0xff]
    %v9666 = vld [vmem:[%s4 + $0xd0] sm:$0xff]
    %v9667 = vld [vmem:[%s4 + $0xd8] sm:$0xff]
    %v9668 = vld [vmem:[%s4 + $0xe0] sm:$0xff]
    %v9669 = vld [vmem:[%s4 + $0xe8] sm:$0xff]
    %v9670 = vld [vmem:[%s4 + $0xf0] sm:$0xff]
    %v9671 = vld [vmem:[%s4 + $0xf8] sm:$0xff]
    %v9672 = vsel %vm393, %v9641, 0.0
    %v9673 = vadd.f32 %v9640, %v9672
    %9674 = vadd.xlane.f32.xlu0 %v9673
    %v9675 = vpop.xlane.xlu0 %9674
    %v9676 = vsel %vm393, %v9643, 0.0
    %v9677 = vadd.f32 %v9642, %v9676
    %9678 = vadd.xlane.f32.xlu0 %v9677
    %v9679 = vpop.xlane.xlu0 %9678
    %v9680 = vsel %vm393, %v9645, 0.0
    %v9681 = vadd.f32 %v9644, %v9680
    %9682 = vadd.xlane.f32.xlu0 %v9681
    %v9683 = vpop.xlane.xlu0 %9682
    %v9684 = vsel %vm393, %v9647, 0.0
    %v9685 = vadd.f32 %v9646, %v9684
    %9686 = vadd.xlane.f32.xlu0 %v9685
    %v9687 = vpop.xlane.xlu0 %9686
    %v9688 = vsel %vm393, %v9649, 0.0
    %v9689 = vadd.f32 %v9648, %v9688
    %9690 = vadd.xlane.f32.xlu0 %v9689
    %v9691 = vpop.xlane.xlu0 %9690
    %v9692 = vsel %vm393, %v9651, 0.0
    %v9693 = vadd.f32 %v9650, %v9692
    %9694 = vadd.xlane.f32.xlu0 %v9693
    %v9695 = vpop.xlane.xlu0 %9694
    %v9696 = vsel %vm393, %v9653, 0.0
    %v9697 = vadd.f32 %v9652, %v9696
    %9698 = vadd.xlane.f32.xlu0 %v9697
    %v9699 = vpop.xlane.xlu0 %9698
    %v9700 = vsel %vm393, %v9655, 0.0
    %v9701 = vadd.f32 %v9654, %v9700
    %9702 = vadd.xlane.f32.xlu0 %v9701
    %v9703 = vpop.xlane.xlu0 %9702
    %v9704 = vsel %vm393, %v9657, 0.0
    %v9705 = vadd.f32 %v9656, %v9704
    %9706 = vadd.xlane.f32.xlu0 %v9705
    %v9707 = vpop.xlane.xlu0 %9706
    %v9708 = vsel %vm393, %v9659, 0.0
    %v9709 = vadd.f32 %v9658, %v9708
    %9710 = vadd.xlane.f32.xlu0 %v9709
    %v9711 = vpop.xlane.xlu0 %9710
    %v9712 = vsel %vm393, %v9661, 0.0
    %v9713 = vadd.f32 %v9660, %v9712
    %9714 = vadd.xlane.f32.xlu0 %v9713
    %v9715 = vpop.xlane.xlu0 %9714
    %v9716 = vsel %vm393, %v9663, 0.0
    %v9717 = vadd.f32 %v9662, %v9716
    %9718 = vadd.xlane.f32.xlu0 %v9717
    %v9719 = vpop.xlane.xlu0 %9718
    %v9720 = vsel %vm393, %v9665, 0.0
    %v9721 = vadd.f32 %v9664, %v9720
    %9722 = vadd.xlane.f32.xlu0 %v9721
    %v9723 = vpop.xlane.xlu0 %9722
    %v9724 = vsel %vm393, %v9667, 0.0
    %v9725 = vadd.f32 %v9666, %v9724
    %9726 = vadd.xlane.f32.xlu0 %v9725
    %v9727 = vpop.xlane.xlu0 %9726
    %v9728 = vsel %vm393, %v9669, 0.0
    %v9729 = vadd.f32 %v9668, %v9728
    %9730 = vadd.xlane.f32.xlu0 %v9729
    %v9731 = vpop.xlane.xlu0 %9730
    %v9732 = vsel %vm393, %v9671, 0.0
    %v9733 = vadd.f32 %v9670, %v9732
    %9734 = vadd.xlane.f32.xlu0 %v9733
    %v9735 = vpop.xlane.xlu0 %9734
    %v9736 = vmul.f32 %v9675, 0.0051020407
    %v9737 = vmul.f32 %v9679, 0.0051020407
    %v9738 = vmul.f32 %v9683, 0.0051020407
    %v9739 = vmul.f32 %v9687, 0.0051020407
    %v9740 = vmul.f32 %v9691, 0.0051020407
    %v9741 = vmul.f32 %v9695, 0.0051020407
    %v9742 = vmul.f32 %v9699, 0.0051020407
    %v9743 = vmul.f32 %v9703, 0.0051020407
    %v9744 = vmul.f32 %v9707, 0.0051020407
    %v9745 = vmul.f32 %v9711, 0.0051020407
    %v9746 = vmul.f32 %v9715, 0.0051020407
    %v9747 = vmul.f32 %v9719, 0.0051020407
    %v9748 = vmul.f32 %v9723, 0.0051020407
    %v9749 = vmul.f32 %v9727, 0.0051020407
    %v9750 = vmul.f32 %v9731, 0.0051020407
    %v9751 = vmul.f32 %v9735, 0.0051020407
    %v9752 = vmul.f32 %v9640, %v9640
    %v9753 = vmul.f32 %v9641, %v9641
    %v9754 = vmul.f32 %v9642, %v9642
    %v9755 = vmul.f32 %v9643, %v9643
    %v9756 = vmul.f32 %v9644, %v9644
    %v9757 = vmul.f32 %v9645, %v9645
    %v9758 = vmul.f32 %v9646, %v9646
    %v9759 = vmul.f32 %v9647, %v9647
    %v9760 = vmul.f32 %v9648, %v9648
    %v9761 = vmul.f32 %v9649, %v9649
    %v9762 = vmul.f32 %v9650, %v9650
    %v9763 = vmul.f32 %v9651, %v9651
    %v9764 = vmul.f32 %v9652, %v9652
    %v9765 = vmul.f32 %v9653, %v9653
    %v9766 = vmul.f32 %v9654, %v9654
    %v9767 = vmul.f32 %v9655, %v9655
    %v9768 = vmul.f32 %v9656, %v9656
    %v9769 = vmul.f32 %v9657, %v9657
    %v9770 = vmul.f32 %v9658, %v9658
    %v9771 = vmul.f32 %v9659, %v9659
    %v9772 = vmul.f32 %v9660, %v9660
    %v9773 = vmul.f32 %v9661, %v9661
    %v9774 = vmul.f32 %v9662, %v9662
    %v9775 = vmul.f32 %v9663, %v9663
    %v9776 = vmul.f32 %v9664, %v9664
    %v9777 = vmul.f32 %v9665, %v9665
    %v9778 = vmul.f32 %v9666, %v9666
    %v9779 = vmul.f32 %v9667, %v9667
    %v9780 = vmul.f32 %v9668, %v9668
    %v9781 = vmul.f32 %v9669, %v9669
    %v9782 = vmul.f32 %v9670, %v9670
    %v9783 = vmul.f32 %v9671, %v9671
    %v9784 = vsel %vm393, %v9753, 0.0
    %v9785 = vadd.f32 %v9752, %v9784
    %9786 = vadd.xlane.f32.xlu0 %v9785
    %v9787 = vpop.xlane.xlu0 %9786
    %v9788 = vsel %vm393, %v9755, 0.0
    %v9789 = vadd.f32 %v9754, %v9788
    %9790 = vadd.xlane.f32.xlu0 %v9789
    %v9791 = vpop.xlane.xlu0 %9790
    %v9792 = vsel %vm393, %v9757, 0.0
    %v9793 = vadd.f32 %v9756, %v9792
    %9794 = vadd.xlane.f32.xlu0 %v9793
    %v9795 = vpop.xlane.xlu0 %9794
    %v9796 = vsel %vm393, %v9759, 0.0
    %v9797 = vadd.f32 %v9758, %v9796
    %9798 = vadd.xlane.f32.xlu0 %v9797
    %v9799 = vpop.xlane.xlu0 %9798
    %v9800 = vsel %vm393, %v9761, 0.0
    %v9801 = vadd.f32 %v9760, %v9800
    %9802 = vadd.xlane.f32.xlu0 %v9801
    %v9803 = vpop.xlane.xlu0 %9802
    %v9804 = vsel %vm393, %v9763, 0.0
    %v9805 = vadd.f32 %v9762, %v9804
    %9806 = vadd.xlane.f32.xlu0 %v9805
    %v9807 = vpop.xlane.xlu0 %9806
    %v9808 = vsel %vm393, %v9765, 0.0
    %v9809 = vadd.f32 %v9764, %v9808
    %9810 = vadd.xlane.f32.xlu0 %v9809
    %v9811 = vpop.xlane.xlu0 %9810
    %v9812 = vsel %vm393, %v9767, 0.0
    %v9813 = vadd.f32 %v9766, %v9812
    %9814 = vadd.xlane.f32.xlu0 %v9813
    %v9815 = vpop.xlane.xlu0 %9814
    %v9816 = vsel %vm393, %v9769, 0.0
    %v9817 = vadd.f32 %v9768, %v9816
    %9818 = vadd.xlane.f32.xlu0 %v9817
    %v9819 = vpop.xlane.xlu0 %9818
    %v9820 = vsel %vm393, %v9771, 0.0
    %v9821 = vadd.f32 %v9770, %v9820
    %9822 = vadd.xlane.f32.xlu0 %v9821
    %v9823 = vpop.xlane.xlu0 %9822
    %v9824 = vsel %vm393, %v9773, 0.0
    %v9825 = vadd.f32 %v9772, %v9824
    %9826 = vadd.xlane.f32.xlu0 %v9825
    %v9827 = vpop.xlane.xlu0 %9826
    %v9828 = vsel %vm393, %v9775, 0.0
    %v9829 = vadd.f32 %v9774, %v9828
    %9830 = vadd.xlane.f32.xlu0 %v9829
    %v9831 = vpop.xlane.xlu0 %9830
    %v9832 = vsel %vm393, %v9777, 0.0
    %v9833 = vadd.f32 %v9776, %v9832
    %9834 = vadd.xlane.f32.xlu0 %v9833
    %v9835 = vpop.xlane.xlu0 %9834
    %v9836 = vsel %vm393, %v9779, 0.0
    %v9837 = vadd.f32 %v9778, %v9836
    %9838 = vadd.xlane.f32.xlu0 %v9837
    %v9839 = vpop.xlane.xlu0 %9838
    %v9840 = vsel %vm393, %v9781, 0.0
    %v9841 = vadd.f32 %v9780, %v9840
    %9842 = vadd.xlane.f32.xlu0 %v9841
    %v9843 = vpop.xlane.xlu0 %9842
    %v9844 = vsel %vm393, %v9783, 0.0
    %v9845 = vadd.f32 %v9782, %v9844
    %9846 = vadd.xlane.f32.xlu0 %v9845
    %v9847 = vpop.xlane.xlu0 %9846
    %v9848 = vmul.f32 %v9787, 0.0051020407
    %v9849 = vmul.f32 %v9791, 0.0051020407
    %v9850 = vmul.f32 %v9795, 0.0051020407
    %v9851 = vmul.f32 %v9799, 0.0051020407
    %v9852 = vmul.f32 %v9803, 0.0051020407
    %v9853 = vmul.f32 %v9807, 0.0051020407
    %v9854 = vmul.f32 %v9811, 0.0051020407
    %v9855 = vmul.f32 %v9815, 0.0051020407
    %v9856 = vmul.f32 %v9819, 0.0051020407
    %v9857 = vmul.f32 %v9823, 0.0051020407
    %v9858 = vmul.f32 %v9827, 0.0051020407
    %v9859 = vmul.f32 %v9831, 0.0051020407
    %v9860 = vmul.f32 %v9835, 0.0051020407
    %v9861 = vmul.f32 %v9839, 0.0051020407
    %v9862 = vmul.f32 %v9843, 0.0051020407
    %v9863 = vmul.f32 %v9847, 0.0051020407
    %v9864 = vmul.f32 %v9736, %v9736
    %v9865 = vmul.f32 %v9737, %v9737
    %v9866 = vmul.f32 %v9738, %v9738
    %v9867 = vmul.f32 %v9739, %v9739
    %v9868 = vmul.f32 %v9740, %v9740
    %v9869 = vmul.f32 %v9741, %v9741
    %v9870 = vmul.f32 %v9742, %v9742
    %v9871 = vmul.f32 %v9743, %v9743
    %v9872 = vmul.f32 %v9744, %v9744
    %v9873 = vmul.f32 %v9745, %v9745
    %v9874 = vmul.f32 %v9746, %v9746
    %v9875 = vmul.f32 %v9747, %v9747
    %v9876 = vmul.f32 %v9748, %v9748
    %v9877 = vmul.f32 %v9749, %v9749
    %v9878 = vmul.f32 %v9750, %v9750
    %v9879 = vmul.f32 %v9751, %v9751
    %v9880 = vsub.f32 %v9848, %v9864
    %v9881 = vsub.f32 %v9849, %v9865
    %v9882 = vsub.f32 %v9850, %v9866
    %v9883 = vsub.f32 %v9851, %v9867
    %v9884 = vsub.f32 %v9852, %v9868
    %v9885 = vsub.f32 %v9853, %v9869
    %v9886 = vsub.f32 %v9854, %v9870
    %v9887 = vsub.f32 %v9855, %v9871
    %v9888 = vsub.f32 %v9856, %v9872
    %v9889 = vsub.f32 %v9857, %v9873
    %v9890 = vsub.f32 %v9858, %v9874
    %v9891 = vsub.f32 %v9859, %v9875
    %v9892 = vsub.f32 %v9860, %v9876
    %v9893 = vsub.f32 %v9861, %v9877
    %v9894 = vsub.f32 %v9862, %v9878
    %v9895 = vsub.f32 %v9863, %v9879
    %v9896 = vld [vmem:[%s3] sm:$0xff]
    %v9897 = vld [vmem:[%s3 + $0x8] sm:$0xff]
    %v9898 = vld [vmem:[%s3 + $0x10] sm:$0xff]
    %v9899 = vld [vmem:[%s3 + $0x18] sm:$0xff]
    %v9900 = vld [vmem:[%s3 + $0x20] sm:$0xff]
    %v9901 = vld [vmem:[%s3 + $0x28] sm:$0xff]
    %v9902 = vld [vmem:[%s3 + $0x30] sm:$0xff]
    %v9903 = vld [vmem:[%s3 + $0x38] sm:$0xff]
    %v9904 = vld [vmem:[%s3 + $0x40] sm:$0xff]
    %v9905 = vld [vmem:[%s3 + $0x48] sm:$0xff]
    %v9906 = vld [vmem:[%s3 + $0x50] sm:$0xff]
    %v9907 = vld [vmem:[%s3 + $0x58] sm:$0xff]
    %v9908 = vld [vmem:[%s3 + $0x60] sm:$0xff]
    %v9909 = vld [vmem:[%s3 + $0x68] sm:$0xff]
    %v9910 = vld [vmem:[%s3 + $0x70] sm:$0xff]
    %v9911 = vld [vmem:[%s3 + $0x78] sm:$0xff]
    %v9912 = vadd.f32 %v9880, 1e-05
    %v9913 = vadd.f32 %v9881, 1e-05
    %v9914 = vadd.f32 %v9882, 1e-05
    %v9915 = vadd.f32 %v9883, 1e-05
    %v9916 = vadd.f32 %v9884, 1e-05
    %v9917 = vadd.f32 %v9885, 1e-05
    %v9918 = vadd.f32 %v9886, 1e-05
    %v9919 = vadd.f32 %v9887, 1e-05
    %v9920 = vadd.f32 %v9888, 1e-05
    %v9921 = vadd.f32 %v9889, 1e-05
    %v9922 = vadd.f32 %v9890, 1e-05
    %v9923 = vadd.f32 %v9891, 1e-05
    %v9924 = vadd.f32 %v9892, 1e-05
    %v9925 = vadd.f32 %v9893, 1e-05
    %v9926 = vadd.f32 %v9894, 1e-05
    %v9927 = vadd.f32 %v9895, 1e-05
    %v9928 = vrsqrt.pop %v9912
    %v9929 = vrsqrt.pop %v9913
    %v9930 = vrsqrt.pop %v9914
    %v9931 = vrsqrt.pop %v9915
    %v9932 = vrsqrt.pop %v9916
    %v9933 = vrsqrt.pop %v9917
    %v9934 = vrsqrt.pop %v9918
    %v9935 = vrsqrt.pop %v9919
    %v9936 = vrsqrt.pop %v9920
    %v9937 = vrsqrt.pop %v9921
    %v9938 = vrsqrt.pop %v9922
    %v9939 = vrsqrt.pop %v9923
    %v9940 = vrsqrt.pop %v9924
    %v9941 = vrsqrt.pop %v9925
    %v9942 = vrsqrt.pop %v9926
    %v9943 = vrsqrt.pop %v9927
    %v9944 = vmul.f32 %v9896, %v9928
    %v9945 = vmul.f32 %v9897, %v9929
    %v9946 = vmul.f32 %v9898, %v9930
    %v9947 = vmul.f32 %v9899, %v9931
    %v9948 = vmul.f32 %v9900, %v9932
    %v9949 = vmul.f32 %v9901, %v9933
    %v9950 = vmul.f32 %v9902, %v9934
    %v9951 = vmul.f32 %v9903, %v9935
    %v9952 = vmul.f32 %v9904, %v9936
    %v9953 = vmul.f32 %v9905, %v9937
    %v9954 = vmul.f32 %v9906, %v9938
    %v9955 = vmul.f32 %v9907, %v9939
    %v9956 = vmul.f32 %v9908, %v9940
    %v9957 = vmul.f32 %v9909, %v9941
    %v9958 = vmul.f32 %v9910, %v9942
    %v9959 = vmul.f32 %v9911, %v9943
    %v9960 = vmul.f32 %v9736, %v9944
    %v9961 = vmul.f32 %v9737, %v9945
    %v9962 = vmul.f32 %v9738, %v9946
    %v9963 = vmul.f32 %v9739, %v9947
    %v9964 = vmul.f32 %v9740, %v9948
    %v9965 = vmul.f32 %v9741, %v9949
    %v9966 = vmul.f32 %v9742, %v9950
    %v9967 = vmul.f32 %v9743, %v9951
    %v9968 = vmul.f32 %v9744, %v9952
    %v9969 = vmul.f32 %v9745, %v9953
    %v9970 = vmul.f32 %v9746, %v9954
    %v9971 = vmul.f32 %v9747, %v9955
    %v9972 = vmul.f32 %v9748, %v9956
    %v9973 = vmul.f32 %v9749, %v9957
    %v9974 = vmul.f32 %v9750, %v9958
    %v9975 = vmul.f32 %v9751, %v9959
    %9992 = vrot.lane.b32.xlu0 %v9960, 1
    %v9993 = vpop.permute.xlu0 %9992
    %9994 = vrot.lane.b32.xlu0 %v9961, 1
    %v9995 = vpop.permute.xlu0 %9994
    %9996 = vrot.lane.b32.xlu0 %v9962, 1
    %v9997 = vpop.permute.xlu0 %9996
    %9998 = vrot.lane.b32.xlu0 %v9963, 1
    %v9999 = vpop.permute.xlu0 %9998
    %10000 = vrot.lane.b32.xlu0 %v9964, 1
    %v10001 = vpop.permute.xlu0 %10000
    %10002 = vrot.lane.b32.xlu0 %v9965, 1
    %v10003 = vpop.permute.xlu0 %10002
    %10004 = vrot.lane.b32.xlu0 %v9966, 1
    %v10005 = vpop.permute.xlu0 %10004
    %10006 = vrot.lane.b32.xlu0 %v9967, 1
    %v10007 = vpop.permute.xlu0 %10006
    %10008 = vrot.lane.b32.xlu0 %v9968, 1
    %v10009 = vpop.permute.xlu0 %10008
    %10010 = vrot.lane.b32.xlu0 %v9969, 1
    %v10011 = vpop.permute.xlu0 %10010
    %10012 = vrot.lane.b32.xlu0 %v9970, 1
    %v10013 = vpop.permute.xlu0 %10012
    %10014 = vrot.lane.b32.xlu0 %v9971, 1
    %v10015 = vpop.permute.xlu0 %10014
    %10016 = vrot.lane.b32.xlu0 %v9972, 1
    %v10017 = vpop.permute.xlu0 %10016
    %10018 = vrot.lane.b32.xlu0 %v9973, 1
    %v10019 = vpop.permute.xlu0 %10018
    %10020 = vrot.lane.b32.xlu0 %v9974, 1
    %v10021 = vpop.permute.xlu0 %10020
    %10022 = vrot.lane.b32.xlu0 %v9975, 1
    %v10023 = vpop.permute.xlu0 %10022
    %v10040 = vsub.f32 %v9896, %v9993
    %v10041 = vsub.f32 %v9897, %v9995
    %v10042 = vsub.f32 %v9898, %v9997
    %v10043 = vsub.f32 %v9899, %v9999
    %v10044 = vsub.f32 %v9900, %v10001
    %v10045 = vsub.f32 %v9901, %v10003
    %v10046 = vsub.f32 %v9902, %v10005
    %v10047 = vsub.f32 %v9903, %v10007
    %v10048 = vsub.f32 %v9904, %v10009
    %v10049 = vsub.f32 %v9905, %v10011
    %v10050 = vsub.f32 %v9906, %v10013
    %v10051 = vsub.f32 %v9907, %v10015
    %v10052 = vsub.f32 %v9908, %v10017
    %v10053 = vsub.f32 %v9909, %v10019
    %v10054 = vsub.f32 %v9910, %v10021
    %v10055 = vsub.f32 %v9911, %v10023
    %10057 = vset.pattern.permute.xlu0 0
    %10058 = vperm.xlu0 %10057, %v9944
    %v10059 = vpop.permute.xlu0 %10058
    %10062 = vset.pattern.permute.xlu0 0
    %10063 = vperm.xlu0 %10062, %v9945
    %v10064 = vpop.permute.xlu0 %10063
    %10067 = vset.pattern.permute.xlu0 0
    %10068 = vperm.xlu0 %10067, %v9946
    %v10069 = vpop.permute.xlu0 %10068
    %10072 = vset.pattern.permute.xlu0 0
    %10073 = vperm.xlu0 %10072, %v9947
    %v10074 = vpop.permute.xlu0 %10073
    %10077 = vset.pattern.permute.xlu0 0
    %10078 = vperm.xlu0 %10077, %v9948
    %v10079 = vpop.permute.xlu0 %10078
    %10082 = vset.pattern.permute.xlu0 0
    %10083 = vperm.xlu0 %10082, %v9949
    %v10084 = vpop.permute.xlu0 %10083
    %10087 = vset.pattern.permute.xlu0 0
    %10088 = vperm.xlu0 %10087, %v9950
    %v10089 = vpop.permute.xlu0 %10088
    %10092 = vset.pattern.permute.xlu0 0
    %10093 = vperm.xlu0 %10092, %v9951
    %v10094 = vpop.permute.xlu0 %10093
    %10097 = vset.pattern.permute.xlu0 0
    %10098 = vperm.xlu0 %10097, %v9952
    %v10099 = vpop.permute.xlu0 %10098
    %10102 = vset.pattern.permute.xlu0 0
    %10103 = vperm.xlu0 %10102, %v9953
    %v10104 = vpop.permute.xlu0 %10103
    %10107 = vset.pattern.permute.xlu0 0
    %10108 = vperm.xlu0 %10107, %v9954
    %v10109 = vpop.permute.xlu0 %10108
    %10112 = vset.pattern.permute.xlu0 0
    %10113 = vperm.xlu0 %10112, %v9955
    %v10114 = vpop.permute.xlu0 %10113
    %10117 = vset.pattern.permute.xlu0 0
    %10118 = vperm.xlu0 %10117, %v9956
    %v10119 = vpop.permute.xlu0 %10118
    %10122 = vset.pattern.permute.xlu0 0
    %10123 = vperm.xlu0 %10122, %v9957
    %v10124 = vpop.permute.xlu0 %10123
    %10127 = vset.pattern.permute.xlu0 0
    %10128 = vperm.xlu0 %10127, %v9958
    %v10129 = vpop.permute.xlu0 %10128
    %10132 = vset.pattern.permute.xlu0 0
    %10133 = vperm.xlu0 %10132, %v9959
    %v10134 = vpop.permute.xlu0 %10133
    %v10136 = vmul.f32 %v9640, %v10059
    %v10137 = vmul.f32 %v9641, %v10059
    %v10138 = vmul.f32 %v9642, %v10064
    %v10139 = vmul.f32 %v9643, %v10064
    %v10140 = vmul.f32 %v9644, %v10069
    %v10141 = vmul.f32 %v9645, %v10069
    %v10142 = vmul.f32 %v9646, %v10074
    %v10143 = vmul.f32 %v9647, %v10074
    %v10144 = vmul.f32 %v9648, %v10079
    %v10145 = vmul.f32 %v9649, %v10079
    %v10146 = vmul.f32 %v9650, %v10084
    %v10147 = vmul.f32 %v9651, %v10084
    %v10148 = vmul.f32 %v9652, %v10089
    %v10149 = vmul.f32 %v9653, %v10089
    %v10150 = vmul.f32 %v9654, %v10094
    %v10151 = vmul.f32 %v9655, %v10094
    %v10152 = vmul.f32 %v9656, %v10099
    %v10153 = vmul.f32 %v9657, %v10099
    %v10154 = vmul.f32 %v9658, %v10104
    %v10155 = vmul.f32 %v9659, %v10104
    %v10156 = vmul.f32 %v9660, %v10109
    %v10157 = vmul.f32 %v9661, %v10109
    %v10158 = vmul.f32 %v9662, %v10114
    %v10159 = vmul.f32 %v9663, %v10114
    %v10160 = vmul.f32 %v9664, %v10119
    %v10161 = vmul.f32 %v9665, %v10119
    %v10162 = vmul.f32 %v9666, %v10124
    %v10163 = vmul.f32 %v9667, %v10124
    %v10164 = vmul.f32 %v9668, %v10129
    %v10165 = vmul.f32 %v9669, %v10129
    %v10166 = vmul.f32 %v9670, %v10134
    %v10167 = vmul.f32 %v9671, %v10134
    %10169 = vset.pattern.permute.xlu0 1
    %10170 = vperm.xlu0 %10169, %v10040
    %v10171 = vpop.permute.xlu0 %10170
    %10174 = vset.pattern.permute.xlu0 1
    %10175 = vperm.xlu0 %10174, %v10041
    %v10176 = vpop.permute.xlu0 %10175
    %10179 = vset.pattern.permute.xlu0 1
    %10180 = vperm.xlu0 %10179, %v10042
    %v10181 = vpop.permute.xlu0 %10180
    %10184 = vset.pattern.permute.xlu0 1
    %10185 = vperm.xlu0 %10184, %v10043
    %v10186 = vpop.permute.xlu0 %10185
    %10189 = vset.pattern.permute.xlu0 1
    %10190 = vperm.xlu0 %10189, %v10044
    %v10191 = vpop.permute.xlu0 %10190
    %10194 = vset.pattern.permute.xlu0 1
    %10195 = vperm.xlu0 %10194, %v10045
    %v10196 = vpop.permute.xlu0 %10195
    %10199 = vset.pattern.permute.xlu0 1
    %10200 = vperm.xlu0 %10199, %v10046
    %v10201 = vpop.permute.xlu0 %10200
    %10204 = vset.pattern.permute.xlu0 1
    %10205 = vperm.xlu0 %10204, %v10047
    %v10206 = vpop.permute.xlu0 %10205
    %10209 = vset.pattern.permute.xlu0 1
    %10210 = vperm.xlu0 %10209, %v10048
    %v10211 = vpop.permute.xlu0 %10210
    %10214 = vset.pattern.permute.xlu0 1
    %10215 = vperm.xlu0 %10214, %v10049
    %v10216 = vpop.permute.xlu0 %10215
    %10219 = vset.pattern.permute.xlu0 1
    %10220 = vperm.xlu0 %10219, %v10050
    %v10221 = vpop.permute.xlu0 %10220
    %10224 = vset.pattern.permute.xlu0 1
    %10225 = vperm.xlu0 %10224, %v10051
    %v10226 = vpop.permute.xlu0 %10225
    %10229 = vset.pattern.permute.xlu0 1
    %10230 = vperm.xlu0 %10229, %v10052
    %v10231 = vpop.permute.xlu0 %10230
    %10234 = vset.pattern.permute.xlu0 1
    %10235 = vperm.xlu0 %10234, %v10053
    %v10236 = vpop.permute.xlu0 %10235
    %10239 = vset.pattern.permute.xlu0 1
    %10240 = vperm.xlu0 %10239, %v10054
    %v10241 = vpop.permute.xlu0 %10240
    %10244 = vset.pattern.permute.xlu0 1
    %10245 = vperm.xlu0 %10244, %v10055
    %v10246 = vpop.permute.xlu0 %10245
    %v10248 = vadd.f32 %v10136, %v10171
    %v10249 = vadd.f32 %v10137, %v10171
    %v10250 = vadd.f32 %v10138, %v10176
    %v10251 = vadd.f32 %v10139, %v10176
    %v10252 = vadd.f32 %v10140, %v10181
    %v10253 = vadd.f32 %v10141, %v10181
    %v10254 = vadd.f32 %v10142, %v10186
    %v10255 = vadd.f32 %v10143, %v10186
    %v10256 = vadd.f32 %v10144, %v10191
    %v10257 = vadd.f32 %v10145, %v10191
    %v10258 = vadd.f32 %v10146, %v10196
    %v10259 = vadd.f32 %v10147, %v10196
    %v10260 = vadd.f32 %v10148, %v10201
    %v10261 = vadd.f32 %v10149, %v10201
    %v10262 = vadd.f32 %v10150, %v10206
    %v10263 = vadd.f32 %v10151, %v10206
    %v10264 = vadd.f32 %v10152, %v10211
    %v10265 = vadd.f32 %v10153, %v10211
    %v10266 = vadd.f32 %v10154, %v10216
    %v10267 = vadd.f32 %v10155, %v10216
    %v10268 = vadd.f32 %v10156, %v10221
    %v10269 = vadd.f32 %v10157, %v10221
    %v10270 = vadd.f32 %v10158, %v10226
    %v10271 = vadd.f32 %v10159, %v10226
    %v10272 = vadd.f32 %v10160, %v10231
    %v10273 = vadd.f32 %v10161, %v10231
    %v10274 = vadd.f32 %v10162, %v10236
    %v10275 = vadd.f32 %v10163, %v10236
    %v10276 = vadd.f32 %v10164, %v10241
    %v10277 = vadd.f32 %v10165, %v10241
    %v10278 = vadd.f32 %v10166, %v10246
    %v10279 = vadd.f32 %v10167, %v10246
    %10280 = vst [vmem:[%s4] sm:$0xff] %v10248
    %10281 = vst.msk [vmem:[%s4 + $0x8] sm:$0xff] %vm393, %v10249
    %10282 = vst [vmem:[%s4 + $0x10] sm:$0xff] %v10250
    %10283 = vst.msk [vmem:[%s4 + $0x18] sm:$0xff] %vm393, %v10251
    %10284 = vst [vmem:[%s4 + $0x20] sm:$0xff] %v10252
    %10285 = vst.msk [vmem:[%s4 + $0x28] sm:$0xff] %vm393, %v10253
    %10286 = vst [vmem:[%s4 + $0x30] sm:$0xff] %v10254
    %10287 = vst.msk [vmem:[%s4 + $0x38] sm:$0xff] %vm393, %v10255
    %10288 = vst [vmem:[%s4 + $0x40] sm:$0xff] %v10256
    %10289 = vst.msk [vmem:[%s4 + $0x48] sm:$0xff] %vm393, %v10257
    %10290 = vst [vmem:[%s4 + $0x50] sm:$0xff] %v10258
    %10291 = vst.msk [vmem:[%s4 + $0x58] sm:$0xff] %vm393, %v10259
    %10292 = vst [vmem:[%s4 + $0x60] sm:$0xff] %v10260
    %10293 = vst.msk [vmem:[%s4 + $0x68] sm:$0xff] %vm393, %v10261
    %10294 = vst [vmem:[%s4 + $0x70] sm:$0xff] %v10262
    %10295 = vst.msk [vmem:[%s4 + $0x78] sm:$0xff] %vm393, %v10263
    %10296 = vst [vmem:[%s4 + $0x80] sm:$0xff] %v10264
    %10297 = vst.msk [vmem:[%s4 + $0x88] sm:$0xff] %vm393, %v10265
    %10298 = vst [vmem:[%s4 + $0x90] sm:$0xff] %v10266
    %10299 = vst.msk [vmem:[%s4 + $0x98] sm:$0xff] %vm393, %v10267
    %10300 = vst [vmem:[%s4 + $0xa0] sm:$0xff] %v10268
    %10301 = vst.msk [vmem:[%s4 + $0xa8] sm:$0xff] %vm393, %v10269
    %10302 = vst [vmem:[%s4 + $0xb0] sm:$0xff] %v10270
    %10303 = vst.msk [vmem:[%s4 + $0xb8] sm:$0xff] %vm393, %v10271
    %10304 = vst [vmem:[%s4 + $0xc0] sm:$0xff] %v10272
    %10305 = vst.msk [vmem:[%s4 + $0xc8] sm:$0xff] %vm393, %v10273
    %10306 = vst [vmem:[%s4 + $0xd0] sm:$0xff] %v10274
    %10307 = vst.msk [vmem:[%s4 + $0xd8] sm:$0xff] %vm393, %v10275
    %10308 = vst [vmem:[%s4 + $0xe0] sm:$0xff] %v10276
    %10309 = vst.msk [vmem:[%s4 + $0xe8] sm:$0xff] %vm393, %v10277
    %10310 = vst [vmem:[%s4 + $0xf0] sm:$0xff] %v10278
    %10311 = vst.msk [vmem:[%s4 + $0xf8] sm:$0xff] %vm393, %v10279
  $region29: #{tpu_custom_call.1} parent=0 // pred_fallthru
    _
  // Predicated region
  $region30: #{tpu_custom_call.1} parent=0 // pred_check
    _
  $region31: #{tpu_custom_call.1} parent=0 // pred_check_branch
    %10313 = sbr.rel (0) target = $region33
  $region32: #{tpu_custom_call.1} parent=0 // pred_region
    _
  $region33: #{tpu_custom_call.1} parent=0 // pred_fallthru
    _
  // Predicated region
  $region34: #{tpu_custom_call.1} parent=0 // pred_check
    _
  $region35: #{tpu_custom_call.1} parent=0 // pred_check_branch
    %10315 = sbr.rel (0) target = $region37
  $region36: #{tpu_custom_call.1} parent=0 // pred_region
    _
  $region37: #{tpu_custom_call.1} parent=0 // pred_fallthru
    _

</llo_original>
